<compile_context>
chip_gen: v6e
topology: v6e:2x2x1
jax: 0.10.0
libtpu: 0.0.40
codegen_flags: <defaults>
</compile_context>

<pallas_src>
import numpy as np
import jax
import jax.numpy as jnp
from jax.experimental import pallas as pl
from jax.experimental.pallas import tpu as pltpu

OUT_DIM = 6                  # actor output dim
H_IN, W_IN, C_IN = 250, 160, 3
# conv1 k=8 s=4 -> (61,39,32); pool2 -> (30,19,32)
# conv2 k=4 s=2 -> (14, 8,64); pool2 -> ( 7, 4,64) -> 1792 features
P1_ROWS = 30 * 19            # 570 pooled conv1 positions
P2_COLS = 7 * 4              # 28 pooled conv2 positions
K1 = C_IN * 8 * 8            # 192
K2 = 32 * 4 * 4              # 512
FEAT = 64 * P2_COLS          # 1792
HEAD_TK = 896                # 1792 = 2*896, 896 = 7*128 (lane-aligned K tile)
HEAD_OUT = 8                 # 6 probs + 1 value + 1 pad (lane-padded store)
BB_MAX = 8                   # batch-block cap (v7x 32 MiB scoped-VMEM safe)


# ---------------- Pallas kernels ----------------

def _heads_kernel(f_ref, wsh_ref, bsh_ref, wac_ref, bac_ref, out_ref, acc_ref):
    # K-tiled shared Linear: f (B, 896) x wsh (896, 512) accumulated in f32,
    # then ReLU + fused actor/critic GEMM + exact softmax, packed (B, 8) out.
    k = pl.program_id(0)

    @pl.when(k == 0)
    def _():
        acc_ref[...] = jnp.zeros_like(acc_ref)

    acc_ref[...] += jnp.dot(f_ref[...], wsh_ref[...],
                            preferred_element_type=jnp.float32)

    @pl.when(k == pl.num_programs(0) - 1)
    def _():
        h = jnp.maximum(acc_ref[...] + bsh_ref[...], 0.0)
        z = jnp.dot(h.astype(jnp.bfloat16), wac_ref[...],
                    preferred_element_type=jnp.float32) + bac_ref[...]
        col = jax.lax.broadcasted_iota(jnp.int32, z.shape, 1)
        is_logit = col < OUT_DIM
        lg = jnp.where(is_logit, z, jnp.float32(-1e30))
        lg = lg - jnp.max(lg, axis=-1, keepdims=True)
        e = jnp.where(is_logit, jnp.exp(lg), 0.0)
        probs = e / jnp.sum(e, axis=-1, keepdims=True)        # exact softmax
        out_ref[...] = jnp.where(is_logit, probs, z)          # [probs | value | 0]


# ---------------- pallas_call wrappers ----------------

def _conv1_pool(p1, w, b, bb):
    """p1: (B_pad, 4, 192, 570) bf16 pool-offset-grouped im2col patches.
    Returns channel-major pooled conv1 activations (B_pad, 32, 570) bf16."""
    b_pad = p1.shape[0]
    nb = b_pad // bb

    def kernel(p_ref, w_ref, b_ref, o_ref):
        wv = w_ref[...]
        bv = b_ref[...]
        for bi in range(bb):  # static unroll over the batch block
            z = jnp.dot(wv, p_ref[bi, 0], preferred_element_type=jnp.float32)
            for q in range(1, 4):
                z = jnp.maximum(z, jnp.dot(wv, p_ref[bi, q],
                                           preferred_element_type=jnp.float32))
            # max(relu(x+b)) == relu(max(x)+b): bias/ReLU once after pool-max.
            o_ref[bi] = jnp.maximum(z + bv, 0.0).astype(jnp.bfloat16)

    return pl.pallas_call(
        kernel,
        out_shape=jax.ShapeDtypeStruct((b_pad, 32, P1_ROWS), jnp.bfloat16),
        grid=(nb,),
        in_specs=[pl.BlockSpec((bb, 4, K1, P1_ROWS), lambda i: (i, 0, 0, 0)),
                  pl.BlockSpec((32, K1), lambda i: (0, 0)),
                  pl.BlockSpec((32, 1), lambda i: (0, 0))],
        out_specs=pl.BlockSpec((bb, 32, P1_ROWS), lambda i: (i, 0, 0)),
        compiler_params=pltpu.CompilerParams(dimension_semantics=("parallel",)),
    )(p1, w, b)


def _conv2_pool(p2, w, b, bb):
    """p2: (NB, 4, 512, bb*28) bf16 -- the bb examples' pooled positions are
    concatenated along lanes.  Returns (NB, 64, bb*28) bf16 channel-major."""
    nb = p2.shape[0]
    lanes = bb * P2_COLS

    def kernel(p_ref, w_ref, b_ref, o_ref):
        wv = w_ref[...]
        z = jnp.dot(wv, p_ref[0, 0], preferred_element_type=jnp.float32)
        for q in range(1, 4):
            z = jnp.maximum(z, jnp.dot(wv, p_ref[0, q],
                                       preferred_element_type=jnp.float32))
        o_ref[0] = jnp.maximum(z + b_ref[...], 0.0).astype(jnp.bfloat16)

    return pl.pallas_call(
        kernel,
        out_shape=jax.ShapeDtypeStruct((nb, 64, lanes), jnp.bfloat16),
        grid=(nb,),
        in_specs=[pl.BlockSpec((1, 4, K2, lanes), lambda i: (i, 0, 0, 0)),
                  pl.BlockSpec((64, K2), lambda i: (0, 0)),
                  pl.BlockSpec((64, 1), lambda i: (0, 0))],
        out_specs=pl.BlockSpec((1, 64, lanes), lambda i: (i, 0, 0)),
        compiler_params=pltpu.CompilerParams(dimension_semantics=("parallel",)),
    )(p2, w, b)


def _heads(feat, wsh, bsh, wac, bac):
    b = feat.shape[0]
    nk = FEAT // HEAD_TK
    out = pl.pallas_call(
        _heads_kernel,
        out_shape=jax.ShapeDtypeStruct((b, HEAD_OUT), jnp.float32),
        grid=(nk,),
        in_specs=[pl.BlockSpec((b, HEAD_TK), lambda k: (0, k)),
                  pl.BlockSpec((HEAD_TK, 512), lambda k: (k, 0)),
                  pl.BlockSpec((1, 512), lambda k: (0, 0)),
                  pl.BlockSpec((512, HEAD_OUT), lambda k: (0, 0)),
                  pl.BlockSpec((1, HEAD_OUT), lambda k: (0, 0))],
        out_specs=pl.BlockSpec((b, HEAD_OUT), lambda k: (0, 0)),
        scratch_shapes=[pltpu.VMEM((b, 512), jnp.float32)],
        compiler_params=pltpu.CompilerParams(dimension_semantics=("arbitrary",)),
    )(feat, wsh, bsh, wac, bac)
    return out[:, :OUT_DIM], out[:, OUT_DIM:OUT_DIM + 1]


# ---------------- parameter prep (one-time, outside jit) ----------------

def prepare_params(params):
    """Reshape torch-layout weights into kernel layouts and cast matmul
    operands to bf16 (f32 accumulation happens inside the kernels)."""
    wac = jnp.concatenate([jnp.asarray(params["Wa"]).T,
                           jnp.asarray(params["Wc"]).T,
                           jnp.zeros((512, HEAD_OUT - OUT_DIM - 1), jnp.float32)],
                          axis=1)
    bac = jnp.concatenate([jnp.asarray(params["ba"]),
                           jnp.asarray(params["bc"]),
                           jnp.zeros((HEAD_OUT - OUT_DIM - 1,), jnp.float32)])
    return {
        "W1f": jnp.asarray(params["W1"]).reshape(32, K1).astype(jnp.bfloat16),   # (32, 192)
        "b1":  jnp.asarray(params["b1"]).reshape(32, 1).astype(jnp.float32),
        "W2f": jnp.asarray(params["W2"]).reshape(64, K2).astype(jnp.bfloat16),   # (64, 512)
        "b2":  jnp.asarray(params["b2"]).reshape(64, 1).astype(jnp.float32),
        "WshT": jnp.asarray(params["Wsh"]).T.astype(jnp.bfloat16),               # (1792, 512)
        "bsh": jnp.asarray(params["bsh"]).reshape(1, 512).astype(jnp.float32),
        "Wac": wac.astype(jnp.bfloat16),                                         # (512, 8)
        "bac": bac.reshape(1, HEAD_OUT).astype(jnp.float32),
    }


# ---------------- im2col glue (pure XLA slice/reshape/transpose) ----------------

def _conv1_patches(xb):
    """im2col for conv1 (k=8, s=4) grouped by 2x2-pool offset, feature-major.
    Output (B, 4, 192, 570) bf16: slab q=(a*2+b), rows = (c,kh,kw) features,
    cols = pooled position ph*19+pw.  pool(2)*stride(4) == k(8), so each
    slab's patches tile the shifted input non-overlappingly."""
    B = xb.shape[0]
    slabs = []
    for a in (0, 1):
        for b in (0, 1):
            xs = xb[:, 4 * a:4 * a + 240, 4 * b:4 * b + 152, :]   # (B,240,152,3)
            xs = xs.reshape(B, 30, 8, 19, 8, 3)                   # (B,ph,kh,pw,kw,c)
            xs = jnp.transpose(xs, (0, 5, 2, 4, 1, 3))            # (B,c,kh,kw,ph,pw)
            slabs.append(xs.reshape(B, K1, P1_ROWS))
    return jnp.stack(slabs, axis=1)


def _conv2_patches_grouped(y_nchw, bb):
    """im2col for conv2 (k=4, s=2) grouped by pool offset, with the bb
    examples of each batch block concatenated along the position (lane) axis.
    y_nchw: (B_pad, 32, 30, 19) bf16 -> (NB, 4, 512, bb*28)."""
    b_pad = y_nchw.shape[0]
    nb = b_pad // bb
    slabs = []
    for a in (0, 1):
        for b in (0, 1):
            ys = y_nchw[:, :, 2 * a:2 * a + 28, 2 * b:2 * b + 16]  # (B,32,28,16)
            ys = ys.reshape(nb, bb, 32, 7, 4, 4, 4)                # (nb,e,c,pi,kh,pj,kw)
            ys = jnp.transpose(ys, (0, 2, 4, 6, 1, 3, 5))          # (nb,c,kh,kw,e,pi,pj)
            slabs.append(ys.reshape(nb, K2, bb * P2_COLS))
    return jnp.stack(slabs, axis=1)


# ---------------- forward ----------------

def _pick_bb(B):
    # Cap at BB_MAX so the conv1 working set stays inside v7x's scoped VMEM;
    # keep >=2 grid steps when possible so both v7x TensorCores get work.
    bb = min(BB_MAX, B)
    if B > 1 and bb == B:
        bb = max(1, B // 2)
    return bb


@jax.jit
def forward(x, p):
    B = x.shape[0]
    bb = _pick_bb(B)
    b_pad = -(-B // bb) * bb
    if b_pad != B:
        x = jnp.pad(x, ((0, b_pad - B), (0, 0), (0, 0), (0, 0)))
    xb = x.astype(jnp.bfloat16)

    p1 = _conv1_patches(xb)                                   # (B_pad, 4, 192, 570)
    pooled1 = _conv1_pool(p1, p["W1f"], p["b1"], bb)          # (B_pad, 32, 570) channel-major
    p2 = _conv2_patches_grouped(
        pooled1.reshape(b_pad, 32, 30, 19), bb)               # (NB, 4, 512, bb*28)
    pooled2 = _conv2_pool(p2, p["W2f"], p["b2"], bb)          # (NB, 64, bb*28)

    nb = b_pad // bb
    feat = (pooled2.reshape(nb, 64, bb, P2_COLS)
            .transpose(0, 2, 1, 3)
            .reshape(b_pad, FEAT))[:B]                        # torch (C,H,W) flatten order
    return _heads(feat, p["WshT"], p["bsh"], p["Wac"], p["bac"])


# ---------------- pure-JAX reference (validation only) ----------------

def ref_forward(x, params):
    dn = ("NHWC", "HWIO", "NHWC")
    hp = jax.lax.Precision.HIGHEST
    y = jax.lax.conv_general_dilated(
        x, jnp.transpose(params["W1"], (2, 3, 1, 0)), (4, 4), "VALID",
        dimension_numbers=dn, precision=hp) + params["b1"]
    y = jnp.maximum(y, 0.0)
    y = jax.lax.reduce_window(y, -jnp.inf, jax.lax.max, (1, 2, 2, 1), (1, 2, 2, 1), "VALID")
    y = jax.lax.conv_general_dilated(
        y, jnp.transpose(params["W2"], (2, 3, 1, 0)), (2, 2), "VALID",
        dimension_numbers=dn, precision=hp) + params["b2"]
    y = jnp.maximum(y, 0.0)
    y = jax.lax.reduce_window(y, -jnp.inf, jax.lax.max, (1, 2, 2, 1), (1, 2, 2, 1), "VALID")
    f = jnp.transpose(y, (0, 3, 1, 2)).reshape(x.shape[0], -1)
    h = jnp.maximum(jnp.dot(f, params["Wsh"].T, precision=hp) + params["bsh"], 0.0)
    logits = jnp.dot(h, params["Wa"].T, precision=hp) + params["ba"]
    probs = jax.nn.softmax(logits, axis=-1)
    values = jnp.dot(h, params["Wc"].T, precision=hp) + params["bc"]
    return probs, values


if __name__ == "__main__":
    key = jax.random.PRNGKey(0)
    ks = jax.random.split(key, 11)

    def uni(k, shape, fan_in):
        bnd = 1.0 / np.sqrt(fan_in)
        return jax.random.uniform(k, shape, jnp.float32, -bnd, bnd)

    params = {
        "W1": uni(ks[0], (32, 3, 8, 8), 3 * 8 * 8),
        "b1": uni(ks[1], (32,), 3 * 8 * 8),
        "W2": uni(ks[2], (64, 32, 4, 4), 32 * 4 * 4),
        "b2": uni(ks[3], (64,), 32 * 4 * 4),
        "Wsh": uni(ks[4], (512, FEAT), FEAT),
        "bsh": uni(ks[5], (512,), FEAT),
        "Wa": uni(ks[6], (OUT_DIM, 512), 512),
        "ba": uni(ks[7], (OUT_DIM,), 512),
        "Wc": uni(ks[8], (1, 512), 512),
        "bc": uni(ks[9], (1,), 512),
    }
    prep = prepare_params(params)   # one-time weight layout/bf16 prep, outside jit

    # Input: NHWC frames; 250x160x3 is implied by the module's Linear(1792, 512).
    # Batch 5 exercises batch-blocking (bb=2) and the tail-padding path.
    B = 5
    x = jax.random.normal(ks[10], (B, H_IN, W_IN, C_IN), jnp.float32)

    probs, values = forward(x, prep)
    probs, values = jax.block_until_ready((probs, values))

    assert probs.shape == (B, OUT_DIM) and values.shape == (B, 1)
    assert np.allclose(np.asarray(jnp.sum(probs, axis=-1)), 1.0, atol=1e-3)

    ref_p, ref_v = ref_forward(x, params)
    assert np.allclose(np.asarray(probs), np.asarray(ref_p), atol=5e-2, rtol=5e-2)
    assert np.allclose(np.asarray(values), np.asarray(ref_v), atol=5e-2, rtol=5e-2)

    print("KERNEL_OK")
</pallas_src>

<mosaic_0001>
module attributes {stable_mosaic.version = 11 : i64} {
  func.func @kernel(%arg0: i32, %arg1: memref<2x4x192x570xbf16, #tpu.memory_space<vmem>>, %arg2: memref<32x192xbf16, #tpu.memory_space<vmem>>, %arg3: memref<32x1xf32, #tpu.memory_space<vmem>>, %arg4: memref<2x32x570xbf16, #tpu.memory_space<vmem>>) attributes {dimension_semantics = [#tpu.dimension_semantics<parallel>], iteration_bounds = array<i64: 3>, scalar_prefetch = 0 : i64, scratch_operands = 0 : i64, tpu.core_type = #tpu.core_type<tc>, window_params = [{transform_indices = @transform_0, window_bounds = array<i64: 2, 4, 192, 570>}, {pipeline_mode = #tpu.pipeline_mode<synchronous>, transform_indices = @transform_1, window_bounds = array<i64: 32, 192>}, {pipeline_mode = #tpu.pipeline_mode<synchronous>, transform_indices = @transform_2, window_bounds = array<i64: 32, 1>}, {transform_indices = @transform_3, window_bounds = array<i64: 2, 32, 570>}]} {
    %c0 = arith.constant 0 : index
    %c0_0 = arith.constant 0 : index
    %0 = vector.load %arg2[%c0, %c0_0] : memref<32x192xbf16, #tpu.memory_space<vmem>>, vector<32x192xbf16>
    %c0_1 = arith.constant 0 : index
    %c0_2 = arith.constant 0 : index
    %1 = vector.load %arg3[%c0_1, %c0_2] : memref<32x1xf32, #tpu.memory_space<vmem>>, vector<32x1xf32>
    %c0_3 = arith.constant 0 : index
    %c0_4 = arith.constant 0 : index
    %c0_5 = arith.constant 0 : index
    %c0_6 = arith.constant 0 : index
    %2 = vector.load %arg1[%c0_3, %c0_4, %c0_5, %c0_6] : memref<2x4x192x570xbf16, #tpu.memory_space<vmem>>, vector<1x1x192x570xbf16>
    %3 = vector.shape_cast %2 : vector<1x1x192x570xbf16> to vector<192x570xbf16>
    %cst = arith.constant dense<0.000000e+00> : vector<32x570xf32>
    %4 = tpu.matmul %0, %3, %cst {dimension_numbers = #tpu.dot_dimension_numbers<[1], [0], [0], [1], [0, 0, 1, 1], [], []>} : vector<32x192xbf16>, vector<192x570xbf16>, vector<32x570xf32> -> vector<32x570xf32>
    %c0_7 = arith.constant 0 : index
    %c1 = arith.constant 1 : index
    %c0_8 = arith.constant 0 : index
    %c0_9 = arith.constant 0 : index
    %5 = vector.load %arg1[%c0_7, %c1, %c0_8, %c0_9] : memref<2x4x192x570xbf16, #tpu.memory_space<vmem>>, vector<1x1x192x570xbf16>
    %6 = vector.shape_cast %5 : vector<1x1x192x570xbf16> to vector<192x570xbf16>
    %cst_10 = arith.constant dense<0.000000e+00> : vector<32x570xf32>
    %7 = tpu.matmul %0, %6, %cst_10 {dimension_numbers = #tpu.dot_dimension_numbers<[1], [0], [0], [1], [0, 0, 1, 1], [], []>} : vector<32x192xbf16>, vector<192x570xbf16>, vector<32x570xf32> -> vector<32x570xf32>
    %8 = arith.maximumf %4, %7 : vector<32x570xf32>
    %c0_11 = arith.constant 0 : index
    %c2 = arith.constant 2 : index
    %c0_12 = arith.constant 0 : index
    %c0_13 = arith.constant 0 : index
    %9 = vector.load %arg1[%c0_11, %c2, %c0_12, %c0_13] : memref<2x4x192x570xbf16, #tpu.memory_space<vmem>>, vector<1x1x192x570xbf16>
    %10 = vector.shape_cast %9 : vector<1x1x192x570xbf16> to vector<192x570xbf16>
    %cst_14 = arith.constant dense<0.000000e+00> : vector<32x570xf32>
    %11 = tpu.matmul %0, %10, %cst_14 {dimension_numbers = #tpu.dot_dimension_numbers<[1], [0], [0], [1], [0, 0, 1, 1], [], []>} : vector<32x192xbf16>, vector<192x570xbf16>, vector<32x570xf32> -> vector<32x570xf32>
    %12 = arith.maximumf %8, %11 : vector<32x570xf32>
    %c0_15 = arith.constant 0 : index
    %c3 = arith.constant 3 : index
    %c0_16 = arith.constant 0 : index
    %c0_17 = arith.constant 0 : index
    %13 = vector.load %arg1[%c0_15, %c3, %c0_16, %c0_17] : memref<2x4x192x570xbf16, #tpu.memory_space<vmem>>, vector<1x1x192x570xbf16>
    %14 = vector.shape_cast %13 : vector<1x1x192x570xbf16> to vector<192x570xbf16>
    %cst_18 = arith.constant dense<0.000000e+00> : vector<32x570xf32>
    %15 = tpu.matmul %0, %14, %cst_18 {dimension_numbers = #tpu.dot_dimension_numbers<[1], [0], [0], [1], [0, 0, 1, 1], [], []>} : vector<32x192xbf16>, vector<192x570xbf16>, vector<32x570xf32> -> vector<32x570xf32>
    %16 = arith.maximumf %12, %15 : vector<32x570xf32>
    %17 = vector.broadcast %1 : vector<32x1xf32> to vector<32x570xf32>
    %18 = arith.addf %16, %17 : vector<32x570xf32>
    %cst_19 = arith.constant 0.000000e+00 : f32
    %19 = vector.broadcast %cst_19 : f32 to vector<32x570xf32>
    %20 = arith.maximumf %18, %19 : vector<32x570xf32>
    %21 = arith.truncf %20 : vector<32x570xf32> to vector<32x570xbf16>
    %c0_20 = arith.constant 0 : index
    %c0_21 = arith.constant 0 : index
    %c0_22 = arith.constant 0 : index
    %22 = vector.load %arg4[%c0_20, %c0_21, %c0_22] : memref<2x32x570xbf16, #tpu.memory_space<vmem>>, vector<1x32x570xbf16>
    %23 = vector.shape_cast %22 : vector<1x32x570xbf16> to vector<32x570xbf16>
    %24 = vector.shape_cast %21 : vector<32x570xbf16> to vector<1x32x570xbf16>
    tpu.vector_store %arg4[%c0_20, %c0_21, %c0_22], %24 {strides = array<i32>} : memref<2x32x570xbf16, #tpu.memory_space<vmem>>, vector<1x32x570xbf16>,
    %c1_23 = arith.constant 1 : index
    %c0_24 = arith.constant 0 : index
    %c0_25 = arith.constant 0 : index
    %c0_26 = arith.constant 0 : index
    %25 = vector.load %arg1[%c1_23, %c0_24, %c0_25, %c0_26] : memref<2x4x192x570xbf16, #tpu.memory_space<vmem>>, vector<1x1x192x570xbf16>
    %26 = vector.shape_cast %25 : vector<1x1x192x570xbf16> to vector<192x570xbf16>
    %cst_27 = arith.constant dense<0.000000e+00> : vector<32x570xf32>
    %27 = tpu.matmul %0, %26, %cst_27 {dimension_numbers = #tpu.dot_dimension_numbers<[1], [0], [0], [1], [0, 0, 1, 1], [], []>} : vector<32x192xbf16>, vector<192x570xbf16>, vector<32x570xf32> -> vector<32x570xf32>
    %c1_28 = arith.constant 1 : index
    %c1_29 = arith.constant 1 : index
    %c0_30 = arith.constant 0 : index
    %c0_31 = arith.constant 0 : index
    %28 = vector.load %arg1[%c1_28, %c1_29, %c0_30, %c0_31] : memref<2x4x192x570xbf16, #tpu.memory_space<vmem>>, vector<1x1x192x570xbf16>
    %29 = vector.shape_cast %28 : vector<1x1x192x570xbf16> to vector<192x570xbf16>
    %cst_32 = arith.constant dense<0.000000e+00> : vector<32x570xf32>
    %30 = tpu.matmul %0, %29, %cst_32 {dimension_numbers = #tpu.dot_dimension_numbers<[1], [0], [0], [1], [0, 0, 1, 1], [], []>} : vector<32x192xbf16>, vector<192x570xbf16>, vector<32x570xf32> -> vector<32x570xf32>
    %31 = arith.maximumf %27, %30 : vector<32x570xf32>
    %c1_33 = arith.constant 1 : index
    %c2_34 = arith.constant 2 : index
    %c0_35 = arith.constant 0 : index
    %c0_36 = arith.constant 0 : index
    %32 = vector.load %arg1[%c1_33, %c2_34, %c0_35, %c0_36] : memref<2x4x192x570xbf16, #tpu.memory_space<vmem>>, vector<1x1x192x570xbf16>
    %33 = vector.shape_cast %32 : vector<1x1x192x570xbf16> to vector<192x570xbf16>
    %cst_37 = arith.constant dense<0.000000e+00> : vector<32x570xf32>
    %34 = tpu.matmul %0, %33, %cst_37 {dimension_numbers = #tpu.dot_dimension_numbers<[1], [0], [0], [1], [0, 0, 1, 1], [], []>} : vector<32x192xbf16>, vector<192x570xbf16>, vector<32x570xf32> -> vector<32x570xf32>
    %35 = arith.maximumf %31, %34 : vector<32x570xf32>
    %c1_38 = arith.constant 1 : index
    %c3_39 = arith.constant 3 : index
    %c0_40 = arith.constant 0 : index
    %c0_41 = arith.constant 0 : index
    %36 = vector.load %arg1[%c1_38, %c3_39, %c0_40, %c0_41] : memref<2x4x192x570xbf16, #tpu.memory_space<vmem>>, vector<1x1x192x570xbf16>
    %37 = vector.shape_cast %36 : vector<1x1x192x570xbf16> to vector<192x570xbf16>
    %cst_42 = arith.constant dense<0.000000e+00> : vector<32x570xf32>
    %38 = tpu.matmul %0, %37, %cst_42 {dimension_numbers = #tpu.dot_dimension_numbers<[1], [0], [0], [1], [0, 0, 1, 1], [], []>} : vector<32x192xbf16>, vector<192x570xbf16>, vector<32x570xf32> -> vector<32x570xf32>
    %39 = arith.maximumf %35, %38 : vector<32x570xf32>
    %40 = vector.broadcast %1 : vector<32x1xf32> to vector<32x570xf32>
    %41 = arith.addf %39, %40 : vector<32x570xf32>
    %cst_43 = arith.constant 0.000000e+00 : f32
    %42 = vector.broadcast %cst_43 : f32 to vector<32x570xf32>
    %43 = arith.maximumf %41, %42 : vector<32x570xf32>
    %44 = arith.truncf %43 : vector<32x570xf32> to vector<32x570xbf16>
    %c1_44 = arith.constant 1 : index
    %c0_45 = arith.constant 0 : index
    %c0_46 = arith.constant 0 : index
    %45 = vector.load %arg4[%c1_44, %c0_45, %c0_46] : memref<2x32x570xbf16, #tpu.memory_space<vmem>>, vector<1x32x570xbf16>
    %46 = vector.shape_cast %45 : vector<1x32x570xbf16> to vector<32x570xbf16>
    %47 = vector.shape_cast %44 : vector<32x570xbf16> to vector<1x32x570xbf16>
    tpu.vector_store %arg4[%c1_44, %c0_45, %c0_46], %47 {strides = array<i32>} : memref<2x32x570xbf16, #tpu.memory_space<vmem>>, vector<1x32x570xbf16>,
    return
  }
  func.func @transform_0(%arg0: i32) -> (i32, i32, i32, i32) {
    %c0_i32 = arith.constant 0 : i32
    %c0_i32_0 = arith.constant 0 : i32
    %c0_i32_1 = arith.constant 0 : i32
    %c0_i32_2 = arith.constant 0 : i32
    return %arg0, %c0_i32, %c0_i32_0, %c0_i32_1 : i32, i32, i32, i32
  }
  func.func @transform_1(%arg0: i32) -> (i32, i32) {
    %c0_i32 = arith.constant 0 : i32
    %c0_i32_0 = arith.constant 0 : i32
    %c0_i32_1 = arith.constant 0 : i32
    return %c0_i32, %c0_i32_0 : i32, i32
  }
  func.func @transform_2(%arg0: i32) -> (i32, i32) {
    %c0_i32 = arith.constant 0 : i32
    %c0_i32_0 = arith.constant 0 : i32
    %c0_i32_1 = arith.constant 0 : i32
    return %c0_i32, %c0_i32_0 : i32, i32
  }
  func.func @transform_3(%arg0: i32) -> (i32, i32, i32) {
    %c0_i32 = arith.constant 0 : i32
    %c0_i32_0 = arith.constant 0 : i32
    %c0_i32_1 = arith.constant 0 : i32
    return %arg0, %c0_i32, %c0_i32_0 : i32, i32, i32
  }
}

module attributes {stable_mosaic.version = 11 : i64} {
  func.func @kernel(%arg0: i32, %arg1: memref<1x4x512x56xbf16, #tpu.memory_space<vmem>>, %arg2: memref<64x512xbf16, #tpu.memory_space<vmem>>, %arg3: memref<64x1xf32, #tpu.memory_space<vmem>>, %arg4: memref<1x64x56xbf16, #tpu.memory_space<vmem>>) attributes {dimension_semantics = [#tpu.dimension_semantics<parallel>], iteration_bounds = array<i64: 3>, scalar_prefetch = 0 : i64, scratch_operands = 0 : i64, tpu.core_type = #tpu.core_type<tc>, window_params = [{transform_indices = @transform_0, window_bounds = array<i64: 1, 4, 512, 56>}, {pipeline_mode = #tpu.pipeline_mode<synchronous>, transform_indices = @transform_1, window_bounds = array<i64: 64, 512>}, {pipeline_mode = #tpu.pipeline_mode<synchronous>, transform_indices = @transform_2, window_bounds = array<i64: 64, 1>}, {transform_indices = @transform_3, window_bounds = array<i64: 1, 64, 56>}]} {
    %c0 = arith.constant 0 : index
    %c0_0 = arith.constant 0 : index
    %0 = vector.load %arg2[%c0, %c0_0] : memref<64x512xbf16, #tpu.memory_space<vmem>>, vector<64x512xbf16>
    %c0_1 = arith.constant 0 : index
    %c0_2 = arith.constant 0 : index
    %c0_3 = arith.constant 0 : index
    %c0_4 = arith.constant 0 : index
    %1 = vector.load %arg1[%c0_1, %c0_2, %c0_3, %c0_4] : memref<1x4x512x56xbf16, #tpu.memory_space<vmem>>, vector<1x1x512x56xbf16>
    %2 = vector.shape_cast %1 : vector<1x1x512x56xbf16> to vector<512x56xbf16>
    %cst = arith.constant dense<0.000000e+00> : vector<64x56xf32>
    %3 = tpu.matmul %0, %2, %cst {dimension_numbers = #tpu.dot_dimension_numbers<[1], [0], [0], [1], [0, 0, 1, 1], [], []>} : vector<64x512xbf16>, vector<512x56xbf16>, vector<64x56xf32> -> vector<64x56xf32>
    %c0_5 = arith.constant 0 : index
    %c1 = arith.constant 1 : index
    %c0_6 = arith.constant 0 : index
    %c0_7 = arith.constant 0 : index
    %4 = vector.load %arg1[%c0_5, %c1, %c0_6, %c0_7] : memref<1x4x512x56xbf16, #tpu.memory_space<vmem>>, vector<1x1x512x56xbf16>
    %5 = vector.shape_cast %4 : vector<1x1x512x56xbf16> to vector<512x56xbf16>
    %cst_8 = arith.constant dense<0.000000e+00> : vector<64x56xf32>
    %6 = tpu.matmul %0, %5, %cst_8 {dimension_numbers = #tpu.dot_dimension_numbers<[1], [0], [0], [1], [0, 0, 1, 1], [], []>} : vector<64x512xbf16>, vector<512x56xbf16>, vector<64x56xf32> -> vector<64x56xf32>
    %7 = arith.maximumf %3, %6 : vector<64x56xf32>
    %c0_9 = arith.constant 0 : index
    %c2 = arith.constant 2 : index
    %c0_10 = arith.constant 0 : index
    %c0_11 = arith.constant 0 : index
    %8 = vector.load %arg1[%c0_9, %c2, %c0_10, %c0_11] : memref<1x4x512x56xbf16, #tpu.memory_space<vmem>>, vector<1x1x512x56xbf16>
    %9 = vector.shape_cast %8 : vector<1x1x512x56xbf16> to vector<512x56xbf16>
    %cst_12 = arith.constant dense<0.000000e+00> : vector<64x56xf32>
    %10 = tpu.matmul %0, %9, %cst_12 {dimension_numbers = #tpu.dot_dimension_numbers<[1], [0], [0], [1], [0, 0, 1, 1], [], []>} : vector<64x512xbf16>, vector<512x56xbf16>, vector<64x56xf32> -> vector<64x56xf32>
    %11 = arith.maximumf %7, %10 : vector<64x56xf32>
    %c0_13 = arith.constant 0 : index
    %c3 = arith.constant 3 : index
    %c0_14 = arith.constant 0 : index
    %c0_15 = arith.constant 0 : index
    %12 = vector.load %arg1[%c0_13, %c3, %c0_14, %c0_15] : memref<1x4x512x56xbf16, #tpu.memory_space<vmem>>, vector<1x1x512x56xbf16>
    %13 = vector.shape_cast %12 : vector<1x1x512x56xbf16> to vector<512x56xbf16>
    %cst_16 = arith.constant dense<0.000000e+00> : vector<64x56xf32>
    %14 = tpu.matmul %0, %13, %cst_16 {dimension_numbers = #tpu.dot_dimension_numbers<[1], [0], [0], [1], [0, 0, 1, 1], [], []>} : vector<64x512xbf16>, vector<512x56xbf16>, vector<64x56xf32> -> vector<64x56xf32>
    %15 = arith.maximumf %11, %14 : vector<64x56xf32>
    %c0_17 = arith.constant 0 : index
    %c0_18 = arith.constant 0 : index
    %16 = vector.load %arg3[%c0_17, %c0_18] : memref<64x1xf32, #tpu.memory_space<vmem>>, vector<64x1xf32>
    %17 = vector.broadcast %16 : vector<64x1xf32> to vector<64x56xf32>
    %18 = arith.addf %15, %17 : vector<64x56xf32>
    %cst_19 = arith.constant 0.000000e+00 : f32
    %19 = vector.broadcast %cst_19 : f32 to vector<64x56xf32>
    %20 = arith.maximumf %18, %19 : vector<64x56xf32>
    %21 = arith.truncf %20 : vector<64x56xf32> to vector<64x56xbf16>
    %c0_20 = arith.constant 0 : index
    %c0_21 = arith.constant 0 : index
    %c0_22 = arith.constant 0 : index
    %22 = vector.load %arg4[%c0_20, %c0_21, %c0_22] : memref<1x64x56xbf16, #tpu.memory_space<vmem>>, vector<1x64x56xbf16>
    %23 = vector.shape_cast %22 : vector<1x64x56xbf16> to vector<64x56xbf16>
    %24 = vector.shape_cast %21 : vector<64x56xbf16> to vector<1x64x56xbf16>
    tpu.vector_store %arg4[%c0_20, %c0_21, %c0_22], %24 {strides = array<i32>} : memref<1x64x56xbf16, #tpu.memory_space<vmem>>, vector<1x64x56xbf16>,
    return
  }
  func.func @transform_0(%arg0: i32) -> (i32, i32, i32, i32) {
    %c0_i32 = arith.constant 0 : i32
    %c0_i32_0 = arith.constant 0 : i32
    %c0_i32_1 = arith.constant 0 : i32
    %c0_i32_2 = arith.constant 0 : i32
    return %arg0, %c0_i32, %c0_i32_0, %c0_i32_1 : i32, i32, i32, i32
  }
  func.func @transform_1(%arg0: i32) -> (i32, i32) {
    %c0_i32 = arith.constant 0 : i32
    %c0_i32_0 = arith.constant 0 : i32
    %c0_i32_1 = arith.constant 0 : i32
    return %c0_i32, %c0_i32_0 : i32, i32
  }
  func.func @transform_2(%arg0: i32) -> (i32, i32) {
    %c0_i32 = arith.constant 0 : i32
    %c0_i32_0 = arith.constant 0 : i32
    %c0_i32_1 = arith.constant 0 : i32
    return %c0_i32, %c0_i32_0 : i32, i32
  }
  func.func @transform_3(%arg0: i32) -> (i32, i32, i32) {
    %c0_i32 = arith.constant 0 : i32
    %c0_i32_0 = arith.constant 0 : i32
    %c0_i32_1 = arith.constant 0 : i32
    return %arg0, %c0_i32, %c0_i32_0 : i32, i32, i32
  }
}

module attributes {stable_mosaic.version = 11 : i64} {
  func.func @_heads_kernel(%arg0: i32, %arg1: memref<5x896xbf16, #tpu.memory_space<vmem>>, %arg2: memref<896x512xbf16, #tpu.memory_space<vmem>>, %arg3: memref<1x512xf32, #tpu.memory_space<vmem>>, %arg4: memref<512x8xbf16, #tpu.memory_space<vmem>>, %arg5: memref<1x8xf32, #tpu.memory_space<vmem>>, %arg6: memref<5x8xf32, #tpu.memory_space<vmem>>, %arg7: memref<5x512xf32, #tpu.memory_space<vmem>>) attributes {dimension_semantics = [#tpu.dimension_semantics<arbitrary>], iteration_bounds = array<i64: 2>, scalar_prefetch = 0 : i64, scratch_operands = 1 : i64, tpu.core_type = #tpu.core_type<tc>, window_params = [{transform_indices = @transform_0, window_bounds = array<i64: 5, 896>}, {transform_indices = @transform_1, window_bounds = array<i64: 896, 512>}, {pipeline_mode = #tpu.pipeline_mode<synchronous>, transform_indices = @transform_2, window_bounds = array<i64: 1, 512>}, {pipeline_mode = #tpu.pipeline_mode<synchronous>, transform_indices = @transform_3, window_bounds = array<i64: 512, 8>}, {pipeline_mode = #tpu.pipeline_mode<synchronous>, transform_indices = @transform_4, window_bounds = array<i64: 1, 8>}, {pipeline_mode = #tpu.pipeline_mode<synchronous>, transform_indices = @transform_5, window_bounds = array<i64: 5, 8>}]} {
    %c0_i32 = arith.constant 0 : i32
    %0 = arith.cmpi eq, %arg0, %c0_i32 : i32
    %1 = arith.extui %0 : i1 to i32
    %c0_i32_0 = arith.constant 0 : i32
    %2 = arith.cmpi ne, %1, %c0_i32_0 : i32
    scf.if %2 {
      %cst_9 = arith.constant 0.000000e+00 : f32
      %12 = vector.broadcast %cst_9 : f32 to vector<5x512xf32>
      %c0_10 = arith.constant 0 : index
      %c0_11 = arith.constant 0 : index
      %13 = vector.load %arg7[%c0_10, %c0_11] : memref<5x512xf32, #tpu.memory_space<vmem>>, vector<5x512xf32>
      tpu.vector_store %arg7[%c0_10, %c0_11], %12 {strides = array<i32>} : memref<5x512xf32, #tpu.memory_space<vmem>>, vector<5x512xf32>,
    } else {
    }
    %c0 = arith.constant 0 : index
    %c0_1 = arith.constant 0 : index
    %3 = vector.load %arg7[%c0, %c0_1] : memref<5x512xf32, #tpu.memory_space<vmem>>, vector<5x512xf32>
    %c0_2 = arith.constant 0 : index
    %c0_3 = arith.constant 0 : index
    %4 = vector.load %arg1[%c0_2, %c0_3] : memref<5x896xbf16, #tpu.memory_space<vmem>>, vector<5x896xbf16>
    %c0_4 = arith.constant 0 : index
    %c0_5 = arith.constant 0 : index
    %5 = vector.load %arg2[%c0_4, %c0_5] : memref<896x512xbf16, #tpu.memory_space<vmem>>, vector<896x512xbf16>
    %cst = arith.constant dense<0.000000e+00> : vector<5x512xf32>
    %6 = tpu.matmul %4, %5, %cst {dimension_numbers = #tpu.dot_dimension_numbers<[1], [0], [0], [1], [0, 0, 1, 1], [], []>} : vector<5x896xbf16>, vector<896x512xbf16>, vector<5x512xf32> -> vector<5x512xf32>
    %7 = arith.addf %3, %6 : vector<5x512xf32>
    %c0_6 = arith.constant 0 : index
    %c0_7 = arith.constant 0 : index
    %8 = vector.load %arg7[%c0_6, %c0_7] : memref<5x512xf32, #tpu.memory_space<vmem>>, vector<5x512xf32>
    tpu.vector_store %arg7[%c0_6, %c0_7], %7 {strides = array<i32>} : memref<5x512xf32, #tpu.memory_space<vmem>>, vector<5x512xf32>,
    %c1_i32 = arith.constant 1 : i32
    %9 = arith.cmpi eq, %arg0, %c1_i32 : i32
    %10 = arith.extui %9 : i1 to i32
    %c0_i32_8 = arith.constant 0 : i32
    %11 = arith.cmpi ne, %10, %c0_i32_8 : i32
    scf.if %11 {
      %c0_9 = arith.constant 0 : index
      %c0_10 = arith.constant 0 : index
      %12 = vector.load %arg7[%c0_9, %c0_10] : memref<5x512xf32, #tpu.memory_space<vmem>>, vector<5x512xf32>
      %c0_11 = arith.constant 0 : index
      %c0_12 = arith.constant 0 : index
      %13 = vector.load %arg3[%c0_11, %c0_12] : memref<1x512xf32, #tpu.memory_space<vmem>>, vector<1x512xf32>
      %14 = vector.broadcast %13 : vector<1x512xf32> to vector<5x512xf32>
      %15 = arith.addf %12, %14 : vector<5x512xf32>
      %cst_13 = arith.constant 0.000000e+00 : f32
      %16 = vector.broadcast %cst_13 : f32 to vector<5x512xf32>
      %17 = arith.maximumf %15, %16 : vector<5x512xf32>
      %18 = arith.truncf %17 : vector<5x512xf32> to vector<5x512xbf16>
      %c0_14 = arith.constant 0 : index
      %c0_15 = arith.constant 0 : index
      %19 = vector.load %arg4[%c0_14, %c0_15] : memref<512x8xbf16, #tpu.memory_space<vmem>>, vector<512x8xbf16>
      %cst_16 = arith.constant dense<0.000000e+00> : vector<5x8xf32>
      %20 = tpu.matmul %18, %19, %cst_16 {dimension_numbers = #tpu.dot_dimension_numbers<[1], [0], [0], [1], [0, 0, 1, 1], [], []>} : vector<5x512xbf16>, vector<512x8xbf16>, vector<5x8xf32> -> vector<5x8xf32>
      %c0_17 = arith.constant 0 : index
      %c0_18 = arith.constant 0 : index
      %21 = vector.load %arg5[%c0_17, %c0_18] : memref<1x8xf32, #tpu.memory_space<vmem>>, vector<1x8xf32>
      %22 = vector.broadcast %21 : vector<1x8xf32> to vector<5x8xf32>
      %23 = arith.addf %20, %22 : vector<5x8xf32>
      %24 = tpu.iota {dimensions = array<i32: 1>} : vector<5x8xi32>
      %c6_i32 = arith.constant 6 : i32
      %25 = vector.broadcast %c6_i32 : i32 to vector<5x8xi32>
      %26 = arith.cmpi slt, %24, %25 : vector<5x8xi32>
      %cst_19 = arith.constant -1.000000e+30 : f32
      %27 = vector.broadcast %cst_19 : f32 to vector<5x8xf32>
      %28 = arith.select %26, %23, %27 : vector<5x8xi1>, vector<5x8xf32>
      %cst_20 = arith.constant dense<0xFF800000> : vector<5xf32>
      %29 = vector.multi_reduction <maximumf>, %28, %cst_20 [1] : vector<5x8xf32> to vector<5xf32>
      %30 = vector.shape_cast %29 : vector<5xf32> to vector<5x1xf32>
      %31 = vector.broadcast %30 : vector<5x1xf32> to vector<5x8xf32>
      %32 = arith.subf %28, %31 : vector<5x8xf32>
      %33 = math.exp %32 : vector<5x8xf32>
      %cst_21 = arith.constant 0.000000e+00 : f32
      %34 = vector.broadcast %cst_21 : f32 to vector<5x8xf32>
      %35 = arith.select %26, %33, %34 : vector<5x8xi1>, vector<5x8xf32>
      %cst_22 = arith.constant dense<0.000000e+00> : vector<5xf32>
      %36 = vector.multi_reduction <add>, %35, %cst_22 [1] : vector<5x8xf32> to vector<5xf32>
      %37 = vector.shape_cast %36 : vector<5xf32> to vector<5x1xf32>
      %38 = vector.broadcast %37 : vector<5x1xf32> to vector<5x8xf32>
      %39 = arith.divf %35, %38 : vector<5x8xf32>
      %40 = arith.select %26, %39, %23 : vector<5x8xi1>, vector<5x8xf32>
      %c0_23 = arith.constant 0 : index
      %c0_24 = arith.constant 0 : index
      %41 = vector.load %arg6[%c0_23, %c0_24] : memref<5x8xf32, #tpu.memory_space<vmem>>, vector<5x8xf32>
      tpu.vector_store %arg6[%c0_23, %c0_24], %40 {strides = array<i32>} : memref<5x8xf32, #tpu.memory_space<vmem>>, vector<5x8xf32>,
    } else {
    }
    return
  }
  func.func @transform_0(%arg0: i32) -> (i32, i32) {
    %c0_i32 = arith.constant 0 : i32
    %c0_i32_0 = arith.constant 0 : i32
    return %c0_i32, %arg0 : i32, i32
  }
  func.func @transform_1(%arg0: i32) -> (i32, i32) {
    %c0_i32 = arith.constant 0 : i32
    %c0_i32_0 = arith.constant 0 : i32
    return %arg0, %c0_i32 : i32, i32
  }
  func.func @transform_2(%arg0: i32) -> (i32, i32) {
    %c0_i32 = arith.constant 0 : i32
    %c0_i32_0 = arith.constant 0 : i32
    %c0_i32_1 = arith.constant 0 : i32
    return %c0_i32, %c0_i32_0 : i32, i32
  }
  func.func @transform_3(%arg0: i32) -> (i32, i32) {
    %c0_i32 = arith.constant 0 : i32
    %c0_i32_0 = arith.constant 0 : i32
    %c0_i32_1 = arith.constant 0 : i32
    return %c0_i32, %c0_i32_0 : i32, i32
  }
  func.func @transform_4(%arg0: i32) -> (i32, i32) {
    %c0_i32 = arith.constant 0 : i32
    %c0_i32_0 = arith.constant 0 : i32
    %c0_i32_1 = arith.constant 0 : i32
    return %c0_i32, %c0_i32_0 : i32, i32
  }
  func.func @transform_5(%arg0: i32) -> (i32, i32) {
    %c0_i32 = arith.constant 0 : i32
    %c0_i32_0 = arith.constant 0 : i32
    %c0_i32_1 = arith.constant 0 : i32
    return %c0_i32, %c0_i32_0 : i32, i32
  }
}

</mosaic_0001>

<llo_original>
// kernel: forward.3
$region0: #{forward.3}
  #allocation0 [shape = 'u32[]', space=smem, size = 0x4, offset = 0x4, fixed_abs, tag = 'smem constant byte address 0x4 - core index']
  #allocation1 [shape = 'u32[144,128]{1,0:T(1,128)}', space=vmem, size = 0x12000, scoped, tag = 'internal scratch']
  %s0 = inlined_call_operand.vmem [shape: bf16[6,4,192,570], index: 0, kind: input, shape index: {}]
  %s1 = inlined_call_operand.vmem [shape: bf16[32,192], index: 1, kind: input, shape index: {}]
  %s2 = inlined_call_operand.vmem [shape: f32[32,1], index: 2, kind: input, shape index: {}]
  %s3 = inlined_call_operand.vmem [shape: bf16[6,32,570], index: 3, kind: output, shape index: {}]
  %s4 = sld [smem:[#allocation0]]
  $region45: #{forward.3} parent=0
    _
  %s6 = ssub.s32 1, %s4
  %s7 = scalar_select 0, %s6, %s4
  loop: start=0, step=1, limit=5
  $region2: #{forward.3} parent=0 // loop_pre_header
    _
  $region3: #{forward.3} parent=0 // loop_header
    %s9 = sphi 0, %s13
    %p10 = scmp.ge.s32.totalorder %s9, 5
    %s19 = sphi 0, %s21
    %s22 = sphi 0, %s19
    %s23 = sphi 0, %s22
    %s39 = sphi 0, %s23
    %s43 = sphi 0, %s43
    %s45 = sphi 0, %s43
    %s46 = sphi 0, %s45
    %s60 = sphi 0, %s46
    %s64 = sphi 0, %s64
    %s66 = sphi 0, %s64
    %s67 = sphi 0, %s66
    %s81 = sphi 0, %s67
    %s87 = sphi 0, %s89
    %s90 = sphi 0, %s87
    %s91 = sphi 0, %s90
    %s107 = sphi 0, %s91
  $region4: #{forward.3} parent=0 // loop_header_branch
    %12 = sbr.rel (%p10) target = $region8
  $region5: #{forward.3} parent=0 // loop_body
    %s14 = ssub.s32 %s9, 1
    %s15 = ssub.s32 %s9, 2
    %s16 = sadd.s32 %s9, 1
    %s17 = ssub.s32 %s9, %s16
    %p18 = scmp.eq.s32.totalorder %s17, 0
    %s20 = sadd.s32 %s19, 1
    %s21 = scalar_select %p18, %s19, %s20
    %p24 = pneg %p18
    %p25 = scmp.eq.s32.totalorder %s9, 2
    %p26 = por %p24, %p25
    %p27 = scmp.ne.s32.totalorder %s19, %s22
    %p28 = scmp.eq.s32.totalorder %s9, 0
    %p29 = por %p27, %p28
    %p30 = scmp.ne.s32.totalorder %s19, %s22
    %p31 = scmp.eq.s32.totalorder %s14, 2
    %p32 = por %p30, %p31
    %p33 = scmp.ne.s32.totalorder %s22, %s23
    %p34 = scmp.eq.s32.totalorder %s14, 0
    %p35 = por %p33, %p34
    %p36 = scmp.ne.s32.totalorder %s22, %s23
    %p37 = scmp.eq.s32.totalorder %s15, 2
    %p38 = por %p36, %p37
    %p40 = scmp.ne.s32.totalorder %s23, %s39
    %p41 = scmp.eq.s32.totalorder %s15, 0
    %p42 = por %p40, %p41
    %s44 = sadd.s32 %s43, 1
    %p47 = scmp.eq.s32.totalorder %s9, 2
    %p48 = scmp.ne.s32.totalorder %s43, %s45
    %p49 = scmp.eq.s32.totalorder %s9, 0
    %p50 = por %p48, %p49
    %p51 = scmp.ne.s32.totalorder %s43, %s45
    %p52 = scmp.eq.s32.totalorder %s14, 2
    %p53 = por %p51, %p52
    %p54 = scmp.ne.s32.totalorder %s45, %s46
    %p55 = scmp.eq.s32.totalorder %s14, 0
    %p56 = por %p54, %p55
    %p57 = scmp.ne.s32.totalorder %s45, %s46
    %p58 = scmp.eq.s32.totalorder %s15, 2
    %p59 = por %p57, %p58
    %p61 = scmp.ne.s32.totalorder %s46, %s60
    %p62 = scmp.eq.s32.totalorder %s15, 0
    %p63 = por %p61, %p62
    %s65 = sadd.s32 %s64, 1
    %p68 = scmp.eq.s32.totalorder %s9, 2
    %p69 = scmp.ne.s32.totalorder %s64, %s66
    %p70 = scmp.eq.s32.totalorder %s9, 0
    %p71 = por %p69, %p70
    %p72 = scmp.ne.s32.totalorder %s64, %s66
    %p73 = scmp.eq.s32.totalorder %s14, 2
    %p74 = por %p72, %p73
    %p75 = scmp.ne.s32.totalorder %s66, %s67
    %p76 = scmp.eq.s32.totalorder %s14, 0
    %p77 = por %p75, %p76
    %p78 = scmp.ne.s32.totalorder %s66, %s67
    %p79 = scmp.eq.s32.totalorder %s15, 2
    %p80 = por %p78, %p79
    %p82 = scmp.ne.s32.totalorder %s67, %s81
    %p83 = scmp.eq.s32.totalorder %s15, 0
    %p84 = por %p82, %p83
    %s85 = ssub.s32 %s9, %s16
    %p86 = scmp.eq.s32.totalorder %s85, 0
    %s88 = sadd.s32 %s87, 1
    %s89 = scalar_select %p86, %s87, %s88
    %p92 = pneg %p86
    %p93 = scmp.eq.s32.totalorder %s9, 2
    %p94 = por %p92, %p93
    %p95 = scmp.ne.s32.totalorder %s87, %s90
    %p96 = scmp.eq.s32.totalorder %s9, 0
    %p97 = por %p95, %p96
    %p98 = scmp.ne.s32.totalorder %s87, %s90
    %p99 = scmp.eq.s32.totalorder %s14, 2
    %p100 = por %p98, %p99
    %p101 = scmp.ne.s32.totalorder %s90, %s91
    %p102 = scmp.eq.s32.totalorder %s14, 0
    %p103 = por %p101, %p102
    %p104 = scmp.ne.s32.totalorder %s90, %s91
    %p105 = scmp.eq.s32.totalorder %s15, 2
    %p106 = por %p104, %p105
    %p108 = scmp.ne.s32.totalorder %s91, %s107
    %p109 = scmp.eq.s32.totalorder %s15, 0
    %p110 = por %p108, %p109
    %p111 = scmp.le.s32.totalorder 1, %s9
    %p112 = scmp.lt.s32.totalorder %s9, 4
    %p113 = pnand %p111, %p112
    %p114 = pneg %p113
    // Predicated region
    $region9: #{forward.3} parent=5 // pred_check
      _
    $region10: #{forward.3} parent=5 // pred_check_branch
      %116 = sbr.rel (%p113) target = $region12
    $region11: #{forward.3} parent=5 // pred_region
      %s117 = ssub.s32 %s9, 1
      // Predicated region
      $region13: #{forward.3} parent=11 // pred_check
        %p118 = pneg %p56
      $region14: #{forward.3} parent=11 // pred_check_branch
        %120 = sbr.rel (%p118) target = $region16
      $region15: #{forward.3} parent=11 // pred_region
        _
      $region16: #{forward.3} parent=11 // pred_fallthru
        _
      // Predicated region
      $region17: #{forward.3} parent=11 // pred_check
        %p121 = pneg %p77
      $region18: #{forward.3} parent=11 // pred_check_branch
        %123 = sbr.rel (%p121) target = $region20
      $region19: #{forward.3} parent=11 // pred_region
        _
      $region20: #{forward.3} parent=11 // pred_fallthru
        _
    $region12: #{forward.3} parent=5 // pred_fallthru
      _
    %p124 = scmp.lt.s32.totalorder %s9, 3
    // Predicated region
    $region21: #{forward.3} parent=5 // pred_check
      %p125 = pneg %p124
    $region22: #{forward.3} parent=5 // pred_check_branch
      %127 = sbr.rel (%p125) target = $region24
    $region23: #{forward.3} parent=5 // pred_region
      // Predicated region
      $region25: #{forward.3} parent=23 // pred_check
        %p128 = pneg %p29
      $region26: #{forward.3} parent=23 // pred_check_branch
        %130 = sbr.rel (%p128) target = $region28
      $region27: #{forward.3} parent=23 // pred_region
        %s131 = smul.u32 2, %s9
        %p132 = scmp.lt.s32.totalorder %s131, 5
        %s133 = scalar_select %p132, %s131, 5
        %s134 = smul.addr %s133, 480
        %s135 = smul.addr %s134, 4
        %s136 = scalar_lea.vmem %s0, %s135
        %s137 = smul.u32 2, %s9
      $region28: #{forward.3} parent=23 // pred_fallthru
        _
    $region24: #{forward.3} parent=5 // pred_fallthru
      _
    %p138 = scmp.le.s32.totalorder 1, %s9
    %p139 = scmp.lt.s32.totalorder %s9, 4
    %p140 = pnand %p138, %p139
    %p141 = pneg %p140
    // Predicated region
    $region29: #{forward.3} parent=5 // pred_check
      _
    $region30: #{forward.3} parent=5 // pred_check_branch
      %143 = sbr.rel (%p140) target = $region32
    $region31: #{forward.3} parent=5 // pred_region
      %s144 = ssub.s32 %s9, 1
      %s145 = smul.u32 2, %s14
      %p146 = scmp.lt.s32.totalorder %s145, 5
      %s147 = scalar_select %p146, %s145, 5
      %s148 = smul.addr %s147, 480
      %s149 = smul.addr %s148, 4
      %s150 = scalar_lea.vmem %s0, %s149
      %p151 = pneg %p35
      %p152 = pneg %p32
      %p153 = pneg %p56
      %p154 = pneg %p53
      %p155 = pneg %p77
      %p156 = pneg %p74
      %p157 = pneg %p103
      %p158 = pneg %p100
      %s159 = smul.u32 2, %s14
      %p160 = scmp.lt.s32.totalorder %s159, 5
      %s161 = scalar_select %p160, %s159, 5
      %s162 = smul.addr %s161, 20
      %s163 = smul.addr %s162, 4
      %s164 = scalar_lea.vmem %s3, %s163
      %s165 = smul.u32 2, %s14
      %p166 = scmp.lt.s32.totalorder %s165, 5
      %s167 = scalar_select %p166, %s165, 5
      %s168 = smul.addr %s167, 480
      %s169 = smul.addr %s168, 4
      %s170 = scalar_lea.vmem %s0, %s169
      %s171 = smul.u32 2, %s14
      %s172 = smul.u32 2, %s14
      %p173 = scmp.lt.s32.totalorder %s172, 5
      %s174 = scalar_select %p173, %s172, 5
      %s175 = smul.addr %s174, 20
      %s176 = smul.addr %s175, 4
      %s177 = scalar_lea.vmem %s3, %s176
      %s178 = smul.u32 2, %s14
      %v180 = vld [vmem:[%s1] sm:$0xff]
      %v181 = vld [vmem:[%s1 + $0x8] sm:$0xff]
      %v182 = vld [vmem:[%s1 + $0x10] sm:$0xff]
      %v183 = vld [vmem:[%s1 + $0x18] sm:$0xff]
      %v184 = vld [vmem:[%s2] sm:$0xff]
      %v185 = vld [vmem:[%s2 + $0x8] sm:$0xff]
      %v186 = vld [vmem:[%s2 + $0x10] sm:$0xff]
      %v187 = vld [vmem:[%s2 + $0x18] sm:$0xff]
      %v188 = vld [vmem:[%s170] sm:$0xff]
      %v189 = vld [vmem:[%s170 + $0x8] sm:$0xff]
      %v190 = vld [vmem:[%s170 + $0x10] sm:$0xf]
      %v191 = vld [vmem:[%s170 + $0x14] sm:$0xff]
      %v192 = vld [vmem:[%s170 + $0x1c] sm:$0xff]
      %v193 = vld [vmem:[%s170 + $0x24] sm:$0xf]
      %v194 = vld [vmem:[%s170 + $0x28] sm:$0xff]
      %v195 = vld [vmem:[%s170 + $0x30] sm:$0xff]
      %v196 = vld [vmem:[%s170 + $0x38] sm:$0xf]
      %v197 = vld [vmem:[%s170 + $0x3c] sm:$0xff]
      %v198 = vld [vmem:[%s170 + $0x44] sm:$0xff]
      %v199 = vld [vmem:[%s170 + $0x4c] sm:$0xf]
      %v200 = vld [vmem:[%s170 + $0x50] sm:$0xff]
      %v201 = vld [vmem:[%s170 + $0x58] sm:$0xff]
      %v202 = vld [vmem:[%s170 + $0x60] sm:$0xf]
      %v203 = vld [vmem:[%s170 + $0x64] sm:$0xff]
      %v204 = vld [vmem:[%s170 + $0x6c] sm:$0xff]
      %v205 = vld [vmem:[%s170 + $0x74] sm:$0xf]
      %v206 = vld [vmem:[%s170 + $0x78] sm:$0xff]
      %v207 = vld [vmem:[%s170 + $0x80] sm:$0xff]
      %v208 = vld [vmem:[%s170 + $0x88] sm:$0xf]
      %v209 = vld [vmem:[%s170 + $0x8c] sm:$0xff]
      %v210 = vld [vmem:[%s170 + $0x94] sm:$0xff]
      %v211 = vld [vmem:[%s170 + $0x9c] sm:$0xf]
      %v212 = vld [vmem:[%s170 + $0xa0] sm:$0xff]
      %v213 = vld [vmem:[%s170 + $0xa8] sm:$0xff]
      %v214 = vld [vmem:[%s170 + $0xb0] sm:$0xf]
      %v215 = vld [vmem:[%s170 + $0xb4] sm:$0xff]
      %v216 = vld [vmem:[%s170 + $0xbc] sm:$0xff]
      %v217 = vld [vmem:[%s170 + $0xc4] sm:$0xf]
      %v218 = vld [vmem:[%s170 + $0xc8] sm:$0xff]
      %v219 = vld [vmem:[%s170 + $0xd0] sm:$0xff]
      %v220 = vld [vmem:[%s170 + $0xd8] sm:$0xf]
      %v221 = vld [vmem:[%s170 + $0xdc] sm:$0xff]
      %v222 = vld [vmem:[%s170 + $0xe4] sm:$0xff]
      %v223 = vld [vmem:[%s170 + $0xec] sm:$0xf]
      %v224 = vld [vmem:[%s170 + $0xf0] sm:$0xff]
      %v225 = vld [vmem:[%s170 + $0xf8] sm:$0xff]
      %v226 = vld [vmem:[%s170 + $0x100] sm:$0xf]
      %v227 = vld [vmem:[%s170 + $0x104] sm:$0xff]
      %v228 = vld [vmem:[%s170 + $0x10c] sm:$0xff]
      %v229 = vld [vmem:[%s170 + $0x114] sm:$0xf]
      %v230 = vld [vmem:[%s170 + $0x118] sm:$0xff]
      %v231 = vld [vmem:[%s170 + $0x120] sm:$0xff]
      %v232 = vld [vmem:[%s170 + $0x128] sm:$0xf]
      %v233 = vld [vmem:[%s170 + $0x12c] sm:$0xff]
      %v234 = vld [vmem:[%s170 + $0x134] sm:$0xff]
      %v235 = vld [vmem:[%s170 + $0x13c] sm:$0xf]
      %v236 = vld [vmem:[%s170 + $0x140] sm:$0xff]
      %v237 = vld [vmem:[%s170 + $0x148] sm:$0xff]
      %v238 = vld [vmem:[%s170 + $0x150] sm:$0xf]
      %v239 = vld [vmem:[%s170 + $0x154] sm:$0xff]
      %v240 = vld [vmem:[%s170 + $0x15c] sm:$0xff]
      %v241 = vld [vmem:[%s170 + $0x164] sm:$0xf]
      %v242 = vld [vmem:[%s170 + $0x168] sm:$0xff]
      %v243 = vld [vmem:[%s170 + $0x170] sm:$0xff]
      %v244 = vld [vmem:[%s170 + $0x178] sm:$0xf]
      %v245 = vld [vmem:[%s170 + $0x17c] sm:$0xff]
      %v246 = vld [vmem:[%s170 + $0x184] sm:$0xff]
      %v247 = vld [vmem:[%s170 + $0x18c] sm:$0xf]
      %v248 = vld [vmem:[%s170 + $0x190] sm:$0xff]
      %v249 = vld [vmem:[%s170 + $0x198] sm:$0xff]
      %v250 = vld [vmem:[%s170 + $0x1a0] sm:$0xf]
      %v251 = vld [vmem:[%s170 + $0x1a4] sm:$0xff]
      %v252 = vld [vmem:[%s170 + $0x1ac] sm:$0xff]
      %v253 = vld [vmem:[%s170 + $0x1b4] sm:$0xf]
      %v254 = vld [vmem:[%s170 + $0x1b8] sm:$0xff]
      %v255 = vld [vmem:[%s170 + $0x1c0] sm:$0xff]
      %v256 = vld [vmem:[%s170 + $0x1c8] sm:$0xf]
      %v257 = vld [vmem:[%s170 + $0x1cc] sm:$0xff]
      %v258 = vld [vmem:[%s170 + $0x1d4] sm:$0xff]
      %v259 = vld [vmem:[%s170 + $0x1dc] sm:$0xf]
      %v264 = vunpack.c.l.b16 %v180
      %v265 = vunpack.c.h.b16 %v180
      %v266 = vunpack.c.l.b16 %v181
      %v267 = vunpack.c.h.b16 %v181
      %v268 = vunpack.c.l.b16 %v182
      %v269 = vunpack.c.h.b16 %v182
      %v270 = vunpack.c.l.b16 %v183
      %v271 = vunpack.c.h.b16 %v183
      %v272 = vpack.c.b16 %v266, %v264
      %v273 = vpack.c.b16 %v267, %v265
      %v274 = vpack.c.b16 %v270, %v268
      %v275 = vpack.c.b16 %v271, %v269
      %v350 = vunpack.c.l.b16 %v188
      %v351 = vunpack.c.h.b16 %v188
      %v352 = vunpack.c.l.b16 %v189
      %v353 = vunpack.c.h.b16 %v189
      %v354 = vunpack.c.l.b16 %v190
      %v355 = vunpack.c.l.b16 %v191
      %v356 = vunpack.c.h.b16 %v191
      %v357 = vunpack.c.l.b16 %v192
      %v358 = vunpack.c.h.b16 %v192
      %v359 = vunpack.c.l.b16 %v193
      %v360 = vunpack.c.l.b16 %v194
      %v361 = vunpack.c.h.b16 %v194
      %v362 = vunpack.c.l.b16 %v195
      %v363 = vunpack.c.h.b16 %v195
      %v364 = vunpack.c.l.b16 %v196
      %v365 = vunpack.c.l.b16 %v197
      %v366 = vunpack.c.h.b16 %v197
      %v367 = vunpack.c.l.b16 %v198
      %v368 = vunpack.c.h.b16 %v198
      %v369 = vunpack.c.l.b16 %v199
      %v370 = vunpack.c.l.b16 %v200
      %v371 = vunpack.c.h.b16 %v200
      %v372 = vunpack.c.l.b16 %v201
      %v373 = vunpack.c.h.b16 %v201
      %v374 = vunpack.c.l.b16 %v202
      %v375 = vunpack.c.l.b16 %v203
      %v376 = vunpack.c.h.b16 %v203
      %v377 = vunpack.c.l.b16 %v204
      %v378 = vunpack.c.h.b16 %v204
      %v379 = vunpack.c.l.b16 %v205
      %v380 = vunpack.c.l.b16 %v206
      %v381 = vunpack.c.h.b16 %v206
      %v382 = vunpack.c.l.b16 %v207
      %v383 = vunpack.c.h.b16 %v207
      %v384 = vunpack.c.l.b16 %v208
      %v385 = vunpack.c.l.b16 %v209
      %v386 = vunpack.c.h.b16 %v209
      %v387 = vunpack.c.l.b16 %v210
      %v388 = vunpack.c.h.b16 %v210
      %v389 = vunpack.c.l.b16 %v211
      %v390 = vunpack.c.l.b16 %v212
      %v391 = vunpack.c.h.b16 %v212
      %v392 = vunpack.c.l.b16 %v213
      %v393 = vunpack.c.h.b16 %v213
      %v394 = vunpack.c.l.b16 %v214
      %v395 = vunpack.c.l.b16 %v215
      %v396 = vunpack.c.h.b16 %v215
      %v397 = vunpack.c.l.b16 %v216
      %v398 = vunpack.c.h.b16 %v216
      %v399 = vunpack.c.l.b16 %v217
      %v400 = vunpack.c.l.b16 %v218
      %v401 = vunpack.c.h.b16 %v218
      %v402 = vunpack.c.l.b16 %v219
      %v403 = vunpack.c.h.b16 %v219
      %v404 = vunpack.c.l.b16 %v220
      %v405 = vunpack.c.l.b16 %v221
      %v406 = vunpack.c.h.b16 %v221
      %v407 = vunpack.c.l.b16 %v222
      %v408 = vunpack.c.h.b16 %v222
      %v409 = vunpack.c.l.b16 %v223
      %v410 = vunpack.c.l.b16 %v224
      %v411 = vunpack.c.h.b16 %v224
      %v412 = vunpack.c.l.b16 %v225
      %v413 = vunpack.c.h.b16 %v225
      %v414 = vunpack.c.l.b16 %v226
      %v415 = vunpack.c.l.b16 %v227
      %v416 = vunpack.c.h.b16 %v227
      %v417 = vunpack.c.l.b16 %v228
      %v418 = vunpack.c.h.b16 %v228
      %v419 = vunpack.c.l.b16 %v229
      %v420 = vunpack.c.l.b16 %v230
      %v421 = vunpack.c.h.b16 %v230
      %v422 = vunpack.c.l.b16 %v231
      %v423 = vunpack.c.h.b16 %v231
      %v424 = vunpack.c.l.b16 %v232
      %v425 = vunpack.c.l.b16 %v233
      %v426 = vunpack.c.h.b16 %v233
      %v427 = vunpack.c.l.b16 %v234
      %v428 = vunpack.c.h.b16 %v234
      %v429 = vunpack.c.l.b16 %v235
      %v430 = vunpack.c.l.b16 %v236
      %v431 = vunpack.c.h.b16 %v236
      %v432 = vunpack.c.l.b16 %v237
      %v433 = vunpack.c.h.b16 %v237
      %v434 = vunpack.c.l.b16 %v238
      %v435 = vunpack.c.l.b16 %v239
      %v436 = vunpack.c.h.b16 %v239
      %v437 = vunpack.c.l.b16 %v240
      %v438 = vunpack.c.h.b16 %v240
      %v439 = vunpack.c.l.b16 %v241
      %v440 = vunpack.c.l.b16 %v242
      %v441 = vunpack.c.h.b16 %v242
      %v442 = vunpack.c.l.b16 %v243
      %v443 = vunpack.c.h.b16 %v243
      %v444 = vunpack.c.l.b16 %v244
      %v445 = vunpack.c.l.b16 %v245
      %v446 = vunpack.c.h.b16 %v245
      %v447 = vunpack.c.l.b16 %v246
      %v448 = vunpack.c.h.b16 %v246
      %v449 = vunpack.c.l.b16 %v247
      %v450 = vunpack.c.l.b16 %v248
      %v451 = vunpack.c.h.b16 %v248
      %v452 = vunpack.c.l.b16 %v249
      %v453 = vunpack.c.h.b16 %v249
      %v454 = vunpack.c.l.b16 %v250
      %v455 = vunpack.c.l.b16 %v251
      %v456 = vunpack.c.h.b16 %v251
      %v457 = vunpack.c.l.b16 %v252
      %v458 = vunpack.c.h.b16 %v252
      %v459 = vunpack.c.l.b16 %v253
      %v460 = vunpack.c.l.b16 %v254
      %v461 = vunpack.c.h.b16 %v254
      %v462 = vunpack.c.l.b16 %v255
      %v463 = vunpack.c.h.b16 %v255
      %v464 = vunpack.c.l.b16 %v256
      %v465 = vunpack.c.l.b16 %v257
      %v466 = vunpack.c.h.b16 %v257
      %v467 = vunpack.c.l.b16 %v258
      %v468 = vunpack.c.h.b16 %v258
      %v469 = vunpack.c.l.b16 %v259
      %v470 = vpack.c.b16 %v355, %v350
      %v471 = vpack.c.b16 %v356, %v351
      %v472 = vpack.c.b16 %v357, %v352
      %v473 = vpack.c.b16 %v358, %v353
      %v474 = vpack.c.b16 %v359, %v354
      %v475 = vpack.c.b16 %v365, %v360
      %v476 = vpack.c.b16 %v366, %v361
      %v477 = vpack.c.b16 %v367, %v362
      %v478 = vpack.c.b16 %v368, %v363
      %v479 = vpack.c.b16 %v369, %v364
      %v480 = vpack.c.b16 %v375, %v370
      %v481 = vpack.c.b16 %v376, %v371
      %v482 = vpack.c.b16 %v377, %v372
      %v483 = vpack.c.b16 %v378, %v373
      %v484 = vpack.c.b16 %v379, %v374
      %v485 = vpack.c.b16 %v385, %v380
      %v486 = vpack.c.b16 %v386, %v381
      %v487 = vpack.c.b16 %v387, %v382
      %v488 = vpack.c.b16 %v388, %v383
      %v489 = vpack.c.b16 %v389, %v384
      %v490 = vpack.c.b16 %v395, %v390
      %v491 = vpack.c.b16 %v396, %v391
      %v492 = vpack.c.b16 %v397, %v392
      %v493 = vpack.c.b16 %v398, %v393
      %v494 = vpack.c.b16 %v399, %v394
      %v495 = vpack.c.b16 %v405, %v400
      %v496 = vpack.c.b16 %v406, %v401
      %v497 = vpack.c.b16 %v407, %v402
      %v498 = vpack.c.b16 %v408, %v403
      %v499 = vpack.c.b16 %v409, %v404
      %v500 = vpack.c.b16 %v415, %v410
      %v501 = vpack.c.b16 %v416, %v411
      %v502 = vpack.c.b16 %v417, %v412
      %v503 = vpack.c.b16 %v418, %v413
      %v504 = vpack.c.b16 %v419, %v414
      %v505 = vpack.c.b16 %v425, %v420
      %v506 = vpack.c.b16 %v426, %v421
      %v507 = vpack.c.b16 %v427, %v422
      %v508 = vpack.c.b16 %v428, %v423
      %v509 = vpack.c.b16 %v429, %v424
      %v510 = vpack.c.b16 %v435, %v430
      %v511 = vpack.c.b16 %v436, %v431
      %v512 = vpack.c.b16 %v437, %v432
      %v513 = vpack.c.b16 %v438, %v433
      %v514 = vpack.c.b16 %v439, %v434
      %v515 = vpack.c.b16 %v445, %v440
      %v516 = vpack.c.b16 %v446, %v441
      %v517 = vpack.c.b16 %v447, %v442
      %v518 = vpack.c.b16 %v448, %v443
      %v519 = vpack.c.b16 %v449, %v444
      %v520 = vpack.c.b16 %v455, %v450
      %v521 = vpack.c.b16 %v456, %v451
      %v522 = vpack.c.b16 %v457, %v452
      %v523 = vpack.c.b16 %v458, %v453
      %v524 = vpack.c.b16 %v459, %v454
      %v525 = vpack.c.b16 %v465, %v460
      %v526 = vpack.c.b16 %v466, %v461
      %v527 = vpack.c.b16 %v467, %v462
      %v528 = vpack.c.b16 %v468, %v463
      %v529 = vpack.c.b16 %v469, %v464
      %vm590 = vcmask 523264
      %v592 = vsel %vm590, %v273, 0
      %v595 = vsel %vm590, %v275, 0
      %597 = vmatprep.subr.bf16.mxu0 %v506
      %598 = vmatpush1.bf16.msra.mxu0 %v505
      %599 = vmatprep.subr.bf16.mxu0 %v501
      %600 = vmatpush1.bf16.msra.mxu0 %v500
      %601 = vmatprep.subr.bf16.mxu0 %v496
      %602 = vmatpush1.bf16.msra.mxu0 %v495
      %603 = vmatprep.subr.bf16.mxu0 %v491
      %604 = vmatpush1.bf16.msra.mxu0 %v490
      %605 = vmatprep.subr.bf16.mxu0 %v486
      %606 = vmatpush1.bf16.msra.mxu0 %v485
      %607 = vmatprep.subr.bf16.mxu0 %v481
      %608 = vmatpush1.bf16.msra.mxu0 %v480
      %609 = vmatprep.subr.bf16.mxu0 %v476
      %610 = vmatpush1.bf16.msra.mxu0 %v475
      %611 = vmatprep.subr.bf16.mxu0 %v471
      %612 = vmatpush1.bf16.msra.mxu0 %v470
      %613 = vmatprep.subr.bf16.mxu0 0
      %614 = vmatpush2.bf16.msra.mxu0 0
      %615 = vmatprep.subr.bf16.mxu0 0
      %616 = vmatpush2.bf16.msra.mxu0 0
      %617 = vmatprep.subr.bf16.mxu0 0
      %618 = vmatpush2.bf16.msra.mxu0 0
      %619 = vmatprep.subr.bf16.mxu0 0
      %620 = vmatpush2.bf16.msra.mxu0 0
      %621 = vmatprep.subr.bf16.mxu0 %v526
      %622 = vmatpush2.bf16.msra.mxu0 %v525
      %623 = vmatprep.subr.bf16.mxu0 %v521
      %624 = vmatpush2.bf16.msra.mxu0 %v520
      %625 = vmatprep.subr.bf16.mxu0 %v516
      %626 = vmatpush2.bf16.msra.mxu0 %v515
      %627 = vmatprep.subr.bf16.mxu0 %v511
      %628 = vmatpush2.bf16.msra.mxu0 %v510
      %629 = vmatprep.mubr.bf16.mxu0 %v592
      %630 = vmatmul.mubr.bf16.gmra.mxu0 %v272
      %v631 = vpop.f32.mrf.mxu0
      %v632 = vadd.f32 0.0, %v631
      %v633 = vpop.f32.mrf.mxu0
      %v634 = vadd.f32 0.0, %v633
      %v635 = vpop.f32.mrf.mxu0
      %v636 = vadd.f32 0.0, %v635
      %v637 = vpop.f32.mrf.mxu0
      %v638 = vadd.f32 0.0, %v637
      %639 = vmatprep.mubr.bf16.mxu0 %v595
      %640 = vmatmul.mubr.bf16.gmra.mxu0 %v274
      %v641 = vpop.f32.mrf.mxu0
      %v642 = vadd.f32 0.0, %v641
      %v643 = vpop.f32.mrf.mxu0
      %v644 = vadd.f32 0.0, %v643
      %v645 = vpop.f32.mrf.mxu0
      %v646 = vadd.f32 0.0, %v645
      %v647 = vpop.f32.mrf.mxu0
      %v648 = vadd.f32 0.0, %v647
      %649 = vdwg.mxu0
      %650 = vmatprep.subr.bf16.mxu0 %v508
      %651 = vmatpush1.bf16.msra.mxu0 %v507
      %652 = vmatprep.subr.bf16.mxu0 %v503
      %653 = vmatpush1.bf16.msra.mxu0 %v502
      %654 = vmatprep.subr.bf16.mxu0 %v498
      %655 = vmatpush1.bf16.msra.mxu0 %v497
      %656 = vmatprep.subr.bf16.mxu0 %v493
      %657 = vmatpush1.bf16.msra.mxu0 %v492
      %658 = vmatprep.subr.bf16.mxu0 %v488
      %659 = vmatpush1.bf16.msra.mxu0 %v487
      %660 = vmatprep.subr.bf16.mxu0 %v483
      %661 = vmatpush1.bf16.msra.mxu0 %v482
      %662 = vmatprep.subr.bf16.mxu0 %v478
      %663 = vmatpush1.bf16.msra.mxu0 %v477
      %664 = vmatprep.subr.bf16.mxu0 %v473
      %665 = vmatpush1.bf16.msra.mxu0 %v472
      %666 = vmatprep.subr.bf16.mxu0 0
      %667 = vmatpush2.bf16.msra.mxu0 0
      %668 = vmatprep.subr.bf16.mxu0 0
      %669 = vmatpush2.bf16.msra.mxu0 0
      %670 = vmatprep.subr.bf16.mxu0 0
      %671 = vmatpush2.bf16.msra.mxu0 0
      %672 = vmatprep.subr.bf16.mxu0 0
      %673 = vmatpush2.bf16.msra.mxu0 0
      %674 = vmatprep.subr.bf16.mxu0 %v528
      %675 = vmatpush2.bf16.msra.mxu0 %v527
      %676 = vmatprep.subr.bf16.mxu0 %v523
      %677 = vmatpush2.bf16.msra.mxu0 %v522
      %678 = vmatprep.subr.bf16.mxu0 %v518
      %679 = vmatpush2.bf16.msra.mxu0 %v517
      %680 = vmatprep.subr.bf16.mxu0 %v513
      %681 = vmatpush2.bf16.msra.mxu0 %v512
      %682 = vmatprep.mubr.bf16.mxu0 %v592
      %683 = vmatmul.mubr.bf16.gmra.mxu0 %v272
      %v684 = vpop.f32.mrf.mxu0
      %v685 = vadd.f32 0.0, %v684
      %v686 = vpop.f32.mrf.mxu0
      %v687 = vadd.f32 0.0, %v686
      %v688 = vpop.f32.mrf.mxu0
      %v689 = vadd.f32 0.0, %v688
      %v690 = vpop.f32.mrf.mxu0
      %v691 = vadd.f32 0.0, %v690
      %692 = vmatprep.mubr.bf16.mxu0 %v595
      %693 = vmatmul.mubr.bf16.gmra.mxu0 %v274
      %v694 = vpop.f32.mrf.mxu0
      %v695 = vadd.f32 0.0, %v694
      %v696 = vpop.f32.mrf.mxu0
      %v697 = vadd.f32 0.0, %v696
      %v698 = vpop.f32.mrf.mxu0
      %v699 = vadd.f32 0.0, %v698
      %v700 = vpop.f32.mrf.mxu0
      %v701 = vadd.f32 0.0, %v700
      %702 = vdwg.mxu0
      %703 = vmatprep.subr.bf16.mxu0 0
      %704 = vmatpush1.bf16.msra.mxu0 %v509
      %705 = vmatprep.subr.bf16.mxu0 0
      %706 = vmatpush1.bf16.msra.mxu0 %v504
      %707 = vmatprep.subr.bf16.mxu0 0
      %708 = vmatpush1.bf16.msra.mxu0 %v499
      %709 = vmatprep.subr.bf16.mxu0 0
      %710 = vmatpush1.bf16.msra.mxu0 %v494
      %711 = vmatprep.subr.bf16.mxu0 0
      %712 = vmatpush1.bf16.msra.mxu0 %v489
      %713 = vmatprep.subr.bf16.mxu0 0
      %714 = vmatpush1.bf16.msra.mxu0 %v484
      %715 = vmatprep.subr.bf16.mxu0 0
      %716 = vmatpush1.bf16.msra.mxu0 %v479
      %717 = vmatprep.subr.bf16.mxu0 0
      %718 = vmatpush1.bf16.msra.mxu0 %v474
      %719 = vmatprep.subr.bf16.mxu0 0
      %720 = vmatpush2.bf16.msra.mxu0 0
      %721 = vmatprep.subr.bf16.mxu0 0
      %722 = vmatpush2.bf16.msra.mxu0 0
      %723 = vmatprep.subr.bf16.mxu0 0
      %724 = vmatpush2.bf16.msra.mxu0 0
      %725 = vmatprep.subr.bf16.mxu0 0
      %726 = vmatpush2.bf16.msra.mxu0 0
      %727 = vmatprep.subr.bf16.mxu0 0
      %728 = vmatpush2.bf16.msra.mxu0 %v529
      %729 = vmatprep.subr.bf16.mxu0 0
      %730 = vmatpush2.bf16.msra.mxu0 %v524
      %731 = vmatprep.subr.bf16.mxu0 0
      %732 = vmatpush2.bf16.msra.mxu0 %v519
      %733 = vmatprep.subr.bf16.mxu0 0
      %734 = vmatpush2.bf16.msra.mxu0 %v514
      %735 = vmatprep.mubr.bf16.mxu0 %v592
      %736 = vmatmul.mubr.bf16.gmra.mxu0 %v272
      %v737 = vpop.f32.mrf.mxu0
      %v738 = vadd.f32 0.0, %v737
      %v739 = vpop.f32.mrf.mxu0
      %v740 = vpop.f32.mrf.mxu0
      %v741 = vadd.f32 0.0, %v740
      %v742 = vpop.f32.mrf.mxu0
      %743 = vmatprep.mubr.bf16.mxu0 %v595
      %744 = vmatmul.mubr.bf16.gmra.mxu0 %v274
      %v745 = vpop.f32.mrf.mxu0
      %v746 = vadd.f32 0.0, %v745
      %v747 = vpop.f32.mrf.mxu0
      %v748 = vpop.f32.mrf.mxu0
      %v749 = vadd.f32 0.0, %v748
      %v750 = vpop.f32.mrf.mxu0
      %751 = vdwg.mxu0
      %s752 = scalar_lea.vmem %s170, 480
      %v753 = vld [vmem:[%s752] sm:$0xff]
      %v754 = vld [vmem:[%s752 + $0x8] sm:$0xff]
      %v755 = vld [vmem:[%s752 + $0x10] sm:$0xf]
      %v756 = vld [vmem:[%s752 + $0x14] sm:$0xff]
      %v757 = vld [vmem:[%s752 + $0x1c] sm:$0xff]
      %v758 = vld [vmem:[%s752 + $0x24] sm:$0xf]
      %v759 = vld [vmem:[%s752 + $0x28] sm:$0xff]
      %v760 = vld [vmem:[%s752 + $0x30] sm:$0xff]
      %v761 = vld [vmem:[%s752 + $0x38] sm:$0xf]
      %v762 = vld [vmem:[%s752 + $0x3c] sm:$0xff]
      %v763 = vld [vmem:[%s752 + $0x44] sm:$0xff]
      %v764 = vld [vmem:[%s752 + $0x4c] sm:$0xf]
      %v765 = vld [vmem:[%s752 + $0x50] sm:$0xff]
      %v766 = vld [vmem:[%s752 + $0x58] sm:$0xff]
      %v767 = vld [vmem:[%s752 + $0x60] sm:$0xf]
      %v768 = vld [vmem:[%s752 + $0x64] sm:$0xff]
      %v769 = vld [vmem:[%s752 + $0x6c] sm:$0xff]
      %v770 = vld [vmem:[%s752 + $0x74] sm:$0xf]
      %v771 = vld [vmem:[%s752 + $0x78] sm:$0xff]
      %v772 = vld [vmem:[%s752 + $0x80] sm:$0xff]
      %v773 = vld [vmem:[%s752 + $0x88] sm:$0xf]
      %v774 = vld [vmem:[%s752 + $0x8c] sm:$0xff]
      %v775 = vld [vmem:[%s752 + $0x94] sm:$0xff]
      %v776 = vld [vmem:[%s752 + $0x9c] sm:$0xf]
      %v777 = vld [vmem:[%s752 + $0xa0] sm:$0xff]
      %v778 = vld [vmem:[%s752 + $0xa8] sm:$0xff]
      %v779 = vld [vmem:[%s752 + $0xb0] sm:$0xf]
      %v780 = vld [vmem:[%s752 + $0xb4] sm:$0xff]
      %v781 = vld [vmem:[%s752 + $0xbc] sm:$0xff]
      %v782 = vld [vmem:[%s752 + $0xc4] sm:$0xf]
      %v783 = vld [vmem:[%s752 + $0xc8] sm:$0xff]
      %v784 = vld [vmem:[%s752 + $0xd0] sm:$0xff]
      %v785 = vld [vmem:[%s752 + $0xd8] sm:$0xf]
      %v786 = vld [vmem:[%s752 + $0xdc] sm:$0xff]
      %v787 = vld [vmem:[%s752 + $0xe4] sm:$0xff]
      %v788 = vld [vmem:[%s752 + $0xec] sm:$0xf]
      %v789 = vld [vmem:[%s752 + $0xf0] sm:$0xff]
      %v790 = vld [vmem:[%s752 + $0xf8] sm:$0xff]
      %v791 = vld [vmem:[%s752 + $0x100] sm:$0xf]
      %v792 = vld [vmem:[%s752 + $0x104] sm:$0xff]
      %v793 = vld [vmem:[%s752 + $0x10c] sm:$0xff]
      %v794 = vld [vmem:[%s752 + $0x114] sm:$0xf]
      %v795 = vld [vmem:[%s752 + $0x118] sm:$0xff]
      %v796 = vld [vmem:[%s752 + $0x120] sm:$0xff]
      %v797 = vld [vmem:[%s752 + $0x128] sm:$0xf]
      %v798 = vld [vmem:[%s752 + $0x12c] sm:$0xff]
      %v799 = vld [vmem:[%s752 + $0x134] sm:$0xff]
      %v800 = vld [vmem:[%s752 + $0x13c] sm:$0xf]
      %v801 = vld [vmem:[%s752 + $0x140] sm:$0xff]
      %v802 = vld [vmem:[%s752 + $0x148] sm:$0xff]
      %v803 = vld [vmem:[%s752 + $0x150] sm:$0xf]
      %v804 = vld [vmem:[%s752 + $0x154] sm:$0xff]
      %v805 = vld [vmem:[%s752 + $0x15c] sm:$0xff]
      %v806 = vld [vmem:[%s752 + $0x164] sm:$0xf]
      %v807 = vld [vmem:[%s752 + $0x168] sm:$0xff]
      %v808 = vld [vmem:[%s752 + $0x170] sm:$0xff]
      %v809 = vld [vmem:[%s752 + $0x178] sm:$0xf]
      %v810 = vld [vmem:[%s752 + $0x17c] sm:$0xff]
      %v811 = vld [vmem:[%s752 + $0x184] sm:$0xff]
      %v812 = vld [vmem:[%s752 + $0x18c] sm:$0xf]
      %v813 = vld [vmem:[%s752 + $0x190] sm:$0xff]
      %v814 = vld [vmem:[%s752 + $0x198] sm:$0xff]
      %v815 = vld [vmem:[%s752 + $0x1a0] sm:$0xf]
      %v816 = vld [vmem:[%s752 + $0x1a4] sm:$0xff]
      %v817 = vld [vmem:[%s752 + $0x1ac] sm:$0xff]
      %v818 = vld [vmem:[%s752 + $0x1b4] sm:$0xf]
      %v819 = vld [vmem:[%s752 + $0x1b8] sm:$0xff]
      %v820 = vld [vmem:[%s752 + $0x1c0] sm:$0xff]
      %v821 = vld [vmem:[%s752 + $0x1c8] sm:$0xf]
      %v822 = vld [vmem:[%s752 + $0x1cc] sm:$0xff]
      %v823 = vld [vmem:[%s752 + $0x1d4] sm:$0xff]
      %v824 = vld [vmem:[%s752 + $0x1dc] sm:$0xf]
      %v897 = vunpack.c.l.b16 %v753
      %v898 = vunpack.c.h.b16 %v753
      %v899 = vunpack.c.l.b16 %v754
      %v900 = vunpack.c.h.b16 %v754
      %v901 = vunpack.c.l.b16 %v755
      %v902 = vunpack.c.l.b16 %v756
      %v903 = vunpack.c.h.b16 %v756
      %v904 = vunpack.c.l.b16 %v757
      %v905 = vunpack.c.h.b16 %v757
      %v906 = vunpack.c.l.b16 %v758
      %v907 = vunpack.c.l.b16 %v759
      %v908 = vunpack.c.h.b16 %v759
      %v909 = vunpack.c.l.b16 %v760
      %v910 = vunpack.c.h.b16 %v760
      %v911 = vunpack.c.l.b16 %v761
      %v912 = vunpack.c.l.b16 %v762
      %v913 = vunpack.c.h.b16 %v762
      %v914 = vunpack.c.l.b16 %v763
      %v915 = vunpack.c.h.b16 %v763
      %v916 = vunpack.c.l.b16 %v764
      %v917 = vunpack.c.l.b16 %v765
      %v918 = vunpack.c.h.b16 %v765
      %v919 = vunpack.c.l.b16 %v766
      %v920 = vunpack.c.h.b16 %v766
      %v921 = vunpack.c.l.b16 %v767
      %v922 = vunpack.c.l.b16 %v768
      %v923 = vunpack.c.h.b16 %v768
      %v924 = vunpack.c.l.b16 %v769
      %v925 = vunpack.c.h.b16 %v769
      %v926 = vunpack.c.l.b16 %v770
      %v927 = vunpack.c.l.b16 %v771
      %v928 = vunpack.c.h.b16 %v771
      %v929 = vunpack.c.l.b16 %v772
      %v930 = vunpack.c.h.b16 %v772
      %v931 = vunpack.c.l.b16 %v773
      %v932 = vunpack.c.l.b16 %v774
      %v933 = vunpack.c.h.b16 %v774
      %v934 = vunpack.c.l.b16 %v775
      %v935 = vunpack.c.h.b16 %v775
      %v936 = vunpack.c.l.b16 %v776
      %v937 = vunpack.c.l.b16 %v777
      %v938 = vunpack.c.h.b16 %v777
      %v939 = vunpack.c.l.b16 %v778
      %v940 = vunpack.c.h.b16 %v778
      %v941 = vunpack.c.l.b16 %v779
      %v942 = vunpack.c.l.b16 %v780
      %v943 = vunpack.c.h.b16 %v780
      %v944 = vunpack.c.l.b16 %v781
      %v945 = vunpack.c.h.b16 %v781
      %v946 = vunpack.c.l.b16 %v782
      %v947 = vunpack.c.l.b16 %v783
      %v948 = vunpack.c.h.b16 %v783
      %v949 = vunpack.c.l.b16 %v784
      %v950 = vunpack.c.h.b16 %v784
      %v951 = vunpack.c.l.b16 %v785
      %v952 = vunpack.c.l.b16 %v786
      %v953 = vunpack.c.h.b16 %v786
      %v954 = vunpack.c.l.b16 %v787
      %v955 = vunpack.c.h.b16 %v787
      %v956 = vunpack.c.l.b16 %v788
      %v957 = vunpack.c.l.b16 %v789
      %v958 = vunpack.c.h.b16 %v789
      %v959 = vunpack.c.l.b16 %v790
      %v960 = vunpack.c.h.b16 %v790
      %v961 = vunpack.c.l.b16 %v791
      %v962 = vunpack.c.l.b16 %v792
      %v963 = vunpack.c.h.b16 %v792
      %v964 = vunpack.c.l.b16 %v793
      %v965 = vunpack.c.h.b16 %v793
      %v966 = vunpack.c.l.b16 %v794
      %v967 = vunpack.c.l.b16 %v795
      %v968 = vunpack.c.h.b16 %v795
      %v969 = vunpack.c.l.b16 %v796
      %v970 = vunpack.c.h.b16 %v796
      %v971 = vunpack.c.l.b16 %v797
      %v972 = vunpack.c.l.b16 %v798
      %v973 = vunpack.c.h.b16 %v798
      %v974 = vunpack.c.l.b16 %v799
      %v975 = vunpack.c.h.b16 %v799
      %v976 = vunpack.c.l.b16 %v800
      %v977 = vunpack.c.l.b16 %v801
      %v978 = vunpack.c.h.b16 %v801
      %v979 = vunpack.c.l.b16 %v802
      %v980 = vunpack.c.h.b16 %v802
      %v981 = vunpack.c.l.b16 %v803
      %v982 = vunpack.c.l.b16 %v804
      %v983 = vunpack.c.h.b16 %v804
      %v984 = vunpack.c.l.b16 %v805
      %v985 = vunpack.c.h.b16 %v805
      %v986 = vunpack.c.l.b16 %v806
      %v987 = vunpack.c.l.b16 %v807
      %v988 = vunpack.c.h.b16 %v807
      %v989 = vunpack.c.l.b16 %v808
      %v990 = vunpack.c.h.b16 %v808
      %v991 = vunpack.c.l.b16 %v809
      %v992 = vunpack.c.l.b16 %v810
      %v993 = vunpack.c.h.b16 %v810
      %v994 = vunpack.c.l.b16 %v811
      %v995 = vunpack.c.h.b16 %v811
      %v996 = vunpack.c.l.b16 %v812
      %v997 = vunpack.c.l.b16 %v813
      %v998 = vunpack.c.h.b16 %v813
      %v999 = vunpack.c.l.b16 %v814
      %v1000 = vunpack.c.h.b16 %v814
      %v1001 = vunpack.c.l.b16 %v815
      %v1002 = vunpack.c.l.b16 %v816
      %v1003 = vunpack.c.h.b16 %v816
      %v1004 = vunpack.c.l.b16 %v817
      %v1005 = vunpack.c.h.b16 %v817
      %v1006 = vunpack.c.l.b16 %v818
      %v1007 = vunpack.c.l.b16 %v819
      %v1008 = vunpack.c.h.b16 %v819
      %v1009 = vunpack.c.l.b16 %v820
      %v1010 = vunpack.c.h.b16 %v820
      %v1011 = vunpack.c.l.b16 %v821
      %v1012 = vunpack.c.l.b16 %v822
      %v1013 = vunpack.c.h.b16 %v822
      %v1014 = vunpack.c.l.b16 %v823
      %v1015 = vunpack.c.h.b16 %v823
      %v1016 = vunpack.c.l.b16 %v824
      %v1017 = vpack.c.b16 %v902, %v897
      %v1018 = vpack.c.b16 %v903, %v898
      %v1019 = vpack.c.b16 %v904, %v899
      %v1020 = vpack.c.b16 %v905, %v900
      %v1021 = vpack.c.b16 %v906, %v901
      %v1022 = vpack.c.b16 %v912, %v907
      %v1023 = vpack.c.b16 %v913, %v908
      %v1024 = vpack.c.b16 %v914, %v909
      %v1025 = vpack.c.b16 %v915, %v910
      %v1026 = vpack.c.b16 %v916, %v911
      %v1027 = vpack.c.b16 %v922, %v917
      %v1028 = vpack.c.b16 %v923, %v918
      %v1029 = vpack.c.b16 %v924, %v919
      %v1030 = vpack.c.b16 %v925, %v920
      %v1031 = vpack.c.b16 %v926, %v921
      %v1032 = vpack.c.b16 %v932, %v927
      %v1033 = vpack.c.b16 %v933, %v928
      %v1034 = vpack.c.b16 %v934, %v929
      %v1035 = vpack.c.b16 %v935, %v930
      %v1036 = vpack.c.b16 %v936, %v931
      %v1037 = vpack.c.b16 %v942, %v937
      %v1038 = vpack.c.b16 %v943, %v938
      %v1039 = vpack.c.b16 %v944, %v939
      %v1040 = vpack.c.b16 %v945, %v940
      %v1041 = vpack.c.b16 %v946, %v941
      %v1042 = vpack.c.b16 %v952, %v947
      %v1043 = vpack.c.b16 %v953, %v948
      %v1044 = vpack.c.b16 %v954, %v949
      %v1045 = vpack.c.b16 %v955, %v950
      %v1046 = vpack.c.b16 %v956, %v951
      %v1047 = vpack.c.b16 %v962, %v957
      %v1048 = vpack.c.b16 %v963, %v958
      %v1049 = vpack.c.b16 %v964, %v959
      %v1050 = vpack.c.b16 %v965, %v960
      %v1051 = vpack.c.b16 %v966, %v961
      %v1052 = vpack.c.b16 %v972, %v967
      %v1053 = vpack.c.b16 %v973, %v968
      %v1054 = vpack.c.b16 %v974, %v969
      %v1055 = vpack.c.b16 %v975, %v970
      %v1056 = vpack.c.b16 %v976, %v971
      %v1057 = vpack.c.b16 %v982, %v977
      %v1058 = vpack.c.b16 %v983, %v978
      %v1059 = vpack.c.b16 %v984, %v979
      %v1060 = vpack.c.b16 %v985, %v980
      %v1061 = vpack.c.b16 %v986, %v981
      %v1062 = vpack.c.b16 %v992, %v987
      %v1063 = vpack.c.b16 %v993, %v988
      %v1064 = vpack.c.b16 %v994, %v989
      %v1065 = vpack.c.b16 %v995, %v990
      %v1066 = vpack.c.b16 %v996, %v991
      %v1067 = vpack.c.b16 %v1002, %v997
      %v1068 = vpack.c.b16 %v1003, %v998
      %v1069 = vpack.c.b16 %v1004, %v999
      %v1070 = vpack.c.b16 %v1005, %v1000
      %v1071 = vpack.c.b16 %v1006, %v1001
      %v1072 = vpack.c.b16 %v1012, %v1007
      %v1073 = vpack.c.b16 %v1013, %v1008
      %v1074 = vpack.c.b16 %v1014, %v1009
      %v1075 = vpack.c.b16 %v1015, %v1010
      %v1076 = vpack.c.b16 %v1016, %v1011
      %1137 = vmatprep.subr.bf16.mxu0 %v1053
      %1138 = vmatpush1.bf16.msra.mxu0 %v1052
      %1139 = vmatprep.subr.bf16.mxu0 %v1048
      %1140 = vmatpush1.bf16.msra.mxu0 %v1047
      %1141 = vmatprep.subr.bf16.mxu0 %v1043
      %1142 = vmatpush1.bf16.msra.mxu0 %v1042
      %1143 = vmatprep.subr.bf16.mxu0 %v1038
      %1144 = vmatpush1.bf16.msra.mxu0 %v1037
      %1145 = vmatprep.subr.bf16.mxu0 %v1033
      %1146 = vmatpush1.bf16.msra.mxu0 %v1032
      %1147 = vmatprep.subr.bf16.mxu0 %v1028
      %1148 = vmatpush1.bf16.msra.mxu0 %v1027
      %1149 = vmatprep.subr.bf16.mxu0 %v1023
      %1150 = vmatpush1.bf16.msra.mxu0 %v1022
      %1151 = vmatprep.subr.bf16.mxu0 %v1018
      %1152 = vmatpush1.bf16.msra.mxu0 %v1017
      %1153 = vmatprep.subr.bf16.mxu0 0
      %1154 = vmatpush2.bf16.msra.mxu0 0
      %1155 = vmatprep.subr.bf16.mxu0 0
      %1156 = vmatpush2.bf16.msra.mxu0 0
      %1157 = vmatprep.subr.bf16.mxu0 0
      %1158 = vmatpush2.bf16.msra.mxu0 0
      %1159 = vmatprep.subr.bf16.mxu0 0
      %1160 = vmatpush2.bf16.msra.mxu0 0
      %1161 = vmatprep.subr.bf16.mxu0 %v1073
      %1162 = vmatpush2.bf16.msra.mxu0 %v1072
      %1163 = vmatprep.subr.bf16.mxu0 %v1068
      %1164 = vmatpush2.bf16.msra.mxu0 %v1067
      %1165 = vmatprep.subr.bf16.mxu0 %v1063
      %1166 = vmatpush2.bf16.msra.mxu0 %v1062
      %1167 = vmatprep.subr.bf16.mxu0 %v1058
      %1168 = vmatpush2.bf16.msra.mxu0 %v1057
      %1169 = vmatprep.mubr.bf16.mxu0 %v592
      %1170 = vmatmul.mubr.bf16.gmra.mxu0 %v272
      %v1171 = vpop.f32.mrf.mxu0
      %v1172 = vadd.f32 0.0, %v1171
      %v1173 = vpop.f32.mrf.mxu0
      %v1174 = vadd.f32 0.0, %v1173
      %v1175 = vpop.f32.mrf.mxu0
      %v1176 = vadd.f32 0.0, %v1175
      %v1177 = vpop.f32.mrf.mxu0
      %v1178 = vadd.f32 0.0, %v1177
      %1179 = vmatprep.mubr.bf16.mxu0 %v595
      %1180 = vmatmul.mubr.bf16.gmra.mxu0 %v274
      %v1181 = vpop.f32.mrf.mxu0
      %v1182 = vadd.f32 0.0, %v1181
      %v1183 = vpop.f32.mrf.mxu0
      %v1184 = vadd.f32 0.0, %v1183
      %v1185 = vpop.f32.mrf.mxu0
      %v1186 = vadd.f32 0.0, %v1185
      %v1187 = vpop.f32.mrf.mxu0
      %v1188 = vadd.f32 0.0, %v1187
      %1189 = vdwg.mxu0
      %1190 = vmatprep.subr.bf16.mxu0 %v1055
      %1191 = vmatpush1.bf16.msra.mxu0 %v1054
      %1192 = vmatprep.subr.bf16.mxu0 %v1050
      %1193 = vmatpush1.bf16.msra.mxu0 %v1049
      %1194 = vmatprep.subr.bf16.mxu0 %v1045
      %1195 = vmatpush1.bf16.msra.mxu0 %v1044
      %1196 = vmatprep.subr.bf16.mxu0 %v1040
      %1197 = vmatpush1.bf16.msra.mxu0 %v1039
      %1198 = vmatprep.subr.bf16.mxu0 %v1035
      %1199 = vmatpush1.bf16.msra.mxu0 %v1034
      %1200 = vmatprep.subr.bf16.mxu0 %v1030
      %1201 = vmatpush1.bf16.msra.mxu0 %v1029
      %1202 = vmatprep.subr.bf16.mxu0 %v1025
      %1203 = vmatpush1.bf16.msra.mxu0 %v1024
      %1204 = vmatprep.subr.bf16.mxu0 %v1020
      %1205 = vmatpush1.bf16.msra.mxu0 %v1019
      %1206 = vmatprep.subr.bf16.mxu0 0
      %1207 = vmatpush2.bf16.msra.mxu0 0
      %1208 = vmatprep.subr.bf16.mxu0 0
      %1209 = vmatpush2.bf16.msra.mxu0 0
      %1210 = vmatprep.subr.bf16.mxu0 0
      %1211 = vmatpush2.bf16.msra.mxu0 0
      %1212 = vmatprep.subr.bf16.mxu0 0
      %1213 = vmatpush2.bf16.msra.mxu0 0
      %1214 = vmatprep.subr.bf16.mxu0 %v1075
      %1215 = vmatpush2.bf16.msra.mxu0 %v1074
      %1216 = vmatprep.subr.bf16.mxu0 %v1070
      %1217 = vmatpush2.bf16.msra.mxu0 %v1069
      %1218 = vmatprep.subr.bf16.mxu0 %v1065
      %1219 = vmatpush2.bf16.msra.mxu0 %v1064
      %1220 = vmatprep.subr.bf16.mxu0 %v1060
      %1221 = vmatpush2.bf16.msra.mxu0 %v1059
      %1222 = vmatprep.mubr.bf16.mxu0 %v592
      %1223 = vmatmul.mubr.bf16.gmra.mxu0 %v272
      %v1224 = vpop.f32.mrf.mxu0
      %v1225 = vadd.f32 0.0, %v1224
      %v1226 = vpop.f32.mrf.mxu0
      %v1227 = vadd.f32 0.0, %v1226
      %v1228 = vpop.f32.mrf.mxu0
      %v1229 = vadd.f32 0.0, %v1228
      %v1230 = vpop.f32.mrf.mxu0
      %v1231 = vadd.f32 0.0, %v1230
      %1232 = vmatprep.mubr.bf16.mxu0 %v595
      %1233 = vmatmul.mubr.bf16.gmra.mxu0 %v274
      %v1234 = vpop.f32.mrf.mxu0
      %v1235 = vadd.f32 0.0, %v1234
      %v1236 = vpop.f32.mrf.mxu0
      %v1237 = vadd.f32 0.0, %v1236
      %v1238 = vpop.f32.mrf.mxu0
      %v1239 = vadd.f32 0.0, %v1238
      %v1240 = vpop.f32.mrf.mxu0
      %v1241 = vadd.f32 0.0, %v1240
      %1242 = vdwg.mxu0
      %1243 = vmatprep.subr.bf16.mxu0 0
      %1244 = vmatpush1.bf16.msra.mxu0 %v1056
      %1245 = vmatprep.subr.bf16.mxu0 0
      %1246 = vmatpush1.bf16.msra.mxu0 %v1051
      %1247 = vmatprep.subr.bf16.mxu0 0
      %1248 = vmatpush1.bf16.msra.mxu0 %v1046
      %1249 = vmatprep.subr.bf16.mxu0 0
      %1250 = vmatpush1.bf16.msra.mxu0 %v1041
      %1251 = vmatprep.subr.bf16.mxu0 0
      %1252 = vmatpush1.bf16.msra.mxu0 %v1036
      %1253 = vmatprep.subr.bf16.mxu0 0
      %1254 = vmatpush1.bf16.msra.mxu0 %v1031
      %1255 = vmatprep.subr.bf16.mxu0 0
      %1256 = vmatpush1.bf16.msra.mxu0 %v1026
      %1257 = vmatprep.subr.bf16.mxu0 0
      %1258 = vmatpush1.bf16.msra.mxu0 %v1021
      %1259 = vmatprep.subr.bf16.mxu0 0
      %1260 = vmatpush2.bf16.msra.mxu0 0
      %1261 = vmatprep.subr.bf16.mxu0 0
      %1262 = vmatpush2.bf16.msra.mxu0 0
      %1263 = vmatprep.subr.bf16.mxu0 0
      %1264 = vmatpush2.bf16.msra.mxu0 0
      %1265 = vmatprep.subr.bf16.mxu0 0
      %1266 = vmatpush2.bf16.msra.mxu0 0
      %1267 = vmatprep.subr.bf16.mxu0 0
      %1268 = vmatpush2.bf16.msra.mxu0 %v1076
      %1269 = vmatprep.subr.bf16.mxu0 0
      %1270 = vmatpush2.bf16.msra.mxu0 %v1071
      %1271 = vmatprep.subr.bf16.mxu0 0
      %1272 = vmatpush2.bf16.msra.mxu0 %v1066
      %1273 = vmatprep.subr.bf16.mxu0 0
      %1274 = vmatpush2.bf16.msra.mxu0 %v1061
      %1275 = vmatprep.mubr.bf16.mxu0 %v592
      %1276 = vmatmul.mubr.bf16.gmra.mxu0 %v272
      %v1277 = vpop.f32.mrf.mxu0
      %v1278 = vadd.f32 0.0, %v1277
      %v1279 = vpop.f32.mrf.mxu0
      %v1280 = vpop.f32.mrf.mxu0
      %v1281 = vadd.f32 0.0, %v1280
      %v1282 = vpop.f32.mrf.mxu0
      %1283 = vmatprep.mubr.bf16.mxu0 %v595
      %1284 = vmatmul.mubr.bf16.gmra.mxu0 %v274
      %v1285 = vpop.f32.mrf.mxu0
      %v1286 = vadd.f32 0.0, %v1285
      %v1287 = vpop.f32.mrf.mxu0
      %v1288 = vpop.f32.mrf.mxu0
      %v1289 = vadd.f32 0.0, %v1288
      %v1290 = vpop.f32.mrf.mxu0
      %1291 = vdwg.mxu0
      %v1292 = vmax.f32 %v632, %v1172
      %v1293 = vmax.f32 %v634, %v1174
      %v1294 = vmax.f32 %v685, %v1225
      %v1295 = vmax.f32 %v687, %v1227
      %v1296 = vmax.f32 %v738, %v1278
      %v1297 = vmax.f32 %v636, %v1176
      %v1298 = vmax.f32 %v638, %v1178
      %v1299 = vmax.f32 %v689, %v1229
      %v1300 = vmax.f32 %v691, %v1231
      %v1301 = vmax.f32 %v741, %v1281
      %v1302 = vmax.f32 %v642, %v1182
      %v1303 = vmax.f32 %v644, %v1184
      %v1304 = vmax.f32 %v695, %v1235
      %v1305 = vmax.f32 %v697, %v1237
      %v1306 = vmax.f32 %v746, %v1286
      %v1307 = vmax.f32 %v646, %v1186
      %v1308 = vmax.f32 %v648, %v1188
      %v1309 = vmax.f32 %v699, %v1239
      %v1310 = vmax.f32 %v701, %v1241
      %v1311 = vmax.f32 %v749, %v1289
      %s1312 = scalar_lea.vmem %s170, 960
      %v1313 = vld [vmem:[%s1312] sm:$0xff]
      %v1314 = vld [vmem:[%s1312 + $0x8] sm:$0xff]
      %v1315 = vld [vmem:[%s1312 + $0x10] sm:$0xf]
      %v1316 = vld [vmem:[%s1312 + $0x14] sm:$0xff]
      %v1317 = vld [vmem:[%s1312 + $0x1c] sm:$0xff]
      %v1318 = vld [vmem:[%s1312 + $0x24] sm:$0xf]
      %v1319 = vld [vmem:[%s1312 + $0x28] sm:$0xff]
      %v1320 = vld [vmem:[%s1312 + $0x30] sm:$0xff]
      %v1321 = vld [vmem:[%s1312 + $0x38] sm:$0xf]
      %v1322 = vld [vmem:[%s1312 + $0x3c] sm:$0xff]
      %v1323 = vld [vmem:[%s1312 + $0x44] sm:$0xff]
      %v1324 = vld [vmem:[%s1312 + $0x4c] sm:$0xf]
      %v1325 = vld [vmem:[%s1312 + $0x50] sm:$0xff]
      %v1326 = vld [vmem:[%s1312 + $0x58] sm:$0xff]
      %v1327 = vld [vmem:[%s1312 + $0x60] sm:$0xf]
      %v1328 = vld [vmem:[%s1312 + $0x64] sm:$0xff]
      %v1329 = vld [vmem:[%s1312 + $0x6c] sm:$0xff]
      %v1330 = vld [vmem:[%s1312 + $0x74] sm:$0xf]
      %v1331 = vld [vmem:[%s1312 + $0x78] sm:$0xff]
      %v1332 = vld [vmem:[%s1312 + $0x80] sm:$0xff]
      %v1333 = vld [vmem:[%s1312 + $0x88] sm:$0xf]
      %v1334 = vld [vmem:[%s1312 + $0x8c] sm:$0xff]
      %v1335 = vld [vmem:[%s1312 + $0x94] sm:$0xff]
      %v1336 = vld [vmem:[%s1312 + $0x9c] sm:$0xf]
      %v1337 = vld [vmem:[%s1312 + $0xa0] sm:$0xff]
      %v1338 = vld [vmem:[%s1312 + $0xa8] sm:$0xff]
      %v1339 = vld [vmem:[%s1312 + $0xb0] sm:$0xf]
      %v1340 = vld [vmem:[%s1312 + $0xb4] sm:$0xff]
      %v1341 = vld [vmem:[%s1312 + $0xbc] sm:$0xff]
      %v1342 = vld [vmem:[%s1312 + $0xc4] sm:$0xf]
      %v1343 = vld [vmem:[%s1312 + $0xc8] sm:$0xff]
      %v1344 = vld [vmem:[%s1312 + $0xd0] sm:$0xff]
      %v1345 = vld [vmem:[%s1312 + $0xd8] sm:$0xf]
      %v1346 = vld [vmem:[%s1312 + $0xdc] sm:$0xff]
      %v1347 = vld [vmem:[%s1312 + $0xe4] sm:$0xff]
      %v1348 = vld [vmem:[%s1312 + $0xec] sm:$0xf]
      %v1349 = vld [vmem:[%s1312 + $0xf0] sm:$0xff]
      %v1350 = vld [vmem:[%s1312 + $0xf8] sm:$0xff]
      %v1351 = vld [vmem:[%s1312 + $0x100] sm:$0xf]
      %v1352 = vld [vmem:[%s1312 + $0x104] sm:$0xff]
      %v1353 = vld [vmem:[%s1312 + $0x10c] sm:$0xff]
      %v1354 = vld [vmem:[%s1312 + $0x114] sm:$0xf]
      %v1355 = vld [vmem:[%s1312 + $0x118] sm:$0xff]
      %v1356 = vld [vmem:[%s1312 + $0x120] sm:$0xff]
      %v1357 = vld [vmem:[%s1312 + $0x128] sm:$0xf]
      %v1358 = vld [vmem:[%s1312 + $0x12c] sm:$0xff]
      %v1359 = vld [vmem:[%s1312 + $0x134] sm:$0xff]
      %v1360 = vld [vmem:[%s1312 + $0x13c] sm:$0xf]
      %v1361 = vld [vmem:[%s1312 + $0x140] sm:$0xff]
      %v1362 = vld [vmem:[%s1312 + $0x148] sm:$0xff]
      %v1363 = vld [vmem:[%s1312 + $0x150] sm:$0xf]
      %v1364 = vld [vmem:[%s1312 + $0x154] sm:$0xff]
      %v1365 = vld [vmem:[%s1312 + $0x15c] sm:$0xff]
      %v1366 = vld [vmem:[%s1312 + $0x164] sm:$0xf]
      %v1367 = vld [vmem:[%s1312 + $0x168] sm:$0xff]
      %v1368 = vld [vmem:[%s1312 + $0x170] sm:$0xff]
      %v1369 = vld [vmem:[%s1312 + $0x178] sm:$0xf]
      %v1370 = vld [vmem:[%s1312 + $0x17c] sm:$0xff]
      %v1371 = vld [vmem:[%s1312 + $0x184] sm:$0xff]
      %v1372 = vld [vmem:[%s1312 + $0x18c] sm:$0xf]
      %v1373 = vld [vmem:[%s1312 + $0x190] sm:$0xff]
      %v1374 = vld [vmem:[%s1312 + $0x198] sm:$0xff]
      %v1375 = vld [vmem:[%s1312 + $0x1a0] sm:$0xf]
      %v1376 = vld [vmem:[%s1312 + $0x1a4] sm:$0xff]
      %v1377 = vld [vmem:[%s1312 + $0x1ac] sm:$0xff]
      %v1378 = vld [vmem:[%s1312 + $0x1b4] sm:$0xf]
      %v1379 = vld [vmem:[%s1312 + $0x1b8] sm:$0xff]
      %v1380 = vld [vmem:[%s1312 + $0x1c0] sm:$0xff]
      %v1381 = vld [vmem:[%s1312 + $0x1c8] sm:$0xf]
      %v1382 = vld [vmem:[%s1312 + $0x1cc] sm:$0xff]
      %v1383 = vld [vmem:[%s1312 + $0x1d4] sm:$0xff]
      %v1384 = vld [vmem:[%s1312 + $0x1dc] sm:$0xf]
      %v1457 = vunpack.c.l.b16 %v1313
      %v1458 = vunpack.c.h.b16 %v1313
      %v1459 = vunpack.c.l.b16 %v1314
      %v1460 = vunpack.c.h.b16 %v1314
      %v1461 = vunpack.c.l.b16 %v1315
      %v1462 = vunpack.c.l.b16 %v1316
      %v1463 = vunpack.c.h.b16 %v1316
      %v1464 = vunpack.c.l.b16 %v1317
      %v1465 = vunpack.c.h.b16 %v1317
      %v1466 = vunpack.c.l.b16 %v1318
      %v1467 = vunpack.c.l.b16 %v1319
      %v1468 = vunpack.c.h.b16 %v1319
      %v1469 = vunpack.c.l.b16 %v1320
      %v1470 = vunpack.c.h.b16 %v1320
      %v1471 = vunpack.c.l.b16 %v1321
      %v1472 = vunpack.c.l.b16 %v1322
      %v1473 = vunpack.c.h.b16 %v1322
      %v1474 = vunpack.c.l.b16 %v1323
      %v1475 = vunpack.c.h.b16 %v1323
      %v1476 = vunpack.c.l.b16 %v1324
      %v1477 = vunpack.c.l.b16 %v1325
      %v1478 = vunpack.c.h.b16 %v1325
      %v1479 = vunpack.c.l.b16 %v1326
      %v1480 = vunpack.c.h.b16 %v1326
      %v1481 = vunpack.c.l.b16 %v1327
      %v1482 = vunpack.c.l.b16 %v1328
      %v1483 = vunpack.c.h.b16 %v1328
      %v1484 = vunpack.c.l.b16 %v1329
      %v1485 = vunpack.c.h.b16 %v1329
      %v1486 = vunpack.c.l.b16 %v1330
      %v1487 = vunpack.c.l.b16 %v1331
      %v1488 = vunpack.c.h.b16 %v1331
      %v1489 = vunpack.c.l.b16 %v1332
      %v1490 = vunpack.c.h.b16 %v1332
      %v1491 = vunpack.c.l.b16 %v1333
      %v1492 = vunpack.c.l.b16 %v1334
      %v1493 = vunpack.c.h.b16 %v1334
      %v1494 = vunpack.c.l.b16 %v1335
      %v1495 = vunpack.c.h.b16 %v1335
      %v1496 = vunpack.c.l.b16 %v1336
      %v1497 = vunpack.c.l.b16 %v1337
      %v1498 = vunpack.c.h.b16 %v1337
      %v1499 = vunpack.c.l.b16 %v1338
      %v1500 = vunpack.c.h.b16 %v1338
      %v1501 = vunpack.c.l.b16 %v1339
      %v1502 = vunpack.c.l.b16 %v1340
      %v1503 = vunpack.c.h.b16 %v1340
      %v1504 = vunpack.c.l.b16 %v1341
      %v1505 = vunpack.c.h.b16 %v1341
      %v1506 = vunpack.c.l.b16 %v1342
      %v1507 = vunpack.c.l.b16 %v1343
      %v1508 = vunpack.c.h.b16 %v1343
      %v1509 = vunpack.c.l.b16 %v1344
      %v1510 = vunpack.c.h.b16 %v1344
      %v1511 = vunpack.c.l.b16 %v1345
      %v1512 = vunpack.c.l.b16 %v1346
      %v1513 = vunpack.c.h.b16 %v1346
      %v1514 = vunpack.c.l.b16 %v1347
      %v1515 = vunpack.c.h.b16 %v1347
      %v1516 = vunpack.c.l.b16 %v1348
      %v1517 = vunpack.c.l.b16 %v1349
      %v1518 = vunpack.c.h.b16 %v1349
      %v1519 = vunpack.c.l.b16 %v1350
      %v1520 = vunpack.c.h.b16 %v1350
      %v1521 = vunpack.c.l.b16 %v1351
      %v1522 = vunpack.c.l.b16 %v1352
      %v1523 = vunpack.c.h.b16 %v1352
      %v1524 = vunpack.c.l.b16 %v1353
      %v1525 = vunpack.c.h.b16 %v1353
      %v1526 = vunpack.c.l.b16 %v1354
      %v1527 = vunpack.c.l.b16 %v1355
      %v1528 = vunpack.c.h.b16 %v1355
      %v1529 = vunpack.c.l.b16 %v1356
      %v1530 = vunpack.c.h.b16 %v1356
      %v1531 = vunpack.c.l.b16 %v1357
      %v1532 = vunpack.c.l.b16 %v1358
      %v1533 = vunpack.c.h.b16 %v1358
      %v1534 = vunpack.c.l.b16 %v1359
      %v1535 = vunpack.c.h.b16 %v1359
      %v1536 = vunpack.c.l.b16 %v1360
      %v1537 = vunpack.c.l.b16 %v1361
      %v1538 = vunpack.c.h.b16 %v1361
      %v1539 = vunpack.c.l.b16 %v1362
      %v1540 = vunpack.c.h.b16 %v1362
      %v1541 = vunpack.c.l.b16 %v1363
      %v1542 = vunpack.c.l.b16 %v1364
      %v1543 = vunpack.c.h.b16 %v1364
      %v1544 = vunpack.c.l.b16 %v1365
      %v1545 = vunpack.c.h.b16 %v1365
      %v1546 = vunpack.c.l.b16 %v1366
      %v1547 = vunpack.c.l.b16 %v1367
      %v1548 = vunpack.c.h.b16 %v1367
      %v1549 = vunpack.c.l.b16 %v1368
      %v1550 = vunpack.c.h.b16 %v1368
      %v1551 = vunpack.c.l.b16 %v1369
      %v1552 = vunpack.c.l.b16 %v1370
      %v1553 = vunpack.c.h.b16 %v1370
      %v1554 = vunpack.c.l.b16 %v1371
      %v1555 = vunpack.c.h.b16 %v1371
      %v1556 = vunpack.c.l.b16 %v1372
      %v1557 = vunpack.c.l.b16 %v1373
      %v1558 = vunpack.c.h.b16 %v1373
      %v1559 = vunpack.c.l.b16 %v1374
      %v1560 = vunpack.c.h.b16 %v1374
      %v1561 = vunpack.c.l.b16 %v1375
      %v1562 = vunpack.c.l.b16 %v1376
      %v1563 = vunpack.c.h.b16 %v1376
      %v1564 = vunpack.c.l.b16 %v1377
      %v1565 = vunpack.c.h.b16 %v1377
      %v1566 = vunpack.c.l.b16 %v1378
      %v1567 = vunpack.c.l.b16 %v1379
      %v1568 = vunpack.c.h.b16 %v1379
      %v1569 = vunpack.c.l.b16 %v1380
      %v1570 = vunpack.c.h.b16 %v1380
      %v1571 = vunpack.c.l.b16 %v1381
      %v1572 = vunpack.c.l.b16 %v1382
      %v1573 = vunpack.c.h.b16 %v1382
      %v1574 = vunpack.c.l.b16 %v1383
      %v1575 = vunpack.c.h.b16 %v1383
      %v1576 = vunpack.c.l.b16 %v1384
      %v1577 = vpack.c.b16 %v1462, %v1457
      %v1578 = vpack.c.b16 %v1463, %v1458
      %v1579 = vpack.c.b16 %v1464, %v1459
      %v1580 = vpack.c.b16 %v1465, %v1460
      %v1581 = vpack.c.b16 %v1466, %v1461
      %v1582 = vpack.c.b16 %v1472, %v1467
      %v1583 = vpack.c.b16 %v1473, %v1468
      %v1584 = vpack.c.b16 %v1474, %v1469
      %v1585 = vpack.c.b16 %v1475, %v1470
      %v1586 = vpack.c.b16 %v1476, %v1471
      %v1587 = vpack.c.b16 %v1482, %v1477
      %v1588 = vpack.c.b16 %v1483, %v1478
      %v1589 = vpack.c.b16 %v1484, %v1479
      %v1590 = vpack.c.b16 %v1485, %v1480
      %v1591 = vpack.c.b16 %v1486, %v1481
      %v1592 = vpack.c.b16 %v1492, %v1487
      %v1593 = vpack.c.b16 %v1493, %v1488
      %v1594 = vpack.c.b16 %v1494, %v1489
      %v1595 = vpack.c.b16 %v1495, %v1490
      %v1596 = vpack.c.b16 %v1496, %v1491
      %v1597 = vpack.c.b16 %v1502, %v1497
      %v1598 = vpack.c.b16 %v1503, %v1498
      %v1599 = vpack.c.b16 %v1504, %v1499
      %v1600 = vpack.c.b16 %v1505, %v1500
      %v1601 = vpack.c.b16 %v1506, %v1501
      %v1602 = vpack.c.b16 %v1512, %v1507
      %v1603 = vpack.c.b16 %v1513, %v1508
      %v1604 = vpack.c.b16 %v1514, %v1509
      %v1605 = vpack.c.b16 %v1515, %v1510
      %v1606 = vpack.c.b16 %v1516, %v1511
      %v1607 = vpack.c.b16 %v1522, %v1517
      %v1608 = vpack.c.b16 %v1523, %v1518
      %v1609 = vpack.c.b16 %v1524, %v1519
      %v1610 = vpack.c.b16 %v1525, %v1520
      %v1611 = vpack.c.b16 %v1526, %v1521
      %v1612 = vpack.c.b16 %v1532, %v1527
      %v1613 = vpack.c.b16 %v1533, %v1528
      %v1614 = vpack.c.b16 %v1534, %v1529
      %v1615 = vpack.c.b16 %v1535, %v1530
      %v1616 = vpack.c.b16 %v1536, %v1531
      %v1617 = vpack.c.b16 %v1542, %v1537
      %v1618 = vpack.c.b16 %v1543, %v1538
      %v1619 = vpack.c.b16 %v1544, %v1539
      %v1620 = vpack.c.b16 %v1545, %v1540
      %v1621 = vpack.c.b16 %v1546, %v1541
      %v1622 = vpack.c.b16 %v1552, %v1547
      %v1623 = vpack.c.b16 %v1553, %v1548
      %v1624 = vpack.c.b16 %v1554, %v1549
      %v1625 = vpack.c.b16 %v1555, %v1550
      %v1626 = vpack.c.b16 %v1556, %v1551
      %v1627 = vpack.c.b16 %v1562, %v1557
      %v1628 = vpack.c.b16 %v1563, %v1558
      %v1629 = vpack.c.b16 %v1564, %v1559
      %v1630 = vpack.c.b16 %v1565, %v1560
      %v1631 = vpack.c.b16 %v1566, %v1561
      %v1632 = vpack.c.b16 %v1572, %v1567
      %v1633 = vpack.c.b16 %v1573, %v1568
      %v1634 = vpack.c.b16 %v1574, %v1569
      %v1635 = vpack.c.b16 %v1575, %v1570
      %v1636 = vpack.c.b16 %v1576, %v1571
      %1697 = vmatprep.subr.bf16.mxu0 %v1613
      %1698 = vmatpush1.bf16.msra.mxu0 %v1612
      %1699 = vmatprep.subr.bf16.mxu0 %v1608
      %1700 = vmatpush1.bf16.msra.mxu0 %v1607
      %1701 = vmatprep.subr.bf16.mxu0 %v1603
      %1702 = vmatpush1.bf16.msra.mxu0 %v1602
      %1703 = vmatprep.subr.bf16.mxu0 %v1598
      %1704 = vmatpush1.bf16.msra.mxu0 %v1597
      %1705 = vmatprep.subr.bf16.mxu0 %v1593
      %1706 = vmatpush1.bf16.msra.mxu0 %v1592
      %1707 = vmatprep.subr.bf16.mxu0 %v1588
      %1708 = vmatpush1.bf16.msra.mxu0 %v1587
      %1709 = vmatprep.subr.bf16.mxu0 %v1583
      %1710 = vmatpush1.bf16.msra.mxu0 %v1582
      %1711 = vmatprep.subr.bf16.mxu0 %v1578
      %1712 = vmatpush1.bf16.msra.mxu0 %v1577
      %1713 = vmatprep.subr.bf16.mxu0 0
      %1714 = vmatpush2.bf16.msra.mxu0 0
      %1715 = vmatprep.subr.bf16.mxu0 0
      %1716 = vmatpush2.bf16.msra.mxu0 0
      %1717 = vmatprep.subr.bf16.mxu0 0
      %1718 = vmatpush2.bf16.msra.mxu0 0
      %1719 = vmatprep.subr.bf16.mxu0 0
      %1720 = vmatpush2.bf16.msra.mxu0 0
      %1721 = vmatprep.subr.bf16.mxu0 %v1633
      %1722 = vmatpush2.bf16.msra.mxu0 %v1632
      %1723 = vmatprep.subr.bf16.mxu0 %v1628
      %1724 = vmatpush2.bf16.msra.mxu0 %v1627
      %1725 = vmatprep.subr.bf16.mxu0 %v1623
      %1726 = vmatpush2.bf16.msra.mxu0 %v1622
      %1727 = vmatprep.subr.bf16.mxu0 %v1618
      %1728 = vmatpush2.bf16.msra.mxu0 %v1617
      %1729 = vmatprep.mubr.bf16.mxu0 %v592
      %1730 = vmatmul.mubr.bf16.gmra.mxu0 %v272
      %v1731 = vpop.f32.mrf.mxu0
      %v1732 = vadd.f32 0.0, %v1731
      %v1733 = vpop.f32.mrf.mxu0
      %v1734 = vadd.f32 0.0, %v1733
      %v1735 = vpop.f32.mrf.mxu0
      %v1736 = vadd.f32 0.0, %v1735
      %v1737 = vpop.f32.mrf.mxu0
      %v1738 = vadd.f32 0.0, %v1737
      %1739 = vmatprep.mubr.bf16.mxu0 %v595
      %1740 = vmatmul.mubr.bf16.gmra.mxu0 %v274
      %v1741 = vpop.f32.mrf.mxu0
      %v1742 = vadd.f32 0.0, %v1741
      %v1743 = vpop.f32.mrf.mxu0
      %v1744 = vadd.f32 0.0, %v1743
      %v1745 = vpop.f32.mrf.mxu0
      %v1746 = vadd.f32 0.0, %v1745
      %v1747 = vpop.f32.mrf.mxu0
      %v1748 = vadd.f32 0.0, %v1747
      %1749 = vdwg.mxu0
      %1750 = vmatprep.subr.bf16.mxu0 %v1615
      %1751 = vmatpush1.bf16.msra.mxu0 %v1614
      %1752 = vmatprep.subr.bf16.mxu0 %v1610
      %1753 = vmatpush1.bf16.msra.mxu0 %v1609
      %1754 = vmatprep.subr.bf16.mxu0 %v1605
      %1755 = vmatpush1.bf16.msra.mxu0 %v1604
      %1756 = vmatprep.subr.bf16.mxu0 %v1600
      %1757 = vmatpush1.bf16.msra.mxu0 %v1599
      %1758 = vmatprep.subr.bf16.mxu0 %v1595
      %1759 = vmatpush1.bf16.msra.mxu0 %v1594
      %1760 = vmatprep.subr.bf16.mxu0 %v1590
      %1761 = vmatpush1.bf16.msra.mxu0 %v1589
      %1762 = vmatprep.subr.bf16.mxu0 %v1585
      %1763 = vmatpush1.bf16.msra.mxu0 %v1584
      %1764 = vmatprep.subr.bf16.mxu0 %v1580
      %1765 = vmatpush1.bf16.msra.mxu0 %v1579
      %1766 = vmatprep.subr.bf16.mxu0 0
      %1767 = vmatpush2.bf16.msra.mxu0 0
      %1768 = vmatprep.subr.bf16.mxu0 0
      %1769 = vmatpush2.bf16.msra.mxu0 0
      %1770 = vmatprep.subr.bf16.mxu0 0
      %1771 = vmatpush2.bf16.msra.mxu0 0
      %1772 = vmatprep.subr.bf16.mxu0 0
      %1773 = vmatpush2.bf16.msra.mxu0 0
      %1774 = vmatprep.subr.bf16.mxu0 %v1635
      %1775 = vmatpush2.bf16.msra.mxu0 %v1634
      %1776 = vmatprep.subr.bf16.mxu0 %v1630
      %1777 = vmatpush2.bf16.msra.mxu0 %v1629
      %1778 = vmatprep.subr.bf16.mxu0 %v1625
      %1779 = vmatpush2.bf16.msra.mxu0 %v1624
      %1780 = vmatprep.subr.bf16.mxu0 %v1620
      %1781 = vmatpush2.bf16.msra.mxu0 %v1619
      %1782 = vmatprep.mubr.bf16.mxu0 %v592
      %1783 = vmatmul.mubr.bf16.gmra.mxu0 %v272
      %v1784 = vpop.f32.mrf.mxu0
      %v1785 = vadd.f32 0.0, %v1784
      %v1786 = vpop.f32.mrf.mxu0
      %v1787 = vadd.f32 0.0, %v1786
      %v1788 = vpop.f32.mrf.mxu0
      %v1789 = vadd.f32 0.0, %v1788
      %v1790 = vpop.f32.mrf.mxu0
      %v1791 = vadd.f32 0.0, %v1790
      %1792 = vmatprep.mubr.bf16.mxu0 %v595
      %1793 = vmatmul.mubr.bf16.gmra.mxu0 %v274
      %v1794 = vpop.f32.mrf.mxu0
      %v1795 = vadd.f32 0.0, %v1794
      %v1796 = vpop.f32.mrf.mxu0
      %v1797 = vadd.f32 0.0, %v1796
      %v1798 = vpop.f32.mrf.mxu0
      %v1799 = vadd.f32 0.0, %v1798
      %v1800 = vpop.f32.mrf.mxu0
      %v1801 = vadd.f32 0.0, %v1800
      %1802 = vdwg.mxu0
      %1803 = vmatprep.subr.bf16.mxu0 0
      %1804 = vmatpush1.bf16.msra.mxu0 %v1616
      %1805 = vmatprep.subr.bf16.mxu0 0
      %1806 = vmatpush1.bf16.msra.mxu0 %v1611
      %1807 = vmatprep.subr.bf16.mxu0 0
      %1808 = vmatpush1.bf16.msra.mxu0 %v1606
      %1809 = vmatprep.subr.bf16.mxu0 0
      %1810 = vmatpush1.bf16.msra.mxu0 %v1601
      %1811 = vmatprep.subr.bf16.mxu0 0
      %1812 = vmatpush1.bf16.msra.mxu0 %v1596
      %1813 = vmatprep.subr.bf16.mxu0 0
      %1814 = vmatpush1.bf16.msra.mxu0 %v1591
      %1815 = vmatprep.subr.bf16.mxu0 0
      %1816 = vmatpush1.bf16.msra.mxu0 %v1586
      %1817 = vmatprep.subr.bf16.mxu0 0
      %1818 = vmatpush1.bf16.msra.mxu0 %v1581
      %1819 = vmatprep.subr.bf16.mxu0 0
      %1820 = vmatpush2.bf16.msra.mxu0 0
      %1821 = vmatprep.subr.bf16.mxu0 0
      %1822 = vmatpush2.bf16.msra.mxu0 0
      %1823 = vmatprep.subr.bf16.mxu0 0
      %1824 = vmatpush2.bf16.msra.mxu0 0
      %1825 = vmatprep.subr.bf16.mxu0 0
      %1826 = vmatpush2.bf16.msra.mxu0 0
      %1827 = vmatprep.subr.bf16.mxu0 0
      %1828 = vmatpush2.bf16.msra.mxu0 %v1636
      %1829 = vmatprep.subr.bf16.mxu0 0
      %1830 = vmatpush2.bf16.msra.mxu0 %v1631
      %1831 = vmatprep.subr.bf16.mxu0 0
      %1832 = vmatpush2.bf16.msra.mxu0 %v1626
      %1833 = vmatprep.subr.bf16.mxu0 0
      %1834 = vmatpush2.bf16.msra.mxu0 %v1621
      %1835 = vmatprep.mubr.bf16.mxu0 %v592
      %1836 = vmatmul.mubr.bf16.gmra.mxu0 %v272
      %v1837 = vpop.f32.mrf.mxu0
      %v1838 = vadd.f32 0.0, %v1837
      %v1839 = vpop.f32.mrf.mxu0
      %v1840 = vpop.f32.mrf.mxu0
      %v1841 = vadd.f32 0.0, %v1840
      %v1842 = vpop.f32.mrf.mxu0
      %1843 = vmatprep.mubr.bf16.mxu0 %v595
      %1844 = vmatmul.mubr.bf16.gmra.mxu0 %v274
      %v1845 = vpop.f32.mrf.mxu0
      %v1846 = vadd.f32 0.0, %v1845
      %v1847 = vpop.f32.mrf.mxu0
      %v1848 = vpop.f32.mrf.mxu0
      %v1849 = vadd.f32 0.0, %v1848
      %v1850 = vpop.f32.mrf.mxu0
      %1851 = vdwg.mxu0
      %v1852 = vmax.f32 %v1292, %v1732
      %v1853 = vmax.f32 %v1293, %v1734
      %v1854 = vmax.f32 %v1294, %v1785
      %v1855 = vmax.f32 %v1295, %v1787
      %v1856 = vmax.f32 %v1296, %v1838
      %v1857 = vmax.f32 %v1297, %v1736
      %v1858 = vmax.f32 %v1298, %v1738
      %v1859 = vmax.f32 %v1299, %v1789
      %v1860 = vmax.f32 %v1300, %v1791
      %v1861 = vmax.f32 %v1301, %v1841
      %v1862 = vmax.f32 %v1302, %v1742
      %v1863 = vmax.f32 %v1303, %v1744
      %v1864 = vmax.f32 %v1304, %v1795
      %v1865 = vmax.f32 %v1305, %v1797
      %v1866 = vmax.f32 %v1306, %v1846
      %v1867 = vmax.f32 %v1307, %v1746
      %v1868 = vmax.f32 %v1308, %v1748
      %v1869 = vmax.f32 %v1309, %v1799
      %v1870 = vmax.f32 %v1310, %v1801
      %v1871 = vmax.f32 %v1311, %v1849
      %s1872 = scalar_lea.vmem %s170, 1440
      %v1873 = vld [vmem:[%s1872] sm:$0xff]
      %v1874 = vld [vmem:[%s1872 + $0x8] sm:$0xff]
      %v1875 = vld [vmem:[%s1872 + $0x10] sm:$0xf]
      %v1876 = vld [vmem:[%s1872 + $0x14] sm:$0xff]
      %v1877 = vld [vmem:[%s1872 + $0x1c] sm:$0xff]
      %v1878 = vld [vmem:[%s1872 + $0x24] sm:$0xf]
      %v1879 = vld [vmem:[%s1872 + $0x28] sm:$0xff]
      %v1880 = vld [vmem:[%s1872 + $0x30] sm:$0xff]
      %v1881 = vld [vmem:[%s1872 + $0x38] sm:$0xf]
      %v1882 = vld [vmem:[%s1872 + $0x3c] sm:$0xff]
      %v1883 = vld [vmem:[%s1872 + $0x44] sm:$0xff]
      %v1884 = vld [vmem:[%s1872 + $0x4c] sm:$0xf]
      %v1885 = vld [vmem:[%s1872 + $0x50] sm:$0xff]
      %v1886 = vld [vmem:[%s1872 + $0x58] sm:$0xff]
      %v1887 = vld [vmem:[%s1872 + $0x60] sm:$0xf]
      %v1888 = vld [vmem:[%s1872 + $0x64] sm:$0xff]
      %v1889 = vld [vmem:[%s1872 + $0x6c] sm:$0xff]
      %v1890 = vld [vmem:[%s1872 + $0x74] sm:$0xf]
      %v1891 = vld [vmem:[%s1872 + $0x78] sm:$0xff]
      %v1892 = vld [vmem:[%s1872 + $0x80] sm:$0xff]
      %v1893 = vld [vmem:[%s1872 + $0x88] sm:$0xf]
      %v1894 = vld [vmem:[%s1872 + $0x8c] sm:$0xff]
      %v1895 = vld [vmem:[%s1872 + $0x94] sm:$0xff]
      %v1896 = vld [vmem:[%s1872 + $0x9c] sm:$0xf]
      %v1897 = vld [vmem:[%s1872 + $0xa0] sm:$0xff]
      %v1898 = vld [vmem:[%s1872 + $0xa8] sm:$0xff]
      %v1899 = vld [vmem:[%s1872 + $0xb0] sm:$0xf]
      %v1900 = vld [vmem:[%s1872 + $0xb4] sm:$0xff]
      %v1901 = vld [vmem:[%s1872 + $0xbc] sm:$0xff]
      %v1902 = vld [vmem:[%s1872 + $0xc4] sm:$0xf]
      %v1903 = vld [vmem:[%s1872 + $0xc8] sm:$0xff]
      %v1904 = vld [vmem:[%s1872 + $0xd0] sm:$0xff]
      %v1905 = vld [vmem:[%s1872 + $0xd8] sm:$0xf]
      %v1906 = vld [vmem:[%s1872 + $0xdc] sm:$0xff]
      %v1907 = vld [vmem:[%s1872 + $0xe4] sm:$0xff]
      %v1908 = vld [vmem:[%s1872 + $0xec] sm:$0xf]
      %v1909 = vld [vmem:[%s1872 + $0xf0] sm:$0xff]
      %v1910 = vld [vmem:[%s1872 + $0xf8] sm:$0xff]
      %v1911 = vld [vmem:[%s1872 + $0x100] sm:$0xf]
      %v1912 = vld [vmem:[%s1872 + $0x104] sm:$0xff]
      %v1913 = vld [vmem:[%s1872 + $0x10c] sm:$0xff]
      %v1914 = vld [vmem:[%s1872 + $0x114] sm:$0xf]
      %v1915 = vld [vmem:[%s1872 + $0x118] sm:$0xff]
      %v1916 = vld [vmem:[%s1872 + $0x120] sm:$0xff]
      %v1917 = vld [vmem:[%s1872 + $0x128] sm:$0xf]
      %v1918 = vld [vmem:[%s1872 + $0x12c] sm:$0xff]
      %v1919 = vld [vmem:[%s1872 + $0x134] sm:$0xff]
      %v1920 = vld [vmem:[%s1872 + $0x13c] sm:$0xf]
      %v1921 = vld [vmem:[%s1872 + $0x140] sm:$0xff]
      %v1922 = vld [vmem:[%s1872 + $0x148] sm:$0xff]
      %v1923 = vld [vmem:[%s1872 + $0x150] sm:$0xf]
      %v1924 = vld [vmem:[%s1872 + $0x154] sm:$0xff]
      %v1925 = vld [vmem:[%s1872 + $0x15c] sm:$0xff]
      %v1926 = vld [vmem:[%s1872 + $0x164] sm:$0xf]
      %v1927 = vld [vmem:[%s1872 + $0x168] sm:$0xff]
      %v1928 = vld [vmem:[%s1872 + $0x170] sm:$0xff]
      %v1929 = vld [vmem:[%s1872 + $0x178] sm:$0xf]
      %v1930 = vld [vmem:[%s1872 + $0x17c] sm:$0xff]
      %v1931 = vld [vmem:[%s1872 + $0x184] sm:$0xff]
      %v1932 = vld [vmem:[%s1872 + $0x18c] sm:$0xf]
      %v1933 = vld [vmem:[%s1872 + $0x190] sm:$0xff]
      %v1934 = vld [vmem:[%s1872 + $0x198] sm:$0xff]
      %v1935 = vld [vmem:[%s1872 + $0x1a0] sm:$0xf]
      %v1936 = vld [vmem:[%s1872 + $0x1a4] sm:$0xff]
      %v1937 = vld [vmem:[%s1872 + $0x1ac] sm:$0xff]
      %v1938 = vld [vmem:[%s1872 + $0x1b4] sm:$0xf]
      %v1939 = vld [vmem:[%s1872 + $0x1b8] sm:$0xff]
      %v1940 = vld [vmem:[%s1872 + $0x1c0] sm:$0xff]
      %v1941 = vld [vmem:[%s1872 + $0x1c8] sm:$0xf]
      %v1942 = vld [vmem:[%s1872 + $0x1cc] sm:$0xff]
      %v1943 = vld [vmem:[%s1872 + $0x1d4] sm:$0xff]
      %v1944 = vld [vmem:[%s1872 + $0x1dc] sm:$0xf]
      %v2017 = vunpack.c.l.b16 %v1873
      %v2018 = vunpack.c.h.b16 %v1873
      %v2019 = vunpack.c.l.b16 %v1874
      %v2020 = vunpack.c.h.b16 %v1874
      %v2021 = vunpack.c.l.b16 %v1875
      %v2022 = vunpack.c.l.b16 %v1876
      %v2023 = vunpack.c.h.b16 %v1876
      %v2024 = vunpack.c.l.b16 %v1877
      %v2025 = vunpack.c.h.b16 %v1877
      %v2026 = vunpack.c.l.b16 %v1878
      %v2027 = vunpack.c.l.b16 %v1879
      %v2028 = vunpack.c.h.b16 %v1879
      %v2029 = vunpack.c.l.b16 %v1880
      %v2030 = vunpack.c.h.b16 %v1880
      %v2031 = vunpack.c.l.b16 %v1881
      %v2032 = vunpack.c.l.b16 %v1882
      %v2033 = vunpack.c.h.b16 %v1882
      %v2034 = vunpack.c.l.b16 %v1883
      %v2035 = vunpack.c.h.b16 %v1883
      %v2036 = vunpack.c.l.b16 %v1884
      %v2037 = vunpack.c.l.b16 %v1885
      %v2038 = vunpack.c.h.b16 %v1885
      %v2039 = vunpack.c.l.b16 %v1886
      %v2040 = vunpack.c.h.b16 %v1886
      %v2041 = vunpack.c.l.b16 %v1887
      %v2042 = vunpack.c.l.b16 %v1888
      %v2043 = vunpack.c.h.b16 %v1888
      %v2044 = vunpack.c.l.b16 %v1889
      %v2045 = vunpack.c.h.b16 %v1889
      %v2046 = vunpack.c.l.b16 %v1890
      %v2047 = vunpack.c.l.b16 %v1891
      %v2048 = vunpack.c.h.b16 %v1891
      %v2049 = vunpack.c.l.b16 %v1892
      %v2050 = vunpack.c.h.b16 %v1892
      %v2051 = vunpack.c.l.b16 %v1893
      %v2052 = vunpack.c.l.b16 %v1894
      %v2053 = vunpack.c.h.b16 %v1894
      %v2054 = vunpack.c.l.b16 %v1895
      %v2055 = vunpack.c.h.b16 %v1895
      %v2056 = vunpack.c.l.b16 %v1896
      %v2057 = vunpack.c.l.b16 %v1897
      %v2058 = vunpack.c.h.b16 %v1897
      %v2059 = vunpack.c.l.b16 %v1898
      %v2060 = vunpack.c.h.b16 %v1898
      %v2061 = vunpack.c.l.b16 %v1899
      %v2062 = vunpack.c.l.b16 %v1900
      %v2063 = vunpack.c.h.b16 %v1900
      %v2064 = vunpack.c.l.b16 %v1901
      %v2065 = vunpack.c.h.b16 %v1901
      %v2066 = vunpack.c.l.b16 %v1902
      %v2067 = vunpack.c.l.b16 %v1903
      %v2068 = vunpack.c.h.b16 %v1903
      %v2069 = vunpack.c.l.b16 %v1904
      %v2070 = vunpack.c.h.b16 %v1904
      %v2071 = vunpack.c.l.b16 %v1905
      %v2072 = vunpack.c.l.b16 %v1906
      %v2073 = vunpack.c.h.b16 %v1906
      %v2074 = vunpack.c.l.b16 %v1907
      %v2075 = vunpack.c.h.b16 %v1907
      %v2076 = vunpack.c.l.b16 %v1908
      %v2077 = vunpack.c.l.b16 %v1909
      %v2078 = vunpack.c.h.b16 %v1909
      %v2079 = vunpack.c.l.b16 %v1910
      %v2080 = vunpack.c.h.b16 %v1910
      %v2081 = vunpack.c.l.b16 %v1911
      %v2082 = vunpack.c.l.b16 %v1912
      %v2083 = vunpack.c.h.b16 %v1912
      %v2084 = vunpack.c.l.b16 %v1913
      %v2085 = vunpack.c.h.b16 %v1913
      %v2086 = vunpack.c.l.b16 %v1914
      %v2087 = vunpack.c.l.b16 %v1915
      %v2088 = vunpack.c.h.b16 %v1915
      %v2089 = vunpack.c.l.b16 %v1916
      %v2090 = vunpack.c.h.b16 %v1916
      %v2091 = vunpack.c.l.b16 %v1917
      %v2092 = vunpack.c.l.b16 %v1918
      %v2093 = vunpack.c.h.b16 %v1918
      %v2094 = vunpack.c.l.b16 %v1919
      %v2095 = vunpack.c.h.b16 %v1919
      %v2096 = vunpack.c.l.b16 %v1920
      %v2097 = vunpack.c.l.b16 %v1921
      %v2098 = vunpack.c.h.b16 %v1921
      %v2099 = vunpack.c.l.b16 %v1922
      %v2100 = vunpack.c.h.b16 %v1922
      %v2101 = vunpack.c.l.b16 %v1923
      %v2102 = vunpack.c.l.b16 %v1924
      %v2103 = vunpack.c.h.b16 %v1924
      %v2104 = vunpack.c.l.b16 %v1925
      %v2105 = vunpack.c.h.b16 %v1925
      %v2106 = vunpack.c.l.b16 %v1926
      %v2107 = vunpack.c.l.b16 %v1927
      %v2108 = vunpack.c.h.b16 %v1927
      %v2109 = vunpack.c.l.b16 %v1928
      %v2110 = vunpack.c.h.b16 %v1928
      %v2111 = vunpack.c.l.b16 %v1929
      %v2112 = vunpack.c.l.b16 %v1930
      %v2113 = vunpack.c.h.b16 %v1930
      %v2114 = vunpack.c.l.b16 %v1931
      %v2115 = vunpack.c.h.b16 %v1931
      %v2116 = vunpack.c.l.b16 %v1932
      %v2117 = vunpack.c.l.b16 %v1933
      %v2118 = vunpack.c.h.b16 %v1933
      %v2119 = vunpack.c.l.b16 %v1934
      %v2120 = vunpack.c.h.b16 %v1934
      %v2121 = vunpack.c.l.b16 %v1935
      %v2122 = vunpack.c.l.b16 %v1936
      %v2123 = vunpack.c.h.b16 %v1936
      %v2124 = vunpack.c.l.b16 %v1937
      %v2125 = vunpack.c.h.b16 %v1937
      %v2126 = vunpack.c.l.b16 %v1938
      %v2127 = vunpack.c.l.b16 %v1939
      %v2128 = vunpack.c.h.b16 %v1939
      %v2129 = vunpack.c.l.b16 %v1940
      %v2130 = vunpack.c.h.b16 %v1940
      %v2131 = vunpack.c.l.b16 %v1941
      %v2132 = vunpack.c.l.b16 %v1942
      %v2133 = vunpack.c.h.b16 %v1942
      %v2134 = vunpack.c.l.b16 %v1943
      %v2135 = vunpack.c.h.b16 %v1943
      %v2136 = vunpack.c.l.b16 %v1944
      %v2137 = vpack.c.b16 %v2022, %v2017
      %v2138 = vpack.c.b16 %v2023, %v2018
      %v2139 = vpack.c.b16 %v2024, %v2019
      %v2140 = vpack.c.b16 %v2025, %v2020
      %v2141 = vpack.c.b16 %v2026, %v2021
      %v2142 = vpack.c.b16 %v2032, %v2027
      %v2143 = vpack.c.b16 %v2033, %v2028
      %v2144 = vpack.c.b16 %v2034, %v2029
      %v2145 = vpack.c.b16 %v2035, %v2030
      %v2146 = vpack.c.b16 %v2036, %v2031
      %v2147 = vpack.c.b16 %v2042, %v2037
      %v2148 = vpack.c.b16 %v2043, %v2038
      %v2149 = vpack.c.b16 %v2044, %v2039
      %v2150 = vpack.c.b16 %v2045, %v2040
      %v2151 = vpack.c.b16 %v2046, %v2041
      %v2152 = vpack.c.b16 %v2052, %v2047
      %v2153 = vpack.c.b16 %v2053, %v2048
      %v2154 = vpack.c.b16 %v2054, %v2049
      %v2155 = vpack.c.b16 %v2055, %v2050
      %v2156 = vpack.c.b16 %v2056, %v2051
      %v2157 = vpack.c.b16 %v2062, %v2057
      %v2158 = vpack.c.b16 %v2063, %v2058
      %v2159 = vpack.c.b16 %v2064, %v2059
      %v2160 = vpack.c.b16 %v2065, %v2060
      %v2161 = vpack.c.b16 %v2066, %v2061
      %v2162 = vpack.c.b16 %v2072, %v2067
      %v2163 = vpack.c.b16 %v2073, %v2068
      %v2164 = vpack.c.b16 %v2074, %v2069
      %v2165 = vpack.c.b16 %v2075, %v2070
      %v2166 = vpack.c.b16 %v2076, %v2071
      %v2167 = vpack.c.b16 %v2082, %v2077
      %v2168 = vpack.c.b16 %v2083, %v2078
      %v2169 = vpack.c.b16 %v2084, %v2079
      %v2170 = vpack.c.b16 %v2085, %v2080
      %v2171 = vpack.c.b16 %v2086, %v2081
      %v2172 = vpack.c.b16 %v2092, %v2087
      %v2173 = vpack.c.b16 %v2093, %v2088
      %v2174 = vpack.c.b16 %v2094, %v2089
      %v2175 = vpack.c.b16 %v2095, %v2090
      %v2176 = vpack.c.b16 %v2096, %v2091
      %v2177 = vpack.c.b16 %v2102, %v2097
      %v2178 = vpack.c.b16 %v2103, %v2098
      %v2179 = vpack.c.b16 %v2104, %v2099
      %v2180 = vpack.c.b16 %v2105, %v2100
      %v2181 = vpack.c.b16 %v2106, %v2101
      %v2182 = vpack.c.b16 %v2112, %v2107
      %v2183 = vpack.c.b16 %v2113, %v2108
      %v2184 = vpack.c.b16 %v2114, %v2109
      %v2185 = vpack.c.b16 %v2115, %v2110
      %v2186 = vpack.c.b16 %v2116, %v2111
      %v2187 = vpack.c.b16 %v2122, %v2117
      %v2188 = vpack.c.b16 %v2123, %v2118
      %v2189 = vpack.c.b16 %v2124, %v2119
      %v2190 = vpack.c.b16 %v2125, %v2120
      %v2191 = vpack.c.b16 %v2126, %v2121
      %v2192 = vpack.c.b16 %v2132, %v2127
      %v2193 = vpack.c.b16 %v2133, %v2128
      %v2194 = vpack.c.b16 %v2134, %v2129
      %v2195 = vpack.c.b16 %v2135, %v2130
      %v2196 = vpack.c.b16 %v2136, %v2131
      %2257 = vmatprep.subr.bf16.mxu0 %v2173
      %2258 = vmatpush1.bf16.msra.mxu0 %v2172
      %2259 = vmatprep.subr.bf16.mxu0 %v2168
      %2260 = vmatpush1.bf16.msra.mxu0 %v2167
      %2261 = vmatprep.subr.bf16.mxu0 %v2163
      %2262 = vmatpush1.bf16.msra.mxu0 %v2162
      %2263 = vmatprep.subr.bf16.mxu0 %v2158
      %2264 = vmatpush1.bf16.msra.mxu0 %v2157
      %2265 = vmatprep.subr.bf16.mxu0 %v2153
      %2266 = vmatpush1.bf16.msra.mxu0 %v2152
      %2267 = vmatprep.subr.bf16.mxu0 %v2148
      %2268 = vmatpush1.bf16.msra.mxu0 %v2147
      %2269 = vmatprep.subr.bf16.mxu0 %v2143
      %2270 = vmatpush1.bf16.msra.mxu0 %v2142
      %2271 = vmatprep.subr.bf16.mxu0 %v2138
      %2272 = vmatpush1.bf16.msra.mxu0 %v2137
      %2273 = vmatprep.subr.bf16.mxu0 0
      %2274 = vmatpush2.bf16.msra.mxu0 0
      %2275 = vmatprep.subr.bf16.mxu0 0
      %2276 = vmatpush2.bf16.msra.mxu0 0
      %2277 = vmatprep.subr.bf16.mxu0 0
      %2278 = vmatpush2.bf16.msra.mxu0 0
      %2279 = vmatprep.subr.bf16.mxu0 0
      %2280 = vmatpush2.bf16.msra.mxu0 0
      %2281 = vmatprep.subr.bf16.mxu0 %v2193
      %2282 = vmatpush2.bf16.msra.mxu0 %v2192
      %2283 = vmatprep.subr.bf16.mxu0 %v2188
      %2284 = vmatpush2.bf16.msra.mxu0 %v2187
      %2285 = vmatprep.subr.bf16.mxu0 %v2183
      %2286 = vmatpush2.bf16.msra.mxu0 %v2182
      %2287 = vmatprep.subr.bf16.mxu0 %v2178
      %2288 = vmatpush2.bf16.msra.mxu0 %v2177
      %2289 = vmatprep.mubr.bf16.mxu0 %v592
      %2290 = vmatmul.mubr.bf16.gmra.mxu0 %v272
      %v2291 = vpop.f32.mrf.mxu0
      %v2292 = vadd.f32 0.0, %v2291
      %v2293 = vpop.f32.mrf.mxu0
      %v2294 = vadd.f32 0.0, %v2293
      %v2295 = vpop.f32.mrf.mxu0
      %v2296 = vadd.f32 0.0, %v2295
      %v2297 = vpop.f32.mrf.mxu0
      %v2298 = vadd.f32 0.0, %v2297
      %2299 = vmatprep.mubr.bf16.mxu0 %v595
      %2300 = vmatmul.mubr.bf16.gmra.mxu0 %v274
      %v2301 = vpop.f32.mrf.mxu0
      %v2302 = vadd.f32 0.0, %v2301
      %v2303 = vpop.f32.mrf.mxu0
      %v2304 = vadd.f32 0.0, %v2303
      %v2305 = vpop.f32.mrf.mxu0
      %v2306 = vadd.f32 0.0, %v2305
      %v2307 = vpop.f32.mrf.mxu0
      %v2308 = vadd.f32 0.0, %v2307
      %2309 = vdwg.mxu0
      %2310 = vmatprep.subr.bf16.mxu0 %v2175
      %2311 = vmatpush1.bf16.msra.mxu0 %v2174
      %2312 = vmatprep.subr.bf16.mxu0 %v2170
      %2313 = vmatpush1.bf16.msra.mxu0 %v2169
      %2314 = vmatprep.subr.bf16.mxu0 %v2165
      %2315 = vmatpush1.bf16.msra.mxu0 %v2164
      %2316 = vmatprep.subr.bf16.mxu0 %v2160
      %2317 = vmatpush1.bf16.msra.mxu0 %v2159
      %2318 = vmatprep.subr.bf16.mxu0 %v2155
      %2319 = vmatpush1.bf16.msra.mxu0 %v2154
      %2320 = vmatprep.subr.bf16.mxu0 %v2150
      %2321 = vmatpush1.bf16.msra.mxu0 %v2149
      %2322 = vmatprep.subr.bf16.mxu0 %v2145
      %2323 = vmatpush1.bf16.msra.mxu0 %v2144
      %2324 = vmatprep.subr.bf16.mxu0 %v2140
      %2325 = vmatpush1.bf16.msra.mxu0 %v2139
      %2326 = vmatprep.subr.bf16.mxu0 0
      %2327 = vmatpush2.bf16.msra.mxu0 0
      %2328 = vmatprep.subr.bf16.mxu0 0
      %2329 = vmatpush2.bf16.msra.mxu0 0
      %2330 = vmatprep.subr.bf16.mxu0 0
      %2331 = vmatpush2.bf16.msra.mxu0 0
      %2332 = vmatprep.subr.bf16.mxu0 0
      %2333 = vmatpush2.bf16.msra.mxu0 0
      %2334 = vmatprep.subr.bf16.mxu0 %v2195
      %2335 = vmatpush2.bf16.msra.mxu0 %v2194
      %2336 = vmatprep.subr.bf16.mxu0 %v2190
      %2337 = vmatpush2.bf16.msra.mxu0 %v2189
      %2338 = vmatprep.subr.bf16.mxu0 %v2185
      %2339 = vmatpush2.bf16.msra.mxu0 %v2184
      %2340 = vmatprep.subr.bf16.mxu0 %v2180
      %2341 = vmatpush2.bf16.msra.mxu0 %v2179
      %2342 = vmatprep.mubr.bf16.mxu0 %v592
      %2343 = vmatmul.mubr.bf16.gmra.mxu0 %v272
      %v2344 = vpop.f32.mrf.mxu0
      %v2345 = vadd.f32 0.0, %v2344
      %v2346 = vpop.f32.mrf.mxu0
      %v2347 = vadd.f32 0.0, %v2346
      %v2348 = vpop.f32.mrf.mxu0
      %v2349 = vadd.f32 0.0, %v2348
      %v2350 = vpop.f32.mrf.mxu0
      %v2351 = vadd.f32 0.0, %v2350
      %2352 = vmatprep.mubr.bf16.mxu0 %v595
      %2353 = vmatmul.mubr.bf16.gmra.mxu0 %v274
      %v2354 = vpop.f32.mrf.mxu0
      %v2355 = vadd.f32 0.0, %v2354
      %v2356 = vpop.f32.mrf.mxu0
      %v2357 = vadd.f32 0.0, %v2356
      %v2358 = vpop.f32.mrf.mxu0
      %v2359 = vadd.f32 0.0, %v2358
      %v2360 = vpop.f32.mrf.mxu0
      %v2361 = vadd.f32 0.0, %v2360
      %2362 = vdwg.mxu0
      %2363 = vmatprep.subr.bf16.mxu0 0
      %2364 = vmatpush1.bf16.msra.mxu0 %v2176
      %2365 = vmatprep.subr.bf16.mxu0 0
      %2366 = vmatpush1.bf16.msra.mxu0 %v2171
      %2367 = vmatprep.subr.bf16.mxu0 0
      %2368 = vmatpush1.bf16.msra.mxu0 %v2166
      %2369 = vmatprep.subr.bf16.mxu0 0
      %2370 = vmatpush1.bf16.msra.mxu0 %v2161
      %2371 = vmatprep.subr.bf16.mxu0 0
      %2372 = vmatpush1.bf16.msra.mxu0 %v2156
      %2373 = vmatprep.subr.bf16.mxu0 0
      %2374 = vmatpush1.bf16.msra.mxu0 %v2151
      %2375 = vmatprep.subr.bf16.mxu0 0
      %2376 = vmatpush1.bf16.msra.mxu0 %v2146
      %2377 = vmatprep.subr.bf16.mxu0 0
      %2378 = vmatpush1.bf16.msra.mxu0 %v2141
      %2379 = vmatprep.subr.bf16.mxu0 0
      %2380 = vmatpush2.bf16.msra.mxu0 0
      %2381 = vmatprep.subr.bf16.mxu0 0
      %2382 = vmatpush2.bf16.msra.mxu0 0
      %2383 = vmatprep.subr.bf16.mxu0 0
      %2384 = vmatpush2.bf16.msra.mxu0 0
      %2385 = vmatprep.subr.bf16.mxu0 0
      %2386 = vmatpush2.bf16.msra.mxu0 0
      %2387 = vmatprep.subr.bf16.mxu0 0
      %2388 = vmatpush2.bf16.msra.mxu0 %v2196
      %2389 = vmatprep.subr.bf16.mxu0 0
      %2390 = vmatpush2.bf16.msra.mxu0 %v2191
      %2391 = vmatprep.subr.bf16.mxu0 0
      %2392 = vmatpush2.bf16.msra.mxu0 %v2186
      %2393 = vmatprep.subr.bf16.mxu0 0
      %2394 = vmatpush2.bf16.msra.mxu0 %v2181
      %2395 = vmatprep.mubr.bf16.mxu0 %v592
      %2396 = vmatmul.mubr.bf16.gmra.mxu0 %v272
      %v2397 = vpop.f32.mrf.mxu0
      %v2398 = vadd.f32 0.0, %v2397
      %v2399 = vpop.f32.mrf.mxu0
      %v2400 = vpop.f32.mrf.mxu0
      %v2401 = vadd.f32 0.0, %v2400
      %v2402 = vpop.f32.mrf.mxu0
      %2403 = vmatprep.mubr.bf16.mxu0 %v595
      %2404 = vmatmul.mubr.bf16.gmra.mxu0 %v274
      %v2405 = vpop.f32.mrf.mxu0
      %v2406 = vadd.f32 0.0, %v2405
      %v2407 = vpop.f32.mrf.mxu0
      %v2408 = vpop.f32.mrf.mxu0
      %v2409 = vadd.f32 0.0, %v2408
      %v2410 = vpop.f32.mrf.mxu0
      %2411 = vdwg.mxu0
      %v2412 = vmax.f32 %v1852, %v2292
      %v2413 = vmax.f32 %v1853, %v2294
      %v2414 = vmax.f32 %v1854, %v2345
      %v2415 = vmax.f32 %v1855, %v2347
      %v2416 = vmax.f32 %v1856, %v2398
      %v2417 = vmax.f32 %v1857, %v2296
      %v2418 = vmax.f32 %v1858, %v2298
      %v2419 = vmax.f32 %v1859, %v2349
      %v2420 = vmax.f32 %v1860, %v2351
      %v2421 = vmax.f32 %v1861, %v2401
      %v2422 = vmax.f32 %v1862, %v2302
      %v2423 = vmax.f32 %v1863, %v2304
      %v2424 = vmax.f32 %v1864, %v2355
      %v2425 = vmax.f32 %v1865, %v2357
      %v2426 = vmax.f32 %v1866, %v2406
      %v2427 = vmax.f32 %v1867, %v2306
      %v2428 = vmax.f32 %v1868, %v2308
      %v2429 = vmax.f32 %v1869, %v2359
      %v2430 = vmax.f32 %v1870, %v2361
      %v2431 = vmax.f32 %v1871, %v2409
      %2433 = vset.pattern.permute.xlu0 0
      %2434 = vperm.xlu0 %2433, %v184
      %v2435 = vpop.permute.xlu0 %2434
      %2438 = vset.pattern.permute.xlu0 0
      %2439 = vperm.xlu0 %2438, %v185
      %v2440 = vpop.permute.xlu0 %2439
      %2443 = vset.pattern.permute.xlu0 0
      %2444 = vperm.xlu0 %2443, %v186
      %v2445 = vpop.permute.xlu0 %2444
      %2448 = vset.pattern.permute.xlu0 0
      %2449 = vperm.xlu0 %2448, %v187
      %v2450 = vpop.permute.xlu0 %2449
      %v2452 = vadd.f32 %v2412, %v2435
      %v2453 = vadd.f32 %v2413, %v2435
      %v2454 = vadd.f32 %v2414, %v2435
      %v2455 = vadd.f32 %v2415, %v2435
      %v2456 = vadd.f32 %v2416, %v2435
      %v2457 = vadd.f32 %v2417, %v2440
      %v2458 = vadd.f32 %v2418, %v2440
      %v2459 = vadd.f32 %v2419, %v2440
      %v2460 = vadd.f32 %v2420, %v2440
      %v2461 = vadd.f32 %v2421, %v2440
      %v2462 = vadd.f32 %v2422, %v2445
      %v2463 = vadd.f32 %v2423, %v2445
      %v2464 = vadd.f32 %v2424, %v2445
      %v2465 = vadd.f32 %v2425, %v2445
      %v2466 = vadd.f32 %v2426, %v2445
      %v2467 = vadd.f32 %v2427, %v2450
      %v2468 = vadd.f32 %v2428, %v2450
      %v2469 = vadd.f32 %v2429, %v2450
      %v2470 = vadd.f32 %v2430, %v2450
      %v2471 = vadd.f32 %v2431, %v2450
      %v2472 = vmax.f32 %v2452, 0.0
      %v2473 = vmax.f32 %v2453, 0.0
      %v2474 = vmax.f32 %v2454, 0.0
      %v2475 = vmax.f32 %v2455, 0.0
      %v2476 = vmax.f32 %v2456, 0.0
      %v2477 = vmax.f32 %v2457, 0.0
      %v2478 = vmax.f32 %v2458, 0.0
      %v2479 = vmax.f32 %v2459, 0.0
      %v2480 = vmax.f32 %v2460, 0.0
      %v2481 = vmax.f32 %v2461, 0.0
      %v2482 = vmax.f32 %v2462, 0.0
      %v2483 = vmax.f32 %v2463, 0.0
      %v2484 = vmax.f32 %v2464, 0.0
      %v2485 = vmax.f32 %v2465, 0.0
      %v2486 = vmax.f32 %v2466, 0.0
      %v2487 = vmax.f32 %v2467, 0.0
      %v2488 = vmax.f32 %v2468, 0.0
      %v2489 = vmax.f32 %v2469, 0.0
      %v2490 = vmax.f32 %v2470, 0.0
      %v2491 = vmax.f32 %v2471, 0.0
      %v2492 = vpack.c.bf16 %v2477, %v2472
      %v2493 = vpack.c.bf16 %v2478, %v2473
      %v2494 = vpack.c.bf16 %v2479, %v2474
      %v2495 = vpack.c.bf16 %v2480, %v2475
      %v2496 = vpack.c.bf16 %v2481, %v2476
      %v2497 = vpack.c.bf16 %v2487, %v2482
      %v2498 = vpack.c.bf16 %v2488, %v2483
      %v2499 = vpack.c.bf16 %v2489, %v2484
      %v2500 = vpack.c.bf16 %v2490, %v2485
      %v2501 = vpack.c.bf16 %v2491, %v2486
      %v2512 = vunpack.c.l.b16 %v2492
      %v2513 = vunpack.c.l.b16 %v2493
      %v2514 = vunpack.c.l.b16 %v2494
      %v2515 = vunpack.c.l.b16 %v2495
      %v2516 = vunpack.c.l.b16 %v2496
      %v2517 = vunpack.c.h.b16 %v2492
      %v2518 = vunpack.c.h.b16 %v2493
      %v2519 = vunpack.c.h.b16 %v2494
      %v2520 = vunpack.c.h.b16 %v2495
      %v2521 = vunpack.c.h.b16 %v2496
      %v2522 = vunpack.c.l.b16 %v2497
      %v2523 = vunpack.c.l.b16 %v2498
      %v2524 = vunpack.c.l.b16 %v2499
      %v2525 = vunpack.c.l.b16 %v2500
      %v2526 = vunpack.c.l.b16 %v2501
      %v2527 = vunpack.c.h.b16 %v2497
      %v2528 = vunpack.c.h.b16 %v2498
      %v2529 = vunpack.c.h.b16 %v2499
      %v2530 = vunpack.c.h.b16 %v2500
      %v2531 = vunpack.c.h.b16 %v2501
      %v2532 = vpack.c.b16 %v2513, %v2512
      %v2533 = vpack.c.b16 %v2515, %v2514
      %v2534 = vpack.c.b16 %v2516, %v2516
      %v2535 = vpack.c.b16 %v2518, %v2517
      %v2536 = vpack.c.b16 %v2520, %v2519
      %v2537 = vpack.c.b16 %v2521, %v2521
      %v2538 = vpack.c.b16 %v2523, %v2522
      %v2539 = vpack.c.b16 %v2525, %v2524
      %v2540 = vpack.c.b16 %v2526, %v2526
      %v2541 = vpack.c.b16 %v2528, %v2527
      %v2542 = vpack.c.b16 %v2530, %v2529
      %v2543 = vpack.c.b16 %v2531, %v2531
      %2556 = vst [vmem:[%s177] sm:$0xff] %v2532
      %2557 = vst [vmem:[%s177 + $0x8] sm:$0xff] %v2533
      %vm2558 = vcmask 470016
      %2559 = vst.msk [vmem:[%s177 + $0x10] sm:$0xf] %vm2558, %v2534
      %2560 = vst [vmem:[%s177 + $0x14] sm:$0xff] %v2535
      %2561 = vst [vmem:[%s177 + $0x1c] sm:$0xff] %v2536
      %2562 = vst.msk [vmem:[%s177 + $0x24] sm:$0xf] %vm2558, %v2537
      %2563 = vst [vmem:[%s177 + $0x28] sm:$0xff] %v2538
      %2564 = vst [vmem:[%s177 + $0x30] sm:$0xff] %v2539
      %2565 = vst.msk [vmem:[%s177 + $0x38] sm:$0xf] %vm2558, %v2540
      %2566 = vst [vmem:[%s177 + $0x3c] sm:$0xff] %v2541
      %2567 = vst [vmem:[%s177 + $0x44] sm:$0xff] %v2542
      %2568 = vst.msk [vmem:[%s177 + $0x4c] sm:$0xf] %vm2558, %v2543
      %s2569 = scalar_lea.vmem %s170, 1920
      %v2570 = vld [vmem:[%s2569] sm:$0xff]
      %v2571 = vld [vmem:[%s2569 + $0x8] sm:$0xff]
      %v2572 = vld [vmem:[%s2569 + $0x10] sm:$0xf]
      %v2573 = vld [vmem:[%s2569 + $0x14] sm:$0xff]
      %v2574 = vld [vmem:[%s2569 + $0x1c] sm:$0xff]
      %v2575 = vld [vmem:[%s2569 + $0x24] sm:$0xf]
      %v2576 = vld [vmem:[%s2569 + $0x28] sm:$0xff]
      %v2577 = vld [vmem:[%s2569 + $0x30] sm:$0xff]
      %v2578 = vld [vmem:[%s2569 + $0x38] sm:$0xf]
      %v2579 = vld [vmem:[%s2569 + $0x3c] sm:$0xff]
      %v2580 = vld [vmem:[%s2569 + $0x44] sm:$0xff]
      %v2581 = vld [vmem:[%s2569 + $0x4c] sm:$0xf]
      %v2582 = vld [vmem:[%s2569 + $0x50] sm:$0xff]
      %v2583 = vld [vmem:[%s2569 + $0x58] sm:$0xff]
      %v2584 = vld [vmem:[%s2569 + $0x60] sm:$0xf]
      %v2585 = vld [vmem:[%s2569 + $0x64] sm:$0xff]
      %v2586 = vld [vmem:[%s2569 + $0x6c] sm:$0xff]
      %v2587 = vld [vmem:[%s2569 + $0x74] sm:$0xf]
      %v2588 = vld [vmem:[%s2569 + $0x78] sm:$0xff]
      %v2589 = vld [vmem:[%s2569 + $0x80] sm:$0xff]
      %v2590 = vld [vmem:[%s2569 + $0x88] sm:$0xf]
      %v2591 = vld [vmem:[%s2569 + $0x8c] sm:$0xff]
      %v2592 = vld [vmem:[%s2569 + $0x94] sm:$0xff]
      %v2593 = vld [vmem:[%s2569 + $0x9c] sm:$0xf]
      %v2594 = vld [vmem:[%s2569 + $0xa0] sm:$0xff]
      %v2595 = vld [vmem:[%s2569 + $0xa8] sm:$0xff]
      %v2596 = vld [vmem:[%s2569 + $0xb0] sm:$0xf]
      %v2597 = vld [vmem:[%s2569 + $0xb4] sm:$0xff]
      %v2598 = vld [vmem:[%s2569 + $0xbc] sm:$0xff]
      %v2599 = vld [vmem:[%s2569 + $0xc4] sm:$0xf]
      %v2600 = vld [vmem:[%s2569 + $0xc8] sm:$0xff]
      %v2601 = vld [vmem:[%s2569 + $0xd0] sm:$0xff]
      %v2602 = vld [vmem:[%s2569 + $0xd8] sm:$0xf]
      %v2603 = vld [vmem:[%s2569 + $0xdc] sm:$0xff]
      %v2604 = vld [vmem:[%s2569 + $0xe4] sm:$0xff]
      %v2605 = vld [vmem:[%s2569 + $0xec] sm:$0xf]
      %v2606 = vld [vmem:[%s2569 + $0xf0] sm:$0xff]
      %v2607 = vld [vmem:[%s2569 + $0xf8] sm:$0xff]
      %v2608 = vld [vmem:[%s2569 + $0x100] sm:$0xf]
      %v2609 = vld [vmem:[%s2569 + $0x104] sm:$0xff]
      %v2610 = vld [vmem:[%s2569 + $0x10c] sm:$0xff]
      %v2611 = vld [vmem:[%s2569 + $0x114] sm:$0xf]
      %v2612 = vld [vmem:[%s2569 + $0x118] sm:$0xff]
      %v2613 = vld [vmem:[%s2569 + $0x120] sm:$0xff]
      %v2614 = vld [vmem:[%s2569 + $0x128] sm:$0xf]
      %v2615 = vld [vmem:[%s2569 + $0x12c] sm:$0xff]
      %v2616 = vld [vmem:[%s2569 + $0x134] sm:$0xff]
      %v2617 = vld [vmem:[%s2569 + $0x13c] sm:$0xf]
      %v2618 = vld [vmem:[%s2569 + $0x140] sm:$0xff]
      %v2619 = vld [vmem:[%s2569 + $0x148] sm:$0xff]
      %v2620 = vld [vmem:[%s2569 + $0x150] sm:$0xf]
      %v2621 = vld [vmem:[%s2569 + $0x154] sm:$0xff]
      %v2622 = vld [vmem:[%s2569 + $0x15c] sm:$0xff]
      %v2623 = vld [vmem:[%s2569 + $0x164] sm:$0xf]
      %v2624 = vld [vmem:[%s2569 + $0x168] sm:$0xff]
      %v2625 = vld [vmem:[%s2569 + $0x170] sm:$0xff]
      %v2626 = vld [vmem:[%s2569 + $0x178] sm:$0xf]
      %v2627 = vld [vmem:[%s2569 + $0x17c] sm:$0xff]
      %v2628 = vld [vmem:[%s2569 + $0x184] sm:$0xff]
      %v2629 = vld [vmem:[%s2569 + $0x18c] sm:$0xf]
      %v2630 = vld [vmem:[%s2569 + $0x190] sm:$0xff]
      %v2631 = vld [vmem:[%s2569 + $0x198] sm:$0xff]
      %v2632 = vld [vmem:[%s2569 + $0x1a0] sm:$0xf]
      %v2633 = vld [vmem:[%s2569 + $0x1a4] sm:$0xff]
      %v2634 = vld [vmem:[%s2569 + $0x1ac] sm:$0xff]
      %v2635 = vld [vmem:[%s2569 + $0x1b4] sm:$0xf]
      %v2636 = vld [vmem:[%s2569 + $0x1b8] sm:$0xff]
      %v2637 = vld [vmem:[%s2569 + $0x1c0] sm:$0xff]
      %v2638 = vld [vmem:[%s2569 + $0x1c8] sm:$0xf]
      %v2639 = vld [vmem:[%s2569 + $0x1cc] sm:$0xff]
      %v2640 = vld [vmem:[%s2569 + $0x1d4] sm:$0xff]
      %v2641 = vld [vmem:[%s2569 + $0x1dc] sm:$0xf]
      %v2714 = vunpack.c.l.b16 %v2570
      %v2715 = vunpack.c.h.b16 %v2570
      %v2716 = vunpack.c.l.b16 %v2571
      %v2717 = vunpack.c.h.b16 %v2571
      %v2718 = vunpack.c.l.b16 %v2572
      %v2719 = vunpack.c.l.b16 %v2573
      %v2720 = vunpack.c.h.b16 %v2573
      %v2721 = vunpack.c.l.b16 %v2574
      %v2722 = vunpack.c.h.b16 %v2574
      %v2723 = vunpack.c.l.b16 %v2575
      %v2724 = vunpack.c.l.b16 %v2576
      %v2725 = vunpack.c.h.b16 %v2576
      %v2726 = vunpack.c.l.b16 %v2577
      %v2727 = vunpack.c.h.b16 %v2577
      %v2728 = vunpack.c.l.b16 %v2578
      %v2729 = vunpack.c.l.b16 %v2579
      %v2730 = vunpack.c.h.b16 %v2579
      %v2731 = vunpack.c.l.b16 %v2580
      %v2732 = vunpack.c.h.b16 %v2580
      %v2733 = vunpack.c.l.b16 %v2581
      %v2734 = vunpack.c.l.b16 %v2582
      %v2735 = vunpack.c.h.b16 %v2582
      %v2736 = vunpack.c.l.b16 %v2583
      %v2737 = vunpack.c.h.b16 %v2583
      %v2738 = vunpack.c.l.b16 %v2584
      %v2739 = vunpack.c.l.b16 %v2585
      %v2740 = vunpack.c.h.b16 %v2585
      %v2741 = vunpack.c.l.b16 %v2586
      %v2742 = vunpack.c.h.b16 %v2586
      %v2743 = vunpack.c.l.b16 %v2587
      %v2744 = vunpack.c.l.b16 %v2588
      %v2745 = vunpack.c.h.b16 %v2588
      %v2746 = vunpack.c.l.b16 %v2589
      %v2747 = vunpack.c.h.b16 %v2589
      %v2748 = vunpack.c.l.b16 %v2590
      %v2749 = vunpack.c.l.b16 %v2591
      %v2750 = vunpack.c.h.b16 %v2591
      %v2751 = vunpack.c.l.b16 %v2592
      %v2752 = vunpack.c.h.b16 %v2592
      %v2753 = vunpack.c.l.b16 %v2593
      %v2754 = vunpack.c.l.b16 %v2594
      %v2755 = vunpack.c.h.b16 %v2594
      %v2756 = vunpack.c.l.b16 %v2595
      %v2757 = vunpack.c.h.b16 %v2595
      %v2758 = vunpack.c.l.b16 %v2596
      %v2759 = vunpack.c.l.b16 %v2597
      %v2760 = vunpack.c.h.b16 %v2597
      %v2761 = vunpack.c.l.b16 %v2598
      %v2762 = vunpack.c.h.b16 %v2598
      %v2763 = vunpack.c.l.b16 %v2599
      %v2764 = vunpack.c.l.b16 %v2600
      %v2765 = vunpack.c.h.b16 %v2600
      %v2766 = vunpack.c.l.b16 %v2601
      %v2767 = vunpack.c.h.b16 %v2601
      %v2768 = vunpack.c.l.b16 %v2602
      %v2769 = vunpack.c.l.b16 %v2603
      %v2770 = vunpack.c.h.b16 %v2603
      %v2771 = vunpack.c.l.b16 %v2604
      %v2772 = vunpack.c.h.b16 %v2604
      %v2773 = vunpack.c.l.b16 %v2605
      %v2774 = vunpack.c.l.b16 %v2606
      %v2775 = vunpack.c.h.b16 %v2606
      %v2776 = vunpack.c.l.b16 %v2607
      %v2777 = vunpack.c.h.b16 %v2607
      %v2778 = vunpack.c.l.b16 %v2608
      %v2779 = vunpack.c.l.b16 %v2609
      %v2780 = vunpack.c.h.b16 %v2609
      %v2781 = vunpack.c.l.b16 %v2610
      %v2782 = vunpack.c.h.b16 %v2610
      %v2783 = vunpack.c.l.b16 %v2611
      %v2784 = vunpack.c.l.b16 %v2612
      %v2785 = vunpack.c.h.b16 %v2612
      %v2786 = vunpack.c.l.b16 %v2613
      %v2787 = vunpack.c.h.b16 %v2613
      %v2788 = vunpack.c.l.b16 %v2614
      %v2789 = vunpack.c.l.b16 %v2615
      %v2790 = vunpack.c.h.b16 %v2615
      %v2791 = vunpack.c.l.b16 %v2616
      %v2792 = vunpack.c.h.b16 %v2616
      %v2793 = vunpack.c.l.b16 %v2617
      %v2794 = vunpack.c.l.b16 %v2618
      %v2795 = vunpack.c.h.b16 %v2618
      %v2796 = vunpack.c.l.b16 %v2619
      %v2797 = vunpack.c.h.b16 %v2619
      %v2798 = vunpack.c.l.b16 %v2620
      %v2799 = vunpack.c.l.b16 %v2621
      %v2800 = vunpack.c.h.b16 %v2621
      %v2801 = vunpack.c.l.b16 %v2622
      %v2802 = vunpack.c.h.b16 %v2622
      %v2803 = vunpack.c.l.b16 %v2623
      %v2804 = vunpack.c.l.b16 %v2624
      %v2805 = vunpack.c.h.b16 %v2624
      %v2806 = vunpack.c.l.b16 %v2625
      %v2807 = vunpack.c.h.b16 %v2625
      %v2808 = vunpack.c.l.b16 %v2626
      %v2809 = vunpack.c.l.b16 %v2627
      %v2810 = vunpack.c.h.b16 %v2627
      %v2811 = vunpack.c.l.b16 %v2628
      %v2812 = vunpack.c.h.b16 %v2628
      %v2813 = vunpack.c.l.b16 %v2629
      %v2814 = vunpack.c.l.b16 %v2630
      %v2815 = vunpack.c.h.b16 %v2630
      %v2816 = vunpack.c.l.b16 %v2631
      %v2817 = vunpack.c.h.b16 %v2631
      %v2818 = vunpack.c.l.b16 %v2632
      %v2819 = vunpack.c.l.b16 %v2633
      %v2820 = vunpack.c.h.b16 %v2633
      %v2821 = vunpack.c.l.b16 %v2634
      %v2822 = vunpack.c.h.b16 %v2634
      %v2823 = vunpack.c.l.b16 %v2635
      %v2824 = vunpack.c.l.b16 %v2636
      %v2825 = vunpack.c.h.b16 %v2636
      %v2826 = vunpack.c.l.b16 %v2637
      %v2827 = vunpack.c.h.b16 %v2637
      %v2828 = vunpack.c.l.b16 %v2638
      %v2829 = vunpack.c.l.b16 %v2639
      %v2830 = vunpack.c.h.b16 %v2639
      %v2831 = vunpack.c.l.b16 %v2640
      %v2832 = vunpack.c.h.b16 %v2640
      %v2833 = vunpack.c.l.b16 %v2641
      %v2834 = vpack.c.b16 %v2719, %v2714
      %v2835 = vpack.c.b16 %v2720, %v2715
      %v2836 = vpack.c.b16 %v2721, %v2716
      %v2837 = vpack.c.b16 %v2722, %v2717
      %v2838 = vpack.c.b16 %v2723, %v2718
      %v2839 = vpack.c.b16 %v2729, %v2724
      %v2840 = vpack.c.b16 %v2730, %v2725
      %v2841 = vpack.c.b16 %v2731, %v2726
      %v2842 = vpack.c.b16 %v2732, %v2727
      %v2843 = vpack.c.b16 %v2733, %v2728
      %v2844 = vpack.c.b16 %v2739, %v2734
      %v2845 = vpack.c.b16 %v2740, %v2735
      %v2846 = vpack.c.b16 %v2741, %v2736
      %v2847 = vpack.c.b16 %v2742, %v2737
      %v2848 = vpack.c.b16 %v2743, %v2738
      %v2849 = vpack.c.b16 %v2749, %v2744
      %v2850 = vpack.c.b16 %v2750, %v2745
      %v2851 = vpack.c.b16 %v2751, %v2746
      %v2852 = vpack.c.b16 %v2752, %v2747
      %v2853 = vpack.c.b16 %v2753, %v2748
      %v2854 = vpack.c.b16 %v2759, %v2754
      %v2855 = vpack.c.b16 %v2760, %v2755
      %v2856 = vpack.c.b16 %v2761, %v2756
      %v2857 = vpack.c.b16 %v2762, %v2757
      %v2858 = vpack.c.b16 %v2763, %v2758
      %v2859 = vpack.c.b16 %v2769, %v2764
      %v2860 = vpack.c.b16 %v2770, %v2765
      %v2861 = vpack.c.b16 %v2771, %v2766
      %v2862 = vpack.c.b16 %v2772, %v2767
      %v2863 = vpack.c.b16 %v2773, %v2768
      %v2864 = vpack.c.b16 %v2779, %v2774
      %v2865 = vpack.c.b16 %v2780, %v2775
      %v2866 = vpack.c.b16 %v2781, %v2776
      %v2867 = vpack.c.b16 %v2782, %v2777
      %v2868 = vpack.c.b16 %v2783, %v2778
      %v2869 = vpack.c.b16 %v2789, %v2784
      %v2870 = vpack.c.b16 %v2790, %v2785
      %v2871 = vpack.c.b16 %v2791, %v2786
      %v2872 = vpack.c.b16 %v2792, %v2787
      %v2873 = vpack.c.b16 %v2793, %v2788
      %v2874 = vpack.c.b16 %v2799, %v2794
      %v2875 = vpack.c.b16 %v2800, %v2795
      %v2876 = vpack.c.b16 %v2801, %v2796
      %v2877 = vpack.c.b16 %v2802, %v2797
      %v2878 = vpack.c.b16 %v2803, %v2798
      %v2879 = vpack.c.b16 %v2809, %v2804
      %v2880 = vpack.c.b16 %v2810, %v2805
      %v2881 = vpack.c.b16 %v2811, %v2806
      %v2882 = vpack.c.b16 %v2812, %v2807
      %v2883 = vpack.c.b16 %v2813, %v2808
      %v2884 = vpack.c.b16 %v2819, %v2814
      %v2885 = vpack.c.b16 %v2820, %v2815
      %v2886 = vpack.c.b16 %v2821, %v2816
      %v2887 = vpack.c.b16 %v2822, %v2817
      %v2888 = vpack.c.b16 %v2823, %v2818
      %v2889 = vpack.c.b16 %v2829, %v2824
      %v2890 = vpack.c.b16 %v2830, %v2825
      %v2891 = vpack.c.b16 %v2831, %v2826
      %v2892 = vpack.c.b16 %v2832, %v2827
      %v2893 = vpack.c.b16 %v2833, %v2828
      %2954 = vmatprep.subr.bf16.mxu0 %v2870
      %2955 = vmatpush1.bf16.msra.mxu0 %v2869
      %2956 = vmatprep.subr.bf16.mxu0 %v2865
      %2957 = vmatpush1.bf16.msra.mxu0 %v2864
      %2958 = vmatprep.subr.bf16.mxu0 %v2860
      %2959 = vmatpush1.bf16.msra.mxu0 %v2859
      %2960 = vmatprep.subr.bf16.mxu0 %v2855
      %2961 = vmatpush1.bf16.msra.mxu0 %v2854
      %2962 = vmatprep.subr.bf16.mxu0 %v2850
      %2963 = vmatpush1.bf16.msra.mxu0 %v2849
      %2964 = vmatprep.subr.bf16.mxu0 %v2845
      %2965 = vmatpush1.bf16.msra.mxu0 %v2844
      %2966 = vmatprep.subr.bf16.mxu0 %v2840
      %2967 = vmatpush1.bf16.msra.mxu0 %v2839
      %2968 = vmatprep.subr.bf16.mxu0 %v2835
      %2969 = vmatpush1.bf16.msra.mxu0 %v2834
      %2970 = vmatprep.subr.bf16.mxu0 0
      %2971 = vmatpush2.bf16.msra.mxu0 0
      %2972 = vmatprep.subr.bf16.mxu0 0
      %2973 = vmatpush2.bf16.msra.mxu0 0
      %2974 = vmatprep.subr.bf16.mxu0 0
      %2975 = vmatpush2.bf16.msra.mxu0 0
      %2976 = vmatprep.subr.bf16.mxu0 0
      %2977 = vmatpush2.bf16.msra.mxu0 0
      %2978 = vmatprep.subr.bf16.mxu0 %v2890
      %2979 = vmatpush2.bf16.msra.mxu0 %v2889
      %2980 = vmatprep.subr.bf16.mxu0 %v2885
      %2981 = vmatpush2.bf16.msra.mxu0 %v2884
      %2982 = vmatprep.subr.bf16.mxu0 %v2880
      %2983 = vmatpush2.bf16.msra.mxu0 %v2879
      %2984 = vmatprep.subr.bf16.mxu0 %v2875
      %2985 = vmatpush2.bf16.msra.mxu0 %v2874
      %2986 = vmatprep.mubr.bf16.mxu0 %v592
      %2987 = vmatmul.mubr.bf16.gmra.mxu0 %v272
      %v2988 = vpop.f32.mrf.mxu0
      %v2989 = vadd.f32 0.0, %v2988
      %v2990 = vpop.f32.mrf.mxu0
      %v2991 = vadd.f32 0.0, %v2990
      %v2992 = vpop.f32.mrf.mxu0
      %v2993 = vadd.f32 0.0, %v2992
      %v2994 = vpop.f32.mrf.mxu0
      %v2995 = vadd.f32 0.0, %v2994
      %2996 = vmatprep.mubr.bf16.mxu0 %v595
      %2997 = vmatmul.mubr.bf16.gmra.mxu0 %v274
      %v2998 = vpop.f32.mrf.mxu0
      %v2999 = vadd.f32 0.0, %v2998
      %v3000 = vpop.f32.mrf.mxu0
      %v3001 = vadd.f32 0.0, %v3000
      %v3002 = vpop.f32.mrf.mxu0
      %v3003 = vadd.f32 0.0, %v3002
      %v3004 = vpop.f32.mrf.mxu0
      %v3005 = vadd.f32 0.0, %v3004
      %3006 = vdwg.mxu0
      %3007 = vmatprep.subr.bf16.mxu0 %v2872
      %3008 = vmatpush1.bf16.msra.mxu0 %v2871
      %3009 = vmatprep.subr.bf16.mxu0 %v2867
      %3010 = vmatpush1.bf16.msra.mxu0 %v2866
      %3011 = vmatprep.subr.bf16.mxu0 %v2862
      %3012 = vmatpush1.bf16.msra.mxu0 %v2861
      %3013 = vmatprep.subr.bf16.mxu0 %v2857
      %3014 = vmatpush1.bf16.msra.mxu0 %v2856
      %3015 = vmatprep.subr.bf16.mxu0 %v2852
      %3016 = vmatpush1.bf16.msra.mxu0 %v2851
      %3017 = vmatprep.subr.bf16.mxu0 %v2847
      %3018 = vmatpush1.bf16.msra.mxu0 %v2846
      %3019 = vmatprep.subr.bf16.mxu0 %v2842
      %3020 = vmatpush1.bf16.msra.mxu0 %v2841
      %3021 = vmatprep.subr.bf16.mxu0 %v2837
      %3022 = vmatpush1.bf16.msra.mxu0 %v2836
      %3023 = vmatprep.subr.bf16.mxu0 0
      %3024 = vmatpush2.bf16.msra.mxu0 0
      %3025 = vmatprep.subr.bf16.mxu0 0
      %3026 = vmatpush2.bf16.msra.mxu0 0
      %3027 = vmatprep.subr.bf16.mxu0 0
      %3028 = vmatpush2.bf16.msra.mxu0 0
      %3029 = vmatprep.subr.bf16.mxu0 0
      %3030 = vmatpush2.bf16.msra.mxu0 0
      %3031 = vmatprep.subr.bf16.mxu0 %v2892
      %3032 = vmatpush2.bf16.msra.mxu0 %v2891
      %3033 = vmatprep.subr.bf16.mxu0 %v2887
      %3034 = vmatpush2.bf16.msra.mxu0 %v2886
      %3035 = vmatprep.subr.bf16.mxu0 %v2882
      %3036 = vmatpush2.bf16.msra.mxu0 %v2881
      %3037 = vmatprep.subr.bf16.mxu0 %v2877
      %3038 = vmatpush2.bf16.msra.mxu0 %v2876
      %3039 = vmatprep.mubr.bf16.mxu0 %v592
      %3040 = vmatmul.mubr.bf16.gmra.mxu0 %v272
      %v3041 = vpop.f32.mrf.mxu0
      %v3042 = vadd.f32 0.0, %v3041
      %v3043 = vpop.f32.mrf.mxu0
      %v3044 = vadd.f32 0.0, %v3043
      %v3045 = vpop.f32.mrf.mxu0
      %v3046 = vadd.f32 0.0, %v3045
      %v3047 = vpop.f32.mrf.mxu0
      %v3048 = vadd.f32 0.0, %v3047
      %3049 = vmatprep.mubr.bf16.mxu0 %v595
      %3050 = vmatmul.mubr.bf16.gmra.mxu0 %v274
      %v3051 = vpop.f32.mrf.mxu0
      %v3052 = vadd.f32 0.0, %v3051
      %v3053 = vpop.f32.mrf.mxu0
      %v3054 = vadd.f32 0.0, %v3053
      %v3055 = vpop.f32.mrf.mxu0
      %v3056 = vadd.f32 0.0, %v3055
      %v3057 = vpop.f32.mrf.mxu0
      %v3058 = vadd.f32 0.0, %v3057
      %3059 = vdwg.mxu0
      %3060 = vmatprep.subr.bf16.mxu0 0
      %3061 = vmatpush1.bf16.msra.mxu0 %v2873
      %3062 = vmatprep.subr.bf16.mxu0 0
      %3063 = vmatpush1.bf16.msra.mxu0 %v2868
      %3064 = vmatprep.subr.bf16.mxu0 0
      %3065 = vmatpush1.bf16.msra.mxu0 %v2863
      %3066 = vmatprep.subr.bf16.mxu0 0
      %3067 = vmatpush1.bf16.msra.mxu0 %v2858
      %3068 = vmatprep.subr.bf16.mxu0 0
      %3069 = vmatpush1.bf16.msra.mxu0 %v2853
      %3070 = vmatprep.subr.bf16.mxu0 0
      %3071 = vmatpush1.bf16.msra.mxu0 %v2848
      %3072 = vmatprep.subr.bf16.mxu0 0
      %3073 = vmatpush1.bf16.msra.mxu0 %v2843
      %3074 = vmatprep.subr.bf16.mxu0 0
      %3075 = vmatpush1.bf16.msra.mxu0 %v2838
      %3076 = vmatprep.subr.bf16.mxu0 0
      %3077 = vmatpush2.bf16.msra.mxu0 0
      %3078 = vmatprep.subr.bf16.mxu0 0
      %3079 = vmatpush2.bf16.msra.mxu0 0
      %3080 = vmatprep.subr.bf16.mxu0 0
      %3081 = vmatpush2.bf16.msra.mxu0 0
      %3082 = vmatprep.subr.bf16.mxu0 0
      %3083 = vmatpush2.bf16.msra.mxu0 0
      %3084 = vmatprep.subr.bf16.mxu0 0
      %3085 = vmatpush2.bf16.msra.mxu0 %v2893
      %3086 = vmatprep.subr.bf16.mxu0 0
      %3087 = vmatpush2.bf16.msra.mxu0 %v2888
      %3088 = vmatprep.subr.bf16.mxu0 0
      %3089 = vmatpush2.bf16.msra.mxu0 %v2883
      %3090 = vmatprep.subr.bf16.mxu0 0
      %3091 = vmatpush2.bf16.msra.mxu0 %v2878
      %3092 = vmatprep.mubr.bf16.mxu0 %v592
      %3093 = vmatmul.mubr.bf16.gmra.mxu0 %v272
      %v3094 = vpop.f32.mrf.mxu0
      %v3095 = vadd.f32 0.0, %v3094
      %v3096 = vpop.f32.mrf.mxu0
      %v3097 = vpop.f32.mrf.mxu0
      %v3098 = vadd.f32 0.0, %v3097
      %v3099 = vpop.f32.mrf.mxu0
      %3100 = vmatprep.mubr.bf16.mxu0 %v595
      %3101 = vmatmul.mubr.bf16.gmra.mxu0 %v274
      %v3102 = vpop.f32.mrf.mxu0
      %v3103 = vadd.f32 0.0, %v3102
      %v3104 = vpop.f32.mrf.mxu0
      %v3105 = vpop.f32.mrf.mxu0
      %v3106 = vadd.f32 0.0, %v3105
      %v3107 = vpop.f32.mrf.mxu0
      %3108 = vdwg.mxu0
      %s3109 = scalar_lea.vmem %s170, 2400
      %v3110 = vld [vmem:[%s3109] sm:$0xff]
      %v3111 = vld [vmem:[%s3109 + $0x8] sm:$0xff]
      %v3112 = vld [vmem:[%s3109 + $0x10] sm:$0xf]
      %v3113 = vld [vmem:[%s3109 + $0x14] sm:$0xff]
      %v3114 = vld [vmem:[%s3109 + $0x1c] sm:$0xff]
      %v3115 = vld [vmem:[%s3109 + $0x24] sm:$0xf]
      %v3116 = vld [vmem:[%s3109 + $0x28] sm:$0xff]
      %v3117 = vld [vmem:[%s3109 + $0x30] sm:$0xff]
      %v3118 = vld [vmem:[%s3109 + $0x38] sm:$0xf]
      %v3119 = vld [vmem:[%s3109 + $0x3c] sm:$0xff]
      %v3120 = vld [vmem:[%s3109 + $0x44] sm:$0xff]
      %v3121 = vld [vmem:[%s3109 + $0x4c] sm:$0xf]
      %v3122 = vld [vmem:[%s3109 + $0x50] sm:$0xff]
      %v3123 = vld [vmem:[%s3109 + $0x58] sm:$0xff]
      %v3124 = vld [vmem:[%s3109 + $0x60] sm:$0xf]
      %v3125 = vld [vmem:[%s3109 + $0x64] sm:$0xff]
      %v3126 = vld [vmem:[%s3109 + $0x6c] sm:$0xff]
      %v3127 = vld [vmem:[%s3109 + $0x74] sm:$0xf]
      %v3128 = vld [vmem:[%s3109 + $0x78] sm:$0xff]
      %v3129 = vld [vmem:[%s3109 + $0x80] sm:$0xff]
      %v3130 = vld [vmem:[%s3109 + $0x88] sm:$0xf]
      %v3131 = vld [vmem:[%s3109 + $0x8c] sm:$0xff]
      %v3132 = vld [vmem:[%s3109 + $0x94] sm:$0xff]
      %v3133 = vld [vmem:[%s3109 + $0x9c] sm:$0xf]
      %v3134 = vld [vmem:[%s3109 + $0xa0] sm:$0xff]
      %v3135 = vld [vmem:[%s3109 + $0xa8] sm:$0xff]
      %v3136 = vld [vmem:[%s3109 + $0xb0] sm:$0xf]
      %v3137 = vld [vmem:[%s3109 + $0xb4] sm:$0xff]
      %v3138 = vld [vmem:[%s3109 + $0xbc] sm:$0xff]
      %v3139 = vld [vmem:[%s3109 + $0xc4] sm:$0xf]
      %v3140 = vld [vmem:[%s3109 + $0xc8] sm:$0xff]
      %v3141 = vld [vmem:[%s3109 + $0xd0] sm:$0xff]
      %v3142 = vld [vmem:[%s3109 + $0xd8] sm:$0xf]
      %v3143 = vld [vmem:[%s3109 + $0xdc] sm:$0xff]
      %v3144 = vld [vmem:[%s3109 + $0xe4] sm:$0xff]
      %v3145 = vld [vmem:[%s3109 + $0xec] sm:$0xf]
      %v3146 = vld [vmem:[%s3109 + $0xf0] sm:$0xff]
      %v3147 = vld [vmem:[%s3109 + $0xf8] sm:$0xff]
      %v3148 = vld [vmem:[%s3109 + $0x100] sm:$0xf]
      %v3149 = vld [vmem:[%s3109 + $0x104] sm:$0xff]
      %v3150 = vld [vmem:[%s3109 + $0x10c] sm:$0xff]
      %v3151 = vld [vmem:[%s3109 + $0x114] sm:$0xf]
      %v3152 = vld [vmem:[%s3109 + $0x118] sm:$0xff]
      %v3153 = vld [vmem:[%s3109 + $0x120] sm:$0xff]
      %v3154 = vld [vmem:[%s3109 + $0x128] sm:$0xf]
      %v3155 = vld [vmem:[%s3109 + $0x12c] sm:$0xff]
      %v3156 = vld [vmem:[%s3109 + $0x134] sm:$0xff]
      %v3157 = vld [vmem:[%s3109 + $0x13c] sm:$0xf]
      %v3158 = vld [vmem:[%s3109 + $0x140] sm:$0xff]
      %v3159 = vld [vmem:[%s3109 + $0x148] sm:$0xff]
      %v3160 = vld [vmem:[%s3109 + $0x150] sm:$0xf]
      %v3161 = vld [vmem:[%s3109 + $0x154] sm:$0xff]
      %v3162 = vld [vmem:[%s3109 + $0x15c] sm:$0xff]
      %v3163 = vld [vmem:[%s3109 + $0x164] sm:$0xf]
      %v3164 = vld [vmem:[%s3109 + $0x168] sm:$0xff]
      %v3165 = vld [vmem:[%s3109 + $0x170] sm:$0xff]
      %v3166 = vld [vmem:[%s3109 + $0x178] sm:$0xf]
      %v3167 = vld [vmem:[%s3109 + $0x17c] sm:$0xff]
      %v3168 = vld [vmem:[%s3109 + $0x184] sm:$0xff]
      %v3169 = vld [vmem:[%s3109 + $0x18c] sm:$0xf]
      %v3170 = vld [vmem:[%s3109 + $0x190] sm:$0xff]
      %v3171 = vld [vmem:[%s3109 + $0x198] sm:$0xff]
      %v3172 = vld [vmem:[%s3109 + $0x1a0] sm:$0xf]
      %v3173 = vld [vmem:[%s3109 + $0x1a4] sm:$0xff]
      %v3174 = vld [vmem:[%s3109 + $0x1ac] sm:$0xff]
      %v3175 = vld [vmem:[%s3109 + $0x1b4] sm:$0xf]
      %v3176 = vld [vmem:[%s3109 + $0x1b8] sm:$0xff]
      %v3177 = vld [vmem:[%s3109 + $0x1c0] sm:$0xff]
      %v3178 = vld [vmem:[%s3109 + $0x1c8] sm:$0xf]
      %v3179 = vld [vmem:[%s3109 + $0x1cc] sm:$0xff]
      %v3180 = vld [vmem:[%s3109 + $0x1d4] sm:$0xff]
      %v3181 = vld [vmem:[%s3109 + $0x1dc] sm:$0xf]
      %v3254 = vunpack.c.l.b16 %v3110
      %v3255 = vunpack.c.h.b16 %v3110
      %v3256 = vunpack.c.l.b16 %v3111
      %v3257 = vunpack.c.h.b16 %v3111
      %v3258 = vunpack.c.l.b16 %v3112
      %v3259 = vunpack.c.l.b16 %v3113
      %v3260 = vunpack.c.h.b16 %v3113
      %v3261 = vunpack.c.l.b16 %v3114
      %v3262 = vunpack.c.h.b16 %v3114
      %v3263 = vunpack.c.l.b16 %v3115
      %v3264 = vunpack.c.l.b16 %v3116
      %v3265 = vunpack.c.h.b16 %v3116
      %v3266 = vunpack.c.l.b16 %v3117
      %v3267 = vunpack.c.h.b16 %v3117
      %v3268 = vunpack.c.l.b16 %v3118
      %v3269 = vunpack.c.l.b16 %v3119
      %v3270 = vunpack.c.h.b16 %v3119
      %v3271 = vunpack.c.l.b16 %v3120
      %v3272 = vunpack.c.h.b16 %v3120
      %v3273 = vunpack.c.l.b16 %v3121
      %v3274 = vunpack.c.l.b16 %v3122
      %v3275 = vunpack.c.h.b16 %v3122
      %v3276 = vunpack.c.l.b16 %v3123
      %v3277 = vunpack.c.h.b16 %v3123
      %v3278 = vunpack.c.l.b16 %v3124
      %v3279 = vunpack.c.l.b16 %v3125
      %v3280 = vunpack.c.h.b16 %v3125
      %v3281 = vunpack.c.l.b16 %v3126
      %v3282 = vunpack.c.h.b16 %v3126
      %v3283 = vunpack.c.l.b16 %v3127
      %v3284 = vunpack.c.l.b16 %v3128
      %v3285 = vunpack.c.h.b16 %v3128
      %v3286 = vunpack.c.l.b16 %v3129
      %v3287 = vunpack.c.h.b16 %v3129
      %v3288 = vunpack.c.l.b16 %v3130
      %v3289 = vunpack.c.l.b16 %v3131
      %v3290 = vunpack.c.h.b16 %v3131
      %v3291 = vunpack.c.l.b16 %v3132
      %v3292 = vunpack.c.h.b16 %v3132
      %v3293 = vunpack.c.l.b16 %v3133
      %v3294 = vunpack.c.l.b16 %v3134
      %v3295 = vunpack.c.h.b16 %v3134
      %v3296 = vunpack.c.l.b16 %v3135
      %v3297 = vunpack.c.h.b16 %v3135
      %v3298 = vunpack.c.l.b16 %v3136
      %v3299 = vunpack.c.l.b16 %v3137
      %v3300 = vunpack.c.h.b16 %v3137
      %v3301 = vunpack.c.l.b16 %v3138
      %v3302 = vunpack.c.h.b16 %v3138
      %v3303 = vunpack.c.l.b16 %v3139
      %v3304 = vunpack.c.l.b16 %v3140
      %v3305 = vunpack.c.h.b16 %v3140
      %v3306 = vunpack.c.l.b16 %v3141
      %v3307 = vunpack.c.h.b16 %v3141
      %v3308 = vunpack.c.l.b16 %v3142
      %v3309 = vunpack.c.l.b16 %v3143
      %v3310 = vunpack.c.h.b16 %v3143
      %v3311 = vunpack.c.l.b16 %v3144
      %v3312 = vunpack.c.h.b16 %v3144
      %v3313 = vunpack.c.l.b16 %v3145
      %v3314 = vunpack.c.l.b16 %v3146
      %v3315 = vunpack.c.h.b16 %v3146
      %v3316 = vunpack.c.l.b16 %v3147
      %v3317 = vunpack.c.h.b16 %v3147
      %v3318 = vunpack.c.l.b16 %v3148
      %v3319 = vunpack.c.l.b16 %v3149
      %v3320 = vunpack.c.h.b16 %v3149
      %v3321 = vunpack.c.l.b16 %v3150
      %v3322 = vunpack.c.h.b16 %v3150
      %v3323 = vunpack.c.l.b16 %v3151
      %v3324 = vunpack.c.l.b16 %v3152
      %v3325 = vunpack.c.h.b16 %v3152
      %v3326 = vunpack.c.l.b16 %v3153
      %v3327 = vunpack.c.h.b16 %v3153
      %v3328 = vunpack.c.l.b16 %v3154
      %v3329 = vunpack.c.l.b16 %v3155
      %v3330 = vunpack.c.h.b16 %v3155
      %v3331 = vunpack.c.l.b16 %v3156
      %v3332 = vunpack.c.h.b16 %v3156
      %v3333 = vunpack.c.l.b16 %v3157
      %v3334 = vunpack.c.l.b16 %v3158
      %v3335 = vunpack.c.h.b16 %v3158
      %v3336 = vunpack.c.l.b16 %v3159
      %v3337 = vunpack.c.h.b16 %v3159
      %v3338 = vunpack.c.l.b16 %v3160
      %v3339 = vunpack.c.l.b16 %v3161
      %v3340 = vunpack.c.h.b16 %v3161
      %v3341 = vunpack.c.l.b16 %v3162
      %v3342 = vunpack.c.h.b16 %v3162
      %v3343 = vunpack.c.l.b16 %v3163
      %v3344 = vunpack.c.l.b16 %v3164
      %v3345 = vunpack.c.h.b16 %v3164
      %v3346 = vunpack.c.l.b16 %v3165
      %v3347 = vunpack.c.h.b16 %v3165
      %v3348 = vunpack.c.l.b16 %v3166
      %v3349 = vunpack.c.l.b16 %v3167
      %v3350 = vunpack.c.h.b16 %v3167
      %v3351 = vunpack.c.l.b16 %v3168
      %v3352 = vunpack.c.h.b16 %v3168
      %v3353 = vunpack.c.l.b16 %v3169
      %v3354 = vunpack.c.l.b16 %v3170
      %v3355 = vunpack.c.h.b16 %v3170
      %v3356 = vunpack.c.l.b16 %v3171
      %v3357 = vunpack.c.h.b16 %v3171
      %v3358 = vunpack.c.l.b16 %v3172
      %v3359 = vunpack.c.l.b16 %v3173
      %v3360 = vunpack.c.h.b16 %v3173
      %v3361 = vunpack.c.l.b16 %v3174
      %v3362 = vunpack.c.h.b16 %v3174
      %v3363 = vunpack.c.l.b16 %v3175
      %v3364 = vunpack.c.l.b16 %v3176
      %v3365 = vunpack.c.h.b16 %v3176
      %v3366 = vunpack.c.l.b16 %v3177
      %v3367 = vunpack.c.h.b16 %v3177
      %v3368 = vunpack.c.l.b16 %v3178
      %v3369 = vunpack.c.l.b16 %v3179
      %v3370 = vunpack.c.h.b16 %v3179
      %v3371 = vunpack.c.l.b16 %v3180
      %v3372 = vunpack.c.h.b16 %v3180
      %v3373 = vunpack.c.l.b16 %v3181
      %v3374 = vpack.c.b16 %v3259, %v3254
      %v3375 = vpack.c.b16 %v3260, %v3255
      %v3376 = vpack.c.b16 %v3261, %v3256
      %v3377 = vpack.c.b16 %v3262, %v3257
      %v3378 = vpack.c.b16 %v3263, %v3258
      %v3379 = vpack.c.b16 %v3269, %v3264
      %v3380 = vpack.c.b16 %v3270, %v3265
      %v3381 = vpack.c.b16 %v3271, %v3266
      %v3382 = vpack.c.b16 %v3272, %v3267
      %v3383 = vpack.c.b16 %v3273, %v3268
      %v3384 = vpack.c.b16 %v3279, %v3274
      %v3385 = vpack.c.b16 %v3280, %v3275
      %v3386 = vpack.c.b16 %v3281, %v3276
      %v3387 = vpack.c.b16 %v3282, %v3277
      %v3388 = vpack.c.b16 %v3283, %v3278
      %v3389 = vpack.c.b16 %v3289, %v3284
      %v3390 = vpack.c.b16 %v3290, %v3285
      %v3391 = vpack.c.b16 %v3291, %v3286
      %v3392 = vpack.c.b16 %v3292, %v3287
      %v3393 = vpack.c.b16 %v3293, %v3288
      %v3394 = vpack.c.b16 %v3299, %v3294
      %v3395 = vpack.c.b16 %v3300, %v3295
      %v3396 = vpack.c.b16 %v3301, %v3296
      %v3397 = vpack.c.b16 %v3302, %v3297
      %v3398 = vpack.c.b16 %v3303, %v3298
      %v3399 = vpack.c.b16 %v3309, %v3304
      %v3400 = vpack.c.b16 %v3310, %v3305
      %v3401 = vpack.c.b16 %v3311, %v3306
      %v3402 = vpack.c.b16 %v3312, %v3307
      %v3403 = vpack.c.b16 %v3313, %v3308
      %v3404 = vpack.c.b16 %v3319, %v3314
      %v3405 = vpack.c.b16 %v3320, %v3315
      %v3406 = vpack.c.b16 %v3321, %v3316
      %v3407 = vpack.c.b16 %v3322, %v3317
      %v3408 = vpack.c.b16 %v3323, %v3318
      %v3409 = vpack.c.b16 %v3329, %v3324
      %v3410 = vpack.c.b16 %v3330, %v3325
      %v3411 = vpack.c.b16 %v3331, %v3326
      %v3412 = vpack.c.b16 %v3332, %v3327
      %v3413 = vpack.c.b16 %v3333, %v3328
      %v3414 = vpack.c.b16 %v3339, %v3334
      %v3415 = vpack.c.b16 %v3340, %v3335
      %v3416 = vpack.c.b16 %v3341, %v3336
      %v3417 = vpack.c.b16 %v3342, %v3337
      %v3418 = vpack.c.b16 %v3343, %v3338
      %v3419 = vpack.c.b16 %v3349, %v3344
      %v3420 = vpack.c.b16 %v3350, %v3345
      %v3421 = vpack.c.b16 %v3351, %v3346
      %v3422 = vpack.c.b16 %v3352, %v3347
      %v3423 = vpack.c.b16 %v3353, %v3348
      %v3424 = vpack.c.b16 %v3359, %v3354
      %v3425 = vpack.c.b16 %v3360, %v3355
      %v3426 = vpack.c.b16 %v3361, %v3356
      %v3427 = vpack.c.b16 %v3362, %v3357
      %v3428 = vpack.c.b16 %v3363, %v3358
      %v3429 = vpack.c.b16 %v3369, %v3364
      %v3430 = vpack.c.b16 %v3370, %v3365
      %v3431 = vpack.c.b16 %v3371, %v3366
      %v3432 = vpack.c.b16 %v3372, %v3367
      %v3433 = vpack.c.b16 %v3373, %v3368
      %3494 = vmatprep.subr.bf16.mxu0 %v3410
      %3495 = vmatpush1.bf16.msra.mxu0 %v3409
      %3496 = vmatprep.subr.bf16.mxu0 %v3405
      %3497 = vmatpush1.bf16.msra.mxu0 %v3404
      %3498 = vmatprep.subr.bf16.mxu0 %v3400
      %3499 = vmatpush1.bf16.msra.mxu0 %v3399
      %3500 = vmatprep.subr.bf16.mxu0 %v3395
      %3501 = vmatpush1.bf16.msra.mxu0 %v3394
      %3502 = vmatprep.subr.bf16.mxu0 %v3390
      %3503 = vmatpush1.bf16.msra.mxu0 %v3389
      %3504 = vmatprep.subr.bf16.mxu0 %v3385
      %3505 = vmatpush1.bf16.msra.mxu0 %v3384
      %3506 = vmatprep.subr.bf16.mxu0 %v3380
      %3507 = vmatpush1.bf16.msra.mxu0 %v3379
      %3508 = vmatprep.subr.bf16.mxu0 %v3375
      %3509 = vmatpush1.bf16.msra.mxu0 %v3374
      %3510 = vmatprep.subr.bf16.mxu0 0
      %3511 = vmatpush2.bf16.msra.mxu0 0
      %3512 = vmatprep.subr.bf16.mxu0 0
      %3513 = vmatpush2.bf16.msra.mxu0 0
      %3514 = vmatprep.subr.bf16.mxu0 0
      %3515 = vmatpush2.bf16.msra.mxu0 0
      %3516 = vmatprep.subr.bf16.mxu0 0
      %3517 = vmatpush2.bf16.msra.mxu0 0
      %3518 = vmatprep.subr.bf16.mxu0 %v3430
      %3519 = vmatpush2.bf16.msra.mxu0 %v3429
      %3520 = vmatprep.subr.bf16.mxu0 %v3425
      %3521 = vmatpush2.bf16.msra.mxu0 %v3424
      %3522 = vmatprep.subr.bf16.mxu0 %v3420
      %3523 = vmatpush2.bf16.msra.mxu0 %v3419
      %3524 = vmatprep.subr.bf16.mxu0 %v3415
      %3525 = vmatpush2.bf16.msra.mxu0 %v3414
      %3526 = vmatprep.mubr.bf16.mxu0 %v592
      %3527 = vmatmul.mubr.bf16.gmra.mxu0 %v272
      %v3528 = vpop.f32.mrf.mxu0
      %v3529 = vadd.f32 0.0, %v3528
      %v3530 = vpop.f32.mrf.mxu0
      %v3531 = vadd.f32 0.0, %v3530
      %v3532 = vpop.f32.mrf.mxu0
      %v3533 = vadd.f32 0.0, %v3532
      %v3534 = vpop.f32.mrf.mxu0
      %v3535 = vadd.f32 0.0, %v3534
      %3536 = vmatprep.mubr.bf16.mxu0 %v595
      %3537 = vmatmul.mubr.bf16.gmra.mxu0 %v274
      %v3538 = vpop.f32.mrf.mxu0
      %v3539 = vadd.f32 0.0, %v3538
      %v3540 = vpop.f32.mrf.mxu0
      %v3541 = vadd.f32 0.0, %v3540
      %v3542 = vpop.f32.mrf.mxu0
      %v3543 = vadd.f32 0.0, %v3542
      %v3544 = vpop.f32.mrf.mxu0
      %v3545 = vadd.f32 0.0, %v3544
      %3546 = vdwg.mxu0
      %3547 = vmatprep.subr.bf16.mxu0 %v3412
      %3548 = vmatpush1.bf16.msra.mxu0 %v3411
      %3549 = vmatprep.subr.bf16.mxu0 %v3407
      %3550 = vmatpush1.bf16.msra.mxu0 %v3406
      %3551 = vmatprep.subr.bf16.mxu0 %v3402
      %3552 = vmatpush1.bf16.msra.mxu0 %v3401
      %3553 = vmatprep.subr.bf16.mxu0 %v3397
      %3554 = vmatpush1.bf16.msra.mxu0 %v3396
      %3555 = vmatprep.subr.bf16.mxu0 %v3392
      %3556 = vmatpush1.bf16.msra.mxu0 %v3391
      %3557 = vmatprep.subr.bf16.mxu0 %v3387
      %3558 = vmatpush1.bf16.msra.mxu0 %v3386
      %3559 = vmatprep.subr.bf16.mxu0 %v3382
      %3560 = vmatpush1.bf16.msra.mxu0 %v3381
      %3561 = vmatprep.subr.bf16.mxu0 %v3377
      %3562 = vmatpush1.bf16.msra.mxu0 %v3376
      %3563 = vmatprep.subr.bf16.mxu0 0
      %3564 = vmatpush2.bf16.msra.mxu0 0
      %3565 = vmatprep.subr.bf16.mxu0 0
      %3566 = vmatpush2.bf16.msra.mxu0 0
      %3567 = vmatprep.subr.bf16.mxu0 0
      %3568 = vmatpush2.bf16.msra.mxu0 0
      %3569 = vmatprep.subr.bf16.mxu0 0
      %3570 = vmatpush2.bf16.msra.mxu0 0
      %3571 = vmatprep.subr.bf16.mxu0 %v3432
      %3572 = vmatpush2.bf16.msra.mxu0 %v3431
      %3573 = vmatprep.subr.bf16.mxu0 %v3427
      %3574 = vmatpush2.bf16.msra.mxu0 %v3426
      %3575 = vmatprep.subr.bf16.mxu0 %v3422
      %3576 = vmatpush2.bf16.msra.mxu0 %v3421
      %3577 = vmatprep.subr.bf16.mxu0 %v3417
      %3578 = vmatpush2.bf16.msra.mxu0 %v3416
      %3579 = vmatprep.mubr.bf16.mxu0 %v592
      %3580 = vmatmul.mubr.bf16.gmra.mxu0 %v272
      %v3581 = vpop.f32.mrf.mxu0
      %v3582 = vadd.f32 0.0, %v3581
      %v3583 = vpop.f32.mrf.mxu0
      %v3584 = vadd.f32 0.0, %v3583
      %v3585 = vpop.f32.mrf.mxu0
      %v3586 = vadd.f32 0.0, %v3585
      %v3587 = vpop.f32.mrf.mxu0
      %v3588 = vadd.f32 0.0, %v3587
      %3589 = vmatprep.mubr.bf16.mxu0 %v595
      %3590 = vmatmul.mubr.bf16.gmra.mxu0 %v274
      %v3591 = vpop.f32.mrf.mxu0
      %v3592 = vadd.f32 0.0, %v3591
      %v3593 = vpop.f32.mrf.mxu0
      %v3594 = vadd.f32 0.0, %v3593
      %v3595 = vpop.f32.mrf.mxu0
      %v3596 = vadd.f32 0.0, %v3595
      %v3597 = vpop.f32.mrf.mxu0
      %v3598 = vadd.f32 0.0, %v3597
      %3599 = vdwg.mxu0
      %3600 = vmatprep.subr.bf16.mxu0 0
      %3601 = vmatpush1.bf16.msra.mxu0 %v3413
      %3602 = vmatprep.subr.bf16.mxu0 0
      %3603 = vmatpush1.bf16.msra.mxu0 %v3408
      %3604 = vmatprep.subr.bf16.mxu0 0
      %3605 = vmatpush1.bf16.msra.mxu0 %v3403
      %3606 = vmatprep.subr.bf16.mxu0 0
      %3607 = vmatpush1.bf16.msra.mxu0 %v3398
      %3608 = vmatprep.subr.bf16.mxu0 0
      %3609 = vmatpush1.bf16.msra.mxu0 %v3393
      %3610 = vmatprep.subr.bf16.mxu0 0
      %3611 = vmatpush1.bf16.msra.mxu0 %v3388
      %3612 = vmatprep.subr.bf16.mxu0 0
      %3613 = vmatpush1.bf16.msra.mxu0 %v3383
      %3614 = vmatprep.subr.bf16.mxu0 0
      %3615 = vmatpush1.bf16.msra.mxu0 %v3378
      %3616 = vmatprep.subr.bf16.mxu0 0
      %3617 = vmatpush2.bf16.msra.mxu0 0
      %3618 = vmatprep.subr.bf16.mxu0 0
      %3619 = vmatpush2.bf16.msra.mxu0 0
      %3620 = vmatprep.subr.bf16.mxu0 0
      %3621 = vmatpush2.bf16.msra.mxu0 0
      %3622 = vmatprep.subr.bf16.mxu0 0
      %3623 = vmatpush2.bf16.msra.mxu0 0
      %3624 = vmatprep.subr.bf16.mxu0 0
      %3625 = vmatpush2.bf16.msra.mxu0 %v3433
      %3626 = vmatprep.subr.bf16.mxu0 0
      %3627 = vmatpush2.bf16.msra.mxu0 %v3428
      %3628 = vmatprep.subr.bf16.mxu0 0
      %3629 = vmatpush2.bf16.msra.mxu0 %v3423
      %3630 = vmatprep.subr.bf16.mxu0 0
      %3631 = vmatpush2.bf16.msra.mxu0 %v3418
      %3632 = vmatprep.mubr.bf16.mxu0 %v592
      %3633 = vmatmul.mubr.bf16.gmra.mxu0 %v272
      %v3634 = vpop.f32.mrf.mxu0
      %v3635 = vadd.f32 0.0, %v3634
      %v3636 = vpop.f32.mrf.mxu0
      %v3637 = vpop.f32.mrf.mxu0
      %v3638 = vadd.f32 0.0, %v3637
      %v3639 = vpop.f32.mrf.mxu0
      %3640 = vmatprep.mubr.bf16.mxu0 %v595
      %3641 = vmatmul.mubr.bf16.gmra.mxu0 %v274
      %v3642 = vpop.f32.mrf.mxu0
      %v3643 = vadd.f32 0.0, %v3642
      %v3644 = vpop.f32.mrf.mxu0
      %v3645 = vpop.f32.mrf.mxu0
      %v3646 = vadd.f32 0.0, %v3645
      %v3647 = vpop.f32.mrf.mxu0
      %3648 = vdwg.mxu0
      %v3649 = vmax.f32 %v2989, %v3529
      %v3650 = vmax.f32 %v2991, %v3531
      %v3651 = vmax.f32 %v3042, %v3582
      %v3652 = vmax.f32 %v3044, %v3584
      %v3653 = vmax.f32 %v3095, %v3635
      %v3654 = vmax.f32 %v2993, %v3533
      %v3655 = vmax.f32 %v2995, %v3535
      %v3656 = vmax.f32 %v3046, %v3586
      %v3657 = vmax.f32 %v3048, %v3588
      %v3658 = vmax.f32 %v3098, %v3638
      %v3659 = vmax.f32 %v2999, %v3539
      %v3660 = vmax.f32 %v3001, %v3541
      %v3661 = vmax.f32 %v3052, %v3592
      %v3662 = vmax.f32 %v3054, %v3594
      %v3663 = vmax.f32 %v3103, %v3643
      %v3664 = vmax.f32 %v3003, %v3543
      %v3665 = vmax.f32 %v3005, %v3545
      %v3666 = vmax.f32 %v3056, %v3596
      %v3667 = vmax.f32 %v3058, %v3598
      %v3668 = vmax.f32 %v3106, %v3646
      %s3669 = scalar_lea.vmem %s170, 2880
      %v3670 = vld [vmem:[%s3669] sm:$0xff]
      %v3671 = vld [vmem:[%s3669 + $0x8] sm:$0xff]
      %v3672 = vld [vmem:[%s3669 + $0x10] sm:$0xf]
      %v3673 = vld [vmem:[%s3669 + $0x14] sm:$0xff]
      %v3674 = vld [vmem:[%s3669 + $0x1c] sm:$0xff]
      %v3675 = vld [vmem:[%s3669 + $0x24] sm:$0xf]
      %v3676 = vld [vmem:[%s3669 + $0x28] sm:$0xff]
      %v3677 = vld [vmem:[%s3669 + $0x30] sm:$0xff]
      %v3678 = vld [vmem:[%s3669 + $0x38] sm:$0xf]
      %v3679 = vld [vmem:[%s3669 + $0x3c] sm:$0xff]
      %v3680 = vld [vmem:[%s3669 + $0x44] sm:$0xff]
      %v3681 = vld [vmem:[%s3669 + $0x4c] sm:$0xf]
      %v3682 = vld [vmem:[%s3669 + $0x50] sm:$0xff]
      %v3683 = vld [vmem:[%s3669 + $0x58] sm:$0xff]
      %v3684 = vld [vmem:[%s3669 + $0x60] sm:$0xf]
      %v3685 = vld [vmem:[%s3669 + $0x64] sm:$0xff]
      %v3686 = vld [vmem:[%s3669 + $0x6c] sm:$0xff]
      %v3687 = vld [vmem:[%s3669 + $0x74] sm:$0xf]
      %v3688 = vld [vmem:[%s3669 + $0x78] sm:$0xff]
      %v3689 = vld [vmem:[%s3669 + $0x80] sm:$0xff]
      %v3690 = vld [vmem:[%s3669 + $0x88] sm:$0xf]
      %v3691 = vld [vmem:[%s3669 + $0x8c] sm:$0xff]
      %v3692 = vld [vmem:[%s3669 + $0x94] sm:$0xff]
      %v3693 = vld [vmem:[%s3669 + $0x9c] sm:$0xf]
      %v3694 = vld [vmem:[%s3669 + $0xa0] sm:$0xff]
      %v3695 = vld [vmem:[%s3669 + $0xa8] sm:$0xff]
      %v3696 = vld [vmem:[%s3669 + $0xb0] sm:$0xf]
      %v3697 = vld [vmem:[%s3669 + $0xb4] sm:$0xff]
      %v3698 = vld [vmem:[%s3669 + $0xbc] sm:$0xff]
      %v3699 = vld [vmem:[%s3669 + $0xc4] sm:$0xf]
      %v3700 = vld [vmem:[%s3669 + $0xc8] sm:$0xff]
      %v3701 = vld [vmem:[%s3669 + $0xd0] sm:$0xff]
      %v3702 = vld [vmem:[%s3669 + $0xd8] sm:$0xf]
      %v3703 = vld [vmem:[%s3669 + $0xdc] sm:$0xff]
      %v3704 = vld [vmem:[%s3669 + $0xe4] sm:$0xff]
      %v3705 = vld [vmem:[%s3669 + $0xec] sm:$0xf]
      %v3706 = vld [vmem:[%s3669 + $0xf0] sm:$0xff]
      %v3707 = vld [vmem:[%s3669 + $0xf8] sm:$0xff]
      %v3708 = vld [vmem:[%s3669 + $0x100] sm:$0xf]
      %v3709 = vld [vmem:[%s3669 + $0x104] sm:$0xff]
      %v3710 = vld [vmem:[%s3669 + $0x10c] sm:$0xff]
      %v3711 = vld [vmem:[%s3669 + $0x114] sm:$0xf]
      %v3712 = vld [vmem:[%s3669 + $0x118] sm:$0xff]
      %v3713 = vld [vmem:[%s3669 + $0x120] sm:$0xff]
      %v3714 = vld [vmem:[%s3669 + $0x128] sm:$0xf]
      %v3715 = vld [vmem:[%s3669 + $0x12c] sm:$0xff]
      %v3716 = vld [vmem:[%s3669 + $0x134] sm:$0xff]
      %v3717 = vld [vmem:[%s3669 + $0x13c] sm:$0xf]
      %v3718 = vld [vmem:[%s3669 + $0x140] sm:$0xff]
      %v3719 = vld [vmem:[%s3669 + $0x148] sm:$0xff]
      %v3720 = vld [vmem:[%s3669 + $0x150] sm:$0xf]
      %v3721 = vld [vmem:[%s3669 + $0x154] sm:$0xff]
      %v3722 = vld [vmem:[%s3669 + $0x15c] sm:$0xff]
      %v3723 = vld [vmem:[%s3669 + $0x164] sm:$0xf]
      %v3724 = vld [vmem:[%s3669 + $0x168] sm:$0xff]
      %v3725 = vld [vmem:[%s3669 + $0x170] sm:$0xff]
      %v3726 = vld [vmem:[%s3669 + $0x178] sm:$0xf]
      %v3727 = vld [vmem:[%s3669 + $0x17c] sm:$0xff]
      %v3728 = vld [vmem:[%s3669 + $0x184] sm:$0xff]
      %v3729 = vld [vmem:[%s3669 + $0x18c] sm:$0xf]
      %v3730 = vld [vmem:[%s3669 + $0x190] sm:$0xff]
      %v3731 = vld [vmem:[%s3669 + $0x198] sm:$0xff]
      %v3732 = vld [vmem:[%s3669 + $0x1a0] sm:$0xf]
      %v3733 = vld [vmem:[%s3669 + $0x1a4] sm:$0xff]
      %v3734 = vld [vmem:[%s3669 + $0x1ac] sm:$0xff]
      %v3735 = vld [vmem:[%s3669 + $0x1b4] sm:$0xf]
      %v3736 = vld [vmem:[%s3669 + $0x1b8] sm:$0xff]
      %v3737 = vld [vmem:[%s3669 + $0x1c0] sm:$0xff]
      %v3738 = vld [vmem:[%s3669 + $0x1c8] sm:$0xf]
      %v3739 = vld [vmem:[%s3669 + $0x1cc] sm:$0xff]
      %v3740 = vld [vmem:[%s3669 + $0x1d4] sm:$0xff]
      %v3741 = vld [vmem:[%s3669 + $0x1dc] sm:$0xf]
      %v3814 = vunpack.c.l.b16 %v3670
      %v3815 = vunpack.c.h.b16 %v3670
      %v3816 = vunpack.c.l.b16 %v3671
      %v3817 = vunpack.c.h.b16 %v3671
      %v3818 = vunpack.c.l.b16 %v3672
      %v3819 = vunpack.c.l.b16 %v3673
      %v3820 = vunpack.c.h.b16 %v3673
      %v3821 = vunpack.c.l.b16 %v3674
      %v3822 = vunpack.c.h.b16 %v3674
      %v3823 = vunpack.c.l.b16 %v3675
      %v3824 = vunpack.c.l.b16 %v3676
      %v3825 = vunpack.c.h.b16 %v3676
      %v3826 = vunpack.c.l.b16 %v3677
      %v3827 = vunpack.c.h.b16 %v3677
      %v3828 = vunpack.c.l.b16 %v3678
      %v3829 = vunpack.c.l.b16 %v3679
      %v3830 = vunpack.c.h.b16 %v3679
      %v3831 = vunpack.c.l.b16 %v3680
      %v3832 = vunpack.c.h.b16 %v3680
      %v3833 = vunpack.c.l.b16 %v3681
      %v3834 = vunpack.c.l.b16 %v3682
      %v3835 = vunpack.c.h.b16 %v3682
      %v3836 = vunpack.c.l.b16 %v3683
      %v3837 = vunpack.c.h.b16 %v3683
      %v3838 = vunpack.c.l.b16 %v3684
      %v3839 = vunpack.c.l.b16 %v3685
      %v3840 = vunpack.c.h.b16 %v3685
      %v3841 = vunpack.c.l.b16 %v3686
      %v3842 = vunpack.c.h.b16 %v3686
      %v3843 = vunpack.c.l.b16 %v3687
      %v3844 = vunpack.c.l.b16 %v3688
      %v3845 = vunpack.c.h.b16 %v3688
      %v3846 = vunpack.c.l.b16 %v3689
      %v3847 = vunpack.c.h.b16 %v3689
      %v3848 = vunpack.c.l.b16 %v3690
      %v3849 = vunpack.c.l.b16 %v3691
      %v3850 = vunpack.c.h.b16 %v3691
      %v3851 = vunpack.c.l.b16 %v3692
      %v3852 = vunpack.c.h.b16 %v3692
      %v3853 = vunpack.c.l.b16 %v3693
      %v3854 = vunpack.c.l.b16 %v3694
      %v3855 = vunpack.c.h.b16 %v3694
      %v3856 = vunpack.c.l.b16 %v3695
      %v3857 = vunpack.c.h.b16 %v3695
      %v3858 = vunpack.c.l.b16 %v3696
      %v3859 = vunpack.c.l.b16 %v3697
      %v3860 = vunpack.c.h.b16 %v3697
      %v3861 = vunpack.c.l.b16 %v3698
      %v3862 = vunpack.c.h.b16 %v3698
      %v3863 = vunpack.c.l.b16 %v3699
      %v3864 = vunpack.c.l.b16 %v3700
      %v3865 = vunpack.c.h.b16 %v3700
      %v3866 = vunpack.c.l.b16 %v3701
      %v3867 = vunpack.c.h.b16 %v3701
      %v3868 = vunpack.c.l.b16 %v3702
      %v3869 = vunpack.c.l.b16 %v3703
      %v3870 = vunpack.c.h.b16 %v3703
      %v3871 = vunpack.c.l.b16 %v3704
      %v3872 = vunpack.c.h.b16 %v3704
      %v3873 = vunpack.c.l.b16 %v3705
      %v3874 = vunpack.c.l.b16 %v3706
      %v3875 = vunpack.c.h.b16 %v3706
      %v3876 = vunpack.c.l.b16 %v3707
      %v3877 = vunpack.c.h.b16 %v3707
      %v3878 = vunpack.c.l.b16 %v3708
      %v3879 = vunpack.c.l.b16 %v3709
      %v3880 = vunpack.c.h.b16 %v3709
      %v3881 = vunpack.c.l.b16 %v3710
      %v3882 = vunpack.c.h.b16 %v3710
      %v3883 = vunpack.c.l.b16 %v3711
      %v3884 = vunpack.c.l.b16 %v3712
      %v3885 = vunpack.c.h.b16 %v3712
      %v3886 = vunpack.c.l.b16 %v3713
      %v3887 = vunpack.c.h.b16 %v3713
      %v3888 = vunpack.c.l.b16 %v3714
      %v3889 = vunpack.c.l.b16 %v3715
      %v3890 = vunpack.c.h.b16 %v3715
      %v3891 = vunpack.c.l.b16 %v3716
      %v3892 = vunpack.c.h.b16 %v3716
      %v3893 = vunpack.c.l.b16 %v3717
      %v3894 = vunpack.c.l.b16 %v3718
      %v3895 = vunpack.c.h.b16 %v3718
      %v3896 = vunpack.c.l.b16 %v3719
      %v3897 = vunpack.c.h.b16 %v3719
      %v3898 = vunpack.c.l.b16 %v3720
      %v3899 = vunpack.c.l.b16 %v3721
      %v3900 = vunpack.c.h.b16 %v3721
      %v3901 = vunpack.c.l.b16 %v3722
      %v3902 = vunpack.c.h.b16 %v3722
      %v3903 = vunpack.c.l.b16 %v3723
      %v3904 = vunpack.c.l.b16 %v3724
      %v3905 = vunpack.c.h.b16 %v3724
      %v3906 = vunpack.c.l.b16 %v3725
      %v3907 = vunpack.c.h.b16 %v3725
      %v3908 = vunpack.c.l.b16 %v3726
      %v3909 = vunpack.c.l.b16 %v3727
      %v3910 = vunpack.c.h.b16 %v3727
      %v3911 = vunpack.c.l.b16 %v3728
      %v3912 = vunpack.c.h.b16 %v3728
      %v3913 = vunpack.c.l.b16 %v3729
      %v3914 = vunpack.c.l.b16 %v3730
      %v3915 = vunpack.c.h.b16 %v3730
      %v3916 = vunpack.c.l.b16 %v3731
      %v3917 = vunpack.c.h.b16 %v3731
      %v3918 = vunpack.c.l.b16 %v3732
      %v3919 = vunpack.c.l.b16 %v3733
      %v3920 = vunpack.c.h.b16 %v3733
      %v3921 = vunpack.c.l.b16 %v3734
      %v3922 = vunpack.c.h.b16 %v3734
      %v3923 = vunpack.c.l.b16 %v3735
      %v3924 = vunpack.c.l.b16 %v3736
      %v3925 = vunpack.c.h.b16 %v3736
      %v3926 = vunpack.c.l.b16 %v3737
      %v3927 = vunpack.c.h.b16 %v3737
      %v3928 = vunpack.c.l.b16 %v3738
      %v3929 = vunpack.c.l.b16 %v3739
      %v3930 = vunpack.c.h.b16 %v3739
      %v3931 = vunpack.c.l.b16 %v3740
      %v3932 = vunpack.c.h.b16 %v3740
      %v3933 = vunpack.c.l.b16 %v3741
      %v3934 = vpack.c.b16 %v3819, %v3814
      %v3935 = vpack.c.b16 %v3820, %v3815
      %v3936 = vpack.c.b16 %v3821, %v3816
      %v3937 = vpack.c.b16 %v3822, %v3817
      %v3938 = vpack.c.b16 %v3823, %v3818
      %v3939 = vpack.c.b16 %v3829, %v3824
      %v3940 = vpack.c.b16 %v3830, %v3825
      %v3941 = vpack.c.b16 %v3831, %v3826
      %v3942 = vpack.c.b16 %v3832, %v3827
      %v3943 = vpack.c.b16 %v3833, %v3828
      %v3944 = vpack.c.b16 %v3839, %v3834
      %v3945 = vpack.c.b16 %v3840, %v3835
      %v3946 = vpack.c.b16 %v3841, %v3836
      %v3947 = vpack.c.b16 %v3842, %v3837
      %v3948 = vpack.c.b16 %v3843, %v3838
      %v3949 = vpack.c.b16 %v3849, %v3844
      %v3950 = vpack.c.b16 %v3850, %v3845
      %v3951 = vpack.c.b16 %v3851, %v3846
      %v3952 = vpack.c.b16 %v3852, %v3847
      %v3953 = vpack.c.b16 %v3853, %v3848
      %v3954 = vpack.c.b16 %v3859, %v3854
      %v3955 = vpack.c.b16 %v3860, %v3855
      %v3956 = vpack.c.b16 %v3861, %v3856
      %v3957 = vpack.c.b16 %v3862, %v3857
      %v3958 = vpack.c.b16 %v3863, %v3858
      %v3959 = vpack.c.b16 %v3869, %v3864
      %v3960 = vpack.c.b16 %v3870, %v3865
      %v3961 = vpack.c.b16 %v3871, %v3866
      %v3962 = vpack.c.b16 %v3872, %v3867
      %v3963 = vpack.c.b16 %v3873, %v3868
      %v3964 = vpack.c.b16 %v3879, %v3874
      %v3965 = vpack.c.b16 %v3880, %v3875
      %v3966 = vpack.c.b16 %v3881, %v3876
      %v3967 = vpack.c.b16 %v3882, %v3877
      %v3968 = vpack.c.b16 %v3883, %v3878
      %v3969 = vpack.c.b16 %v3889, %v3884
      %v3970 = vpack.c.b16 %v3890, %v3885
      %v3971 = vpack.c.b16 %v3891, %v3886
      %v3972 = vpack.c.b16 %v3892, %v3887
      %v3973 = vpack.c.b16 %v3893, %v3888
      %v3974 = vpack.c.b16 %v3899, %v3894
      %v3975 = vpack.c.b16 %v3900, %v3895
      %v3976 = vpack.c.b16 %v3901, %v3896
      %v3977 = vpack.c.b16 %v3902, %v3897
      %v3978 = vpack.c.b16 %v3903, %v3898
      %v3979 = vpack.c.b16 %v3909, %v3904
      %v3980 = vpack.c.b16 %v3910, %v3905
      %v3981 = vpack.c.b16 %v3911, %v3906
      %v3982 = vpack.c.b16 %v3912, %v3907
      %v3983 = vpack.c.b16 %v3913, %v3908
      %v3984 = vpack.c.b16 %v3919, %v3914
      %v3985 = vpack.c.b16 %v3920, %v3915
      %v3986 = vpack.c.b16 %v3921, %v3916
      %v3987 = vpack.c.b16 %v3922, %v3917
      %v3988 = vpack.c.b16 %v3923, %v3918
      %v3989 = vpack.c.b16 %v3929, %v3924
      %v3990 = vpack.c.b16 %v3930, %v3925
      %v3991 = vpack.c.b16 %v3931, %v3926
      %v3992 = vpack.c.b16 %v3932, %v3927
      %v3993 = vpack.c.b16 %v3933, %v3928
      %4054 = vmatprep.subr.bf16.mxu0 %v3970
      %4055 = vmatpush1.bf16.msra.mxu0 %v3969
      %4056 = vmatprep.subr.bf16.mxu0 %v3965
      %4057 = vmatpush1.bf16.msra.mxu0 %v3964
      %4058 = vmatprep.subr.bf16.mxu0 %v3960
      %4059 = vmatpush1.bf16.msra.mxu0 %v3959
      %4060 = vmatprep.subr.bf16.mxu0 %v3955
      %4061 = vmatpush1.bf16.msra.mxu0 %v3954
      %4062 = vmatprep.subr.bf16.mxu0 %v3950
      %4063 = vmatpush1.bf16.msra.mxu0 %v3949
      %4064 = vmatprep.subr.bf16.mxu0 %v3945
      %4065 = vmatpush1.bf16.msra.mxu0 %v3944
      %4066 = vmatprep.subr.bf16.mxu0 %v3940
      %4067 = vmatpush1.bf16.msra.mxu0 %v3939
      %4068 = vmatprep.subr.bf16.mxu0 %v3935
      %4069 = vmatpush1.bf16.msra.mxu0 %v3934
      %4070 = vmatprep.subr.bf16.mxu0 0
      %4071 = vmatpush2.bf16.msra.mxu0 0
      %4072 = vmatprep.subr.bf16.mxu0 0
      %4073 = vmatpush2.bf16.msra.mxu0 0
      %4074 = vmatprep.subr.bf16.mxu0 0
      %4075 = vmatpush2.bf16.msra.mxu0 0
      %4076 = vmatprep.subr.bf16.mxu0 0
      %4077 = vmatpush2.bf16.msra.mxu0 0
      %4078 = vmatprep.subr.bf16.mxu0 %v3990
      %4079 = vmatpush2.bf16.msra.mxu0 %v3989
      %4080 = vmatprep.subr.bf16.mxu0 %v3985
      %4081 = vmatpush2.bf16.msra.mxu0 %v3984
      %4082 = vmatprep.subr.bf16.mxu0 %v3980
      %4083 = vmatpush2.bf16.msra.mxu0 %v3979
      %4084 = vmatprep.subr.bf16.mxu0 %v3975
      %4085 = vmatpush2.bf16.msra.mxu0 %v3974
      %4086 = vmatprep.mubr.bf16.mxu0 %v592
      %4087 = vmatmul.mubr.bf16.gmra.mxu0 %v272
      %v4088 = vpop.f32.mrf.mxu0
      %v4089 = vadd.f32 0.0, %v4088
      %v4090 = vpop.f32.mrf.mxu0
      %v4091 = vadd.f32 0.0, %v4090
      %v4092 = vpop.f32.mrf.mxu0
      %v4093 = vadd.f32 0.0, %v4092
      %v4094 = vpop.f32.mrf.mxu0
      %v4095 = vadd.f32 0.0, %v4094
      %4096 = vmatprep.mubr.bf16.mxu0 %v595
      %4097 = vmatmul.mubr.bf16.gmra.mxu0 %v274
      %v4098 = vpop.f32.mrf.mxu0
      %v4099 = vadd.f32 0.0, %v4098
      %v4100 = vpop.f32.mrf.mxu0
      %v4101 = vadd.f32 0.0, %v4100
      %v4102 = vpop.f32.mrf.mxu0
      %v4103 = vadd.f32 0.0, %v4102
      %v4104 = vpop.f32.mrf.mxu0
      %v4105 = vadd.f32 0.0, %v4104
      %4106 = vdwg.mxu0
      %4107 = vmatprep.subr.bf16.mxu0 %v3972
      %4108 = vmatpush1.bf16.msra.mxu0 %v3971
      %4109 = vmatprep.subr.bf16.mxu0 %v3967
      %4110 = vmatpush1.bf16.msra.mxu0 %v3966
      %4111 = vmatprep.subr.bf16.mxu0 %v3962
      %4112 = vmatpush1.bf16.msra.mxu0 %v3961
      %4113 = vmatprep.subr.bf16.mxu0 %v3957
      %4114 = vmatpush1.bf16.msra.mxu0 %v3956
      %4115 = vmatprep.subr.bf16.mxu0 %v3952
      %4116 = vmatpush1.bf16.msra.mxu0 %v3951
      %4117 = vmatprep.subr.bf16.mxu0 %v3947
      %4118 = vmatpush1.bf16.msra.mxu0 %v3946
      %4119 = vmatprep.subr.bf16.mxu0 %v3942
      %4120 = vmatpush1.bf16.msra.mxu0 %v3941
      %4121 = vmatprep.subr.bf16.mxu0 %v3937
      %4122 = vmatpush1.bf16.msra.mxu0 %v3936
      %4123 = vmatprep.subr.bf16.mxu0 0
      %4124 = vmatpush2.bf16.msra.mxu0 0
      %4125 = vmatprep.subr.bf16.mxu0 0
      %4126 = vmatpush2.bf16.msra.mxu0 0
      %4127 = vmatprep.subr.bf16.mxu0 0
      %4128 = vmatpush2.bf16.msra.mxu0 0
      %4129 = vmatprep.subr.bf16.mxu0 0
      %4130 = vmatpush2.bf16.msra.mxu0 0
      %4131 = vmatprep.subr.bf16.mxu0 %v3992
      %4132 = vmatpush2.bf16.msra.mxu0 %v3991
      %4133 = vmatprep.subr.bf16.mxu0 %v3987
      %4134 = vmatpush2.bf16.msra.mxu0 %v3986
      %4135 = vmatprep.subr.bf16.mxu0 %v3982
      %4136 = vmatpush2.bf16.msra.mxu0 %v3981
      %4137 = vmatprep.subr.bf16.mxu0 %v3977
      %4138 = vmatpush2.bf16.msra.mxu0 %v3976
      %4139 = vmatprep.mubr.bf16.mxu0 %v592
      %4140 = vmatmul.mubr.bf16.gmra.mxu0 %v272
      %v4141 = vpop.f32.mrf.mxu0
      %v4142 = vadd.f32 0.0, %v4141
      %v4143 = vpop.f32.mrf.mxu0
      %v4144 = vadd.f32 0.0, %v4143
      %v4145 = vpop.f32.mrf.mxu0
      %v4146 = vadd.f32 0.0, %v4145
      %v4147 = vpop.f32.mrf.mxu0
      %v4148 = vadd.f32 0.0, %v4147
      %4149 = vmatprep.mubr.bf16.mxu0 %v595
      %4150 = vmatmul.mubr.bf16.gmra.mxu0 %v274
      %v4151 = vpop.f32.mrf.mxu0
      %v4152 = vadd.f32 0.0, %v4151
      %v4153 = vpop.f32.mrf.mxu0
      %v4154 = vadd.f32 0.0, %v4153
      %v4155 = vpop.f32.mrf.mxu0
      %v4156 = vadd.f32 0.0, %v4155
      %v4157 = vpop.f32.mrf.mxu0
      %v4158 = vadd.f32 0.0, %v4157
      %4159 = vdwg.mxu0
      %4160 = vmatprep.subr.bf16.mxu0 0
      %4161 = vmatpush1.bf16.msra.mxu0 %v3973
      %4162 = vmatprep.subr.bf16.mxu0 0
      %4163 = vmatpush1.bf16.msra.mxu0 %v3968
      %4164 = vmatprep.subr.bf16.mxu0 0
      %4165 = vmatpush1.bf16.msra.mxu0 %v3963
      %4166 = vmatprep.subr.bf16.mxu0 0
      %4167 = vmatpush1.bf16.msra.mxu0 %v3958
      %4168 = vmatprep.subr.bf16.mxu0 0
      %4169 = vmatpush1.bf16.msra.mxu0 %v3953
      %4170 = vmatprep.subr.bf16.mxu0 0
      %4171 = vmatpush1.bf16.msra.mxu0 %v3948
      %4172 = vmatprep.subr.bf16.mxu0 0
      %4173 = vmatpush1.bf16.msra.mxu0 %v3943
      %4174 = vmatprep.subr.bf16.mxu0 0
      %4175 = vmatpush1.bf16.msra.mxu0 %v3938
      %4176 = vmatprep.subr.bf16.mxu0 0
      %4177 = vmatpush2.bf16.msra.mxu0 0
      %4178 = vmatprep.subr.bf16.mxu0 0
      %4179 = vmatpush2.bf16.msra.mxu0 0
      %4180 = vmatprep.subr.bf16.mxu0 0
      %4181 = vmatpush2.bf16.msra.mxu0 0
      %4182 = vmatprep.subr.bf16.mxu0 0
      %4183 = vmatpush2.bf16.msra.mxu0 0
      %4184 = vmatprep.subr.bf16.mxu0 0
      %4185 = vmatpush2.bf16.msra.mxu0 %v3993
      %4186 = vmatprep.subr.bf16.mxu0 0
      %4187 = vmatpush2.bf16.msra.mxu0 %v3988
      %4188 = vmatprep.subr.bf16.mxu0 0
      %4189 = vmatpush2.bf16.msra.mxu0 %v3983
      %4190 = vmatprep.subr.bf16.mxu0 0
      %4191 = vmatpush2.bf16.msra.mxu0 %v3978
      %4192 = vmatprep.mubr.bf16.mxu0 %v592
      %4193 = vmatmul.mubr.bf16.gmra.mxu0 %v272
      %v4194 = vpop.f32.mrf.mxu0
      %v4195 = vadd.f32 0.0, %v4194
      %v4196 = vpop.f32.mrf.mxu0
      %v4197 = vpop.f32.mrf.mxu0
      %v4198 = vadd.f32 0.0, %v4197
      %v4199 = vpop.f32.mrf.mxu0
      %4200 = vmatprep.mubr.bf16.mxu0 %v595
      %4201 = vmatmul.mubr.bf16.gmra.mxu0 %v274
      %v4202 = vpop.f32.mrf.mxu0
      %v4203 = vadd.f32 0.0, %v4202
      %v4204 = vpop.f32.mrf.mxu0
      %v4205 = vpop.f32.mrf.mxu0
      %v4206 = vadd.f32 0.0, %v4205
      %v4207 = vpop.f32.mrf.mxu0
      %4208 = vdwg.mxu0
      %v4209 = vmax.f32 %v3649, %v4089
      %v4210 = vmax.f32 %v3650, %v4091
      %v4211 = vmax.f32 %v3651, %v4142
      %v4212 = vmax.f32 %v3652, %v4144
      %v4213 = vmax.f32 %v3653, %v4195
      %v4214 = vmax.f32 %v3654, %v4093
      %v4215 = vmax.f32 %v3655, %v4095
      %v4216 = vmax.f32 %v3656, %v4146
      %v4217 = vmax.f32 %v3657, %v4148
      %v4218 = vmax.f32 %v3658, %v4198
      %v4219 = vmax.f32 %v3659, %v4099
      %v4220 = vmax.f32 %v3660, %v4101
      %v4221 = vmax.f32 %v3661, %v4152
      %v4222 = vmax.f32 %v3662, %v4154
      %v4223 = vmax.f32 %v3663, %v4203
      %v4224 = vmax.f32 %v3664, %v4103
      %v4225 = vmax.f32 %v3665, %v4105
      %v4226 = vmax.f32 %v3666, %v4156
      %v4227 = vmax.f32 %v3667, %v4158
      %v4228 = vmax.f32 %v3668, %v4206
      %s4229 = scalar_lea.vmem %s170, 3360
      %v4230 = vld [vmem:[%s4229] sm:$0xff]
      %v4231 = vld [vmem:[%s4229 + $0x8] sm:$0xff]
      %v4232 = vld [vmem:[%s4229 + $0x10] sm:$0xf]
      %v4233 = vld [vmem:[%s4229 + $0x14] sm:$0xff]
      %v4234 = vld [vmem:[%s4229 + $0x1c] sm:$0xff]
      %v4235 = vld [vmem:[%s4229 + $0x24] sm:$0xf]
      %v4236 = vld [vmem:[%s4229 + $0x28] sm:$0xff]
      %v4237 = vld [vmem:[%s4229 + $0x30] sm:$0xff]
      %v4238 = vld [vmem:[%s4229 + $0x38] sm:$0xf]
      %v4239 = vld [vmem:[%s4229 + $0x3c] sm:$0xff]
      %v4240 = vld [vmem:[%s4229 + $0x44] sm:$0xff]
      %v4241 = vld [vmem:[%s4229 + $0x4c] sm:$0xf]
      %v4242 = vld [vmem:[%s4229 + $0x50] sm:$0xff]
      %v4243 = vld [vmem:[%s4229 + $0x58] sm:$0xff]
      %v4244 = vld [vmem:[%s4229 + $0x60] sm:$0xf]
      %v4245 = vld [vmem:[%s4229 + $0x64] sm:$0xff]
      %v4246 = vld [vmem:[%s4229 + $0x6c] sm:$0xff]
      %v4247 = vld [vmem:[%s4229 + $0x74] sm:$0xf]
      %v4248 = vld [vmem:[%s4229 + $0x78] sm:$0xff]
      %v4249 = vld [vmem:[%s4229 + $0x80] sm:$0xff]
      %v4250 = vld [vmem:[%s4229 + $0x88] sm:$0xf]
      %v4251 = vld [vmem:[%s4229 + $0x8c] sm:$0xff]
      %v4252 = vld [vmem:[%s4229 + $0x94] sm:$0xff]
      %v4253 = vld [vmem:[%s4229 + $0x9c] sm:$0xf]
      %v4254 = vld [vmem:[%s4229 + $0xa0] sm:$0xff]
      %v4255 = vld [vmem:[%s4229 + $0xa8] sm:$0xff]
      %v4256 = vld [vmem:[%s4229 + $0xb0] sm:$0xf]
      %v4257 = vld [vmem:[%s4229 + $0xb4] sm:$0xff]
      %v4258 = vld [vmem:[%s4229 + $0xbc] sm:$0xff]
      %v4259 = vld [vmem:[%s4229 + $0xc4] sm:$0xf]
      %v4260 = vld [vmem:[%s4229 + $0xc8] sm:$0xff]
      %v4261 = vld [vmem:[%s4229 + $0xd0] sm:$0xff]
      %v4262 = vld [vmem:[%s4229 + $0xd8] sm:$0xf]
      %v4263 = vld [vmem:[%s4229 + $0xdc] sm:$0xff]
      %v4264 = vld [vmem:[%s4229 + $0xe4] sm:$0xff]
      %v4265 = vld [vmem:[%s4229 + $0xec] sm:$0xf]
      %v4266 = vld [vmem:[%s4229 + $0xf0] sm:$0xff]
      %v4267 = vld [vmem:[%s4229 + $0xf8] sm:$0xff]
      %v4268 = vld [vmem:[%s4229 + $0x100] sm:$0xf]
      %v4269 = vld [vmem:[%s4229 + $0x104] sm:$0xff]
      %v4270 = vld [vmem:[%s4229 + $0x10c] sm:$0xff]
      %v4271 = vld [vmem:[%s4229 + $0x114] sm:$0xf]
      %v4272 = vld [vmem:[%s4229 + $0x118] sm:$0xff]
      %v4273 = vld [vmem:[%s4229 + $0x120] sm:$0xff]
      %v4274 = vld [vmem:[%s4229 + $0x128] sm:$0xf]
      %v4275 = vld [vmem:[%s4229 + $0x12c] sm:$0xff]
      %v4276 = vld [vmem:[%s4229 + $0x134] sm:$0xff]
      %v4277 = vld [vmem:[%s4229 + $0x13c] sm:$0xf]
      %v4278 = vld [vmem:[%s4229 + $0x140] sm:$0xff]
      %v4279 = vld [vmem:[%s4229 + $0x148] sm:$0xff]
      %v4280 = vld [vmem:[%s4229 + $0x150] sm:$0xf]
      %v4281 = vld [vmem:[%s4229 + $0x154] sm:$0xff]
      %v4282 = vld [vmem:[%s4229 + $0x15c] sm:$0xff]
      %v4283 = vld [vmem:[%s4229 + $0x164] sm:$0xf]
      %v4284 = vld [vmem:[%s4229 + $0x168] sm:$0xff]
      %v4285 = vld [vmem:[%s4229 + $0x170] sm:$0xff]
      %v4286 = vld [vmem:[%s4229 + $0x178] sm:$0xf]
      %v4287 = vld [vmem:[%s4229 + $0x17c] sm:$0xff]
      %v4288 = vld [vmem:[%s4229 + $0x184] sm:$0xff]
      %v4289 = vld [vmem:[%s4229 + $0x18c] sm:$0xf]
      %v4290 = vld [vmem:[%s4229 + $0x190] sm:$0xff]
      %v4291 = vld [vmem:[%s4229 + $0x198] sm:$0xff]
      %v4292 = vld [vmem:[%s4229 + $0x1a0] sm:$0xf]
      %v4293 = vld [vmem:[%s4229 + $0x1a4] sm:$0xff]
      %v4294 = vld [vmem:[%s4229 + $0x1ac] sm:$0xff]
      %v4295 = vld [vmem:[%s4229 + $0x1b4] sm:$0xf]
      %v4296 = vld [vmem:[%s4229 + $0x1b8] sm:$0xff]
      %v4297 = vld [vmem:[%s4229 + $0x1c0] sm:$0xff]
      %v4298 = vld [vmem:[%s4229 + $0x1c8] sm:$0xf]
      %v4299 = vld [vmem:[%s4229 + $0x1cc] sm:$0xff]
      %v4300 = vld [vmem:[%s4229 + $0x1d4] sm:$0xff]
      %v4301 = vld [vmem:[%s4229 + $0x1dc] sm:$0xf]
      %v4374 = vunpack.c.l.b16 %v4230
      %v4375 = vunpack.c.h.b16 %v4230
      %v4376 = vunpack.c.l.b16 %v4231
      %v4377 = vunpack.c.h.b16 %v4231
      %v4378 = vunpack.c.l.b16 %v4232
      %v4379 = vunpack.c.l.b16 %v4233
      %v4380 = vunpack.c.h.b16 %v4233
      %v4381 = vunpack.c.l.b16 %v4234
      %v4382 = vunpack.c.h.b16 %v4234
      %v4383 = vunpack.c.l.b16 %v4235
      %v4384 = vunpack.c.l.b16 %v4236
      %v4385 = vunpack.c.h.b16 %v4236
      %v4386 = vunpack.c.l.b16 %v4237
      %v4387 = vunpack.c.h.b16 %v4237
      %v4388 = vunpack.c.l.b16 %v4238
      %v4389 = vunpack.c.l.b16 %v4239
      %v4390 = vunpack.c.h.b16 %v4239
      %v4391 = vunpack.c.l.b16 %v4240
      %v4392 = vunpack.c.h.b16 %v4240
      %v4393 = vunpack.c.l.b16 %v4241
      %v4394 = vunpack.c.l.b16 %v4242
      %v4395 = vunpack.c.h.b16 %v4242
      %v4396 = vunpack.c.l.b16 %v4243
      %v4397 = vunpack.c.h.b16 %v4243
      %v4398 = vunpack.c.l.b16 %v4244
      %v4399 = vunpack.c.l.b16 %v4245
      %v4400 = vunpack.c.h.b16 %v4245
      %v4401 = vunpack.c.l.b16 %v4246
      %v4402 = vunpack.c.h.b16 %v4246
      %v4403 = vunpack.c.l.b16 %v4247
      %v4404 = vunpack.c.l.b16 %v4248
      %v4405 = vunpack.c.h.b16 %v4248
      %v4406 = vunpack.c.l.b16 %v4249
      %v4407 = vunpack.c.h.b16 %v4249
      %v4408 = vunpack.c.l.b16 %v4250
      %v4409 = vunpack.c.l.b16 %v4251
      %v4410 = vunpack.c.h.b16 %v4251
      %v4411 = vunpack.c.l.b16 %v4252
      %v4412 = vunpack.c.h.b16 %v4252
      %v4413 = vunpack.c.l.b16 %v4253
      %v4414 = vunpack.c.l.b16 %v4254
      %v4415 = vunpack.c.h.b16 %v4254
      %v4416 = vunpack.c.l.b16 %v4255
      %v4417 = vunpack.c.h.b16 %v4255
      %v4418 = vunpack.c.l.b16 %v4256
      %v4419 = vunpack.c.l.b16 %v4257
      %v4420 = vunpack.c.h.b16 %v4257
      %v4421 = vunpack.c.l.b16 %v4258
      %v4422 = vunpack.c.h.b16 %v4258
      %v4423 = vunpack.c.l.b16 %v4259
      %v4424 = vunpack.c.l.b16 %v4260
      %v4425 = vunpack.c.h.b16 %v4260
      %v4426 = vunpack.c.l.b16 %v4261
      %v4427 = vunpack.c.h.b16 %v4261
      %v4428 = vunpack.c.l.b16 %v4262
      %v4429 = vunpack.c.l.b16 %v4263
      %v4430 = vunpack.c.h.b16 %v4263
      %v4431 = vunpack.c.l.b16 %v4264
      %v4432 = vunpack.c.h.b16 %v4264
      %v4433 = vunpack.c.l.b16 %v4265
      %v4434 = vunpack.c.l.b16 %v4266
      %v4435 = vunpack.c.h.b16 %v4266
      %v4436 = vunpack.c.l.b16 %v4267
      %v4437 = vunpack.c.h.b16 %v4267
      %v4438 = vunpack.c.l.b16 %v4268
      %v4439 = vunpack.c.l.b16 %v4269
      %v4440 = vunpack.c.h.b16 %v4269
      %v4441 = vunpack.c.l.b16 %v4270
      %v4442 = vunpack.c.h.b16 %v4270
      %v4443 = vunpack.c.l.b16 %v4271
      %v4444 = vunpack.c.l.b16 %v4272
      %v4445 = vunpack.c.h.b16 %v4272
      %v4446 = vunpack.c.l.b16 %v4273
      %v4447 = vunpack.c.h.b16 %v4273
      %v4448 = vunpack.c.l.b16 %v4274
      %v4449 = vunpack.c.l.b16 %v4275
      %v4450 = vunpack.c.h.b16 %v4275
      %v4451 = vunpack.c.l.b16 %v4276
      %v4452 = vunpack.c.h.b16 %v4276
      %v4453 = vunpack.c.l.b16 %v4277
      %v4454 = vunpack.c.l.b16 %v4278
      %v4455 = vunpack.c.h.b16 %v4278
      %v4456 = vunpack.c.l.b16 %v4279
      %v4457 = vunpack.c.h.b16 %v4279
      %v4458 = vunpack.c.l.b16 %v4280
      %v4459 = vunpack.c.l.b16 %v4281
      %v4460 = vunpack.c.h.b16 %v4281
      %v4461 = vunpack.c.l.b16 %v4282
      %v4462 = vunpack.c.h.b16 %v4282
      %v4463 = vunpack.c.l.b16 %v4283
      %v4464 = vunpack.c.l.b16 %v4284
      %v4465 = vunpack.c.h.b16 %v4284
      %v4466 = vunpack.c.l.b16 %v4285
      %v4467 = vunpack.c.h.b16 %v4285
      %v4468 = vunpack.c.l.b16 %v4286
      %v4469 = vunpack.c.l.b16 %v4287
      %v4470 = vunpack.c.h.b16 %v4287
      %v4471 = vunpack.c.l.b16 %v4288
      %v4472 = vunpack.c.h.b16 %v4288
      %v4473 = vunpack.c.l.b16 %v4289
      %v4474 = vunpack.c.l.b16 %v4290
      %v4475 = vunpack.c.h.b16 %v4290
      %v4476 = vunpack.c.l.b16 %v4291
      %v4477 = vunpack.c.h.b16 %v4291
      %v4478 = vunpack.c.l.b16 %v4292
      %v4479 = vunpack.c.l.b16 %v4293
      %v4480 = vunpack.c.h.b16 %v4293
      %v4481 = vunpack.c.l.b16 %v4294
      %v4482 = vunpack.c.h.b16 %v4294
      %v4483 = vunpack.c.l.b16 %v4295
      %v4484 = vunpack.c.l.b16 %v4296
      %v4485 = vunpack.c.h.b16 %v4296
      %v4486 = vunpack.c.l.b16 %v4297
      %v4487 = vunpack.c.h.b16 %v4297
      %v4488 = vunpack.c.l.b16 %v4298
      %v4489 = vunpack.c.l.b16 %v4299
      %v4490 = vunpack.c.h.b16 %v4299
      %v4491 = vunpack.c.l.b16 %v4300
      %v4492 = vunpack.c.h.b16 %v4300
      %v4493 = vunpack.c.l.b16 %v4301
      %v4494 = vpack.c.b16 %v4379, %v4374
      %v4495 = vpack.c.b16 %v4380, %v4375
      %v4496 = vpack.c.b16 %v4381, %v4376
      %v4497 = vpack.c.b16 %v4382, %v4377
      %v4498 = vpack.c.b16 %v4383, %v4378
      %v4499 = vpack.c.b16 %v4389, %v4384
      %v4500 = vpack.c.b16 %v4390, %v4385
      %v4501 = vpack.c.b16 %v4391, %v4386
      %v4502 = vpack.c.b16 %v4392, %v4387
      %v4503 = vpack.c.b16 %v4393, %v4388
      %v4504 = vpack.c.b16 %v4399, %v4394
      %v4505 = vpack.c.b16 %v4400, %v4395
      %v4506 = vpack.c.b16 %v4401, %v4396
      %v4507 = vpack.c.b16 %v4402, %v4397
      %v4508 = vpack.c.b16 %v4403, %v4398
      %v4509 = vpack.c.b16 %v4409, %v4404
      %v4510 = vpack.c.b16 %v4410, %v4405
      %v4511 = vpack.c.b16 %v4411, %v4406
      %v4512 = vpack.c.b16 %v4412, %v4407
      %v4513 = vpack.c.b16 %v4413, %v4408
      %v4514 = vpack.c.b16 %v4419, %v4414
      %v4515 = vpack.c.b16 %v4420, %v4415
      %v4516 = vpack.c.b16 %v4421, %v4416
      %v4517 = vpack.c.b16 %v4422, %v4417
      %v4518 = vpack.c.b16 %v4423, %v4418
      %v4519 = vpack.c.b16 %v4429, %v4424
      %v4520 = vpack.c.b16 %v4430, %v4425
      %v4521 = vpack.c.b16 %v4431, %v4426
      %v4522 = vpack.c.b16 %v4432, %v4427
      %v4523 = vpack.c.b16 %v4433, %v4428
      %v4524 = vpack.c.b16 %v4439, %v4434
      %v4525 = vpack.c.b16 %v4440, %v4435
      %v4526 = vpack.c.b16 %v4441, %v4436
      %v4527 = vpack.c.b16 %v4442, %v4437
      %v4528 = vpack.c.b16 %v4443, %v4438
      %v4529 = vpack.c.b16 %v4449, %v4444
      %v4530 = vpack.c.b16 %v4450, %v4445
      %v4531 = vpack.c.b16 %v4451, %v4446
      %v4532 = vpack.c.b16 %v4452, %v4447
      %v4533 = vpack.c.b16 %v4453, %v4448
      %v4534 = vpack.c.b16 %v4459, %v4454
      %v4535 = vpack.c.b16 %v4460, %v4455
      %v4536 = vpack.c.b16 %v4461, %v4456
      %v4537 = vpack.c.b16 %v4462, %v4457
      %v4538 = vpack.c.b16 %v4463, %v4458
      %v4539 = vpack.c.b16 %v4469, %v4464
      %v4540 = vpack.c.b16 %v4470, %v4465
      %v4541 = vpack.c.b16 %v4471, %v4466
      %v4542 = vpack.c.b16 %v4472, %v4467
      %v4543 = vpack.c.b16 %v4473, %v4468
      %v4544 = vpack.c.b16 %v4479, %v4474
      %v4545 = vpack.c.b16 %v4480, %v4475
      %v4546 = vpack.c.b16 %v4481, %v4476
      %v4547 = vpack.c.b16 %v4482, %v4477
      %v4548 = vpack.c.b16 %v4483, %v4478
      %v4549 = vpack.c.b16 %v4489, %v4484
      %v4550 = vpack.c.b16 %v4490, %v4485
      %v4551 = vpack.c.b16 %v4491, %v4486
      %v4552 = vpack.c.b16 %v4492, %v4487
      %v4553 = vpack.c.b16 %v4493, %v4488
      %4614 = vmatprep.subr.bf16.mxu0 %v4530
      %4615 = vmatpush1.bf16.msra.mxu0 %v4529
      %4616 = vmatprep.subr.bf16.mxu0 %v4525
      %4617 = vmatpush1.bf16.msra.mxu0 %v4524
      %4618 = vmatprep.subr.bf16.mxu0 %v4520
      %4619 = vmatpush1.bf16.msra.mxu0 %v4519
      %4620 = vmatprep.subr.bf16.mxu0 %v4515
      %4621 = vmatpush1.bf16.msra.mxu0 %v4514
      %4622 = vmatprep.subr.bf16.mxu0 %v4510
      %4623 = vmatpush1.bf16.msra.mxu0 %v4509
      %4624 = vmatprep.subr.bf16.mxu0 %v4505
      %4625 = vmatpush1.bf16.msra.mxu0 %v4504
      %4626 = vmatprep.subr.bf16.mxu0 %v4500
      %4627 = vmatpush1.bf16.msra.mxu0 %v4499
      %4628 = vmatprep.subr.bf16.mxu0 %v4495
      %4629 = vmatpush1.bf16.msra.mxu0 %v4494
      %4630 = vmatprep.subr.bf16.mxu0 0
      %4631 = vmatpush2.bf16.msra.mxu0 0
      %4632 = vmatprep.subr.bf16.mxu0 0
      %4633 = vmatpush2.bf16.msra.mxu0 0
      %4634 = vmatprep.subr.bf16.mxu0 0
      %4635 = vmatpush2.bf16.msra.mxu0 0
      %4636 = vmatprep.subr.bf16.mxu0 0
      %4637 = vmatpush2.bf16.msra.mxu0 0
      %4638 = vmatprep.subr.bf16.mxu0 %v4550
      %4639 = vmatpush2.bf16.msra.mxu0 %v4549
      %4640 = vmatprep.subr.bf16.mxu0 %v4545
      %4641 = vmatpush2.bf16.msra.mxu0 %v4544
      %4642 = vmatprep.subr.bf16.mxu0 %v4540
      %4643 = vmatpush2.bf16.msra.mxu0 %v4539
      %4644 = vmatprep.subr.bf16.mxu0 %v4535
      %4645 = vmatpush2.bf16.msra.mxu0 %v4534
      %4646 = vmatprep.mubr.bf16.mxu0 %v592
      %4647 = vmatmul.mubr.bf16.gmra.mxu0 %v272
      %v4648 = vpop.f32.mrf.mxu0
      %v4649 = vadd.f32 0.0, %v4648
      %v4650 = vpop.f32.mrf.mxu0
      %v4651 = vadd.f32 0.0, %v4650
      %v4652 = vpop.f32.mrf.mxu0
      %v4653 = vadd.f32 0.0, %v4652
      %v4654 = vpop.f32.mrf.mxu0
      %v4655 = vadd.f32 0.0, %v4654
      %4656 = vmatprep.mubr.bf16.mxu0 %v595
      %4657 = vmatmul.mubr.bf16.gmra.mxu0 %v274
      %v4658 = vpop.f32.mrf.mxu0
      %v4659 = vadd.f32 0.0, %v4658
      %v4660 = vpop.f32.mrf.mxu0
      %v4661 = vadd.f32 0.0, %v4660
      %v4662 = vpop.f32.mrf.mxu0
      %v4663 = vadd.f32 0.0, %v4662
      %v4664 = vpop.f32.mrf.mxu0
      %v4665 = vadd.f32 0.0, %v4664
      %4666 = vdwg.mxu0
      %4667 = vmatprep.subr.bf16.mxu0 %v4532
      %4668 = vmatpush1.bf16.msra.mxu0 %v4531
      %4669 = vmatprep.subr.bf16.mxu0 %v4527
      %4670 = vmatpush1.bf16.msra.mxu0 %v4526
      %4671 = vmatprep.subr.bf16.mxu0 %v4522
      %4672 = vmatpush1.bf16.msra.mxu0 %v4521
      %4673 = vmatprep.subr.bf16.mxu0 %v4517
      %4674 = vmatpush1.bf16.msra.mxu0 %v4516
      %4675 = vmatprep.subr.bf16.mxu0 %v4512
      %4676 = vmatpush1.bf16.msra.mxu0 %v4511
      %4677 = vmatprep.subr.bf16.mxu0 %v4507
      %4678 = vmatpush1.bf16.msra.mxu0 %v4506
      %4679 = vmatprep.subr.bf16.mxu0 %v4502
      %4680 = vmatpush1.bf16.msra.mxu0 %v4501
      %4681 = vmatprep.subr.bf16.mxu0 %v4497
      %4682 = vmatpush1.bf16.msra.mxu0 %v4496
      %4683 = vmatprep.subr.bf16.mxu0 0
      %4684 = vmatpush2.bf16.msra.mxu0 0
      %4685 = vmatprep.subr.bf16.mxu0 0
      %4686 = vmatpush2.bf16.msra.mxu0 0
      %4687 = vmatprep.subr.bf16.mxu0 0
      %4688 = vmatpush2.bf16.msra.mxu0 0
      %4689 = vmatprep.subr.bf16.mxu0 0
      %4690 = vmatpush2.bf16.msra.mxu0 0
      %4691 = vmatprep.subr.bf16.mxu0 %v4552
      %4692 = vmatpush2.bf16.msra.mxu0 %v4551
      %4693 = vmatprep.subr.bf16.mxu0 %v4547
      %4694 = vmatpush2.bf16.msra.mxu0 %v4546
      %4695 = vmatprep.subr.bf16.mxu0 %v4542
      %4696 = vmatpush2.bf16.msra.mxu0 %v4541
      %4697 = vmatprep.subr.bf16.mxu0 %v4537
      %4698 = vmatpush2.bf16.msra.mxu0 %v4536
      %4699 = vmatprep.mubr.bf16.mxu0 %v592
      %4700 = vmatmul.mubr.bf16.gmra.mxu0 %v272
      %v4701 = vpop.f32.mrf.mxu0
      %v4702 = vadd.f32 0.0, %v4701
      %v4703 = vpop.f32.mrf.mxu0
      %v4704 = vadd.f32 0.0, %v4703
      %v4705 = vpop.f32.mrf.mxu0
      %v4706 = vadd.f32 0.0, %v4705
      %v4707 = vpop.f32.mrf.mxu0
      %v4708 = vadd.f32 0.0, %v4707
      %4709 = vmatprep.mubr.bf16.mxu0 %v595
      %4710 = vmatmul.mubr.bf16.gmra.mxu0 %v274
      %v4711 = vpop.f32.mrf.mxu0
      %v4712 = vadd.f32 0.0, %v4711
      %v4713 = vpop.f32.mrf.mxu0
      %v4714 = vadd.f32 0.0, %v4713
      %v4715 = vpop.f32.mrf.mxu0
      %v4716 = vadd.f32 0.0, %v4715
      %v4717 = vpop.f32.mrf.mxu0
      %v4718 = vadd.f32 0.0, %v4717
      %4719 = vdwg.mxu0
      %4720 = vmatprep.subr.bf16.mxu0 0
      %4721 = vmatpush1.bf16.msra.mxu0 %v4533
      %4722 = vmatprep.subr.bf16.mxu0 0
      %4723 = vmatpush1.bf16.msra.mxu0 %v4528
      %4724 = vmatprep.subr.bf16.mxu0 0
      %4725 = vmatpush1.bf16.msra.mxu0 %v4523
      %4726 = vmatprep.subr.bf16.mxu0 0
      %4727 = vmatpush1.bf16.msra.mxu0 %v4518
      %4728 = vmatprep.subr.bf16.mxu0 0
      %4729 = vmatpush1.bf16.msra.mxu0 %v4513
      %4730 = vmatprep.subr.bf16.mxu0 0
      %4731 = vmatpush1.bf16.msra.mxu0 %v4508
      %4732 = vmatprep.subr.bf16.mxu0 0
      %4733 = vmatpush1.bf16.msra.mxu0 %v4503
      %4734 = vmatprep.subr.bf16.mxu0 0
      %4735 = vmatpush1.bf16.msra.mxu0 %v4498
      %4736 = vmatprep.subr.bf16.mxu0 0
      %4737 = vmatpush2.bf16.msra.mxu0 0
      %4738 = vmatprep.subr.bf16.mxu0 0
      %4739 = vmatpush2.bf16.msra.mxu0 0
      %4740 = vmatprep.subr.bf16.mxu0 0
      %4741 = vmatpush2.bf16.msra.mxu0 0
      %4742 = vmatprep.subr.bf16.mxu0 0
      %4743 = vmatpush2.bf16.msra.mxu0 0
      %4744 = vmatprep.subr.bf16.mxu0 0
      %4745 = vmatpush2.bf16.msra.mxu0 %v4553
      %4746 = vmatprep.subr.bf16.mxu0 0
      %4747 = vmatpush2.bf16.msra.mxu0 %v4548
      %4748 = vmatprep.subr.bf16.mxu0 0
      %4749 = vmatpush2.bf16.msra.mxu0 %v4543
      %4750 = vmatprep.subr.bf16.mxu0 0
      %4751 = vmatpush2.bf16.msra.mxu0 %v4538
      %4752 = vmatprep.mubr.bf16.mxu0 %v592
      %4753 = vmatmul.mubr.bf16.gmra.mxu0 %v272
      %v4754 = vpop.f32.mrf.mxu0
      %v4755 = vadd.f32 0.0, %v4754
      %v4756 = vpop.f32.mrf.mxu0
      %v4757 = vpop.f32.mrf.mxu0
      %v4758 = vadd.f32 0.0, %v4757
      %v4759 = vpop.f32.mrf.mxu0
      %4760 = vmatprep.mubr.bf16.mxu0 %v595
      %4761 = vmatmul.mubr.bf16.gmra.mxu0 %v274
      %v4762 = vpop.f32.mrf.mxu0
      %v4763 = vadd.f32 0.0, %v4762
      %v4764 = vpop.f32.mrf.mxu0
      %v4765 = vpop.f32.mrf.mxu0
      %v4766 = vadd.f32 0.0, %v4765
      %v4767 = vpop.f32.mrf.mxu0
      %4768 = vdwg.mxu0
      %v4769 = vmax.f32 %v4209, %v4649
      %v4770 = vmax.f32 %v4210, %v4651
      %v4771 = vmax.f32 %v4211, %v4702
      %v4772 = vmax.f32 %v4212, %v4704
      %v4773 = vmax.f32 %v4213, %v4755
      %v4774 = vmax.f32 %v4214, %v4653
      %v4775 = vmax.f32 %v4215, %v4655
      %v4776 = vmax.f32 %v4216, %v4706
      %v4777 = vmax.f32 %v4217, %v4708
      %v4778 = vmax.f32 %v4218, %v4758
      %v4779 = vmax.f32 %v4219, %v4659
      %v4780 = vmax.f32 %v4220, %v4661
      %v4781 = vmax.f32 %v4221, %v4712
      %v4782 = vmax.f32 %v4222, %v4714
      %v4783 = vmax.f32 %v4223, %v4763
      %v4784 = vmax.f32 %v4224, %v4663
      %v4785 = vmax.f32 %v4225, %v4665
      %v4786 = vmax.f32 %v4226, %v4716
      %v4787 = vmax.f32 %v4227, %v4718
      %v4788 = vmax.f32 %v4228, %v4766
      %v4789 = vadd.f32 %v4769, %v2435
      %v4790 = vadd.f32 %v4770, %v2435
      %v4791 = vadd.f32 %v4771, %v2435
      %v4792 = vadd.f32 %v4772, %v2435
      %v4793 = vadd.f32 %v4773, %v2435
      %v4794 = vadd.f32 %v4774, %v2440
      %v4795 = vadd.f32 %v4775, %v2440
      %v4796 = vadd.f32 %v4776, %v2440
      %v4797 = vadd.f32 %v4777, %v2440
      %v4798 = vadd.f32 %v4778, %v2440
      %v4799 = vadd.f32 %v4779, %v2445
      %v4800 = vadd.f32 %v4780, %v2445
      %v4801 = vadd.f32 %v4781, %v2445
      %v4802 = vadd.f32 %v4782, %v2445
      %v4803 = vadd.f32 %v4783, %v2445
      %v4804 = vadd.f32 %v4784, %v2450
      %v4805 = vadd.f32 %v4785, %v2450
      %v4806 = vadd.f32 %v4786, %v2450
      %v4807 = vadd.f32 %v4787, %v2450
      %v4808 = vadd.f32 %v4788, %v2450
      %v4809 = vmax.f32 %v4789, 0.0
      %v4810 = vmax.f32 %v4790, 0.0
      %v4811 = vmax.f32 %v4791, 0.0
      %v4812 = vmax.f32 %v4792, 0.0
      %v4813 = vmax.f32 %v4793, 0.0
      %v4814 = vmax.f32 %v4794, 0.0
      %v4815 = vmax.f32 %v4795, 0.0
      %v4816 = vmax.f32 %v4796, 0.0
      %v4817 = vmax.f32 %v4797, 0.0
      %v4818 = vmax.f32 %v4798, 0.0
      %v4819 = vmax.f32 %v4799, 0.0
      %v4820 = vmax.f32 %v4800, 0.0
      %v4821 = vmax.f32 %v4801, 0.0
      %v4822 = vmax.f32 %v4802, 0.0
      %v4823 = vmax.f32 %v4803, 0.0
      %v4824 = vmax.f32 %v4804, 0.0
      %v4825 = vmax.f32 %v4805, 0.0
      %v4826 = vmax.f32 %v4806, 0.0
      %v4827 = vmax.f32 %v4807, 0.0
      %v4828 = vmax.f32 %v4808, 0.0
      %v4829 = vpack.c.bf16 %v4814, %v4809
      %v4830 = vpack.c.bf16 %v4815, %v4810
      %v4831 = vpack.c.bf16 %v4816, %v4811
      %v4832 = vpack.c.bf16 %v4817, %v4812
      %v4833 = vpack.c.bf16 %v4818, %v4813
      %v4834 = vpack.c.bf16 %v4824, %v4819
      %v4835 = vpack.c.bf16 %v4825, %v4820
      %v4836 = vpack.c.bf16 %v4826, %v4821
      %v4837 = vpack.c.bf16 %v4827, %v4822
      %v4838 = vpack.c.bf16 %v4828, %v4823
      %v4849 = vunpack.c.l.b16 %v4829
      %v4850 = vunpack.c.l.b16 %v4830
      %v4851 = vunpack.c.l.b16 %v4831
      %v4852 = vunpack.c.l.b16 %v4832
      %v4853 = vunpack.c.l.b16 %v4833
      %v4854 = vunpack.c.h.b16 %v4829
      %v4855 = vunpack.c.h.b16 %v4830
      %v4856 = vunpack.c.h.b16 %v4831
      %v4857 = vunpack.c.h.b16 %v4832
      %v4858 = vunpack.c.h.b16 %v4833
      %v4859 = vunpack.c.l.b16 %v4834
      %v4860 = vunpack.c.l.b16 %v4835
      %v4861 = vunpack.c.l.b16 %v4836
      %v4862 = vunpack.c.l.b16 %v4837
      %v4863 = vunpack.c.l.b16 %v4838
      %v4864 = vunpack.c.h.b16 %v4834
      %v4865 = vunpack.c.h.b16 %v4835
      %v4866 = vunpack.c.h.b16 %v4836
      %v4867 = vunpack.c.h.b16 %v4837
      %v4868 = vunpack.c.h.b16 %v4838
      %v4869 = vpack.c.b16 %v4850, %v4849
      %v4870 = vpack.c.b16 %v4852, %v4851
      %v4871 = vpack.c.b16 %v4853, %v4853
      %v4872 = vpack.c.b16 %v4855, %v4854
      %v4873 = vpack.c.b16 %v4857, %v4856
      %v4874 = vpack.c.b16 %v4858, %v4858
      %v4875 = vpack.c.b16 %v4860, %v4859
      %v4876 = vpack.c.b16 %v4862, %v4861
      %v4877 = vpack.c.b16 %v4863, %v4863
      %v4878 = vpack.c.b16 %v4865, %v4864
      %v4879 = vpack.c.b16 %v4867, %v4866
      %v4880 = vpack.c.b16 %v4868, %v4868
      %s4893 = scalar_lea.vmem %s177, 80
      %4894 = vst [vmem:[%s4893] sm:$0xff] %v4869
      %4895 = vst [vmem:[%s4893 + $0x8] sm:$0xff] %v4870
      %4896 = vst.msk [vmem:[%s4893 + $0x10] sm:$0xf] %vm2558, %v4871
      %4897 = vst [vmem:[%s4893 + $0x14] sm:$0xff] %v4872
      %4898 = vst [vmem:[%s4893 + $0x1c] sm:$0xff] %v4873
      %4899 = vst.msk [vmem:[%s4893 + $0x24] sm:$0xf] %vm2558, %v4874
      %4900 = vst [vmem:[%s4893 + $0x28] sm:$0xff] %v4875
      %4901 = vst [vmem:[%s4893 + $0x30] sm:$0xff] %v4876
      %4902 = vst.msk [vmem:[%s4893 + $0x38] sm:$0xf] %vm2558, %v4877
      %4903 = vst [vmem:[%s4893 + $0x3c] sm:$0xff] %v4878
      %4904 = vst [vmem:[%s4893 + $0x44] sm:$0xff] %v4879
      %4905 = vst.msk [vmem:[%s4893 + $0x4c] sm:$0xf] %vm2558, %v4880
      %s4906 = smul.u32 2, %s14
      %p4907 = scmp.lt.s32.totalorder %s4906, 5
      %s4908 = scalar_select %p4907, %s4906, 5
      %s4909 = smul.addr %s4908, 20
      %s4910 = smul.addr %s4909, 4
      %s4911 = scalar_lea.vmem %s3, %s4910
      // Predicated region
      $region33: #{forward.3} parent=31 // pred_check
        %p4912 = pneg %p100
      $region34: #{forward.3} parent=31 // pred_check_branch
        %4914 = sbr.rel (%p4912) target = $region36
      $region35: #{forward.3} parent=31 // pred_region
        %s4915 = smul.u32 2, %s14
      $region36: #{forward.3} parent=31 // pred_fallthru
        _
    $region32: #{forward.3} parent=5 // pred_fallthru
      _
    %p4916 = scmp.le.s32.totalorder 2, %s9
    // Predicated region
    $region37: #{forward.3} parent=5 // pred_check
      %p4917 = pneg %p4916
    $region38: #{forward.3} parent=5 // pred_check_branch
      %4919 = sbr.rel (%p4917) target = $region40
    $region39: #{forward.3} parent=5 // pred_region
      %s4920 = ssub.s32 %s9, 2
      // Predicated region
      $region41: #{forward.3} parent=39 // pred_check
        %p4921 = pneg %p106
      $region42: #{forward.3} parent=39 // pred_check_branch
        %4923 = sbr.rel (%p4921) target = $region44
      $region43: #{forward.3} parent=39 // pred_region
        %s4924 = smul.u32 2, %s15
        %p4925 = scmp.lt.s32.totalorder %s4924, 5
        %s4926 = scalar_select %p4925, %s4924, 5
        %s4927 = smul.addr %s4926, 20
        %s4928 = smul.addr %s4927, 4
        %s4929 = scalar_lea.vmem %s3, %s4928
      $region44: #{forward.3} parent=39 // pred_fallthru
        _
    $region40: #{forward.3} parent=5 // pred_fallthru
      _
  $region6: #{forward.3} parent=0 // loop_footer
    %s13 = sadd.s32 1, %s9
  $region7: #{forward.3} parent=0 // loop_footer_branch
    %8 = sbr.rel target = $region3
  $region8: #{forward.3} parent=0 // loop_exit
    _

// kernel: forward.4
$region0: #{forward.4}
  #allocation0 [shape = 'u32[]', space=smem, size = 0x4, offset = 0x4, fixed_abs, tag = 'smem constant byte address 0x4 - core index']
  #allocation1 [shape = 'u32[144,128]{1,0:T(1,128)}', space=vmem, size = 0x12000, scoped, tag = 'internal scratch']
  %s0 = inlined_call_operand.vmem [shape: bf16[3,4,512,56], index: 0, kind: input, shape index: {}]
  %s1 = inlined_call_operand.vmem [shape: bf16[64,512], index: 1, kind: input, shape index: {}]
  %s2 = inlined_call_operand.vmem [shape: f32[64,1], index: 2, kind: input, shape index: {}]
  %s3 = inlined_call_operand.vmem [shape: bf16[3,64,56], index: 3, kind: output, shape index: {}]
  %s4 = sld [smem:[#allocation0]]
  $region45: #{forward.4} parent=0
    _
  %s6 = ssub.s32 1, %s4
  %s7 = scalar_select 0, %s6, %s4
  loop: start=0, step=1, limit=5
  $region2: #{forward.4} parent=0 // loop_pre_header
    _
  $region3: #{forward.4} parent=0 // loop_header
    %s9 = sphi 0, %s13
    %p10 = scmp.ge.s32.totalorder %s9, 5
    %s19 = sphi 0, %s21
    %s22 = sphi 0, %s19
    %s23 = sphi 0, %s22
    %s39 = sphi 0, %s23
    %s43 = sphi 0, %s43
    %s45 = sphi 0, %s43
    %s46 = sphi 0, %s45
    %s60 = sphi 0, %s46
    %s64 = sphi 0, %s64
    %s66 = sphi 0, %s64
    %s67 = sphi 0, %s66
    %s81 = sphi 0, %s67
    %s87 = sphi 0, %s89
    %s90 = sphi 0, %s87
    %s91 = sphi 0, %s90
    %s107 = sphi 0, %s91
  $region4: #{forward.4} parent=0 // loop_header_branch
    %12 = sbr.rel (%p10) target = $region8
  $region5: #{forward.4} parent=0 // loop_body
    %s14 = ssub.s32 %s9, 1
    %s15 = ssub.s32 %s9, 2
    %s16 = sadd.s32 %s9, 1
    %s17 = ssub.s32 %s9, %s16
    %p18 = scmp.eq.s32.totalorder %s17, 0
    %s20 = sadd.s32 %s19, 1
    %s21 = scalar_select %p18, %s19, %s20
    %p24 = pneg %p18
    %p25 = scmp.eq.s32.totalorder %s9, 2
    %p26 = por %p24, %p25
    %p27 = scmp.ne.s32.totalorder %s19, %s22
    %p28 = scmp.eq.s32.totalorder %s9, 0
    %p29 = por %p27, %p28
    %p30 = scmp.ne.s32.totalorder %s19, %s22
    %p31 = scmp.eq.s32.totalorder %s14, 2
    %p32 = por %p30, %p31
    %p33 = scmp.ne.s32.totalorder %s22, %s23
    %p34 = scmp.eq.s32.totalorder %s14, 0
    %p35 = por %p33, %p34
    %p36 = scmp.ne.s32.totalorder %s22, %s23
    %p37 = scmp.eq.s32.totalorder %s15, 2
    %p38 = por %p36, %p37
    %p40 = scmp.ne.s32.totalorder %s23, %s39
    %p41 = scmp.eq.s32.totalorder %s15, 0
    %p42 = por %p40, %p41
    %s44 = sadd.s32 %s43, 1
    %p47 = scmp.eq.s32.totalorder %s9, 2
    %p48 = scmp.ne.s32.totalorder %s43, %s45
    %p49 = scmp.eq.s32.totalorder %s9, 0
    %p50 = por %p48, %p49
    %p51 = scmp.ne.s32.totalorder %s43, %s45
    %p52 = scmp.eq.s32.totalorder %s14, 2
    %p53 = por %p51, %p52
    %p54 = scmp.ne.s32.totalorder %s45, %s46
    %p55 = scmp.eq.s32.totalorder %s14, 0
    %p56 = por %p54, %p55
    %p57 = scmp.ne.s32.totalorder %s45, %s46
    %p58 = scmp.eq.s32.totalorder %s15, 2
    %p59 = por %p57, %p58
    %p61 = scmp.ne.s32.totalorder %s46, %s60
    %p62 = scmp.eq.s32.totalorder %s15, 0
    %p63 = por %p61, %p62
    %s65 = sadd.s32 %s64, 1
    %p68 = scmp.eq.s32.totalorder %s9, 2
    %p69 = scmp.ne.s32.totalorder %s64, %s66
    %p70 = scmp.eq.s32.totalorder %s9, 0
    %p71 = por %p69, %p70
    %p72 = scmp.ne.s32.totalorder %s64, %s66
    %p73 = scmp.eq.s32.totalorder %s14, 2
    %p74 = por %p72, %p73
    %p75 = scmp.ne.s32.totalorder %s66, %s67
    %p76 = scmp.eq.s32.totalorder %s14, 0
    %p77 = por %p75, %p76
    %p78 = scmp.ne.s32.totalorder %s66, %s67
    %p79 = scmp.eq.s32.totalorder %s15, 2
    %p80 = por %p78, %p79
    %p82 = scmp.ne.s32.totalorder %s67, %s81
    %p83 = scmp.eq.s32.totalorder %s15, 0
    %p84 = por %p82, %p83
    %s85 = ssub.s32 %s9, %s16
    %p86 = scmp.eq.s32.totalorder %s85, 0
    %s88 = sadd.s32 %s87, 1
    %s89 = scalar_select %p86, %s87, %s88
    %p92 = pneg %p86
    %p93 = scmp.eq.s32.totalorder %s9, 2
    %p94 = por %p92, %p93
    %p95 = scmp.ne.s32.totalorder %s87, %s90
    %p96 = scmp.eq.s32.totalorder %s9, 0
    %p97 = por %p95, %p96
    %p98 = scmp.ne.s32.totalorder %s87, %s90
    %p99 = scmp.eq.s32.totalorder %s14, 2
    %p100 = por %p98, %p99
    %p101 = scmp.ne.s32.totalorder %s90, %s91
    %p102 = scmp.eq.s32.totalorder %s14, 0
    %p103 = por %p101, %p102
    %p104 = scmp.ne.s32.totalorder %s90, %s91
    %p105 = scmp.eq.s32.totalorder %s15, 2
    %p106 = por %p104, %p105
    %p108 = scmp.ne.s32.totalorder %s91, %s107
    %p109 = scmp.eq.s32.totalorder %s15, 0
    %p110 = por %p108, %p109
    %p111 = scmp.le.s32.totalorder 1, %s9
    %p112 = scmp.lt.s32.totalorder %s9, 4
    %p113 = pnand %p111, %p112
    %p114 = pneg %p113
    // Predicated region
    $region9: #{forward.4} parent=5 // pred_check
      _
    $region10: #{forward.4} parent=5 // pred_check_branch
      %116 = sbr.rel (%p113) target = $region12
    $region11: #{forward.4} parent=5 // pred_region
      %s117 = ssub.s32 %s9, 1
      // Predicated region
      $region13: #{forward.4} parent=11 // pred_check
        %p118 = pneg %p56
      $region14: #{forward.4} parent=11 // pred_check_branch
        %120 = sbr.rel (%p118) target = $region16
      $region15: #{forward.4} parent=11 // pred_region
        _
      $region16: #{forward.4} parent=11 // pred_fallthru
        _
      // Predicated region
      $region17: #{forward.4} parent=11 // pred_check
        %p121 = pneg %p77
      $region18: #{forward.4} parent=11 // pred_check_branch
        %123 = sbr.rel (%p121) target = $region20
      $region19: #{forward.4} parent=11 // pred_region
        _
      $region20: #{forward.4} parent=11 // pred_fallthru
        _
    $region12: #{forward.4} parent=5 // pred_fallthru
      _
    %p124 = scmp.lt.s32.totalorder %s9, 3
    // Predicated region
    $region21: #{forward.4} parent=5 // pred_check
      %p125 = pneg %p124
    $region22: #{forward.4} parent=5 // pred_check_branch
      %127 = sbr.rel (%p125) target = $region24
    $region23: #{forward.4} parent=5 // pred_region
      // Predicated region
      $region25: #{forward.4} parent=23 // pred_check
        %p128 = pneg %p29
      $region26: #{forward.4} parent=23 // pred_check_branch
        %130 = sbr.rel (%p128) target = $region28
      $region27: #{forward.4} parent=23 // pred_region
        %p131 = scmp.lt.s32.totalorder %s9, 2
        %s132 = scalar_select %p131, %s9, 2
        %s133 = smul.addr %s132, 256
        %s134 = smul.addr %s133, 4
        %s135 = scalar_lea.vmem %s0, %s134
      $region28: #{forward.4} parent=23 // pred_fallthru
        _
    $region24: #{forward.4} parent=5 // pred_fallthru
      _
    %p136 = scmp.le.s32.totalorder 1, %s9
    %p137 = scmp.lt.s32.totalorder %s9, 4
    %p138 = pnand %p136, %p137
    %p139 = pneg %p138
    // Predicated region
    $region29: #{forward.4} parent=5 // pred_check
      _
    $region30: #{forward.4} parent=5 // pred_check_branch
      %141 = sbr.rel (%p138) target = $region32
    $region31: #{forward.4} parent=5 // pred_region
      %s142 = ssub.s32 %s9, 1
      %p143 = scmp.lt.s32.totalorder %s14, 2
      %s144 = scalar_select %p143, %s14, 2
      %s145 = smul.addr %s144, 256
      %s146 = smul.addr %s145, 4
      %s147 = scalar_lea.vmem %s0, %s146
      %p148 = pneg %p35
      %p149 = pneg %p32
      %p150 = pneg %p56
      %p151 = pneg %p53
      %p152 = pneg %p77
      %p153 = pneg %p74
      %p154 = pneg %p103
      %p155 = pneg %p100
      %p156 = scmp.lt.s32.totalorder %s14, 2
      %s157 = scalar_select %p156, %s14, 2
      %s158 = smul.addr %s157, 8
      %s159 = smul.addr %s158, 4
      %s160 = scalar_lea.vmem %s3, %s159
      %p161 = scmp.lt.s32.totalorder %s14, 2
      %s162 = scalar_select %p161, %s14, 2
      %s163 = smul.addr %s162, 256
      %s164 = smul.addr %s163, 4
      %s165 = scalar_lea.vmem %s0, %s164
      %p166 = scmp.lt.s32.totalorder %s14, 2
      %s167 = scalar_select %p166, %s14, 2
      %s168 = smul.addr %s167, 8
      %s169 = smul.addr %s168, 4
      %s170 = scalar_lea.vmem %s3, %s169
      %v172 = vld [vmem:[%s1] sm:$0xff]
      %v173 = vld [vmem:[%s1 + $0x8] sm:$0xff]
      %v174 = vld [vmem:[%s1 + $0x10] sm:$0xff]
      %v175 = vld [vmem:[%s1 + $0x18] sm:$0xff]
      %v176 = vld [vmem:[%s1 + $0x20] sm:$0xff]
      %v177 = vld [vmem:[%s1 + $0x28] sm:$0xff]
      %v178 = vld [vmem:[%s1 + $0x30] sm:$0xff]
      %v179 = vld [vmem:[%s1 + $0x38] sm:$0xff]
      %v180 = vld [vmem:[%s1 + $0x40] sm:$0xff]
      %v181 = vld [vmem:[%s1 + $0x48] sm:$0xff]
      %v182 = vld [vmem:[%s1 + $0x50] sm:$0xff]
      %v183 = vld [vmem:[%s1 + $0x58] sm:$0xff]
      %v184 = vld [vmem:[%s1 + $0x60] sm:$0xff]
      %v185 = vld [vmem:[%s1 + $0x68] sm:$0xff]
      %v186 = vld [vmem:[%s1 + $0x70] sm:$0xff]
      %v187 = vld [vmem:[%s1 + $0x78] sm:$0xff]
      %v188 = vld [vmem:[%s165] sm:$0xf]
      %v189 = vld [vmem:[%s165 + $0x4] sm:$0xf]
      %v190 = vld [vmem:[%s165 + $0x8] sm:$0xf]
      %v191 = vld [vmem:[%s165 + $0xc] sm:$0xf]
      %v192 = vld [vmem:[%s165 + $0x10] sm:$0xf]
      %v193 = vld [vmem:[%s165 + $0x14] sm:$0xf]
      %v194 = vld [vmem:[%s165 + $0x18] sm:$0xf]
      %v195 = vld [vmem:[%s165 + $0x1c] sm:$0xf]
      %v196 = vld [vmem:[%s165 + $0x20] sm:$0xf]
      %v197 = vld [vmem:[%s165 + $0x24] sm:$0xf]
      %v198 = vld [vmem:[%s165 + $0x28] sm:$0xf]
      %v199 = vld [vmem:[%s165 + $0x2c] sm:$0xf]
      %v200 = vld [vmem:[%s165 + $0x30] sm:$0xf]
      %v201 = vld [vmem:[%s165 + $0x34] sm:$0xf]
      %v202 = vld [vmem:[%s165 + $0x38] sm:$0xf]
      %v203 = vld [vmem:[%s165 + $0x3c] sm:$0xf]
      %v204 = vld [vmem:[%s165 + $0x40] sm:$0xf]
      %v205 = vld [vmem:[%s165 + $0x44] sm:$0xf]
      %v206 = vld [vmem:[%s165 + $0x48] sm:$0xf]
      %v207 = vld [vmem:[%s165 + $0x4c] sm:$0xf]
      %v208 = vld [vmem:[%s165 + $0x50] sm:$0xf]
      %v209 = vld [vmem:[%s165 + $0x54] sm:$0xf]
      %v210 = vld [vmem:[%s165 + $0x58] sm:$0xf]
      %v211 = vld [vmem:[%s165 + $0x5c] sm:$0xf]
      %v212 = vld [vmem:[%s165 + $0x60] sm:$0xf]
      %v213 = vld [vmem:[%s165 + $0x64] sm:$0xf]
      %v214 = vld [vmem:[%s165 + $0x68] sm:$0xf]
      %v215 = vld [vmem:[%s165 + $0x6c] sm:$0xf]
      %v216 = vld [vmem:[%s165 + $0x70] sm:$0xf]
      %v217 = vld [vmem:[%s165 + $0x74] sm:$0xf]
      %v218 = vld [vmem:[%s165 + $0x78] sm:$0xf]
      %v219 = vld [vmem:[%s165 + $0x7c] sm:$0xf]
      %v220 = vld [vmem:[%s165 + $0x80] sm:$0xf]
      %v221 = vld [vmem:[%s165 + $0x84] sm:$0xf]
      %v222 = vld [vmem:[%s165 + $0x88] sm:$0xf]
      %v223 = vld [vmem:[%s165 + $0x8c] sm:$0xf]
      %v224 = vld [vmem:[%s165 + $0x90] sm:$0xf]
      %v225 = vld [vmem:[%s165 + $0x94] sm:$0xf]
      %v226 = vld [vmem:[%s165 + $0x98] sm:$0xf]
      %v227 = vld [vmem:[%s165 + $0x9c] sm:$0xf]
      %v228 = vld [vmem:[%s165 + $0xa0] sm:$0xf]
      %v229 = vld [vmem:[%s165 + $0xa4] sm:$0xf]
      %v230 = vld [vmem:[%s165 + $0xa8] sm:$0xf]
      %v231 = vld [vmem:[%s165 + $0xac] sm:$0xf]
      %v232 = vld [vmem:[%s165 + $0xb0] sm:$0xf]
      %v233 = vld [vmem:[%s165 + $0xb4] sm:$0xf]
      %v234 = vld [vmem:[%s165 + $0xb8] sm:$0xf]
      %v235 = vld [vmem:[%s165 + $0xbc] sm:$0xf]
      %v236 = vld [vmem:[%s165 + $0xc0] sm:$0xf]
      %v237 = vld [vmem:[%s165 + $0xc4] sm:$0xf]
      %v238 = vld [vmem:[%s165 + $0xc8] sm:$0xf]
      %v239 = vld [vmem:[%s165 + $0xcc] sm:$0xf]
      %v240 = vld [vmem:[%s165 + $0xd0] sm:$0xf]
      %v241 = vld [vmem:[%s165 + $0xd4] sm:$0xf]
      %v242 = vld [vmem:[%s165 + $0xd8] sm:$0xf]
      %v243 = vld [vmem:[%s165 + $0xdc] sm:$0xf]
      %v244 = vld [vmem:[%s165 + $0xe0] sm:$0xf]
      %v245 = vld [vmem:[%s165 + $0xe4] sm:$0xf]
      %v246 = vld [vmem:[%s165 + $0xe8] sm:$0xf]
      %v247 = vld [vmem:[%s165 + $0xec] sm:$0xf]
      %v248 = vld [vmem:[%s165 + $0xf0] sm:$0xf]
      %v249 = vld [vmem:[%s165 + $0xf4] sm:$0xf]
      %v250 = vld [vmem:[%s165 + $0xf8] sm:$0xf]
      %v251 = vld [vmem:[%s165 + $0xfc] sm:$0xf]
      %v268 = vunpack.c.l.b16 %v172
      %v269 = vunpack.c.h.b16 %v172
      %v270 = vunpack.c.l.b16 %v173
      %v271 = vunpack.c.h.b16 %v173
      %v272 = vunpack.c.l.b16 %v174
      %v273 = vunpack.c.h.b16 %v174
      %v274 = vunpack.c.l.b16 %v175
      %v275 = vunpack.c.h.b16 %v175
      %v276 = vunpack.c.l.b16 %v176
      %v277 = vunpack.c.h.b16 %v176
      %v278 = vunpack.c.l.b16 %v177
      %v279 = vunpack.c.h.b16 %v177
      %v280 = vunpack.c.l.b16 %v178
      %v281 = vunpack.c.h.b16 %v178
      %v282 = vunpack.c.l.b16 %v179
      %v283 = vunpack.c.h.b16 %v179
      %v284 = vunpack.c.l.b16 %v180
      %v285 = vunpack.c.h.b16 %v180
      %v286 = vunpack.c.l.b16 %v181
      %v287 = vunpack.c.h.b16 %v181
      %v288 = vunpack.c.l.b16 %v182
      %v289 = vunpack.c.h.b16 %v182
      %v290 = vunpack.c.l.b16 %v183
      %v291 = vunpack.c.h.b16 %v183
      %v292 = vunpack.c.l.b16 %v184
      %v293 = vunpack.c.h.b16 %v184
      %v294 = vunpack.c.l.b16 %v185
      %v295 = vunpack.c.h.b16 %v185
      %v296 = vunpack.c.l.b16 %v186
      %v297 = vunpack.c.h.b16 %v186
      %v298 = vunpack.c.l.b16 %v187
      %v299 = vunpack.c.h.b16 %v187
      %v300 = vpack.c.b16 %v272, %v268
      %v301 = vpack.c.b16 %v273, %v269
      %v302 = vpack.c.b16 %v274, %v270
      %v303 = vpack.c.b16 %v275, %v271
      %v304 = vpack.c.b16 %v280, %v276
      %v305 = vpack.c.b16 %v281, %v277
      %v306 = vpack.c.b16 %v282, %v278
      %v307 = vpack.c.b16 %v283, %v279
      %v308 = vpack.c.b16 %v288, %v284
      %v309 = vpack.c.b16 %v289, %v285
      %v310 = vpack.c.b16 %v290, %v286
      %v311 = vpack.c.b16 %v291, %v287
      %v312 = vpack.c.b16 %v296, %v292
      %v313 = vpack.c.b16 %v297, %v293
      %v314 = vpack.c.b16 %v298, %v294
      %v315 = vpack.c.b16 %v299, %v295
      %v396 = vunpack.c.l.b16 %v188
      %v397 = vunpack.c.l.b16 %v189
      %v398 = vunpack.c.l.b16 %v190
      %v399 = vunpack.c.l.b16 %v191
      %v400 = vunpack.c.l.b16 %v192
      %v401 = vunpack.c.l.b16 %v193
      %v402 = vunpack.c.l.b16 %v194
      %v403 = vunpack.c.l.b16 %v195
      %v404 = vunpack.c.l.b16 %v196
      %v405 = vunpack.c.l.b16 %v197
      %v406 = vunpack.c.l.b16 %v198
      %v407 = vunpack.c.l.b16 %v199
      %v408 = vunpack.c.l.b16 %v200
      %v409 = vunpack.c.l.b16 %v201
      %v410 = vunpack.c.l.b16 %v202
      %v411 = vunpack.c.l.b16 %v203
      %v412 = vunpack.c.l.b16 %v204
      %v413 = vunpack.c.l.b16 %v205
      %v414 = vunpack.c.l.b16 %v206
      %v415 = vunpack.c.l.b16 %v207
      %v416 = vunpack.c.l.b16 %v208
      %v417 = vunpack.c.l.b16 %v209
      %v418 = vunpack.c.l.b16 %v210
      %v419 = vunpack.c.l.b16 %v211
      %v420 = vunpack.c.l.b16 %v212
      %v421 = vunpack.c.l.b16 %v213
      %v422 = vunpack.c.l.b16 %v214
      %v423 = vunpack.c.l.b16 %v215
      %v424 = vunpack.c.l.b16 %v216
      %v425 = vunpack.c.l.b16 %v217
      %v426 = vunpack.c.l.b16 %v218
      %v427 = vunpack.c.l.b16 %v219
      %v428 = vunpack.c.l.b16 %v220
      %v429 = vunpack.c.l.b16 %v221
      %v430 = vunpack.c.l.b16 %v222
      %v431 = vunpack.c.l.b16 %v223
      %v432 = vunpack.c.l.b16 %v224
      %v433 = vunpack.c.l.b16 %v225
      %v434 = vunpack.c.l.b16 %v226
      %v435 = vunpack.c.l.b16 %v227
      %v436 = vunpack.c.l.b16 %v228
      %v437 = vunpack.c.l.b16 %v229
      %v438 = vunpack.c.l.b16 %v230
      %v439 = vunpack.c.l.b16 %v231
      %v440 = vunpack.c.l.b16 %v232
      %v441 = vunpack.c.l.b16 %v233
      %v442 = vunpack.c.l.b16 %v234
      %v443 = vunpack.c.l.b16 %v235
      %v444 = vunpack.c.l.b16 %v236
      %v445 = vunpack.c.l.b16 %v237
      %v446 = vunpack.c.l.b16 %v238
      %v447 = vunpack.c.l.b16 %v239
      %v448 = vunpack.c.l.b16 %v240
      %v449 = vunpack.c.l.b16 %v241
      %v450 = vunpack.c.l.b16 %v242
      %v451 = vunpack.c.l.b16 %v243
      %v452 = vunpack.c.l.b16 %v244
      %v453 = vunpack.c.l.b16 %v245
      %v454 = vunpack.c.l.b16 %v246
      %v455 = vunpack.c.l.b16 %v247
      %v456 = vunpack.c.l.b16 %v248
      %v457 = vunpack.c.l.b16 %v249
      %v458 = vunpack.c.l.b16 %v250
      %v459 = vunpack.c.l.b16 %v251
      %v460 = vpack.c.b16 %v397, %v396
      %v461 = vpack.c.b16 %v399, %v398
      %v462 = vpack.c.b16 %v401, %v400
      %v463 = vpack.c.b16 %v403, %v402
      %v464 = vpack.c.b16 %v405, %v404
      %v465 = vpack.c.b16 %v407, %v406
      %v466 = vpack.c.b16 %v409, %v408
      %v467 = vpack.c.b16 %v411, %v410
      %v468 = vpack.c.b16 %v413, %v412
      %v469 = vpack.c.b16 %v415, %v414
      %v470 = vpack.c.b16 %v417, %v416
      %v471 = vpack.c.b16 %v419, %v418
      %v472 = vpack.c.b16 %v421, %v420
      %v473 = vpack.c.b16 %v423, %v422
      %v474 = vpack.c.b16 %v425, %v424
      %v475 = vpack.c.b16 %v427, %v426
      %v476 = vpack.c.b16 %v429, %v428
      %v477 = vpack.c.b16 %v431, %v430
      %v478 = vpack.c.b16 %v433, %v432
      %v479 = vpack.c.b16 %v435, %v434
      %v480 = vpack.c.b16 %v437, %v436
      %v481 = vpack.c.b16 %v439, %v438
      %v482 = vpack.c.b16 %v441, %v440
      %v483 = vpack.c.b16 %v443, %v442
      %v484 = vpack.c.b16 %v445, %v444
      %v485 = vpack.c.b16 %v447, %v446
      %v486 = vpack.c.b16 %v449, %v448
      %v487 = vpack.c.b16 %v451, %v450
      %v488 = vpack.c.b16 %v453, %v452
      %v489 = vpack.c.b16 %v455, %v454
      %v490 = vpack.c.b16 %v457, %v456
      %v491 = vpack.c.b16 %v459, %v458
      %524 = vmatprep.subr.bf16.mxu0 0
      %525 = vmatpush1.bf16.msra.mxu0 %v467
      %526 = vmatprep.subr.bf16.mxu0 0
      %527 = vmatpush1.bf16.msra.mxu0 %v466
      %528 = vmatprep.subr.bf16.mxu0 0
      %529 = vmatpush1.bf16.msra.mxu0 %v465
      %530 = vmatprep.subr.bf16.mxu0 0
      %531 = vmatpush1.bf16.msra.mxu0 %v464
      %532 = vmatprep.subr.bf16.mxu0 0
      %533 = vmatpush1.bf16.msra.mxu0 %v463
      %534 = vmatprep.subr.bf16.mxu0 0
      %535 = vmatpush1.bf16.msra.mxu0 %v462
      %536 = vmatprep.subr.bf16.mxu0 0
      %537 = vmatpush1.bf16.msra.mxu0 %v461
      %538 = vmatprep.subr.bf16.mxu0 0
      %539 = vmatpush1.bf16.msra.mxu0 %v460
      %540 = vmatprep.subr.bf16.mxu0 0
      %541 = vmatpush2.bf16.msra.mxu0 %v475
      %542 = vmatprep.subr.bf16.mxu0 0
      %543 = vmatpush2.bf16.msra.mxu0 %v474
      %544 = vmatprep.subr.bf16.mxu0 0
      %545 = vmatpush2.bf16.msra.mxu0 %v473
      %546 = vmatprep.subr.bf16.mxu0 0
      %547 = vmatpush2.bf16.msra.mxu0 %v472
      %548 = vmatprep.subr.bf16.mxu0 0
      %549 = vmatpush2.bf16.msra.mxu0 %v471
      %550 = vmatprep.subr.bf16.mxu0 0
      %551 = vmatpush2.bf16.msra.mxu0 %v470
      %552 = vmatprep.subr.bf16.mxu0 0
      %553 = vmatpush2.bf16.msra.mxu0 %v469
      %554 = vmatprep.subr.bf16.mxu0 0
      %555 = vmatpush2.bf16.msra.mxu0 %v468
      %556 = vmatprep.mubr.bf16.mxu0 %v301
      %557 = vmatmul.mubr.bf16.gmra.mxu0 %v300
      %v558 = vpop.f32.mrf.mxu0
      %v559 = vadd.f32 0.0, %v558
      %v560 = vpop.f32.mrf.mxu0
      %v561 = vpop.f32.mrf.mxu0
      %v562 = vadd.f32 0.0, %v561
      %v563 = vpop.f32.mrf.mxu0
      %564 = vmatprep.mubr.bf16.mxu0 %v305
      %565 = vmatmul.mubr.bf16.gmra.mxu0 %v304
      %v566 = vpop.f32.mrf.mxu0
      %v567 = vadd.f32 0.0, %v566
      %v568 = vpop.f32.mrf.mxu0
      %v569 = vpop.f32.mrf.mxu0
      %v570 = vadd.f32 0.0, %v569
      %v571 = vpop.f32.mrf.mxu0
      %572 = vmatprep.mubr.bf16.mxu0 %v309
      %573 = vmatmul.mubr.bf16.gmra.mxu0 %v308
      %v574 = vpop.f32.mrf.mxu0
      %v575 = vadd.f32 0.0, %v574
      %v576 = vpop.f32.mrf.mxu0
      %v577 = vpop.f32.mrf.mxu0
      %v578 = vadd.f32 0.0, %v577
      %v579 = vpop.f32.mrf.mxu0
      %580 = vmatprep.mubr.bf16.mxu0 %v313
      %581 = vmatmul.mubr.bf16.gmra.mxu0 %v312
      %v582 = vpop.f32.mrf.mxu0
      %v583 = vadd.f32 0.0, %v582
      %v584 = vpop.f32.mrf.mxu0
      %v585 = vpop.f32.mrf.mxu0
      %v586 = vadd.f32 0.0, %v585
      %v587 = vpop.f32.mrf.mxu0
      %588 = vdwg.mxu0
      %589 = vmatprep.subr.bf16.mxu0 0
      %590 = vmatpush1.bf16.msra.mxu0 %v483
      %591 = vmatprep.subr.bf16.mxu0 0
      %592 = vmatpush1.bf16.msra.mxu0 %v482
      %593 = vmatprep.subr.bf16.mxu0 0
      %594 = vmatpush1.bf16.msra.mxu0 %v481
      %595 = vmatprep.subr.bf16.mxu0 0
      %596 = vmatpush1.bf16.msra.mxu0 %v480
      %597 = vmatprep.subr.bf16.mxu0 0
      %598 = vmatpush1.bf16.msra.mxu0 %v479
      %599 = vmatprep.subr.bf16.mxu0 0
      %600 = vmatpush1.bf16.msra.mxu0 %v478
      %601 = vmatprep.subr.bf16.mxu0 0
      %602 = vmatpush1.bf16.msra.mxu0 %v477
      %603 = vmatprep.subr.bf16.mxu0 0
      %604 = vmatpush1.bf16.msra.mxu0 %v476
      %605 = vmatprep.subr.bf16.mxu0 0
      %606 = vmatpush2.bf16.msra.mxu0 %v491
      %607 = vmatprep.subr.bf16.mxu0 0
      %608 = vmatpush2.bf16.msra.mxu0 %v490
      %609 = vmatprep.subr.bf16.mxu0 0
      %610 = vmatpush2.bf16.msra.mxu0 %v489
      %611 = vmatprep.subr.bf16.mxu0 0
      %612 = vmatpush2.bf16.msra.mxu0 %v488
      %613 = vmatprep.subr.bf16.mxu0 0
      %614 = vmatpush2.bf16.msra.mxu0 %v487
      %615 = vmatprep.subr.bf16.mxu0 0
      %616 = vmatpush2.bf16.msra.mxu0 %v486
      %617 = vmatprep.subr.bf16.mxu0 0
      %618 = vmatpush2.bf16.msra.mxu0 %v485
      %619 = vmatprep.subr.bf16.mxu0 0
      %620 = vmatpush2.bf16.msra.mxu0 %v484
      %621 = vmatprep.mubr.bf16.mxu0 %v303
      %622 = vmatmul.mubr.bf16.gmra.mxu0 %v302
      %v623 = vpop.f32.mrf.mxu0
      %v624 = vadd.f32 %v559, %v623
      %v625 = vpop.f32.mrf.mxu0
      %v626 = vpop.f32.mrf.mxu0
      %v627 = vadd.f32 %v562, %v626
      %v628 = vpop.f32.mrf.mxu0
      %629 = vmatprep.mubr.bf16.mxu0 %v307
      %630 = vmatmul.mubr.bf16.gmra.mxu0 %v306
      %v631 = vpop.f32.mrf.mxu0
      %v632 = vadd.f32 %v567, %v631
      %v633 = vpop.f32.mrf.mxu0
      %v634 = vpop.f32.mrf.mxu0
      %v635 = vadd.f32 %v570, %v634
      %v636 = vpop.f32.mrf.mxu0
      %637 = vmatprep.mubr.bf16.mxu0 %v311
      %638 = vmatmul.mubr.bf16.gmra.mxu0 %v310
      %v639 = vpop.f32.mrf.mxu0
      %v640 = vadd.f32 %v575, %v639
      %v641 = vpop.f32.mrf.mxu0
      %v642 = vpop.f32.mrf.mxu0
      %v643 = vadd.f32 %v578, %v642
      %v644 = vpop.f32.mrf.mxu0
      %645 = vmatprep.mubr.bf16.mxu0 %v315
      %646 = vmatmul.mubr.bf16.gmra.mxu0 %v314
      %v647 = vpop.f32.mrf.mxu0
      %v648 = vadd.f32 %v583, %v647
      %v649 = vpop.f32.mrf.mxu0
      %v650 = vpop.f32.mrf.mxu0
      %v651 = vadd.f32 %v586, %v650
      %v652 = vpop.f32.mrf.mxu0
      %653 = vdwg.mxu0
      %s654 = scalar_lea.vmem %s165, 256
      %v655 = vld [vmem:[%s654] sm:$0xf]
      %v656 = vld [vmem:[%s654 + $0x4] sm:$0xf]
      %v657 = vld [vmem:[%s654 + $0x8] sm:$0xf]
      %v658 = vld [vmem:[%s654 + $0xc] sm:$0xf]
      %v659 = vld [vmem:[%s654 + $0x10] sm:$0xf]
      %v660 = vld [vmem:[%s654 + $0x14] sm:$0xf]
      %v661 = vld [vmem:[%s654 + $0x18] sm:$0xf]
      %v662 = vld [vmem:[%s654 + $0x1c] sm:$0xf]
      %v663 = vld [vmem:[%s654 + $0x20] sm:$0xf]
      %v664 = vld [vmem:[%s654 + $0x24] sm:$0xf]
      %v665 = vld [vmem:[%s654 + $0x28] sm:$0xf]
      %v666 = vld [vmem:[%s654 + $0x2c] sm:$0xf]
      %v667 = vld [vmem:[%s654 + $0x30] sm:$0xf]
      %v668 = vld [vmem:[%s654 + $0x34] sm:$0xf]
      %v669 = vld [vmem:[%s654 + $0x38] sm:$0xf]
      %v670 = vld [vmem:[%s654 + $0x3c] sm:$0xf]
      %v671 = vld [vmem:[%s654 + $0x40] sm:$0xf]
      %v672 = vld [vmem:[%s654 + $0x44] sm:$0xf]
      %v673 = vld [vmem:[%s654 + $0x48] sm:$0xf]
      %v674 = vld [vmem:[%s654 + $0x4c] sm:$0xf]
      %v675 = vld [vmem:[%s654 + $0x50] sm:$0xf]
      %v676 = vld [vmem:[%s654 + $0x54] sm:$0xf]
      %v677 = vld [vmem:[%s654 + $0x58] sm:$0xf]
      %v678 = vld [vmem:[%s654 + $0x5c] sm:$0xf]
      %v679 = vld [vmem:[%s654 + $0x60] sm:$0xf]
      %v680 = vld [vmem:[%s654 + $0x64] sm:$0xf]
      %v681 = vld [vmem:[%s654 + $0x68] sm:$0xf]
      %v682 = vld [vmem:[%s654 + $0x6c] sm:$0xf]
      %v683 = vld [vmem:[%s654 + $0x70] sm:$0xf]
      %v684 = vld [vmem:[%s654 + $0x74] sm:$0xf]
      %v685 = vld [vmem:[%s654 + $0x78] sm:$0xf]
      %v686 = vld [vmem:[%s654 + $0x7c] sm:$0xf]
      %v687 = vld [vmem:[%s654 + $0x80] sm:$0xf]
      %v688 = vld [vmem:[%s654 + $0x84] sm:$0xf]
      %v689 = vld [vmem:[%s654 + $0x88] sm:$0xf]
      %v690 = vld [vmem:[%s654 + $0x8c] sm:$0xf]
      %v691 = vld [vmem:[%s654 + $0x90] sm:$0xf]
      %v692 = vld [vmem:[%s654 + $0x94] sm:$0xf]
      %v693 = vld [vmem:[%s654 + $0x98] sm:$0xf]
      %v694 = vld [vmem:[%s654 + $0x9c] sm:$0xf]
      %v695 = vld [vmem:[%s654 + $0xa0] sm:$0xf]
      %v696 = vld [vmem:[%s654 + $0xa4] sm:$0xf]
      %v697 = vld [vmem:[%s654 + $0xa8] sm:$0xf]
      %v698 = vld [vmem:[%s654 + $0xac] sm:$0xf]
      %v699 = vld [vmem:[%s654 + $0xb0] sm:$0xf]
      %v700 = vld [vmem:[%s654 + $0xb4] sm:$0xf]
      %v701 = vld [vmem:[%s654 + $0xb8] sm:$0xf]
      %v702 = vld [vmem:[%s654 + $0xbc] sm:$0xf]
      %v703 = vld [vmem:[%s654 + $0xc0] sm:$0xf]
      %v704 = vld [vmem:[%s654 + $0xc4] sm:$0xf]
      %v705 = vld [vmem:[%s654 + $0xc8] sm:$0xf]
      %v706 = vld [vmem:[%s654 + $0xcc] sm:$0xf]
      %v707 = vld [vmem:[%s654 + $0xd0] sm:$0xf]
      %v708 = vld [vmem:[%s654 + $0xd4] sm:$0xf]
      %v709 = vld [vmem:[%s654 + $0xd8] sm:$0xf]
      %v710 = vld [vmem:[%s654 + $0xdc] sm:$0xf]
      %v711 = vld [vmem:[%s654 + $0xe0] sm:$0xf]
      %v712 = vld [vmem:[%s654 + $0xe4] sm:$0xf]
      %v713 = vld [vmem:[%s654 + $0xe8] sm:$0xf]
      %v714 = vld [vmem:[%s654 + $0xec] sm:$0xf]
      %v715 = vld [vmem:[%s654 + $0xf0] sm:$0xf]
      %v716 = vld [vmem:[%s654 + $0xf4] sm:$0xf]
      %v717 = vld [vmem:[%s654 + $0xf8] sm:$0xf]
      %v718 = vld [vmem:[%s654 + $0xfc] sm:$0xf]
      %v783 = vunpack.c.l.b16 %v655
      %v784 = vunpack.c.l.b16 %v656
      %v785 = vunpack.c.l.b16 %v657
      %v786 = vunpack.c.l.b16 %v658
      %v787 = vunpack.c.l.b16 %v659
      %v788 = vunpack.c.l.b16 %v660
      %v789 = vunpack.c.l.b16 %v661
      %v790 = vunpack.c.l.b16 %v662
      %v791 = vunpack.c.l.b16 %v663
      %v792 = vunpack.c.l.b16 %v664
      %v793 = vunpack.c.l.b16 %v665
      %v794 = vunpack.c.l.b16 %v666
      %v795 = vunpack.c.l.b16 %v667
      %v796 = vunpack.c.l.b16 %v668
      %v797 = vunpack.c.l.b16 %v669
      %v798 = vunpack.c.l.b16 %v670
      %v799 = vunpack.c.l.b16 %v671
      %v800 = vunpack.c.l.b16 %v672
      %v801 = vunpack.c.l.b16 %v673
      %v802 = vunpack.c.l.b16 %v674
      %v803 = vunpack.c.l.b16 %v675
      %v804 = vunpack.c.l.b16 %v676
      %v805 = vunpack.c.l.b16 %v677
      %v806 = vunpack.c.l.b16 %v678
      %v807 = vunpack.c.l.b16 %v679
      %v808 = vunpack.c.l.b16 %v680
      %v809 = vunpack.c.l.b16 %v681
      %v810 = vunpack.c.l.b16 %v682
      %v811 = vunpack.c.l.b16 %v683
      %v812 = vunpack.c.l.b16 %v684
      %v813 = vunpack.c.l.b16 %v685
      %v814 = vunpack.c.l.b16 %v686
      %v815 = vunpack.c.l.b16 %v687
      %v816 = vunpack.c.l.b16 %v688
      %v817 = vunpack.c.l.b16 %v689
      %v818 = vunpack.c.l.b16 %v690
      %v819 = vunpack.c.l.b16 %v691
      %v820 = vunpack.c.l.b16 %v692
      %v821 = vunpack.c.l.b16 %v693
      %v822 = vunpack.c.l.b16 %v694
      %v823 = vunpack.c.l.b16 %v695
      %v824 = vunpack.c.l.b16 %v696
      %v825 = vunpack.c.l.b16 %v697
      %v826 = vunpack.c.l.b16 %v698
      %v827 = vunpack.c.l.b16 %v699
      %v828 = vunpack.c.l.b16 %v700
      %v829 = vunpack.c.l.b16 %v701
      %v830 = vunpack.c.l.b16 %v702
      %v831 = vunpack.c.l.b16 %v703
      %v832 = vunpack.c.l.b16 %v704
      %v833 = vunpack.c.l.b16 %v705
      %v834 = vunpack.c.l.b16 %v706
      %v835 = vunpack.c.l.b16 %v707
      %v836 = vunpack.c.l.b16 %v708
      %v837 = vunpack.c.l.b16 %v709
      %v838 = vunpack.c.l.b16 %v710
      %v839 = vunpack.c.l.b16 %v711
      %v840 = vunpack.c.l.b16 %v712
      %v841 = vunpack.c.l.b16 %v713
      %v842 = vunpack.c.l.b16 %v714
      %v843 = vunpack.c.l.b16 %v715
      %v844 = vunpack.c.l.b16 %v716
      %v845 = vunpack.c.l.b16 %v717
      %v846 = vunpack.c.l.b16 %v718
      %v847 = vpack.c.b16 %v784, %v783
      %v848 = vpack.c.b16 %v786, %v785
      %v849 = vpack.c.b16 %v788, %v787
      %v850 = vpack.c.b16 %v790, %v789
      %v851 = vpack.c.b16 %v792, %v791
      %v852 = vpack.c.b16 %v794, %v793
      %v853 = vpack.c.b16 %v796, %v795
      %v854 = vpack.c.b16 %v798, %v797
      %v855 = vpack.c.b16 %v800, %v799
      %v856 = vpack.c.b16 %v802, %v801
      %v857 = vpack.c.b16 %v804, %v803
      %v858 = vpack.c.b16 %v806, %v805
      %v859 = vpack.c.b16 %v808, %v807
      %v860 = vpack.c.b16 %v810, %v809
      %v861 = vpack.c.b16 %v812, %v811
      %v862 = vpack.c.b16 %v814, %v813
      %v863 = vpack.c.b16 %v816, %v815
      %v864 = vpack.c.b16 %v818, %v817
      %v865 = vpack.c.b16 %v820, %v819
      %v866 = vpack.c.b16 %v822, %v821
      %v867 = vpack.c.b16 %v824, %v823
      %v868 = vpack.c.b16 %v826, %v825
      %v869 = vpack.c.b16 %v828, %v827
      %v870 = vpack.c.b16 %v830, %v829
      %v871 = vpack.c.b16 %v832, %v831
      %v872 = vpack.c.b16 %v834, %v833
      %v873 = vpack.c.b16 %v836, %v835
      %v874 = vpack.c.b16 %v838, %v837
      %v875 = vpack.c.b16 %v840, %v839
      %v876 = vpack.c.b16 %v842, %v841
      %v877 = vpack.c.b16 %v844, %v843
      %v878 = vpack.c.b16 %v846, %v845
      %911 = vmatprep.subr.bf16.mxu0 0
      %912 = vmatpush1.bf16.msra.mxu0 %v854
      %913 = vmatprep.subr.bf16.mxu0 0
      %914 = vmatpush1.bf16.msra.mxu0 %v853
      %915 = vmatprep.subr.bf16.mxu0 0
      %916 = vmatpush1.bf16.msra.mxu0 %v852
      %917 = vmatprep.subr.bf16.mxu0 0
      %918 = vmatpush1.bf16.msra.mxu0 %v851
      %919 = vmatprep.subr.bf16.mxu0 0
      %920 = vmatpush1.bf16.msra.mxu0 %v850
      %921 = vmatprep.subr.bf16.mxu0 0
      %922 = vmatpush1.bf16.msra.mxu0 %v849
      %923 = vmatprep.subr.bf16.mxu0 0
      %924 = vmatpush1.bf16.msra.mxu0 %v848
      %925 = vmatprep.subr.bf16.mxu0 0
      %926 = vmatpush1.bf16.msra.mxu0 %v847
      %927 = vmatprep.subr.bf16.mxu0 0
      %928 = vmatpush2.bf16.msra.mxu0 %v862
      %929 = vmatprep.subr.bf16.mxu0 0
      %930 = vmatpush2.bf16.msra.mxu0 %v861
      %931 = vmatprep.subr.bf16.mxu0 0
      %932 = vmatpush2.bf16.msra.mxu0 %v860
      %933 = vmatprep.subr.bf16.mxu0 0
      %934 = vmatpush2.bf16.msra.mxu0 %v859
      %935 = vmatprep.subr.bf16.mxu0 0
      %936 = vmatpush2.bf16.msra.mxu0 %v858
      %937 = vmatprep.subr.bf16.mxu0 0
      %938 = vmatpush2.bf16.msra.mxu0 %v857
      %939 = vmatprep.subr.bf16.mxu0 0
      %940 = vmatpush2.bf16.msra.mxu0 %v856
      %941 = vmatprep.subr.bf16.mxu0 0
      %942 = vmatpush2.bf16.msra.mxu0 %v855
      %943 = vmatprep.mubr.bf16.mxu0 %v301
      %944 = vmatmul.mubr.bf16.gmra.mxu0 %v300
      %v945 = vpop.f32.mrf.mxu0
      %v946 = vadd.f32 0.0, %v945
      %v947 = vpop.f32.mrf.mxu0
      %v948 = vpop.f32.mrf.mxu0
      %v949 = vadd.f32 0.0, %v948
      %v950 = vpop.f32.mrf.mxu0
      %951 = vmatprep.mubr.bf16.mxu0 %v305
      %952 = vmatmul.mubr.bf16.gmra.mxu0 %v304
      %v953 = vpop.f32.mrf.mxu0
      %v954 = vadd.f32 0.0, %v953
      %v955 = vpop.f32.mrf.mxu0
      %v956 = vpop.f32.mrf.mxu0
      %v957 = vadd.f32 0.0, %v956
      %v958 = vpop.f32.mrf.mxu0
      %959 = vmatprep.mubr.bf16.mxu0 %v309
      %960 = vmatmul.mubr.bf16.gmra.mxu0 %v308
      %v961 = vpop.f32.mrf.mxu0
      %v962 = vadd.f32 0.0, %v961
      %v963 = vpop.f32.mrf.mxu0
      %v964 = vpop.f32.mrf.mxu0
      %v965 = vadd.f32 0.0, %v964
      %v966 = vpop.f32.mrf.mxu0
      %967 = vmatprep.mubr.bf16.mxu0 %v313
      %968 = vmatmul.mubr.bf16.gmra.mxu0 %v312
      %v969 = vpop.f32.mrf.mxu0
      %v970 = vadd.f32 0.0, %v969
      %v971 = vpop.f32.mrf.mxu0
      %v972 = vpop.f32.mrf.mxu0
      %v973 = vadd.f32 0.0, %v972
      %v974 = vpop.f32.mrf.mxu0
      %975 = vdwg.mxu0
      %976 = vmatprep.subr.bf16.mxu0 0
      %977 = vmatpush1.bf16.msra.mxu0 %v870
      %978 = vmatprep.subr.bf16.mxu0 0
      %979 = vmatpush1.bf16.msra.mxu0 %v869
      %980 = vmatprep.subr.bf16.mxu0 0
      %981 = vmatpush1.bf16.msra.mxu0 %v868
      %982 = vmatprep.subr.bf16.mxu0 0
      %983 = vmatpush1.bf16.msra.mxu0 %v867
      %984 = vmatprep.subr.bf16.mxu0 0
      %985 = vmatpush1.bf16.msra.mxu0 %v866
      %986 = vmatprep.subr.bf16.mxu0 0
      %987 = vmatpush1.bf16.msra.mxu0 %v865
      %988 = vmatprep.subr.bf16.mxu0 0
      %989 = vmatpush1.bf16.msra.mxu0 %v864
      %990 = vmatprep.subr.bf16.mxu0 0
      %991 = vmatpush1.bf16.msra.mxu0 %v863
      %992 = vmatprep.subr.bf16.mxu0 0
      %993 = vmatpush2.bf16.msra.mxu0 %v878
      %994 = vmatprep.subr.bf16.mxu0 0
      %995 = vmatpush2.bf16.msra.mxu0 %v877
      %996 = vmatprep.subr.bf16.mxu0 0
      %997 = vmatpush2.bf16.msra.mxu0 %v876
      %998 = vmatprep.subr.bf16.mxu0 0
      %999 = vmatpush2.bf16.msra.mxu0 %v875
      %1000 = vmatprep.subr.bf16.mxu0 0
      %1001 = vmatpush2.bf16.msra.mxu0 %v874
      %1002 = vmatprep.subr.bf16.mxu0 0
      %1003 = vmatpush2.bf16.msra.mxu0 %v873
      %1004 = vmatprep.subr.bf16.mxu0 0
      %1005 = vmatpush2.bf16.msra.mxu0 %v872
      %1006 = vmatprep.subr.bf16.mxu0 0
      %1007 = vmatpush2.bf16.msra.mxu0 %v871
      %1008 = vmatprep.mubr.bf16.mxu0 %v303
      %1009 = vmatmul.mubr.bf16.gmra.mxu0 %v302
      %v1010 = vpop.f32.mrf.mxu0
      %v1011 = vadd.f32 %v946, %v1010
      %v1012 = vpop.f32.mrf.mxu0
      %v1013 = vpop.f32.mrf.mxu0
      %v1014 = vadd.f32 %v949, %v1013
      %v1015 = vpop.f32.mrf.mxu0
      %1016 = vmatprep.mubr.bf16.mxu0 %v307
      %1017 = vmatmul.mubr.bf16.gmra.mxu0 %v306
      %v1018 = vpop.f32.mrf.mxu0
      %v1019 = vadd.f32 %v954, %v1018
      %v1020 = vpop.f32.mrf.mxu0
      %v1021 = vpop.f32.mrf.mxu0
      %v1022 = vadd.f32 %v957, %v1021
      %v1023 = vpop.f32.mrf.mxu0
      %1024 = vmatprep.mubr.bf16.mxu0 %v311
      %1025 = vmatmul.mubr.bf16.gmra.mxu0 %v310
      %v1026 = vpop.f32.mrf.mxu0
      %v1027 = vadd.f32 %v962, %v1026
      %v1028 = vpop.f32.mrf.mxu0
      %v1029 = vpop.f32.mrf.mxu0
      %v1030 = vadd.f32 %v965, %v1029
      %v1031 = vpop.f32.mrf.mxu0
      %1032 = vmatprep.mubr.bf16.mxu0 %v315
      %1033 = vmatmul.mubr.bf16.gmra.mxu0 %v314
      %v1034 = vpop.f32.mrf.mxu0
      %v1035 = vadd.f32 %v970, %v1034
      %v1036 = vpop.f32.mrf.mxu0
      %v1037 = vpop.f32.mrf.mxu0
      %v1038 = vadd.f32 %v973, %v1037
      %v1039 = vpop.f32.mrf.mxu0
      %1040 = vdwg.mxu0
      %v1041 = vmax.f32 %v624, %v1011
      %v1042 = vmax.f32 %v627, %v1014
      %v1043 = vmax.f32 %v632, %v1019
      %v1044 = vmax.f32 %v635, %v1022
      %v1045 = vmax.f32 %v640, %v1027
      %v1046 = vmax.f32 %v643, %v1030
      %v1047 = vmax.f32 %v648, %v1035
      %v1048 = vmax.f32 %v651, %v1038
      %s1049 = scalar_lea.vmem %s165, 512
      %v1050 = vld [vmem:[%s1049] sm:$0xf]
      %v1051 = vld [vmem:[%s1049 + $0x4] sm:$0xf]
      %v1052 = vld [vmem:[%s1049 + $0x8] sm:$0xf]
      %v1053 = vld [vmem:[%s1049 + $0xc] sm:$0xf]
      %v1054 = vld [vmem:[%s1049 + $0x10] sm:$0xf]
      %v1055 = vld [vmem:[%s1049 + $0x14] sm:$0xf]
      %v1056 = vld [vmem:[%s1049 + $0x18] sm:$0xf]
      %v1057 = vld [vmem:[%s1049 + $0x1c] sm:$0xf]
      %v1058 = vld [vmem:[%s1049 + $0x20] sm:$0xf]
      %v1059 = vld [vmem:[%s1049 + $0x24] sm:$0xf]
      %v1060 = vld [vmem:[%s1049 + $0x28] sm:$0xf]
      %v1061 = vld [vmem:[%s1049 + $0x2c] sm:$0xf]
      %v1062 = vld [vmem:[%s1049 + $0x30] sm:$0xf]
      %v1063 = vld [vmem:[%s1049 + $0x34] sm:$0xf]
      %v1064 = vld [vmem:[%s1049 + $0x38] sm:$0xf]
      %v1065 = vld [vmem:[%s1049 + $0x3c] sm:$0xf]
      %v1066 = vld [vmem:[%s1049 + $0x40] sm:$0xf]
      %v1067 = vld [vmem:[%s1049 + $0x44] sm:$0xf]
      %v1068 = vld [vmem:[%s1049 + $0x48] sm:$0xf]
      %v1069 = vld [vmem:[%s1049 + $0x4c] sm:$0xf]
      %v1070 = vld [vmem:[%s1049 + $0x50] sm:$0xf]
      %v1071 = vld [vmem:[%s1049 + $0x54] sm:$0xf]
      %v1072 = vld [vmem:[%s1049 + $0x58] sm:$0xf]
      %v1073 = vld [vmem:[%s1049 + $0x5c] sm:$0xf]
      %v1074 = vld [vmem:[%s1049 + $0x60] sm:$0xf]
      %v1075 = vld [vmem:[%s1049 + $0x64] sm:$0xf]
      %v1076 = vld [vmem:[%s1049 + $0x68] sm:$0xf]
      %v1077 = vld [vmem:[%s1049 + $0x6c] sm:$0xf]
      %v1078 = vld [vmem:[%s1049 + $0x70] sm:$0xf]
      %v1079 = vld [vmem:[%s1049 + $0x74] sm:$0xf]
      %v1080 = vld [vmem:[%s1049 + $0x78] sm:$0xf]
      %v1081 = vld [vmem:[%s1049 + $0x7c] sm:$0xf]
      %v1082 = vld [vmem:[%s1049 + $0x80] sm:$0xf]
      %v1083 = vld [vmem:[%s1049 + $0x84] sm:$0xf]
      %v1084 = vld [vmem:[%s1049 + $0x88] sm:$0xf]
      %v1085 = vld [vmem:[%s1049 + $0x8c] sm:$0xf]
      %v1086 = vld [vmem:[%s1049 + $0x90] sm:$0xf]
      %v1087 = vld [vmem:[%s1049 + $0x94] sm:$0xf]
      %v1088 = vld [vmem:[%s1049 + $0x98] sm:$0xf]
      %v1089 = vld [vmem:[%s1049 + $0x9c] sm:$0xf]
      %v1090 = vld [vmem:[%s1049 + $0xa0] sm:$0xf]
      %v1091 = vld [vmem:[%s1049 + $0xa4] sm:$0xf]
      %v1092 = vld [vmem:[%s1049 + $0xa8] sm:$0xf]
      %v1093 = vld [vmem:[%s1049 + $0xac] sm:$0xf]
      %v1094 = vld [vmem:[%s1049 + $0xb0] sm:$0xf]
      %v1095 = vld [vmem:[%s1049 + $0xb4] sm:$0xf]
      %v1096 = vld [vmem:[%s1049 + $0xb8] sm:$0xf]
      %v1097 = vld [vmem:[%s1049 + $0xbc] sm:$0xf]
      %v1098 = vld [vmem:[%s1049 + $0xc0] sm:$0xf]
      %v1099 = vld [vmem:[%s1049 + $0xc4] sm:$0xf]
      %v1100 = vld [vmem:[%s1049 + $0xc8] sm:$0xf]
      %v1101 = vld [vmem:[%s1049 + $0xcc] sm:$0xf]
      %v1102 = vld [vmem:[%s1049 + $0xd0] sm:$0xf]
      %v1103 = vld [vmem:[%s1049 + $0xd4] sm:$0xf]
      %v1104 = vld [vmem:[%s1049 + $0xd8] sm:$0xf]
      %v1105 = vld [vmem:[%s1049 + $0xdc] sm:$0xf]
      %v1106 = vld [vmem:[%s1049 + $0xe0] sm:$0xf]
      %v1107 = vld [vmem:[%s1049 + $0xe4] sm:$0xf]
      %v1108 = vld [vmem:[%s1049 + $0xe8] sm:$0xf]
      %v1109 = vld [vmem:[%s1049 + $0xec] sm:$0xf]
      %v1110 = vld [vmem:[%s1049 + $0xf0] sm:$0xf]
      %v1111 = vld [vmem:[%s1049 + $0xf4] sm:$0xf]
      %v1112 = vld [vmem:[%s1049 + $0xf8] sm:$0xf]
      %v1113 = vld [vmem:[%s1049 + $0xfc] sm:$0xf]
      %v1178 = vunpack.c.l.b16 %v1050
      %v1179 = vunpack.c.l.b16 %v1051
      %v1180 = vunpack.c.l.b16 %v1052
      %v1181 = vunpack.c.l.b16 %v1053
      %v1182 = vunpack.c.l.b16 %v1054
      %v1183 = vunpack.c.l.b16 %v1055
      %v1184 = vunpack.c.l.b16 %v1056
      %v1185 = vunpack.c.l.b16 %v1057
      %v1186 = vunpack.c.l.b16 %v1058
      %v1187 = vunpack.c.l.b16 %v1059
      %v1188 = vunpack.c.l.b16 %v1060
      %v1189 = vunpack.c.l.b16 %v1061
      %v1190 = vunpack.c.l.b16 %v1062
      %v1191 = vunpack.c.l.b16 %v1063
      %v1192 = vunpack.c.l.b16 %v1064
      %v1193 = vunpack.c.l.b16 %v1065
      %v1194 = vunpack.c.l.b16 %v1066
      %v1195 = vunpack.c.l.b16 %v1067
      %v1196 = vunpack.c.l.b16 %v1068
      %v1197 = vunpack.c.l.b16 %v1069
      %v1198 = vunpack.c.l.b16 %v1070
      %v1199 = vunpack.c.l.b16 %v1071
      %v1200 = vunpack.c.l.b16 %v1072
      %v1201 = vunpack.c.l.b16 %v1073
      %v1202 = vunpack.c.l.b16 %v1074
      %v1203 = vunpack.c.l.b16 %v1075
      %v1204 = vunpack.c.l.b16 %v1076
      %v1205 = vunpack.c.l.b16 %v1077
      %v1206 = vunpack.c.l.b16 %v1078
      %v1207 = vunpack.c.l.b16 %v1079
      %v1208 = vunpack.c.l.b16 %v1080
      %v1209 = vunpack.c.l.b16 %v1081
      %v1210 = vunpack.c.l.b16 %v1082
      %v1211 = vunpack.c.l.b16 %v1083
      %v1212 = vunpack.c.l.b16 %v1084
      %v1213 = vunpack.c.l.b16 %v1085
      %v1214 = vunpack.c.l.b16 %v1086
      %v1215 = vunpack.c.l.b16 %v1087
      %v1216 = vunpack.c.l.b16 %v1088
      %v1217 = vunpack.c.l.b16 %v1089
      %v1218 = vunpack.c.l.b16 %v1090
      %v1219 = vunpack.c.l.b16 %v1091
      %v1220 = vunpack.c.l.b16 %v1092
      %v1221 = vunpack.c.l.b16 %v1093
      %v1222 = vunpack.c.l.b16 %v1094
      %v1223 = vunpack.c.l.b16 %v1095
      %v1224 = vunpack.c.l.b16 %v1096
      %v1225 = vunpack.c.l.b16 %v1097
      %v1226 = vunpack.c.l.b16 %v1098
      %v1227 = vunpack.c.l.b16 %v1099
      %v1228 = vunpack.c.l.b16 %v1100
      %v1229 = vunpack.c.l.b16 %v1101
      %v1230 = vunpack.c.l.b16 %v1102
      %v1231 = vunpack.c.l.b16 %v1103
      %v1232 = vunpack.c.l.b16 %v1104
      %v1233 = vunpack.c.l.b16 %v1105
      %v1234 = vunpack.c.l.b16 %v1106
      %v1235 = vunpack.c.l.b16 %v1107
      %v1236 = vunpack.c.l.b16 %v1108
      %v1237 = vunpack.c.l.b16 %v1109
      %v1238 = vunpack.c.l.b16 %v1110
      %v1239 = vunpack.c.l.b16 %v1111
      %v1240 = vunpack.c.l.b16 %v1112
      %v1241 = vunpack.c.l.b16 %v1113
      %v1242 = vpack.c.b16 %v1179, %v1178
      %v1243 = vpack.c.b16 %v1181, %v1180
      %v1244 = vpack.c.b16 %v1183, %v1182
      %v1245 = vpack.c.b16 %v1185, %v1184
      %v1246 = vpack.c.b16 %v1187, %v1186
      %v1247 = vpack.c.b16 %v1189, %v1188
      %v1248 = vpack.c.b16 %v1191, %v1190
      %v1249 = vpack.c.b16 %v1193, %v1192
      %v1250 = vpack.c.b16 %v1195, %v1194
      %v1251 = vpack.c.b16 %v1197, %v1196
      %v1252 = vpack.c.b16 %v1199, %v1198
      %v1253 = vpack.c.b16 %v1201, %v1200
      %v1254 = vpack.c.b16 %v1203, %v1202
      %v1255 = vpack.c.b16 %v1205, %v1204
      %v1256 = vpack.c.b16 %v1207, %v1206
      %v1257 = vpack.c.b16 %v1209, %v1208
      %v1258 = vpack.c.b16 %v1211, %v1210
      %v1259 = vpack.c.b16 %v1213, %v1212
      %v1260 = vpack.c.b16 %v1215, %v1214
      %v1261 = vpack.c.b16 %v1217, %v1216
      %v1262 = vpack.c.b16 %v1219, %v1218
      %v1263 = vpack.c.b16 %v1221, %v1220
      %v1264 = vpack.c.b16 %v1223, %v1222
      %v1265 = vpack.c.b16 %v1225, %v1224
      %v1266 = vpack.c.b16 %v1227, %v1226
      %v1267 = vpack.c.b16 %v1229, %v1228
      %v1268 = vpack.c.b16 %v1231, %v1230
      %v1269 = vpack.c.b16 %v1233, %v1232
      %v1270 = vpack.c.b16 %v1235, %v1234
      %v1271 = vpack.c.b16 %v1237, %v1236
      %v1272 = vpack.c.b16 %v1239, %v1238
      %v1273 = vpack.c.b16 %v1241, %v1240
      %1306 = vmatprep.subr.bf16.mxu0 0
      %1307 = vmatpush1.bf16.msra.mxu0 %v1249
      %1308 = vmatprep.subr.bf16.mxu0 0
      %1309 = vmatpush1.bf16.msra.mxu0 %v1248
      %1310 = vmatprep.subr.bf16.mxu0 0
      %1311 = vmatpush1.bf16.msra.mxu0 %v1247
      %1312 = vmatprep.subr.bf16.mxu0 0
      %1313 = vmatpush1.bf16.msra.mxu0 %v1246
      %1314 = vmatprep.subr.bf16.mxu0 0
      %1315 = vmatpush1.bf16.msra.mxu0 %v1245
      %1316 = vmatprep.subr.bf16.mxu0 0
      %1317 = vmatpush1.bf16.msra.mxu0 %v1244
      %1318 = vmatprep.subr.bf16.mxu0 0
      %1319 = vmatpush1.bf16.msra.mxu0 %v1243
      %1320 = vmatprep.subr.bf16.mxu0 0
      %1321 = vmatpush1.bf16.msra.mxu0 %v1242
      %1322 = vmatprep.subr.bf16.mxu0 0
      %1323 = vmatpush2.bf16.msra.mxu0 %v1257
      %1324 = vmatprep.subr.bf16.mxu0 0
      %1325 = vmatpush2.bf16.msra.mxu0 %v1256
      %1326 = vmatprep.subr.bf16.mxu0 0
      %1327 = vmatpush2.bf16.msra.mxu0 %v1255
      %1328 = vmatprep.subr.bf16.mxu0 0
      %1329 = vmatpush2.bf16.msra.mxu0 %v1254
      %1330 = vmatprep.subr.bf16.mxu0 0
      %1331 = vmatpush2.bf16.msra.mxu0 %v1253
      %1332 = vmatprep.subr.bf16.mxu0 0
      %1333 = vmatpush2.bf16.msra.mxu0 %v1252
      %1334 = vmatprep.subr.bf16.mxu0 0
      %1335 = vmatpush2.bf16.msra.mxu0 %v1251
      %1336 = vmatprep.subr.bf16.mxu0 0
      %1337 = vmatpush2.bf16.msra.mxu0 %v1250
      %1338 = vmatprep.mubr.bf16.mxu0 %v301
      %1339 = vmatmul.mubr.bf16.gmra.mxu0 %v300
      %v1340 = vpop.f32.mrf.mxu0
      %v1341 = vadd.f32 0.0, %v1340
      %v1342 = vpop.f32.mrf.mxu0
      %v1343 = vpop.f32.mrf.mxu0
      %v1344 = vadd.f32 0.0, %v1343
      %v1345 = vpop.f32.mrf.mxu0
      %1346 = vmatprep.mubr.bf16.mxu0 %v305
      %1347 = vmatmul.mubr.bf16.gmra.mxu0 %v304
      %v1348 = vpop.f32.mrf.mxu0
      %v1349 = vadd.f32 0.0, %v1348
      %v1350 = vpop.f32.mrf.mxu0
      %v1351 = vpop.f32.mrf.mxu0
      %v1352 = vadd.f32 0.0, %v1351
      %v1353 = vpop.f32.mrf.mxu0
      %1354 = vmatprep.mubr.bf16.mxu0 %v309
      %1355 = vmatmul.mubr.bf16.gmra.mxu0 %v308
      %v1356 = vpop.f32.mrf.mxu0
      %v1357 = vadd.f32 0.0, %v1356
      %v1358 = vpop.f32.mrf.mxu0
      %v1359 = vpop.f32.mrf.mxu0
      %v1360 = vadd.f32 0.0, %v1359
      %v1361 = vpop.f32.mrf.mxu0
      %1362 = vmatprep.mubr.bf16.mxu0 %v313
      %1363 = vmatmul.mubr.bf16.gmra.mxu0 %v312
      %v1364 = vpop.f32.mrf.mxu0
      %v1365 = vadd.f32 0.0, %v1364
      %v1366 = vpop.f32.mrf.mxu0
      %v1367 = vpop.f32.mrf.mxu0
      %v1368 = vadd.f32 0.0, %v1367
      %v1369 = vpop.f32.mrf.mxu0
      %1370 = vdwg.mxu0
      %1371 = vmatprep.subr.bf16.mxu0 0
      %1372 = vmatpush1.bf16.msra.mxu0 %v1265
      %1373 = vmatprep.subr.bf16.mxu0 0
      %1374 = vmatpush1.bf16.msra.mxu0 %v1264
      %1375 = vmatprep.subr.bf16.mxu0 0
      %1376 = vmatpush1.bf16.msra.mxu0 %v1263
      %1377 = vmatprep.subr.bf16.mxu0 0
      %1378 = vmatpush1.bf16.msra.mxu0 %v1262
      %1379 = vmatprep.subr.bf16.mxu0 0
      %1380 = vmatpush1.bf16.msra.mxu0 %v1261
      %1381 = vmatprep.subr.bf16.mxu0 0
      %1382 = vmatpush1.bf16.msra.mxu0 %v1260
      %1383 = vmatprep.subr.bf16.mxu0 0
      %1384 = vmatpush1.bf16.msra.mxu0 %v1259
      %1385 = vmatprep.subr.bf16.mxu0 0
      %1386 = vmatpush1.bf16.msra.mxu0 %v1258
      %1387 = vmatprep.subr.bf16.mxu0 0
      %1388 = vmatpush2.bf16.msra.mxu0 %v1273
      %1389 = vmatprep.subr.bf16.mxu0 0
      %1390 = vmatpush2.bf16.msra.mxu0 %v1272
      %1391 = vmatprep.subr.bf16.mxu0 0
      %1392 = vmatpush2.bf16.msra.mxu0 %v1271
      %1393 = vmatprep.subr.bf16.mxu0 0
      %1394 = vmatpush2.bf16.msra.mxu0 %v1270
      %1395 = vmatprep.subr.bf16.mxu0 0
      %1396 = vmatpush2.bf16.msra.mxu0 %v1269
      %1397 = vmatprep.subr.bf16.mxu0 0
      %1398 = vmatpush2.bf16.msra.mxu0 %v1268
      %1399 = vmatprep.subr.bf16.mxu0 0
      %1400 = vmatpush2.bf16.msra.mxu0 %v1267
      %1401 = vmatprep.subr.bf16.mxu0 0
      %1402 = vmatpush2.bf16.msra.mxu0 %v1266
      %1403 = vmatprep.mubr.bf16.mxu0 %v303
      %1404 = vmatmul.mubr.bf16.gmra.mxu0 %v302
      %v1405 = vpop.f32.mrf.mxu0
      %v1406 = vadd.f32 %v1341, %v1405
      %v1407 = vpop.f32.mrf.mxu0
      %v1408 = vpop.f32.mrf.mxu0
      %v1409 = vadd.f32 %v1344, %v1408
      %v1410 = vpop.f32.mrf.mxu0
      %1411 = vmatprep.mubr.bf16.mxu0 %v307
      %1412 = vmatmul.mubr.bf16.gmra.mxu0 %v306
      %v1413 = vpop.f32.mrf.mxu0
      %v1414 = vadd.f32 %v1349, %v1413
      %v1415 = vpop.f32.mrf.mxu0
      %v1416 = vpop.f32.mrf.mxu0
      %v1417 = vadd.f32 %v1352, %v1416
      %v1418 = vpop.f32.mrf.mxu0
      %1419 = vmatprep.mubr.bf16.mxu0 %v311
      %1420 = vmatmul.mubr.bf16.gmra.mxu0 %v310
      %v1421 = vpop.f32.mrf.mxu0
      %v1422 = vadd.f32 %v1357, %v1421
      %v1423 = vpop.f32.mrf.mxu0
      %v1424 = vpop.f32.mrf.mxu0
      %v1425 = vadd.f32 %v1360, %v1424
      %v1426 = vpop.f32.mrf.mxu0
      %1427 = vmatprep.mubr.bf16.mxu0 %v315
      %1428 = vmatmul.mubr.bf16.gmra.mxu0 %v314
      %v1429 = vpop.f32.mrf.mxu0
      %v1430 = vadd.f32 %v1365, %v1429
      %v1431 = vpop.f32.mrf.mxu0
      %v1432 = vpop.f32.mrf.mxu0
      %v1433 = vadd.f32 %v1368, %v1432
      %v1434 = vpop.f32.mrf.mxu0
      %1435 = vdwg.mxu0
      %v1436 = vmax.f32 %v1041, %v1406
      %v1437 = vmax.f32 %v1042, %v1409
      %v1438 = vmax.f32 %v1043, %v1414
      %v1439 = vmax.f32 %v1044, %v1417
      %v1440 = vmax.f32 %v1045, %v1422
      %v1441 = vmax.f32 %v1046, %v1425
      %v1442 = vmax.f32 %v1047, %v1430
      %v1443 = vmax.f32 %v1048, %v1433
      %s1444 = scalar_lea.vmem %s165, 768
      %v1445 = vld [vmem:[%s1444] sm:$0xf]
      %v1446 = vld [vmem:[%s1444 + $0x4] sm:$0xf]
      %v1447 = vld [vmem:[%s1444 + $0x8] sm:$0xf]
      %v1448 = vld [vmem:[%s1444 + $0xc] sm:$0xf]
      %v1449 = vld [vmem:[%s1444 + $0x10] sm:$0xf]
      %v1450 = vld [vmem:[%s1444 + $0x14] sm:$0xf]
      %v1451 = vld [vmem:[%s1444 + $0x18] sm:$0xf]
      %v1452 = vld [vmem:[%s1444 + $0x1c] sm:$0xf]
      %v1453 = vld [vmem:[%s1444 + $0x20] sm:$0xf]
      %v1454 = vld [vmem:[%s1444 + $0x24] sm:$0xf]
      %v1455 = vld [vmem:[%s1444 + $0x28] sm:$0xf]
      %v1456 = vld [vmem:[%s1444 + $0x2c] sm:$0xf]
      %v1457 = vld [vmem:[%s1444 + $0x30] sm:$0xf]
      %v1458 = vld [vmem:[%s1444 + $0x34] sm:$0xf]
      %v1459 = vld [vmem:[%s1444 + $0x38] sm:$0xf]
      %v1460 = vld [vmem:[%s1444 + $0x3c] sm:$0xf]
      %v1461 = vld [vmem:[%s1444 + $0x40] sm:$0xf]
      %v1462 = vld [vmem:[%s1444 + $0x44] sm:$0xf]
      %v1463 = vld [vmem:[%s1444 + $0x48] sm:$0xf]
      %v1464 = vld [vmem:[%s1444 + $0x4c] sm:$0xf]
      %v1465 = vld [vmem:[%s1444 + $0x50] sm:$0xf]
      %v1466 = vld [vmem:[%s1444 + $0x54] sm:$0xf]
      %v1467 = vld [vmem:[%s1444 + $0x58] sm:$0xf]
      %v1468 = vld [vmem:[%s1444 + $0x5c] sm:$0xf]
      %v1469 = vld [vmem:[%s1444 + $0x60] sm:$0xf]
      %v1470 = vld [vmem:[%s1444 + $0x64] sm:$0xf]
      %v1471 = vld [vmem:[%s1444 + $0x68] sm:$0xf]
      %v1472 = vld [vmem:[%s1444 + $0x6c] sm:$0xf]
      %v1473 = vld [vmem:[%s1444 + $0x70] sm:$0xf]
      %v1474 = vld [vmem:[%s1444 + $0x74] sm:$0xf]
      %v1475 = vld [vmem:[%s1444 + $0x78] sm:$0xf]
      %v1476 = vld [vmem:[%s1444 + $0x7c] sm:$0xf]
      %v1477 = vld [vmem:[%s1444 + $0x80] sm:$0xf]
      %v1478 = vld [vmem:[%s1444 + $0x84] sm:$0xf]
      %v1479 = vld [vmem:[%s1444 + $0x88] sm:$0xf]
      %v1480 = vld [vmem:[%s1444 + $0x8c] sm:$0xf]
      %v1481 = vld [vmem:[%s1444 + $0x90] sm:$0xf]
      %v1482 = vld [vmem:[%s1444 + $0x94] sm:$0xf]
      %v1483 = vld [vmem:[%s1444 + $0x98] sm:$0xf]
      %v1484 = vld [vmem:[%s1444 + $0x9c] sm:$0xf]
      %v1485 = vld [vmem:[%s1444 + $0xa0] sm:$0xf]
      %v1486 = vld [vmem:[%s1444 + $0xa4] sm:$0xf]
      %v1487 = vld [vmem:[%s1444 + $0xa8] sm:$0xf]
      %v1488 = vld [vmem:[%s1444 + $0xac] sm:$0xf]
      %v1489 = vld [vmem:[%s1444 + $0xb0] sm:$0xf]
      %v1490 = vld [vmem:[%s1444 + $0xb4] sm:$0xf]
      %v1491 = vld [vmem:[%s1444 + $0xb8] sm:$0xf]
      %v1492 = vld [vmem:[%s1444 + $0xbc] sm:$0xf]
      %v1493 = vld [vmem:[%s1444 + $0xc0] sm:$0xf]
      %v1494 = vld [vmem:[%s1444 + $0xc4] sm:$0xf]
      %v1495 = vld [vmem:[%s1444 + $0xc8] sm:$0xf]
      %v1496 = vld [vmem:[%s1444 + $0xcc] sm:$0xf]
      %v1497 = vld [vmem:[%s1444 + $0xd0] sm:$0xf]
      %v1498 = vld [vmem:[%s1444 + $0xd4] sm:$0xf]
      %v1499 = vld [vmem:[%s1444 + $0xd8] sm:$0xf]
      %v1500 = vld [vmem:[%s1444 + $0xdc] sm:$0xf]
      %v1501 = vld [vmem:[%s1444 + $0xe0] sm:$0xf]
      %v1502 = vld [vmem:[%s1444 + $0xe4] sm:$0xf]
      %v1503 = vld [vmem:[%s1444 + $0xe8] sm:$0xf]
      %v1504 = vld [vmem:[%s1444 + $0xec] sm:$0xf]
      %v1505 = vld [vmem:[%s1444 + $0xf0] sm:$0xf]
      %v1506 = vld [vmem:[%s1444 + $0xf4] sm:$0xf]
      %v1507 = vld [vmem:[%s1444 + $0xf8] sm:$0xf]
      %v1508 = vld [vmem:[%s1444 + $0xfc] sm:$0xf]
      %v1573 = vunpack.c.l.b16 %v1445
      %v1574 = vunpack.c.l.b16 %v1446
      %v1575 = vunpack.c.l.b16 %v1447
      %v1576 = vunpack.c.l.b16 %v1448
      %v1577 = vunpack.c.l.b16 %v1449
      %v1578 = vunpack.c.l.b16 %v1450
      %v1579 = vunpack.c.l.b16 %v1451
      %v1580 = vunpack.c.l.b16 %v1452
      %v1581 = vunpack.c.l.b16 %v1453
      %v1582 = vunpack.c.l.b16 %v1454
      %v1583 = vunpack.c.l.b16 %v1455
      %v1584 = vunpack.c.l.b16 %v1456
      %v1585 = vunpack.c.l.b16 %v1457
      %v1586 = vunpack.c.l.b16 %v1458
      %v1587 = vunpack.c.l.b16 %v1459
      %v1588 = vunpack.c.l.b16 %v1460
      %v1589 = vunpack.c.l.b16 %v1461
      %v1590 = vunpack.c.l.b16 %v1462
      %v1591 = vunpack.c.l.b16 %v1463
      %v1592 = vunpack.c.l.b16 %v1464
      %v1593 = vunpack.c.l.b16 %v1465
      %v1594 = vunpack.c.l.b16 %v1466
      %v1595 = vunpack.c.l.b16 %v1467
      %v1596 = vunpack.c.l.b16 %v1468
      %v1597 = vunpack.c.l.b16 %v1469
      %v1598 = vunpack.c.l.b16 %v1470
      %v1599 = vunpack.c.l.b16 %v1471
      %v1600 = vunpack.c.l.b16 %v1472
      %v1601 = vunpack.c.l.b16 %v1473
      %v1602 = vunpack.c.l.b16 %v1474
      %v1603 = vunpack.c.l.b16 %v1475
      %v1604 = vunpack.c.l.b16 %v1476
      %v1605 = vunpack.c.l.b16 %v1477
      %v1606 = vunpack.c.l.b16 %v1478
      %v1607 = vunpack.c.l.b16 %v1479
      %v1608 = vunpack.c.l.b16 %v1480
      %v1609 = vunpack.c.l.b16 %v1481
      %v1610 = vunpack.c.l.b16 %v1482
      %v1611 = vunpack.c.l.b16 %v1483
      %v1612 = vunpack.c.l.b16 %v1484
      %v1613 = vunpack.c.l.b16 %v1485
      %v1614 = vunpack.c.l.b16 %v1486
      %v1615 = vunpack.c.l.b16 %v1487
      %v1616 = vunpack.c.l.b16 %v1488
      %v1617 = vunpack.c.l.b16 %v1489
      %v1618 = vunpack.c.l.b16 %v1490
      %v1619 = vunpack.c.l.b16 %v1491
      %v1620 = vunpack.c.l.b16 %v1492
      %v1621 = vunpack.c.l.b16 %v1493
      %v1622 = vunpack.c.l.b16 %v1494
      %v1623 = vunpack.c.l.b16 %v1495
      %v1624 = vunpack.c.l.b16 %v1496
      %v1625 = vunpack.c.l.b16 %v1497
      %v1626 = vunpack.c.l.b16 %v1498
      %v1627 = vunpack.c.l.b16 %v1499
      %v1628 = vunpack.c.l.b16 %v1500
      %v1629 = vunpack.c.l.b16 %v1501
      %v1630 = vunpack.c.l.b16 %v1502
      %v1631 = vunpack.c.l.b16 %v1503
      %v1632 = vunpack.c.l.b16 %v1504
      %v1633 = vunpack.c.l.b16 %v1505
      %v1634 = vunpack.c.l.b16 %v1506
      %v1635 = vunpack.c.l.b16 %v1507
      %v1636 = vunpack.c.l.b16 %v1508
      %v1637 = vpack.c.b16 %v1574, %v1573
      %v1638 = vpack.c.b16 %v1576, %v1575
      %v1639 = vpack.c.b16 %v1578, %v1577
      %v1640 = vpack.c.b16 %v1580, %v1579
      %v1641 = vpack.c.b16 %v1582, %v1581
      %v1642 = vpack.c.b16 %v1584, %v1583
      %v1643 = vpack.c.b16 %v1586, %v1585
      %v1644 = vpack.c.b16 %v1588, %v1587
      %v1645 = vpack.c.b16 %v1590, %v1589
      %v1646 = vpack.c.b16 %v1592, %v1591
      %v1647 = vpack.c.b16 %v1594, %v1593
      %v1648 = vpack.c.b16 %v1596, %v1595
      %v1649 = vpack.c.b16 %v1598, %v1597
      %v1650 = vpack.c.b16 %v1600, %v1599
      %v1651 = vpack.c.b16 %v1602, %v1601
      %v1652 = vpack.c.b16 %v1604, %v1603
      %v1653 = vpack.c.b16 %v1606, %v1605
      %v1654 = vpack.c.b16 %v1608, %v1607
      %v1655 = vpack.c.b16 %v1610, %v1609
      %v1656 = vpack.c.b16 %v1612, %v1611
      %v1657 = vpack.c.b16 %v1614, %v1613
      %v1658 = vpack.c.b16 %v1616, %v1615
      %v1659 = vpack.c.b16 %v1618, %v1617
      %v1660 = vpack.c.b16 %v1620, %v1619
      %v1661 = vpack.c.b16 %v1622, %v1621
      %v1662 = vpack.c.b16 %v1624, %v1623
      %v1663 = vpack.c.b16 %v1626, %v1625
      %v1664 = vpack.c.b16 %v1628, %v1627
      %v1665 = vpack.c.b16 %v1630, %v1629
      %v1666 = vpack.c.b16 %v1632, %v1631
      %v1667 = vpack.c.b16 %v1634, %v1633
      %v1668 = vpack.c.b16 %v1636, %v1635
      %1701 = vmatprep.subr.bf16.mxu0 0
      %1702 = vmatpush1.bf16.msra.mxu0 %v1644
      %1703 = vmatprep.subr.bf16.mxu0 0
      %1704 = vmatpush1.bf16.msra.mxu0 %v1643
      %1705 = vmatprep.subr.bf16.mxu0 0
      %1706 = vmatpush1.bf16.msra.mxu0 %v1642
      %1707 = vmatprep.subr.bf16.mxu0 0
      %1708 = vmatpush1.bf16.msra.mxu0 %v1641
      %1709 = vmatprep.subr.bf16.mxu0 0
      %1710 = vmatpush1.bf16.msra.mxu0 %v1640
      %1711 = vmatprep.subr.bf16.mxu0 0
      %1712 = vmatpush1.bf16.msra.mxu0 %v1639
      %1713 = vmatprep.subr.bf16.mxu0 0
      %1714 = vmatpush1.bf16.msra.mxu0 %v1638
      %1715 = vmatprep.subr.bf16.mxu0 0
      %1716 = vmatpush1.bf16.msra.mxu0 %v1637
      %1717 = vmatprep.subr.bf16.mxu0 0
      %1718 = vmatpush2.bf16.msra.mxu0 %v1652
      %1719 = vmatprep.subr.bf16.mxu0 0
      %1720 = vmatpush2.bf16.msra.mxu0 %v1651
      %1721 = vmatprep.subr.bf16.mxu0 0
      %1722 = vmatpush2.bf16.msra.mxu0 %v1650
      %1723 = vmatprep.subr.bf16.mxu0 0
      %1724 = vmatpush2.bf16.msra.mxu0 %v1649
      %1725 = vmatprep.subr.bf16.mxu0 0
      %1726 = vmatpush2.bf16.msra.mxu0 %v1648
      %1727 = vmatprep.subr.bf16.mxu0 0
      %1728 = vmatpush2.bf16.msra.mxu0 %v1647
      %1729 = vmatprep.subr.bf16.mxu0 0
      %1730 = vmatpush2.bf16.msra.mxu0 %v1646
      %1731 = vmatprep.subr.bf16.mxu0 0
      %1732 = vmatpush2.bf16.msra.mxu0 %v1645
      %1733 = vmatprep.mubr.bf16.mxu0 %v301
      %1734 = vmatmul.mubr.bf16.gmra.mxu0 %v300
      %v1735 = vpop.f32.mrf.mxu0
      %v1736 = vadd.f32 0.0, %v1735
      %v1737 = vpop.f32.mrf.mxu0
      %v1738 = vpop.f32.mrf.mxu0
      %v1739 = vadd.f32 0.0, %v1738
      %v1740 = vpop.f32.mrf.mxu0
      %1741 = vmatprep.mubr.bf16.mxu0 %v305
      %1742 = vmatmul.mubr.bf16.gmra.mxu0 %v304
      %v1743 = vpop.f32.mrf.mxu0
      %v1744 = vadd.f32 0.0, %v1743
      %v1745 = vpop.f32.mrf.mxu0
      %v1746 = vpop.f32.mrf.mxu0
      %v1747 = vadd.f32 0.0, %v1746
      %v1748 = vpop.f32.mrf.mxu0
      %1749 = vmatprep.mubr.bf16.mxu0 %v309
      %1750 = vmatmul.mubr.bf16.gmra.mxu0 %v308
      %v1751 = vpop.f32.mrf.mxu0
      %v1752 = vadd.f32 0.0, %v1751
      %v1753 = vpop.f32.mrf.mxu0
      %v1754 = vpop.f32.mrf.mxu0
      %v1755 = vadd.f32 0.0, %v1754
      %v1756 = vpop.f32.mrf.mxu0
      %1757 = vmatprep.mubr.bf16.mxu0 %v313
      %1758 = vmatmul.mubr.bf16.gmra.mxu0 %v312
      %v1759 = vpop.f32.mrf.mxu0
      %v1760 = vadd.f32 0.0, %v1759
      %v1761 = vpop.f32.mrf.mxu0
      %v1762 = vpop.f32.mrf.mxu0
      %v1763 = vadd.f32 0.0, %v1762
      %v1764 = vpop.f32.mrf.mxu0
      %1765 = vdwg.mxu0
      %1766 = vmatprep.subr.bf16.mxu0 0
      %1767 = vmatpush1.bf16.msra.mxu0 %v1660
      %1768 = vmatprep.subr.bf16.mxu0 0
      %1769 = vmatpush1.bf16.msra.mxu0 %v1659
      %1770 = vmatprep.subr.bf16.mxu0 0
      %1771 = vmatpush1.bf16.msra.mxu0 %v1658
      %1772 = vmatprep.subr.bf16.mxu0 0
      %1773 = vmatpush1.bf16.msra.mxu0 %v1657
      %1774 = vmatprep.subr.bf16.mxu0 0
      %1775 = vmatpush1.bf16.msra.mxu0 %v1656
      %1776 = vmatprep.subr.bf16.mxu0 0
      %1777 = vmatpush1.bf16.msra.mxu0 %v1655
      %1778 = vmatprep.subr.bf16.mxu0 0
      %1779 = vmatpush1.bf16.msra.mxu0 %v1654
      %1780 = vmatprep.subr.bf16.mxu0 0
      %1781 = vmatpush1.bf16.msra.mxu0 %v1653
      %1782 = vmatprep.subr.bf16.mxu0 0
      %1783 = vmatpush2.bf16.msra.mxu0 %v1668
      %1784 = vmatprep.subr.bf16.mxu0 0
      %1785 = vmatpush2.bf16.msra.mxu0 %v1667
      %1786 = vmatprep.subr.bf16.mxu0 0
      %1787 = vmatpush2.bf16.msra.mxu0 %v1666
      %1788 = vmatprep.subr.bf16.mxu0 0
      %1789 = vmatpush2.bf16.msra.mxu0 %v1665
      %1790 = vmatprep.subr.bf16.mxu0 0
      %1791 = vmatpush2.bf16.msra.mxu0 %v1664
      %1792 = vmatprep.subr.bf16.mxu0 0
      %1793 = vmatpush2.bf16.msra.mxu0 %v1663
      %1794 = vmatprep.subr.bf16.mxu0 0
      %1795 = vmatpush2.bf16.msra.mxu0 %v1662
      %1796 = vmatprep.subr.bf16.mxu0 0
      %1797 = vmatpush2.bf16.msra.mxu0 %v1661
      %1798 = vmatprep.mubr.bf16.mxu0 %v303
      %1799 = vmatmul.mubr.bf16.gmra.mxu0 %v302
      %v1800 = vpop.f32.mrf.mxu0
      %v1801 = vadd.f32 %v1736, %v1800
      %v1802 = vpop.f32.mrf.mxu0
      %v1803 = vpop.f32.mrf.mxu0
      %v1804 = vadd.f32 %v1739, %v1803
      %v1805 = vpop.f32.mrf.mxu0
      %1806 = vmatprep.mubr.bf16.mxu0 %v307
      %1807 = vmatmul.mubr.bf16.gmra.mxu0 %v306
      %v1808 = vpop.f32.mrf.mxu0
      %v1809 = vadd.f32 %v1744, %v1808
      %v1810 = vpop.f32.mrf.mxu0
      %v1811 = vpop.f32.mrf.mxu0
      %v1812 = vadd.f32 %v1747, %v1811
      %v1813 = vpop.f32.mrf.mxu0
      %1814 = vmatprep.mubr.bf16.mxu0 %v311
      %1815 = vmatmul.mubr.bf16.gmra.mxu0 %v310
      %v1816 = vpop.f32.mrf.mxu0
      %v1817 = vadd.f32 %v1752, %v1816
      %v1818 = vpop.f32.mrf.mxu0
      %v1819 = vpop.f32.mrf.mxu0
      %v1820 = vadd.f32 %v1755, %v1819
      %v1821 = vpop.f32.mrf.mxu0
      %1822 = vmatprep.mubr.bf16.mxu0 %v315
      %1823 = vmatmul.mubr.bf16.gmra.mxu0 %v314
      %v1824 = vpop.f32.mrf.mxu0
      %v1825 = vadd.f32 %v1760, %v1824
      %v1826 = vpop.f32.mrf.mxu0
      %v1827 = vpop.f32.mrf.mxu0
      %v1828 = vadd.f32 %v1763, %v1827
      %v1829 = vpop.f32.mrf.mxu0
      %1830 = vdwg.mxu0
      %v1831 = vmax.f32 %v1436, %v1801
      %v1832 = vmax.f32 %v1437, %v1804
      %v1833 = vmax.f32 %v1438, %v1809
      %v1834 = vmax.f32 %v1439, %v1812
      %v1835 = vmax.f32 %v1440, %v1817
      %v1836 = vmax.f32 %v1441, %v1820
      %v1837 = vmax.f32 %v1442, %v1825
      %v1838 = vmax.f32 %v1443, %v1828
      %v1839 = vld [vmem:[%s2] sm:$0xff]
      %v1840 = vld [vmem:[%s2 + $0x8] sm:$0xff]
      %v1841 = vld [vmem:[%s2 + $0x10] sm:$0xff]
      %v1842 = vld [vmem:[%s2 + $0x18] sm:$0xff]
      %v1843 = vld [vmem:[%s2 + $0x20] sm:$0xff]
      %v1844 = vld [vmem:[%s2 + $0x28] sm:$0xff]
      %v1845 = vld [vmem:[%s2 + $0x30] sm:$0xff]
      %v1846 = vld [vmem:[%s2 + $0x38] sm:$0xff]
      %1848 = vset.pattern.permute.xlu0 0
      %1849 = vperm.xlu0 %1848, %v1839
      %v1850 = vpop.permute.xlu0 %1849
      %1853 = vset.pattern.permute.xlu0 0
      %1854 = vperm.xlu0 %1853, %v1840
      %v1855 = vpop.permute.xlu0 %1854
      %1858 = vset.pattern.permute.xlu0 0
      %1859 = vperm.xlu0 %1858, %v1841
      %v1860 = vpop.permute.xlu0 %1859
      %1863 = vset.pattern.permute.xlu0 0
      %1864 = vperm.xlu0 %1863, %v1842
      %v1865 = vpop.permute.xlu0 %1864
      %1868 = vset.pattern.permute.xlu0 0
      %1869 = vperm.xlu0 %1868, %v1843
      %v1870 = vpop.permute.xlu0 %1869
      %1873 = vset.pattern.permute.xlu0 0
      %1874 = vperm.xlu0 %1873, %v1844
      %v1875 = vpop.permute.xlu0 %1874
      %1878 = vset.pattern.permute.xlu0 0
      %1879 = vperm.xlu0 %1878, %v1845
      %v1880 = vpop.permute.xlu0 %1879
      %1883 = vset.pattern.permute.xlu0 0
      %1884 = vperm.xlu0 %1883, %v1846
      %v1885 = vpop.permute.xlu0 %1884
      %v1887 = vadd.f32 %v1831, %v1850
      %v1888 = vadd.f32 %v1832, %v1855
      %v1889 = vadd.f32 %v1833, %v1860
      %v1890 = vadd.f32 %v1834, %v1865
      %v1891 = vadd.f32 %v1835, %v1870
      %v1892 = vadd.f32 %v1836, %v1875
      %v1893 = vadd.f32 %v1837, %v1880
      %v1894 = vadd.f32 %v1838, %v1885
      %v1895 = vmax.f32 %v1887, 0.0
      %v1896 = vmax.f32 %v1888, 0.0
      %v1897 = vmax.f32 %v1889, 0.0
      %v1898 = vmax.f32 %v1890, 0.0
      %v1899 = vmax.f32 %v1891, 0.0
      %v1900 = vmax.f32 %v1892, 0.0
      %v1901 = vmax.f32 %v1893, 0.0
      %v1902 = vmax.f32 %v1894, 0.0
      %v1903 = vpack.c.bf16 %v1896, %v1895
      %v1904 = vpack.c.bf16 %v1898, %v1897
      %v1905 = vpack.c.bf16 %v1900, %v1899
      %v1906 = vpack.c.bf16 %v1902, %v1901
      %v1911 = vunpack.c.l.b16 %v1903
      %v1912 = vunpack.c.h.b16 %v1903
      %v1913 = vunpack.c.l.b16 %v1904
      %v1914 = vunpack.c.h.b16 %v1904
      %v1915 = vunpack.c.l.b16 %v1905
      %v1916 = vunpack.c.h.b16 %v1905
      %v1917 = vunpack.c.l.b16 %v1906
      %v1918 = vunpack.c.h.b16 %v1906
      %v1919 = vpack.c.b16 %v1911, %v1911
      %v1920 = vpack.c.b16 %v1912, %v1912
      %v1921 = vpack.c.b16 %v1913, %v1913
      %v1922 = vpack.c.b16 %v1914, %v1914
      %v1923 = vpack.c.b16 %v1915, %v1915
      %v1924 = vpack.c.b16 %v1916, %v1916
      %v1925 = vpack.c.b16 %v1917, %v1917
      %v1926 = vpack.c.b16 %v1918, %v1918
      %vm1935 = vcmask 453632
      %1936 = vst.msk [vmem:[%s170] sm:$0xf] %vm1935, %v1919
      %1937 = vst.msk [vmem:[%s170 + $0x4] sm:$0xf] %vm1935, %v1920
      %1938 = vst.msk [vmem:[%s170 + $0x8] sm:$0xf] %vm1935, %v1921
      %1939 = vst.msk [vmem:[%s170 + $0xc] sm:$0xf] %vm1935, %v1922
      %1940 = vst.msk [vmem:[%s170 + $0x10] sm:$0xf] %vm1935, %v1923
      %1941 = vst.msk [vmem:[%s170 + $0x14] sm:$0xf] %vm1935, %v1924
      %1942 = vst.msk [vmem:[%s170 + $0x18] sm:$0xf] %vm1935, %v1925
      %1943 = vst.msk [vmem:[%s170 + $0x1c] sm:$0xf] %vm1935, %v1926
      %p1944 = scmp.lt.s32.totalorder %s14, 2
      %s1945 = scalar_select %p1944, %s14, 2
      %s1946 = smul.addr %s1945, 8
      %s1947 = smul.addr %s1946, 4
      %s1948 = scalar_lea.vmem %s3, %s1947
      // Predicated region
      $region33: #{forward.4} parent=31 // pred_check
        %p1949 = pneg %p100
      $region34: #{forward.4} parent=31 // pred_check_branch
        %1951 = sbr.rel (%p1949) target = $region36
      $region35: #{forward.4} parent=31 // pred_region
        _
      $region36: #{forward.4} parent=31 // pred_fallthru
        _
    $region32: #{forward.4} parent=5 // pred_fallthru
      _
    %p1952 = scmp.le.s32.totalorder 2, %s9
    // Predicated region
    $region37: #{forward.4} parent=5 // pred_check
      %p1953 = pneg %p1952
    $region38: #{forward.4} parent=5 // pred_check_branch
      %1955 = sbr.rel (%p1953) target = $region40
    $region39: #{forward.4} parent=5 // pred_region
      %s1956 = ssub.s32 %s9, 2
      // Predicated region
      $region41: #{forward.4} parent=39 // pred_check
        %p1957 = pneg %p106
      $region42: #{forward.4} parent=39 // pred_check_branch
        %1959 = sbr.rel (%p1957) target = $region44
      $region43: #{forward.4} parent=39 // pred_region
        %p1960 = scmp.lt.s32.totalorder %s15, 2
        %s1961 = scalar_select %p1960, %s15, 2
        %s1962 = smul.addr %s1961, 8
        %s1963 = smul.addr %s1962, 4
        %s1964 = scalar_lea.vmem %s3, %s1963
      $region44: #{forward.4} parent=39 // pred_fallthru
        _
    $region40: #{forward.4} parent=5 // pred_fallthru
      _
  $region6: #{forward.4} parent=0 // loop_footer
    %s13 = sadd.s32 1, %s9
  $region7: #{forward.4} parent=0 // loop_footer_branch
    %8 = sbr.rel target = $region3
  $region8: #{forward.4} parent=0 // loop_exit
    _

// kernel: forward.5
$region0: #{forward.5}
  #allocation0 [shape = 'u32[]', space=smem, size = 0x4, offset = 0x4, fixed_abs, tag = 'smem constant byte address 0x4 - core index']
  #allocation1 [shape = 'u32[144,128]{1,0:T(1,128)}', space=vmem, size = 0x12000, scoped, tag = 'internal scratch']
  #allocation2 [shape = 'f32[5,512]{1,0:T(8,128)}', space=vmem, size = 0x4000, scoped, tag = 'scratch operand']
  %s0 = inlined_call_operand.vmem [shape: bf16[5,1792], index: 0, kind: input, shape index: {}]
  %s1 = inlined_call_operand.vmem [shape: bf16[1792,512], index: 1, kind: input, shape index: {}]
  %s2 = inlined_call_operand.vmem [shape: f32[1,512], index: 2, kind: input, shape index: {}]
  %s3 = inlined_call_operand.vmem [shape: bf16[512,8], index: 3, kind: input, shape index: {}]
  %s4 = inlined_call_operand.vmem [shape: f32[1,8], index: 4, kind: input, shape index: {}]
  %s5 = inlined_call_operand.vmem [shape: f32[5,8], index: 5, kind: output, shape index: {}]
  %s6 = sld [smem:[#allocation0]]
  $region61: #{forward.5} parent=0
    _
  %s8 = ssub.s32 1, %s6
  %s9 = scalar_select 0, %s8, %s6
  loop: start=0, step=1, limit=4
  $region2: #{forward.5} parent=0 // loop_pre_header
    _
  $region3: #{forward.5} parent=0 // loop_header
    %s11 = sphi 0, %s15
    %p12 = scmp.ge.s32.totalorder %s11, 4
    %s21 = sphi 0, %s23
    %s24 = sphi 0, %s21
    %s25 = sphi 0, %s24
    %s41 = sphi 0, %s25
    %s47 = sphi 0, %s49
    %s50 = sphi 0, %s47
    %s51 = sphi 0, %s50
    %s67 = sphi 0, %s51
    %s71 = sphi 0, %s71
    %s73 = sphi 0, %s71
    %s74 = sphi 0, %s73
    %s88 = sphi 0, %s74
    %s92 = sphi 0, %s92
    %s94 = sphi 0, %s92
    %s95 = sphi 0, %s94
    %s109 = sphi 0, %s95
    %s113 = sphi 0, %s113
    %s115 = sphi 0, %s113
    %s116 = sphi 0, %s115
    %s130 = sphi 0, %s116
    %s134 = sphi 0, %s134
    %s136 = sphi 0, %s134
    %s137 = sphi 0, %s136
    %s151 = sphi 0, %s137
  $region4: #{forward.5} parent=0 // loop_header_branch
    %14 = sbr.rel (%p12) target = $region8
  $region5: #{forward.5} parent=0 // loop_body
    %s16 = ssub.s32 %s11, 1
    %s17 = ssub.s32 %s11, 2
    %s18 = sadd.s32 %s11, 1
    %s19 = ssub.s32 %s11, %s18
    %p20 = scmp.eq.s32.totalorder %s19, 0
    %s22 = sadd.s32 %s21, 1
    %s23 = scalar_select %p20, %s21, %s22
    %p26 = pneg %p20
    %p27 = scmp.eq.s32.totalorder %s11, 1
    %p28 = por %p26, %p27
    %p29 = scmp.ne.s32.totalorder %s21, %s24
    %p30 = scmp.eq.s32.totalorder %s11, 0
    %p31 = por %p29, %p30
    %p32 = scmp.ne.s32.totalorder %s21, %s24
    %p33 = scmp.eq.s32.totalorder %s16, 1
    %p34 = por %p32, %p33
    %p35 = scmp.ne.s32.totalorder %s24, %s25
    %p36 = scmp.eq.s32.totalorder %s16, 0
    %p37 = por %p35, %p36
    %p38 = scmp.ne.s32.totalorder %s24, %s25
    %p39 = scmp.eq.s32.totalorder %s17, 1
    %p40 = por %p38, %p39
    %p42 = scmp.ne.s32.totalorder %s25, %s41
    %p43 = scmp.eq.s32.totalorder %s17, 0
    %p44 = por %p42, %p43
    %s45 = ssub.s32 %s11, %s18
    %p46 = scmp.eq.s32.totalorder %s45, 0
    %s48 = sadd.s32 %s47, 1
    %s49 = scalar_select %p46, %s47, %s48
    %p52 = pneg %p46
    %p53 = scmp.eq.s32.totalorder %s11, 1
    %p54 = por %p52, %p53
    %p55 = scmp.ne.s32.totalorder %s47, %s50
    %p56 = scmp.eq.s32.totalorder %s11, 0
    %p57 = por %p55, %p56
    %p58 = scmp.ne.s32.totalorder %s47, %s50
    %p59 = scmp.eq.s32.totalorder %s16, 1
    %p60 = por %p58, %p59
    %p61 = scmp.ne.s32.totalorder %s50, %s51
    %p62 = scmp.eq.s32.totalorder %s16, 0
    %p63 = por %p61, %p62
    %p64 = scmp.ne.s32.totalorder %s50, %s51
    %p65 = scmp.eq.s32.totalorder %s17, 1
    %p66 = por %p64, %p65
    %p68 = scmp.ne.s32.totalorder %s51, %s67
    %p69 = scmp.eq.s32.totalorder %s17, 0
    %p70 = por %p68, %p69
    %s72 = sadd.s32 %s71, 1
    %p75 = scmp.eq.s32.totalorder %s11, 1
    %p76 = scmp.ne.s32.totalorder %s71, %s73
    %p77 = scmp.eq.s32.totalorder %s11, 0
    %p78 = por %p76, %p77
    %p79 = scmp.ne.s32.totalorder %s71, %s73
    %p80 = scmp.eq.s32.totalorder %s16, 1
    %p81 = por %p79, %p80
    %p82 = scmp.ne.s32.totalorder %s73, %s74
    %p83 = scmp.eq.s32.totalorder %s16, 0
    %p84 = por %p82, %p83
    %p85 = scmp.ne.s32.totalorder %s73, %s74
    %p86 = scmp.eq.s32.totalorder %s17, 1
    %p87 = por %p85, %p86
    %p89 = scmp.ne.s32.totalorder %s74, %s88
    %p90 = scmp.eq.s32.totalorder %s17, 0
    %p91 = por %p89, %p90
    %s93 = sadd.s32 %s92, 1
    %p96 = scmp.eq.s32.totalorder %s11, 1
    %p97 = scmp.ne.s32.totalorder %s92, %s94
    %p98 = scmp.eq.s32.totalorder %s11, 0
    %p99 = por %p97, %p98
    %p100 = scmp.ne.s32.totalorder %s92, %s94
    %p101 = scmp.eq.s32.totalorder %s16, 1
    %p102 = por %p100, %p101
    %p103 = scmp.ne.s32.totalorder %s94, %s95
    %p104 = scmp.eq.s32.totalorder %s16, 0
    %p105 = por %p103, %p104
    %p106 = scmp.ne.s32.totalorder %s94, %s95
    %p107 = scmp.eq.s32.totalorder %s17, 1
    %p108 = por %p106, %p107
    %p110 = scmp.ne.s32.totalorder %s95, %s109
    %p111 = scmp.eq.s32.totalorder %s17, 0
    %p112 = por %p110, %p111
    %s114 = sadd.s32 %s113, 1
    %p117 = scmp.eq.s32.totalorder %s11, 1
    %p118 = scmp.ne.s32.totalorder %s113, %s115
    %p119 = scmp.eq.s32.totalorder %s11, 0
    %p120 = por %p118, %p119
    %p121 = scmp.ne.s32.totalorder %s113, %s115
    %p122 = scmp.eq.s32.totalorder %s16, 1
    %p123 = por %p121, %p122
    %p124 = scmp.ne.s32.totalorder %s115, %s116
    %p125 = scmp.eq.s32.totalorder %s16, 0
    %p126 = por %p124, %p125
    %p127 = scmp.ne.s32.totalorder %s115, %s116
    %p128 = scmp.eq.s32.totalorder %s17, 1
    %p129 = por %p127, %p128
    %p131 = scmp.ne.s32.totalorder %s116, %s130
    %p132 = scmp.eq.s32.totalorder %s17, 0
    %p133 = por %p131, %p132
    %s135 = sadd.s32 %s134, 1
    %p138 = scmp.eq.s32.totalorder %s11, 1
    %p139 = scmp.ne.s32.totalorder %s134, %s136
    %p140 = scmp.eq.s32.totalorder %s11, 0
    %p141 = por %p139, %p140
    %p142 = scmp.ne.s32.totalorder %s134, %s136
    %p143 = scmp.eq.s32.totalorder %s16, 1
    %p144 = por %p142, %p143
    %p145 = scmp.ne.s32.totalorder %s136, %s137
    %p146 = scmp.eq.s32.totalorder %s16, 0
    %p147 = por %p145, %p146
    %p148 = scmp.ne.s32.totalorder %s136, %s137
    %p149 = scmp.eq.s32.totalorder %s17, 1
    %p150 = por %p148, %p149
    %p152 = scmp.ne.s32.totalorder %s137, %s151
    %p153 = scmp.eq.s32.totalorder %s17, 0
    %p154 = por %p152, %p153
    %p155 = scmp.le.s32.totalorder 1, %s11
    %p156 = scmp.lt.s32.totalorder %s11, 3
    %p157 = pnand %p155, %p156
    %p158 = pneg %p157
    // Predicated region
    $region9: #{forward.5} parent=5 // pred_check
      _
    $region10: #{forward.5} parent=5 // pred_check_branch
      %160 = sbr.rel (%p157) target = $region12
    $region11: #{forward.5} parent=5 // pred_region
      %s161 = ssub.s32 %s11, 1
      // Predicated region
      $region13: #{forward.5} parent=11 // pred_check
        %p162 = pneg %p84
      $region14: #{forward.5} parent=11 // pred_check_branch
        %164 = sbr.rel (%p162) target = $region16
      $region15: #{forward.5} parent=11 // pred_region
        _
      $region16: #{forward.5} parent=11 // pred_fallthru
        _
      // Predicated region
      $region17: #{forward.5} parent=11 // pred_check
        %p165 = pneg %p105
      $region18: #{forward.5} parent=11 // pred_check_branch
        %167 = sbr.rel (%p165) target = $region20
      $region19: #{forward.5} parent=11 // pred_region
        _
      $region20: #{forward.5} parent=11 // pred_fallthru
        _
      // Predicated region
      $region21: #{forward.5} parent=11 // pred_check
        %p168 = pneg %p126
      $region22: #{forward.5} parent=11 // pred_check_branch
        %170 = sbr.rel (%p168) target = $region24
      $region23: #{forward.5} parent=11 // pred_region
        _
      $region24: #{forward.5} parent=11 // pred_fallthru
        _
    $region12: #{forward.5} parent=5 // pred_fallthru
      _
    %p171 = scmp.lt.s32.totalorder %s11, 2
    // Predicated region
    $region25: #{forward.5} parent=5 // pred_check
      %p172 = pneg %p171
    $region26: #{forward.5} parent=5 // pred_check_branch
      %174 = sbr.rel (%p172) target = $region28
    $region27: #{forward.5} parent=5 // pred_region
      // Predicated region
      $region29: #{forward.5} parent=27 // pred_check
        %p175 = pneg %p31
      $region30: #{forward.5} parent=27 // pred_check_branch
        %177 = sbr.rel (%p175) target = $region32
      $region31: #{forward.5} parent=27 // pred_region
        %s178 = smul.u32 7, %s11
        %p179 = scmp.lt.s32.totalorder %s178, 13
        %s180 = scalar_select %p179, %s178, 13
        %s181 = smul.addr %s180, 4
        %s182 = scalar_lea.vmem %s0, %s181
        %s183 = smul.u32 7, %s11
      $region32: #{forward.5} parent=27 // pred_fallthru
        _
      // Predicated region
      $region33: #{forward.5} parent=27 // pred_check
        %p184 = pneg %p57
      $region34: #{forward.5} parent=27 // pred_check_branch
        %186 = sbr.rel (%p184) target = $region36
      $region35: #{forward.5} parent=27 // pred_region
        %s187 = smul.u32 112, %s11
        %p188 = scmp.lt.s32.totalorder %s187, 223
        %s189 = scalar_select %p188, %s187, 223
        %s190 = smul.addr %s189, 4
        %s191 = smul.addr %s190, 4
        %s192 = scalar_lea.vmem %s1, %s191
        %s193 = smul.u32 112, %s11
      $region36: #{forward.5} parent=27 // pred_fallthru
        _
    $region28: #{forward.5} parent=5 // pred_fallthru
      _
    %p194 = scmp.le.s32.totalorder 1, %s11
    %p195 = scmp.lt.s32.totalorder %s11, 3
    %p196 = pnand %p194, %p195
    %p197 = pneg %p196
    // Predicated region
    $region37: #{forward.5} parent=5 // pred_check
      _
    $region38: #{forward.5} parent=5 // pred_check_branch
      %199 = sbr.rel (%p196) target = $region40
    $region39: #{forward.5} parent=5 // pred_region
      %s200 = ssub.s32 %s11, 1
      %s201 = smul.u32 7, %s16
      %p202 = scmp.lt.s32.totalorder %s201, 13
      %s203 = scalar_select %p202, %s201, 13
      %s204 = smul.addr %s203, 4
      %s205 = scalar_lea.vmem %s0, %s204
      %p206 = pneg %p37
      %p207 = pneg %p34
      %s208 = smul.u32 112, %s16
      %p209 = scmp.lt.s32.totalorder %s208, 223
      %s210 = scalar_select %p209, %s208, 223
      %s211 = smul.addr %s210, 4
      %s212 = smul.addr %s211, 4
      %s213 = scalar_lea.vmem %s1, %s212
      %p214 = pneg %p63
      %p215 = pneg %p60
      %p216 = pneg %p84
      %p217 = pneg %p81
      %p218 = pneg %p105
      %p219 = pneg %p102
      %p220 = pneg %p126
      %p221 = pneg %p123
      %p222 = pneg %p147
      %p223 = pneg %p144
      %s224 = smul.u32 7, %s16
      %p225 = scmp.lt.s32.totalorder %s224, 13
      %s226 = scalar_select %p225, %s224, 13
      %s227 = smul.addr %s226, 4
      %s228 = scalar_lea.vmem %s0, %s227
      %s229 = smul.u32 7, %s16
      %s230 = smul.u32 112, %s16
      %p231 = scmp.lt.s32.totalorder %s230, 223
      %s232 = scalar_select %p231, %s230, 223
      %s233 = smul.addr %s232, 4
      %s234 = smul.addr %s233, 4
      %s235 = scalar_lea.vmem %s1, %s234
      %s236 = smul.u32 112, %s16
      %p238 = scmp.eq.s32.totalorder %s16, 0
      // Predicated region
      $region41: #{forward.5} parent=39 // pred_check
        %p239 = pneg %p238
      $region42: #{forward.5} parent=39 // pred_check_branch
        %241 = sbr.rel (%p239) target = $region44
      $region43: #{forward.5} parent=39 // pred_region
        %242 = vst [vmem:[#allocation2] sm:$0x1f] 0.0
        %243 = vst [vmem:[#allocation2 + $0x8] sm:$0x1f] 0.0
        %244 = vst [vmem:[#allocation2 + $0x10] sm:$0x1f] 0.0
        %245 = vst [vmem:[#allocation2 + $0x18] sm:$0x1f] 0.0
      $region44: #{forward.5} parent=39 // pred_fallthru
        _
      %v246 = vld [vmem:[#allocation2] sm:$0x1f]
      %v247 = vld [vmem:[#allocation2 + $0x8] sm:$0x1f]
      %v248 = vld [vmem:[#allocation2 + $0x10] sm:$0x1f]
      %v249 = vld [vmem:[#allocation2 + $0x18] sm:$0x1f]
      %v250 = vld [vmem:[%s228] sm:$0x77]
      %v251 = vld [vmem:[%s228 + $0x8] sm:$0x77]
      %v252 = vld [vmem:[%s228 + $0x10] sm:$0x77]
      %v253 = vld [vmem:[%s228 + $0x18] sm:$0x7]
      %v254 = vld [vmem:[%s235] sm:$0xff]
      %v255 = vld [vmem:[%s235 + $0x8] sm:$0xff]
      %v256 = vld [vmem:[%s235 + $0x10] sm:$0xff]
      %v257 = vld [vmem:[%s235 + $0x18] sm:$0xff]
      %v258 = vld [vmem:[%s235 + $0x20] sm:$0xff]
      %v259 = vld [vmem:[%s235 + $0x28] sm:$0xff]
      %v260 = vld [vmem:[%s235 + $0x30] sm:$0xff]
      %v261 = vld [vmem:[%s235 + $0x38] sm:$0xff]
      %v262 = vld [vmem:[%s235 + $0x40] sm:$0xff]
      %v263 = vld [vmem:[%s235 + $0x48] sm:$0xff]
      %v264 = vld [vmem:[%s235 + $0x50] sm:$0xff]
      %v265 = vld [vmem:[%s235 + $0x58] sm:$0xff]
      %v266 = vld [vmem:[%s235 + $0x60] sm:$0xff]
      %v267 = vld [vmem:[%s235 + $0x68] sm:$0xff]
      %v268 = vld [vmem:[%s235 + $0x70] sm:$0xff]
      %v269 = vld [vmem:[%s235 + $0x78] sm:$0xff]
      %v270 = vld [vmem:[%s235 + $0x80] sm:$0xff]
      %v271 = vld [vmem:[%s235 + $0x88] sm:$0xff]
      %v272 = vld [vmem:[%s235 + $0x90] sm:$0xff]
      %v273 = vld [vmem:[%s235 + $0x98] sm:$0xff]
      %v274 = vld [vmem:[%s235 + $0xa0] sm:$0xff]
      %v275 = vld [vmem:[%s235 + $0xa8] sm:$0xff]
      %v276 = vld [vmem:[%s235 + $0xb0] sm:$0xff]
      %v277 = vld [vmem:[%s235 + $0xb8] sm:$0xff]
      %v278 = vld [vmem:[%s235 + $0xc0] sm:$0xff]
      %v279 = vld [vmem:[%s235 + $0xc8] sm:$0xff]
      %v280 = vld [vmem:[%s235 + $0xd0] sm:$0xff]
      %v281 = vld [vmem:[%s235 + $0xd8] sm:$0xff]
      %v282 = vld [vmem:[%s235 + $0xe0] sm:$0xff]
      %v283 = vld [vmem:[%s235 + $0xe8] sm:$0xff]
      %v284 = vld [vmem:[%s235 + $0xf0] sm:$0xff]
      %v285 = vld [vmem:[%s235 + $0xf8] sm:$0xff]
      %v286 = vld [vmem:[%s235 + $0x100] sm:$0xff]
      %v287 = vld [vmem:[%s235 + $0x108] sm:$0xff]
      %v288 = vld [vmem:[%s235 + $0x110] sm:$0xff]
      %v289 = vld [vmem:[%s235 + $0x118] sm:$0xff]
      %v290 = vld [vmem:[%s235 + $0x120] sm:$0xff]
      %v291 = vld [vmem:[%s235 + $0x128] sm:$0xff]
      %v292 = vld [vmem:[%s235 + $0x130] sm:$0xff]
      %v293 = vld [vmem:[%s235 + $0x138] sm:$0xff]
      %v294 = vld [vmem:[%s235 + $0x140] sm:$0xff]
      %v295 = vld [vmem:[%s235 + $0x148] sm:$0xff]
      %v296 = vld [vmem:[%s235 + $0x150] sm:$0xff]
      %v297 = vld [vmem:[%s235 + $0x158] sm:$0xff]
      %v298 = vld [vmem:[%s235 + $0x160] sm:$0xff]
      %v299 = vld [vmem:[%s235 + $0x168] sm:$0xff]
      %v300 = vld [vmem:[%s235 + $0x170] sm:$0xff]
      %v301 = vld [vmem:[%s235 + $0x178] sm:$0xff]
      %v302 = vld [vmem:[%s235 + $0x180] sm:$0xff]
      %v303 = vld [vmem:[%s235 + $0x188] sm:$0xff]
      %v304 = vld [vmem:[%s235 + $0x190] sm:$0xff]
      %v305 = vld [vmem:[%s235 + $0x198] sm:$0xff]
      %v306 = vld [vmem:[%s235 + $0x1a0] sm:$0xff]
      %v307 = vld [vmem:[%s235 + $0x1a8] sm:$0xff]
      %v308 = vld [vmem:[%s235 + $0x1b0] sm:$0xff]
      %v309 = vld [vmem:[%s235 + $0x1b8] sm:$0xff]
      %v310 = vld [vmem:[%s235 + $0x1c0] sm:$0xff]
      %v311 = vld [vmem:[%s235 + $0x1c8] sm:$0xff]
      %v312 = vld [vmem:[%s235 + $0x1d0] sm:$0xff]
      %v313 = vld [vmem:[%s235 + $0x1d8] sm:$0xff]
      %v314 = vld [vmem:[%s235 + $0x1e0] sm:$0xff]
      %v315 = vld [vmem:[%s235 + $0x1e8] sm:$0xff]
      %v316 = vld [vmem:[%s235 + $0x1f0] sm:$0xff]
      %v317 = vld [vmem:[%s235 + $0x1f8] sm:$0xff]
      %v318 = vld [vmem:[%s235 + $0x200] sm:$0xff]
      %v319 = vld [vmem:[%s235 + $0x208] sm:$0xff]
      %v320 = vld [vmem:[%s235 + $0x210] sm:$0xff]
      %v321 = vld [vmem:[%s235 + $0x218] sm:$0xff]
      %v322 = vld [vmem:[%s235 + $0x220] sm:$0xff]
      %v323 = vld [vmem:[%s235 + $0x228] sm:$0xff]
      %v324 = vld [vmem:[%s235 + $0x230] sm:$0xff]
      %v325 = vld [vmem:[%s235 + $0x238] sm:$0xff]
      %v326 = vld [vmem:[%s235 + $0x240] sm:$0xff]
      %v327 = vld [vmem:[%s235 + $0x248] sm:$0xff]
      %v328 = vld [vmem:[%s235 + $0x250] sm:$0xff]
      %v329 = vld [vmem:[%s235 + $0x258] sm:$0xff]
      %v330 = vld [vmem:[%s235 + $0x260] sm:$0xff]
      %v331 = vld [vmem:[%s235 + $0x268] sm:$0xff]
      %v332 = vld [vmem:[%s235 + $0x270] sm:$0xff]
      %v333 = vld [vmem:[%s235 + $0x278] sm:$0xff]
      %v334 = vld [vmem:[%s235 + $0x280] sm:$0xff]
      %v335 = vld [vmem:[%s235 + $0x288] sm:$0xff]
      %v336 = vld [vmem:[%s235 + $0x290] sm:$0xff]
      %v337 = vld [vmem:[%s235 + $0x298] sm:$0xff]
      %v338 = vld [vmem:[%s235 + $0x2a0] sm:$0xff]
      %v339 = vld [vmem:[%s235 + $0x2a8] sm:$0xff]
      %v340 = vld [vmem:[%s235 + $0x2b0] sm:$0xff]
      %v341 = vld [vmem:[%s235 + $0x2b8] sm:$0xff]
      %v342 = vld [vmem:[%s235 + $0x2c0] sm:$0xff]
      %v343 = vld [vmem:[%s235 + $0x2c8] sm:$0xff]
      %v344 = vld [vmem:[%s235 + $0x2d0] sm:$0xff]
      %v345 = vld [vmem:[%s235 + $0x2d8] sm:$0xff]
      %v346 = vld [vmem:[%s235 + $0x2e0] sm:$0xff]
      %v347 = vld [vmem:[%s235 + $0x2e8] sm:$0xff]
      %v348 = vld [vmem:[%s235 + $0x2f0] sm:$0xff]
      %v349 = vld [vmem:[%s235 + $0x2f8] sm:$0xff]
      %v350 = vld [vmem:[%s235 + $0x300] sm:$0xff]
      %v351 = vld [vmem:[%s235 + $0x308] sm:$0xff]
      %v352 = vld [vmem:[%s235 + $0x310] sm:$0xff]
      %v353 = vld [vmem:[%s235 + $0x318] sm:$0xff]
      %v354 = vld [vmem:[%s235 + $0x320] sm:$0xff]
      %v355 = vld [vmem:[%s235 + $0x328] sm:$0xff]
      %v356 = vld [vmem:[%s235 + $0x330] sm:$0xff]
      %v357 = vld [vmem:[%s235 + $0x338] sm:$0xff]
      %v358 = vld [vmem:[%s235 + $0x340] sm:$0xff]
      %v359 = vld [vmem:[%s235 + $0x348] sm:$0xff]
      %v360 = vld [vmem:[%s235 + $0x350] sm:$0xff]
      %v361 = vld [vmem:[%s235 + $0x358] sm:$0xff]
      %v362 = vld [vmem:[%s235 + $0x360] sm:$0xff]
      %v363 = vld [vmem:[%s235 + $0x368] sm:$0xff]
      %v364 = vld [vmem:[%s235 + $0x370] sm:$0xff]
      %v365 = vld [vmem:[%s235 + $0x378] sm:$0xff]
      %v366 = vld [vmem:[%s235 + $0x380] sm:$0xff]
      %v367 = vld [vmem:[%s235 + $0x388] sm:$0xff]
      %v368 = vld [vmem:[%s235 + $0x390] sm:$0xff]
      %v369 = vld [vmem:[%s235 + $0x398] sm:$0xff]
      %v370 = vld [vmem:[%s235 + $0x3a0] sm:$0xff]
      %v371 = vld [vmem:[%s235 + $0x3a8] sm:$0xff]
      %v372 = vld [vmem:[%s235 + $0x3b0] sm:$0xff]
      %v373 = vld [vmem:[%s235 + $0x3b8] sm:$0xff]
      %v374 = vld [vmem:[%s235 + $0x3c0] sm:$0xff]
      %v375 = vld [vmem:[%s235 + $0x3c8] sm:$0xff]
      %v376 = vld [vmem:[%s235 + $0x3d0] sm:$0xff]
      %v377 = vld [vmem:[%s235 + $0x3d8] sm:$0xff]
      %v378 = vld [vmem:[%s235 + $0x3e0] sm:$0xff]
      %v379 = vld [vmem:[%s235 + $0x3e8] sm:$0xff]
      %v380 = vld [vmem:[%s235 + $0x3f0] sm:$0xff]
      %v381 = vld [vmem:[%s235 + $0x3f8] sm:$0xff]
      %v382 = vld [vmem:[%s235 + $0x400] sm:$0xff]
      %v383 = vld [vmem:[%s235 + $0x408] sm:$0xff]
      %v384 = vld [vmem:[%s235 + $0x410] sm:$0xff]
      %v385 = vld [vmem:[%s235 + $0x418] sm:$0xff]
      %v386 = vld [vmem:[%s235 + $0x420] sm:$0xff]
      %v387 = vld [vmem:[%s235 + $0x428] sm:$0xff]
      %v388 = vld [vmem:[%s235 + $0x430] sm:$0xff]
      %v389 = vld [vmem:[%s235 + $0x438] sm:$0xff]
      %v390 = vld [vmem:[%s235 + $0x440] sm:$0xff]
      %v391 = vld [vmem:[%s235 + $0x448] sm:$0xff]
      %v392 = vld [vmem:[%s235 + $0x450] sm:$0xff]
      %v393 = vld [vmem:[%s235 + $0x458] sm:$0xff]
      %v394 = vld [vmem:[%s235 + $0x460] sm:$0xff]
      %v395 = vld [vmem:[%s235 + $0x468] sm:$0xff]
      %v396 = vld [vmem:[%s235 + $0x470] sm:$0xff]
      %v397 = vld [vmem:[%s235 + $0x478] sm:$0xff]
      %v398 = vld [vmem:[%s235 + $0x480] sm:$0xff]
      %v399 = vld [vmem:[%s235 + $0x488] sm:$0xff]
      %v400 = vld [vmem:[%s235 + $0x490] sm:$0xff]
      %v401 = vld [vmem:[%s235 + $0x498] sm:$0xff]
      %v402 = vld [vmem:[%s235 + $0x4a0] sm:$0xff]
      %v403 = vld [vmem:[%s235 + $0x4a8] sm:$0xff]
      %v404 = vld [vmem:[%s235 + $0x4b0] sm:$0xff]
      %v405 = vld [vmem:[%s235 + $0x4b8] sm:$0xff]
      %v406 = vld [vmem:[%s235 + $0x4c0] sm:$0xff]
      %v407 = vld [vmem:[%s235 + $0x4c8] sm:$0xff]
      %v408 = vld [vmem:[%s235 + $0x4d0] sm:$0xff]
      %v409 = vld [vmem:[%s235 + $0x4d8] sm:$0xff]
      %v410 = vld [vmem:[%s235 + $0x4e0] sm:$0xff]
      %v411 = vld [vmem:[%s235 + $0x4e8] sm:$0xff]
      %v412 = vld [vmem:[%s235 + $0x4f0] sm:$0xff]
      %v413 = vld [vmem:[%s235 + $0x4f8] sm:$0xff]
      %v414 = vld [vmem:[%s235 + $0x500] sm:$0xff]
      %v415 = vld [vmem:[%s235 + $0x508] sm:$0xff]
      %v416 = vld [vmem:[%s235 + $0x510] sm:$0xff]
      %v417 = vld [vmem:[%s235 + $0x518] sm:$0xff]
      %v418 = vld [vmem:[%s235 + $0x520] sm:$0xff]
      %v419 = vld [vmem:[%s235 + $0x528] sm:$0xff]
      %v420 = vld [vmem:[%s235 + $0x530] sm:$0xff]
      %v421 = vld [vmem:[%s235 + $0x538] sm:$0xff]
      %v422 = vld [vmem:[%s235 + $0x540] sm:$0xff]
      %v423 = vld [vmem:[%s235 + $0x548] sm:$0xff]
      %v424 = vld [vmem:[%s235 + $0x550] sm:$0xff]
      %v425 = vld [vmem:[%s235 + $0x558] sm:$0xff]
      %v426 = vld [vmem:[%s235 + $0x560] sm:$0xff]
      %v427 = vld [vmem:[%s235 + $0x568] sm:$0xff]
      %v428 = vld [vmem:[%s235 + $0x570] sm:$0xff]
      %v429 = vld [vmem:[%s235 + $0x578] sm:$0xff]
      %v430 = vld [vmem:[%s235 + $0x580] sm:$0xff]
      %v431 = vld [vmem:[%s235 + $0x588] sm:$0xff]
      %v432 = vld [vmem:[%s235 + $0x590] sm:$0xff]
      %v433 = vld [vmem:[%s235 + $0x598] sm:$0xff]
      %v434 = vld [vmem:[%s235 + $0x5a0] sm:$0xff]
      %v435 = vld [vmem:[%s235 + $0x5a8] sm:$0xff]
      %v436 = vld [vmem:[%s235 + $0x5b0] sm:$0xff]
      %v437 = vld [vmem:[%s235 + $0x5b8] sm:$0xff]
      %v438 = vld [vmem:[%s235 + $0x5c0] sm:$0xff]
      %v439 = vld [vmem:[%s235 + $0x5c8] sm:$0xff]
      %v440 = vld [vmem:[%s235 + $0x5d0] sm:$0xff]
      %v441 = vld [vmem:[%s235 + $0x5d8] sm:$0xff]
      %v442 = vld [vmem:[%s235 + $0x5e0] sm:$0xff]
      %v443 = vld [vmem:[%s235 + $0x5e8] sm:$0xff]
      %v444 = vld [vmem:[%s235 + $0x5f0] sm:$0xff]
      %v445 = vld [vmem:[%s235 + $0x5f8] sm:$0xff]
      %v446 = vld [vmem:[%s235 + $0x600] sm:$0xff]
      %v447 = vld [vmem:[%s235 + $0x608] sm:$0xff]
      %v448 = vld [vmem:[%s235 + $0x610] sm:$0xff]
      %v449 = vld [vmem:[%s235 + $0x618] sm:$0xff]
      %v450 = vld [vmem:[%s235 + $0x620] sm:$0xff]
      %v451 = vld [vmem:[%s235 + $0x628] sm:$0xff]
      %v452 = vld [vmem:[%s235 + $0x630] sm:$0xff]
      %v453 = vld [vmem:[%s235 + $0x638] sm:$0xff]
      %v454 = vld [vmem:[%s235 + $0x640] sm:$0xff]
      %v455 = vld [vmem:[%s235 + $0x648] sm:$0xff]
      %v456 = vld [vmem:[%s235 + $0x650] sm:$0xff]
      %v457 = vld [vmem:[%s235 + $0x658] sm:$0xff]
      %v458 = vld [vmem:[%s235 + $0x660] sm:$0xff]
      %v459 = vld [vmem:[%s235 + $0x668] sm:$0xff]
      %v460 = vld [vmem:[%s235 + $0x670] sm:$0xff]
      %v461 = vld [vmem:[%s235 + $0x678] sm:$0xff]
      %v462 = vld [vmem:[%s235 + $0x680] sm:$0xff]
      %v463 = vld [vmem:[%s235 + $0x688] sm:$0xff]
      %v464 = vld [vmem:[%s235 + $0x690] sm:$0xff]
      %v465 = vld [vmem:[%s235 + $0x698] sm:$0xff]
      %v466 = vld [vmem:[%s235 + $0x6a0] sm:$0xff]
      %v467 = vld [vmem:[%s235 + $0x6a8] sm:$0xff]
      %v468 = vld [vmem:[%s235 + $0x6b0] sm:$0xff]
      %v469 = vld [vmem:[%s235 + $0x6b8] sm:$0xff]
      %v470 = vld [vmem:[%s235 + $0x6c0] sm:$0xff]
      %v471 = vld [vmem:[%s235 + $0x6c8] sm:$0xff]
      %v472 = vld [vmem:[%s235 + $0x6d0] sm:$0xff]
      %v473 = vld [vmem:[%s235 + $0x6d8] sm:$0xff]
      %v474 = vld [vmem:[%s235 + $0x6e0] sm:$0xff]
      %v475 = vld [vmem:[%s235 + $0x6e8] sm:$0xff]
      %v476 = vld [vmem:[%s235 + $0x6f0] sm:$0xff]
      %v477 = vld [vmem:[%s235 + $0x6f8] sm:$0xff]
      %v482 = vunpack.c.l.b16 %v250
      %v483 = vunpack.c.h.b16 %v250
      %v484 = vunpack.c.l.b16 %v251
      %v485 = vunpack.c.h.b16 %v251
      %v486 = vunpack.c.l.b16 %v252
      %v487 = vunpack.c.h.b16 %v252
      %v488 = vunpack.c.l.b16 %v253
      %v489 = vpack.c.b16 %v482, %v482
      %v490 = vpack.c.b16 %v483, %v483
      %v491 = vpack.c.b16 %v484, %v484
      %v492 = vpack.c.b16 %v485, %v485
      %v493 = vpack.c.b16 %v486, %v486
      %v494 = vpack.c.b16 %v487, %v487
      %v495 = vpack.c.b16 %v488, %v488
      %v727 = vunpack.c.l.b16 %v254
      %v728 = vunpack.c.h.b16 %v254
      %v729 = vunpack.c.l.b16 %v255
      %v730 = vunpack.c.h.b16 %v255
      %v731 = vunpack.c.l.b16 %v256
      %v732 = vunpack.c.h.b16 %v256
      %v733 = vunpack.c.l.b16 %v257
      %v734 = vunpack.c.h.b16 %v257
      %v735 = vunpack.c.l.b16 %v258
      %v736 = vunpack.c.h.b16 %v258
      %v737 = vunpack.c.l.b16 %v259
      %v738 = vunpack.c.h.b16 %v259
      %v739 = vunpack.c.l.b16 %v260
      %v740 = vunpack.c.h.b16 %v260
      %v741 = vunpack.c.l.b16 %v261
      %v742 = vunpack.c.h.b16 %v261
      %v743 = vunpack.c.l.b16 %v262
      %v744 = vunpack.c.h.b16 %v262
      %v745 = vunpack.c.l.b16 %v263
      %v746 = vunpack.c.h.b16 %v263
      %v747 = vunpack.c.l.b16 %v264
      %v748 = vunpack.c.h.b16 %v264
      %v749 = vunpack.c.l.b16 %v265
      %v750 = vunpack.c.h.b16 %v265
      %v751 = vunpack.c.l.b16 %v266
      %v752 = vunpack.c.h.b16 %v266
      %v753 = vunpack.c.l.b16 %v267
      %v754 = vunpack.c.h.b16 %v267
      %v755 = vunpack.c.l.b16 %v268
      %v756 = vunpack.c.h.b16 %v268
      %v757 = vunpack.c.l.b16 %v269
      %v758 = vunpack.c.h.b16 %v269
      %v759 = vunpack.c.l.b16 %v270
      %v760 = vunpack.c.h.b16 %v270
      %v761 = vunpack.c.l.b16 %v271
      %v762 = vunpack.c.h.b16 %v271
      %v763 = vunpack.c.l.b16 %v272
      %v764 = vunpack.c.h.b16 %v272
      %v765 = vunpack.c.l.b16 %v273
      %v766 = vunpack.c.h.b16 %v273
      %v767 = vunpack.c.l.b16 %v274
      %v768 = vunpack.c.h.b16 %v274
      %v769 = vunpack.c.l.b16 %v275
      %v770 = vunpack.c.h.b16 %v275
      %v771 = vunpack.c.l.b16 %v276
      %v772 = vunpack.c.h.b16 %v276
      %v773 = vunpack.c.l.b16 %v277
      %v774 = vunpack.c.h.b16 %v277
      %v775 = vunpack.c.l.b16 %v278
      %v776 = vunpack.c.h.b16 %v278
      %v777 = vunpack.c.l.b16 %v279
      %v778 = vunpack.c.h.b16 %v279
      %v779 = vunpack.c.l.b16 %v280
      %v780 = vunpack.c.h.b16 %v280
      %v781 = vunpack.c.l.b16 %v281
      %v782 = vunpack.c.h.b16 %v281
      %v783 = vunpack.c.l.b16 %v282
      %v784 = vunpack.c.h.b16 %v282
      %v785 = vunpack.c.l.b16 %v283
      %v786 = vunpack.c.h.b16 %v283
      %v787 = vunpack.c.l.b16 %v284
      %v788 = vunpack.c.h.b16 %v284
      %v789 = vunpack.c.l.b16 %v285
      %v790 = vunpack.c.h.b16 %v285
      %v791 = vunpack.c.l.b16 %v286
      %v792 = vunpack.c.h.b16 %v286
      %v793 = vunpack.c.l.b16 %v287
      %v794 = vunpack.c.h.b16 %v287
      %v795 = vunpack.c.l.b16 %v288
      %v796 = vunpack.c.h.b16 %v288
      %v797 = vunpack.c.l.b16 %v289
      %v798 = vunpack.c.h.b16 %v289
      %v799 = vunpack.c.l.b16 %v290
      %v800 = vunpack.c.h.b16 %v290
      %v801 = vunpack.c.l.b16 %v291
      %v802 = vunpack.c.h.b16 %v291
      %v803 = vunpack.c.l.b16 %v292
      %v804 = vunpack.c.h.b16 %v292
      %v805 = vunpack.c.l.b16 %v293
      %v806 = vunpack.c.h.b16 %v293
      %v807 = vunpack.c.l.b16 %v294
      %v808 = vunpack.c.h.b16 %v294
      %v809 = vunpack.c.l.b16 %v295
      %v810 = vunpack.c.h.b16 %v295
      %v811 = vunpack.c.l.b16 %v296
      %v812 = vunpack.c.h.b16 %v296
      %v813 = vunpack.c.l.b16 %v297
      %v814 = vunpack.c.h.b16 %v297
      %v815 = vunpack.c.l.b16 %v298
      %v816 = vunpack.c.h.b16 %v298
      %v817 = vunpack.c.l.b16 %v299
      %v818 = vunpack.c.h.b16 %v299
      %v819 = vunpack.c.l.b16 %v300
      %v820 = vunpack.c.h.b16 %v300
      %v821 = vunpack.c.l.b16 %v301
      %v822 = vunpack.c.h.b16 %v301
      %v823 = vunpack.c.l.b16 %v302
      %v824 = vunpack.c.h.b16 %v302
      %v825 = vunpack.c.l.b16 %v303
      %v826 = vunpack.c.h.b16 %v303
      %v827 = vunpack.c.l.b16 %v304
      %v828 = vunpack.c.h.b16 %v304
      %v829 = vunpack.c.l.b16 %v305
      %v830 = vunpack.c.h.b16 %v305
      %v831 = vunpack.c.l.b16 %v306
      %v832 = vunpack.c.h.b16 %v306
      %v833 = vunpack.c.l.b16 %v307
      %v834 = vunpack.c.h.b16 %v307
      %v835 = vunpack.c.l.b16 %v308
      %v836 = vunpack.c.h.b16 %v308
      %v837 = vunpack.c.l.b16 %v309
      %v838 = vunpack.c.h.b16 %v309
      %v839 = vunpack.c.l.b16 %v310
      %v840 = vunpack.c.h.b16 %v310
      %v841 = vunpack.c.l.b16 %v311
      %v842 = vunpack.c.h.b16 %v311
      %v843 = vunpack.c.l.b16 %v312
      %v844 = vunpack.c.h.b16 %v312
      %v845 = vunpack.c.l.b16 %v313
      %v846 = vunpack.c.h.b16 %v313
      %v847 = vunpack.c.l.b16 %v314
      %v848 = vunpack.c.h.b16 %v314
      %v849 = vunpack.c.l.b16 %v315
      %v850 = vunpack.c.h.b16 %v315
      %v851 = vunpack.c.l.b16 %v316
      %v852 = vunpack.c.h.b16 %v316
      %v853 = vunpack.c.l.b16 %v317
      %v854 = vunpack.c.h.b16 %v317
      %v855 = vunpack.c.l.b16 %v318
      %v856 = vunpack.c.h.b16 %v318
      %v857 = vunpack.c.l.b16 %v319
      %v858 = vunpack.c.h.b16 %v319
      %v859 = vunpack.c.l.b16 %v320
      %v860 = vunpack.c.h.b16 %v320
      %v861 = vunpack.c.l.b16 %v321
      %v862 = vunpack.c.h.b16 %v321
      %v863 = vunpack.c.l.b16 %v322
      %v864 = vunpack.c.h.b16 %v322
      %v865 = vunpack.c.l.b16 %v323
      %v866 = vunpack.c.h.b16 %v323
      %v867 = vunpack.c.l.b16 %v324
      %v868 = vunpack.c.h.b16 %v324
      %v869 = vunpack.c.l.b16 %v325
      %v870 = vunpack.c.h.b16 %v325
      %v871 = vunpack.c.l.b16 %v326
      %v872 = vunpack.c.h.b16 %v326
      %v873 = vunpack.c.l.b16 %v327
      %v874 = vunpack.c.h.b16 %v327
      %v875 = vunpack.c.l.b16 %v328
      %v876 = vunpack.c.h.b16 %v328
      %v877 = vunpack.c.l.b16 %v329
      %v878 = vunpack.c.h.b16 %v329
      %v879 = vunpack.c.l.b16 %v330
      %v880 = vunpack.c.h.b16 %v330
      %v881 = vunpack.c.l.b16 %v331
      %v882 = vunpack.c.h.b16 %v331
      %v883 = vunpack.c.l.b16 %v332
      %v884 = vunpack.c.h.b16 %v332
      %v885 = vunpack.c.l.b16 %v333
      %v886 = vunpack.c.h.b16 %v333
      %v887 = vunpack.c.l.b16 %v334
      %v888 = vunpack.c.h.b16 %v334
      %v889 = vunpack.c.l.b16 %v335
      %v890 = vunpack.c.h.b16 %v335
      %v891 = vunpack.c.l.b16 %v336
      %v892 = vunpack.c.h.b16 %v336
      %v893 = vunpack.c.l.b16 %v337
      %v894 = vunpack.c.h.b16 %v337
      %v895 = vunpack.c.l.b16 %v338
      %v896 = vunpack.c.h.b16 %v338
      %v897 = vunpack.c.l.b16 %v339
      %v898 = vunpack.c.h.b16 %v339
      %v899 = vunpack.c.l.b16 %v340
      %v900 = vunpack.c.h.b16 %v340
      %v901 = vunpack.c.l.b16 %v341
      %v902 = vunpack.c.h.b16 %v341
      %v903 = vunpack.c.l.b16 %v342
      %v904 = vunpack.c.h.b16 %v342
      %v905 = vunpack.c.l.b16 %v343
      %v906 = vunpack.c.h.b16 %v343
      %v907 = vunpack.c.l.b16 %v344
      %v908 = vunpack.c.h.b16 %v344
      %v909 = vunpack.c.l.b16 %v345
      %v910 = vunpack.c.h.b16 %v345
      %v911 = vunpack.c.l.b16 %v346
      %v912 = vunpack.c.h.b16 %v346
      %v913 = vunpack.c.l.b16 %v347
      %v914 = vunpack.c.h.b16 %v347
      %v915 = vunpack.c.l.b16 %v348
      %v916 = vunpack.c.h.b16 %v348
      %v917 = vunpack.c.l.b16 %v349
      %v918 = vunpack.c.h.b16 %v349
      %v919 = vunpack.c.l.b16 %v350
      %v920 = vunpack.c.h.b16 %v350
      %v921 = vunpack.c.l.b16 %v351
      %v922 = vunpack.c.h.b16 %v351
      %v923 = vunpack.c.l.b16 %v352
      %v924 = vunpack.c.h.b16 %v352
      %v925 = vunpack.c.l.b16 %v353
      %v926 = vunpack.c.h.b16 %v353
      %v927 = vunpack.c.l.b16 %v354
      %v928 = vunpack.c.h.b16 %v354
      %v929 = vunpack.c.l.b16 %v355
      %v930 = vunpack.c.h.b16 %v355
      %v931 = vunpack.c.l.b16 %v356
      %v932 = vunpack.c.h.b16 %v356
      %v933 = vunpack.c.l.b16 %v357
      %v934 = vunpack.c.h.b16 %v357
      %v935 = vunpack.c.l.b16 %v358
      %v936 = vunpack.c.h.b16 %v358
      %v937 = vunpack.c.l.b16 %v359
      %v938 = vunpack.c.h.b16 %v359
      %v939 = vunpack.c.l.b16 %v360
      %v940 = vunpack.c.h.b16 %v360
      %v941 = vunpack.c.l.b16 %v361
      %v942 = vunpack.c.h.b16 %v361
      %v943 = vunpack.c.l.b16 %v362
      %v944 = vunpack.c.h.b16 %v362
      %v945 = vunpack.c.l.b16 %v363
      %v946 = vunpack.c.h.b16 %v363
      %v947 = vunpack.c.l.b16 %v364
      %v948 = vunpack.c.h.b16 %v364
      %v949 = vunpack.c.l.b16 %v365
      %v950 = vunpack.c.h.b16 %v365
      %v951 = vunpack.c.l.b16 %v366
      %v952 = vunpack.c.h.b16 %v366
      %v953 = vunpack.c.l.b16 %v367
      %v954 = vunpack.c.h.b16 %v367
      %v955 = vunpack.c.l.b16 %v368
      %v956 = vunpack.c.h.b16 %v368
      %v957 = vunpack.c.l.b16 %v369
      %v958 = vunpack.c.h.b16 %v369
      %v959 = vunpack.c.l.b16 %v370
      %v960 = vunpack.c.h.b16 %v370
      %v961 = vunpack.c.l.b16 %v371
      %v962 = vunpack.c.h.b16 %v371
      %v963 = vunpack.c.l.b16 %v372
      %v964 = vunpack.c.h.b16 %v372
      %v965 = vunpack.c.l.b16 %v373
      %v966 = vunpack.c.h.b16 %v373
      %v967 = vunpack.c.l.b16 %v374
      %v968 = vunpack.c.h.b16 %v374
      %v969 = vunpack.c.l.b16 %v375
      %v970 = vunpack.c.h.b16 %v375
      %v971 = vunpack.c.l.b16 %v376
      %v972 = vunpack.c.h.b16 %v376
      %v973 = vunpack.c.l.b16 %v377
      %v974 = vunpack.c.h.b16 %v377
      %v975 = vunpack.c.l.b16 %v378
      %v976 = vunpack.c.h.b16 %v378
      %v977 = vunpack.c.l.b16 %v379
      %v978 = vunpack.c.h.b16 %v379
      %v979 = vunpack.c.l.b16 %v380
      %v980 = vunpack.c.h.b16 %v380
      %v981 = vunpack.c.l.b16 %v381
      %v982 = vunpack.c.h.b16 %v381
      %v983 = vunpack.c.l.b16 %v382
      %v984 = vunpack.c.h.b16 %v382
      %v985 = vunpack.c.l.b16 %v383
      %v986 = vunpack.c.h.b16 %v383
      %v987 = vunpack.c.l.b16 %v384
      %v988 = vunpack.c.h.b16 %v384
      %v989 = vunpack.c.l.b16 %v385
      %v990 = vunpack.c.h.b16 %v385
      %v991 = vunpack.c.l.b16 %v386
      %v992 = vunpack.c.h.b16 %v386
      %v993 = vunpack.c.l.b16 %v387
      %v994 = vunpack.c.h.b16 %v387
      %v995 = vunpack.c.l.b16 %v388
      %v996 = vunpack.c.h.b16 %v388
      %v997 = vunpack.c.l.b16 %v389
      %v998 = vunpack.c.h.b16 %v389
      %v999 = vunpack.c.l.b16 %v390
      %v1000 = vunpack.c.h.b16 %v390
      %v1001 = vunpack.c.l.b16 %v391
      %v1002 = vunpack.c.h.b16 %v391
      %v1003 = vunpack.c.l.b16 %v392
      %v1004 = vunpack.c.h.b16 %v392
      %v1005 = vunpack.c.l.b16 %v393
      %v1006 = vunpack.c.h.b16 %v393
      %v1007 = vunpack.c.l.b16 %v394
      %v1008 = vunpack.c.h.b16 %v394
      %v1009 = vunpack.c.l.b16 %v395
      %v1010 = vunpack.c.h.b16 %v395
      %v1011 = vunpack.c.l.b16 %v396
      %v1012 = vunpack.c.h.b16 %v396
      %v1013 = vunpack.c.l.b16 %v397
      %v1014 = vunpack.c.h.b16 %v397
      %v1015 = vunpack.c.l.b16 %v398
      %v1016 = vunpack.c.h.b16 %v398
      %v1017 = vunpack.c.l.b16 %v399
      %v1018 = vunpack.c.h.b16 %v399
      %v1019 = vunpack.c.l.b16 %v400
      %v1020 = vunpack.c.h.b16 %v400
      %v1021 = vunpack.c.l.b16 %v401
      %v1022 = vunpack.c.h.b16 %v401
      %v1023 = vunpack.c.l.b16 %v402
      %v1024 = vunpack.c.h.b16 %v402
      %v1025 = vunpack.c.l.b16 %v403
      %v1026 = vunpack.c.h.b16 %v403
      %v1027 = vunpack.c.l.b16 %v404
      %v1028 = vunpack.c.h.b16 %v404
      %v1029 = vunpack.c.l.b16 %v405
      %v1030 = vunpack.c.h.b16 %v405
      %v1031 = vunpack.c.l.b16 %v406
      %v1032 = vunpack.c.h.b16 %v406
      %v1033 = vunpack.c.l.b16 %v407
      %v1034 = vunpack.c.h.b16 %v407
      %v1035 = vunpack.c.l.b16 %v408
      %v1036 = vunpack.c.h.b16 %v408
      %v1037 = vunpack.c.l.b16 %v409
      %v1038 = vunpack.c.h.b16 %v409
      %v1039 = vunpack.c.l.b16 %v410
      %v1040 = vunpack.c.h.b16 %v410
      %v1041 = vunpack.c.l.b16 %v411
      %v1042 = vunpack.c.h.b16 %v411
      %v1043 = vunpack.c.l.b16 %v412
      %v1044 = vunpack.c.h.b16 %v412
      %v1045 = vunpack.c.l.b16 %v413
      %v1046 = vunpack.c.h.b16 %v413
      %v1047 = vunpack.c.l.b16 %v414
      %v1048 = vunpack.c.h.b16 %v414
      %v1049 = vunpack.c.l.b16 %v415
      %v1050 = vunpack.c.h.b16 %v415
      %v1051 = vunpack.c.l.b16 %v416
      %v1052 = vunpack.c.h.b16 %v416
      %v1053 = vunpack.c.l.b16 %v417
      %v1054 = vunpack.c.h.b16 %v417
      %v1055 = vunpack.c.l.b16 %v418
      %v1056 = vunpack.c.h.b16 %v418
      %v1057 = vunpack.c.l.b16 %v419
      %v1058 = vunpack.c.h.b16 %v419
      %v1059 = vunpack.c.l.b16 %v420
      %v1060 = vunpack.c.h.b16 %v420
      %v1061 = vunpack.c.l.b16 %v421
      %v1062 = vunpack.c.h.b16 %v421
      %v1063 = vunpack.c.l.b16 %v422
      %v1064 = vunpack.c.h.b16 %v422
      %v1065 = vunpack.c.l.b16 %v423
      %v1066 = vunpack.c.h.b16 %v423
      %v1067 = vunpack.c.l.b16 %v424
      %v1068 = vunpack.c.h.b16 %v424
      %v1069 = vunpack.c.l.b16 %v425
      %v1070 = vunpack.c.h.b16 %v425
      %v1071 = vunpack.c.l.b16 %v426
      %v1072 = vunpack.c.h.b16 %v426
      %v1073 = vunpack.c.l.b16 %v427
      %v1074 = vunpack.c.h.b16 %v427
      %v1075 = vunpack.c.l.b16 %v428
      %v1076 = vunpack.c.h.b16 %v428
      %v1077 = vunpack.c.l.b16 %v429
      %v1078 = vunpack.c.h.b16 %v429
      %v1079 = vunpack.c.l.b16 %v430
      %v1080 = vunpack.c.h.b16 %v430
      %v1081 = vunpack.c.l.b16 %v431
      %v1082 = vunpack.c.h.b16 %v431
      %v1083 = vunpack.c.l.b16 %v432
      %v1084 = vunpack.c.h.b16 %v432
      %v1085 = vunpack.c.l.b16 %v433
      %v1086 = vunpack.c.h.b16 %v433
      %v1087 = vunpack.c.l.b16 %v434
      %v1088 = vunpack.c.h.b16 %v434
      %v1089 = vunpack.c.l.b16 %v435
      %v1090 = vunpack.c.h.b16 %v435
      %v1091 = vunpack.c.l.b16 %v436
      %v1092 = vunpack.c.h.b16 %v436
      %v1093 = vunpack.c.l.b16 %v437
      %v1094 = vunpack.c.h.b16 %v437
      %v1095 = vunpack.c.l.b16 %v438
      %v1096 = vunpack.c.h.b16 %v438
      %v1097 = vunpack.c.l.b16 %v439
      %v1098 = vunpack.c.h.b16 %v439
      %v1099 = vunpack.c.l.b16 %v440
      %v1100 = vunpack.c.h.b16 %v440
      %v1101 = vunpack.c.l.b16 %v441
      %v1102 = vunpack.c.h.b16 %v441
      %v1103 = vunpack.c.l.b16 %v442
      %v1104 = vunpack.c.h.b16 %v442
      %v1105 = vunpack.c.l.b16 %v443
      %v1106 = vunpack.c.h.b16 %v443
      %v1107 = vunpack.c.l.b16 %v444
      %v1108 = vunpack.c.h.b16 %v444
      %v1109 = vunpack.c.l.b16 %v445
      %v1110 = vunpack.c.h.b16 %v445
      %v1111 = vunpack.c.l.b16 %v446
      %v1112 = vunpack.c.h.b16 %v446
      %v1113 = vunpack.c.l.b16 %v447
      %v1114 = vunpack.c.h.b16 %v447
      %v1115 = vunpack.c.l.b16 %v448
      %v1116 = vunpack.c.h.b16 %v448
      %v1117 = vunpack.c.l.b16 %v449
      %v1118 = vunpack.c.h.b16 %v449
      %v1119 = vunpack.c.l.b16 %v450
      %v1120 = vunpack.c.h.b16 %v450
      %v1121 = vunpack.c.l.b16 %v451
      %v1122 = vunpack.c.h.b16 %v451
      %v1123 = vunpack.c.l.b16 %v452
      %v1124 = vunpack.c.h.b16 %v452
      %v1125 = vunpack.c.l.b16 %v453
      %v1126 = vunpack.c.h.b16 %v453
      %v1127 = vunpack.c.l.b16 %v454
      %v1128 = vunpack.c.h.b16 %v454
      %v1129 = vunpack.c.l.b16 %v455
      %v1130 = vunpack.c.h.b16 %v455
      %v1131 = vunpack.c.l.b16 %v456
      %v1132 = vunpack.c.h.b16 %v456
      %v1133 = vunpack.c.l.b16 %v457
      %v1134 = vunpack.c.h.b16 %v457
      %v1135 = vunpack.c.l.b16 %v458
      %v1136 = vunpack.c.h.b16 %v458
      %v1137 = vunpack.c.l.b16 %v459
      %v1138 = vunpack.c.h.b16 %v459
      %v1139 = vunpack.c.l.b16 %v460
      %v1140 = vunpack.c.h.b16 %v460
      %v1141 = vunpack.c.l.b16 %v461
      %v1142 = vunpack.c.h.b16 %v461
      %v1143 = vunpack.c.l.b16 %v462
      %v1144 = vunpack.c.h.b16 %v462
      %v1145 = vunpack.c.l.b16 %v463
      %v1146 = vunpack.c.h.b16 %v463
      %v1147 = vunpack.c.l.b16 %v464
      %v1148 = vunpack.c.h.b16 %v464
      %v1149 = vunpack.c.l.b16 %v465
      %v1150 = vunpack.c.h.b16 %v465
      %v1151 = vunpack.c.l.b16 %v466
      %v1152 = vunpack.c.h.b16 %v466
      %v1153 = vunpack.c.l.b16 %v467
      %v1154 = vunpack.c.h.b16 %v467
      %v1155 = vunpack.c.l.b16 %v468
      %v1156 = vunpack.c.h.b16 %v468
      %v1157 = vunpack.c.l.b16 %v469
      %v1158 = vunpack.c.h.b16 %v469
      %v1159 = vunpack.c.l.b16 %v470
      %v1160 = vunpack.c.h.b16 %v470
      %v1161 = vunpack.c.l.b16 %v471
      %v1162 = vunpack.c.h.b16 %v471
      %v1163 = vunpack.c.l.b16 %v472
      %v1164 = vunpack.c.h.b16 %v472
      %v1165 = vunpack.c.l.b16 %v473
      %v1166 = vunpack.c.h.b16 %v473
      %v1167 = vunpack.c.l.b16 %v474
      %v1168 = vunpack.c.h.b16 %v474
      %v1169 = vunpack.c.l.b16 %v475
      %v1170 = vunpack.c.h.b16 %v475
      %v1171 = vunpack.c.l.b16 %v476
      %v1172 = vunpack.c.h.b16 %v476
      %v1173 = vunpack.c.l.b16 %v477
      %v1174 = vunpack.c.h.b16 %v477
      %v1175 = vpack.c.b16 %v731, %v727
      %v1176 = vpack.c.b16 %v732, %v728
      %v1177 = vpack.c.b16 %v733, %v729
      %v1178 = vpack.c.b16 %v734, %v730
      %v1179 = vpack.c.b16 %v739, %v735
      %v1180 = vpack.c.b16 %v740, %v736
      %v1181 = vpack.c.b16 %v741, %v737
      %v1182 = vpack.c.b16 %v742, %v738
      %v1183 = vpack.c.b16 %v747, %v743
      %v1184 = vpack.c.b16 %v748, %v744
      %v1185 = vpack.c.b16 %v749, %v745
      %v1186 = vpack.c.b16 %v750, %v746
      %v1187 = vpack.c.b16 %v755, %v751
      %v1188 = vpack.c.b16 %v756, %v752
      %v1189 = vpack.c.b16 %v757, %v753
      %v1190 = vpack.c.b16 %v758, %v754
      %v1191 = vpack.c.b16 %v763, %v759
      %v1192 = vpack.c.b16 %v764, %v760
      %v1193 = vpack.c.b16 %v765, %v761
      %v1194 = vpack.c.b16 %v766, %v762
      %v1195 = vpack.c.b16 %v771, %v767
      %v1196 = vpack.c.b16 %v772, %v768
      %v1197 = vpack.c.b16 %v773, %v769
      %v1198 = vpack.c.b16 %v774, %v770
      %v1199 = vpack.c.b16 %v779, %v775
      %v1200 = vpack.c.b16 %v780, %v776
      %v1201 = vpack.c.b16 %v781, %v777
      %v1202 = vpack.c.b16 %v782, %v778
      %v1203 = vpack.c.b16 %v787, %v783
      %v1204 = vpack.c.b16 %v788, %v784
      %v1205 = vpack.c.b16 %v789, %v785
      %v1206 = vpack.c.b16 %v790, %v786
      %v1207 = vpack.c.b16 %v795, %v791
      %v1208 = vpack.c.b16 %v796, %v792
      %v1209 = vpack.c.b16 %v797, %v793
      %v1210 = vpack.c.b16 %v798, %v794
      %v1211 = vpack.c.b16 %v803, %v799
      %v1212 = vpack.c.b16 %v804, %v800
      %v1213 = vpack.c.b16 %v805, %v801
      %v1214 = vpack.c.b16 %v806, %v802
      %v1215 = vpack.c.b16 %v811, %v807
      %v1216 = vpack.c.b16 %v812, %v808
      %v1217 = vpack.c.b16 %v813, %v809
      %v1218 = vpack.c.b16 %v814, %v810
      %v1219 = vpack.c.b16 %v819, %v815
      %v1220 = vpack.c.b16 %v820, %v816
      %v1221 = vpack.c.b16 %v821, %v817
      %v1222 = vpack.c.b16 %v822, %v818
      %v1223 = vpack.c.b16 %v827, %v823
      %v1224 = vpack.c.b16 %v828, %v824
      %v1225 = vpack.c.b16 %v829, %v825
      %v1226 = vpack.c.b16 %v830, %v826
      %v1227 = vpack.c.b16 %v835, %v831
      %v1228 = vpack.c.b16 %v836, %v832
      %v1229 = vpack.c.b16 %v837, %v833
      %v1230 = vpack.c.b16 %v838, %v834
      %v1231 = vpack.c.b16 %v843, %v839
      %v1232 = vpack.c.b16 %v844, %v840
      %v1233 = vpack.c.b16 %v845, %v841
      %v1234 = vpack.c.b16 %v846, %v842
      %v1235 = vpack.c.b16 %v851, %v847
      %v1236 = vpack.c.b16 %v852, %v848
      %v1237 = vpack.c.b16 %v853, %v849
      %v1238 = vpack.c.b16 %v854, %v850
      %v1239 = vpack.c.b16 %v859, %v855
      %v1240 = vpack.c.b16 %v860, %v856
      %v1241 = vpack.c.b16 %v861, %v857
      %v1242 = vpack.c.b16 %v862, %v858
      %v1243 = vpack.c.b16 %v867, %v863
      %v1244 = vpack.c.b16 %v868, %v864
      %v1245 = vpack.c.b16 %v869, %v865
      %v1246 = vpack.c.b16 %v870, %v866
      %v1247 = vpack.c.b16 %v875, %v871
      %v1248 = vpack.c.b16 %v876, %v872
      %v1249 = vpack.c.b16 %v877, %v873
      %v1250 = vpack.c.b16 %v878, %v874
      %v1251 = vpack.c.b16 %v883, %v879
      %v1252 = vpack.c.b16 %v884, %v880
      %v1253 = vpack.c.b16 %v885, %v881
      %v1254 = vpack.c.b16 %v886, %v882
      %v1255 = vpack.c.b16 %v891, %v887
      %v1256 = vpack.c.b16 %v892, %v888
      %v1257 = vpack.c.b16 %v893, %v889
      %v1258 = vpack.c.b16 %v894, %v890
      %v1259 = vpack.c.b16 %v899, %v895
      %v1260 = vpack.c.b16 %v900, %v896
      %v1261 = vpack.c.b16 %v901, %v897
      %v1262 = vpack.c.b16 %v902, %v898
      %v1263 = vpack.c.b16 %v907, %v903
      %v1264 = vpack.c.b16 %v908, %v904
      %v1265 = vpack.c.b16 %v909, %v905
      %v1266 = vpack.c.b16 %v910, %v906
      %v1267 = vpack.c.b16 %v915, %v911
      %v1268 = vpack.c.b16 %v916, %v912
      %v1269 = vpack.c.b16 %v917, %v913
      %v1270 = vpack.c.b16 %v918, %v914
      %v1271 = vpack.c.b16 %v923, %v919
      %v1272 = vpack.c.b16 %v924, %v920
      %v1273 = vpack.c.b16 %v925, %v921
      %v1274 = vpack.c.b16 %v926, %v922
      %v1275 = vpack.c.b16 %v931, %v927
      %v1276 = vpack.c.b16 %v932, %v928
      %v1277 = vpack.c.b16 %v933, %v929
      %v1278 = vpack.c.b16 %v934, %v930
      %v1279 = vpack.c.b16 %v939, %v935
      %v1280 = vpack.c.b16 %v940, %v936
      %v1281 = vpack.c.b16 %v941, %v937
      %v1282 = vpack.c.b16 %v942, %v938
      %v1283 = vpack.c.b16 %v947, %v943
      %v1284 = vpack.c.b16 %v948, %v944
      %v1285 = vpack.c.b16 %v949, %v945
      %v1286 = vpack.c.b16 %v950, %v946
      %v1287 = vpack.c.b16 %v955, %v951
      %v1288 = vpack.c.b16 %v956, %v952
      %v1289 = vpack.c.b16 %v957, %v953
      %v1290 = vpack.c.b16 %v958, %v954
      %v1291 = vpack.c.b16 %v963, %v959
      %v1292 = vpack.c.b16 %v964, %v960
      %v1293 = vpack.c.b16 %v965, %v961
      %v1294 = vpack.c.b16 %v966, %v962
      %v1295 = vpack.c.b16 %v971, %v967
      %v1296 = vpack.c.b16 %v972, %v968
      %v1297 = vpack.c.b16 %v973, %v969
      %v1298 = vpack.c.b16 %v974, %v970
      %v1299 = vpack.c.b16 %v979, %v975
      %v1300 = vpack.c.b16 %v980, %v976
      %v1301 = vpack.c.b16 %v981, %v977
      %v1302 = vpack.c.b16 %v982, %v978
      %v1303 = vpack.c.b16 %v987, %v983
      %v1304 = vpack.c.b16 %v988, %v984
      %v1305 = vpack.c.b16 %v989, %v985
      %v1306 = vpack.c.b16 %v990, %v986
      %v1307 = vpack.c.b16 %v995, %v991
      %v1308 = vpack.c.b16 %v996, %v992
      %v1309 = vpack.c.b16 %v997, %v993
      %v1310 = vpack.c.b16 %v998, %v994
      %v1311 = vpack.c.b16 %v1003, %v999
      %v1312 = vpack.c.b16 %v1004, %v1000
      %v1313 = vpack.c.b16 %v1005, %v1001
      %v1314 = vpack.c.b16 %v1006, %v1002
      %v1315 = vpack.c.b16 %v1011, %v1007
      %v1316 = vpack.c.b16 %v1012, %v1008
      %v1317 = vpack.c.b16 %v1013, %v1009
      %v1318 = vpack.c.b16 %v1014, %v1010
      %v1319 = vpack.c.b16 %v1019, %v1015
      %v1320 = vpack.c.b16 %v1020, %v1016
      %v1321 = vpack.c.b16 %v1021, %v1017
      %v1322 = vpack.c.b16 %v1022, %v1018
      %v1323 = vpack.c.b16 %v1027, %v1023
      %v1324 = vpack.c.b16 %v1028, %v1024
      %v1325 = vpack.c.b16 %v1029, %v1025
      %v1326 = vpack.c.b16 %v1030, %v1026
      %v1327 = vpack.c.b16 %v1035, %v1031
      %v1328 = vpack.c.b16 %v1036, %v1032
      %v1329 = vpack.c.b16 %v1037, %v1033
      %v1330 = vpack.c.b16 %v1038, %v1034
      %v1331 = vpack.c.b16 %v1043, %v1039
      %v1332 = vpack.c.b16 %v1044, %v1040
      %v1333 = vpack.c.b16 %v1045, %v1041
      %v1334 = vpack.c.b16 %v1046, %v1042
      %v1335 = vpack.c.b16 %v1051, %v1047
      %v1336 = vpack.c.b16 %v1052, %v1048
      %v1337 = vpack.c.b16 %v1053, %v1049
      %v1338 = vpack.c.b16 %v1054, %v1050
      %v1339 = vpack.c.b16 %v1059, %v1055
      %v1340 = vpack.c.b16 %v1060, %v1056
      %v1341 = vpack.c.b16 %v1061, %v1057
      %v1342 = vpack.c.b16 %v1062, %v1058
      %v1343 = vpack.c.b16 %v1067, %v1063
      %v1344 = vpack.c.b16 %v1068, %v1064
      %v1345 = vpack.c.b16 %v1069, %v1065
      %v1346 = vpack.c.b16 %v1070, %v1066
      %v1347 = vpack.c.b16 %v1075, %v1071
      %v1348 = vpack.c.b16 %v1076, %v1072
      %v1349 = vpack.c.b16 %v1077, %v1073
      %v1350 = vpack.c.b16 %v1078, %v1074
      %v1351 = vpack.c.b16 %v1083, %v1079
      %v1352 = vpack.c.b16 %v1084, %v1080
      %v1353 = vpack.c.b16 %v1085, %v1081
      %v1354 = vpack.c.b16 %v1086, %v1082
      %v1355 = vpack.c.b16 %v1091, %v1087
      %v1356 = vpack.c.b16 %v1092, %v1088
      %v1357 = vpack.c.b16 %v1093, %v1089
      %v1358 = vpack.c.b16 %v1094, %v1090
      %v1359 = vpack.c.b16 %v1099, %v1095
      %v1360 = vpack.c.b16 %v1100, %v1096
      %v1361 = vpack.c.b16 %v1101, %v1097
      %v1362 = vpack.c.b16 %v1102, %v1098
      %v1363 = vpack.c.b16 %v1107, %v1103
      %v1364 = vpack.c.b16 %v1108, %v1104
      %v1365 = vpack.c.b16 %v1109, %v1105
      %v1366 = vpack.c.b16 %v1110, %v1106
      %v1367 = vpack.c.b16 %v1115, %v1111
      %v1368 = vpack.c.b16 %v1116, %v1112
      %v1369 = vpack.c.b16 %v1117, %v1113
      %v1370 = vpack.c.b16 %v1118, %v1114
      %v1371 = vpack.c.b16 %v1123, %v1119
      %v1372 = vpack.c.b16 %v1124, %v1120
      %v1373 = vpack.c.b16 %v1125, %v1121
      %v1374 = vpack.c.b16 %v1126, %v1122
      %v1375 = vpack.c.b16 %v1131, %v1127
      %v1376 = vpack.c.b16 %v1132, %v1128
      %v1377 = vpack.c.b16 %v1133, %v1129
      %v1378 = vpack.c.b16 %v1134, %v1130
      %v1379 = vpack.c.b16 %v1139, %v1135
      %v1380 = vpack.c.b16 %v1140, %v1136
      %v1381 = vpack.c.b16 %v1141, %v1137
      %v1382 = vpack.c.b16 %v1142, %v1138
      %v1383 = vpack.c.b16 %v1147, %v1143
      %v1384 = vpack.c.b16 %v1148, %v1144
      %v1385 = vpack.c.b16 %v1149, %v1145
      %v1386 = vpack.c.b16 %v1150, %v1146
      %v1387 = vpack.c.b16 %v1155, %v1151
      %v1388 = vpack.c.b16 %v1156, %v1152
      %v1389 = vpack.c.b16 %v1157, %v1153
      %v1390 = vpack.c.b16 %v1158, %v1154
      %v1391 = vpack.c.b16 %v1163, %v1159
      %v1392 = vpack.c.b16 %v1164, %v1160
      %v1393 = vpack.c.b16 %v1165, %v1161
      %v1394 = vpack.c.b16 %v1166, %v1162
      %v1395 = vpack.c.b16 %v1171, %v1167
      %v1396 = vpack.c.b16 %v1172, %v1168
      %v1397 = vpack.c.b16 %v1173, %v1169
      %v1398 = vpack.c.b16 %v1174, %v1170
      %1623 = vmatprep.subr.bf16.mxu0 %v1204
      %1624 = vmatpush1.bf16.msra.mxu0 %v1203
      %1625 = vmatprep.subr.bf16.mxu0 %v1200
      %1626 = vmatpush1.bf16.msra.mxu0 %v1199
      %1627 = vmatprep.subr.bf16.mxu0 %v1196
      %1628 = vmatpush1.bf16.msra.mxu0 %v1195
      %1629 = vmatprep.subr.bf16.mxu0 %v1192
      %1630 = vmatpush1.bf16.msra.mxu0 %v1191
      %1631 = vmatprep.subr.bf16.mxu0 %v1188
      %1632 = vmatpush1.bf16.msra.mxu0 %v1187
      %1633 = vmatprep.subr.bf16.mxu0 %v1184
      %1634 = vmatpush1.bf16.msra.mxu0 %v1183
      %1635 = vmatprep.subr.bf16.mxu0 %v1180
      %1636 = vmatpush1.bf16.msra.mxu0 %v1179
      %1637 = vmatprep.subr.bf16.mxu0 %v1176
      %1638 = vmatpush1.bf16.msra.mxu0 %v1175
      %1639 = vmatprep.subr.bf16.mxu0 %v1236
      %1640 = vmatpush2.bf16.msra.mxu0 %v1235
      %1641 = vmatprep.subr.bf16.mxu0 %v1232
      %1642 = vmatpush2.bf16.msra.mxu0 %v1231
      %1643 = vmatprep.subr.bf16.mxu0 %v1228
      %1644 = vmatpush2.bf16.msra.mxu0 %v1227
      %1645 = vmatprep.subr.bf16.mxu0 %v1224
      %1646 = vmatpush2.bf16.msra.mxu0 %v1223
      %1647 = vmatprep.subr.bf16.mxu0 %v1220
      %1648 = vmatpush2.bf16.msra.mxu0 %v1219
      %1649 = vmatprep.subr.bf16.mxu0 %v1216
      %1650 = vmatpush2.bf16.msra.mxu0 %v1215
      %1651 = vmatprep.subr.bf16.mxu0 %v1212
      %1652 = vmatpush2.bf16.msra.mxu0 %v1211
      %1653 = vmatprep.subr.bf16.mxu0 %v1208
      %1654 = vmatpush2.bf16.msra.mxu0 %v1207
      %1655 = vmatprep.mubr.bf16.mxu0 %v490
      %1656 = vmatmul.mubr.bf16.gmra.mxu0 %v489
      %v1657 = vpop.f32.mrf.mxu0
      %v1658 = vadd.f32 0.0, %v1657
      %v1659 = vpop.f32.mrf.mxu0
      %v1660 = vadd.f32 0.0, %v1659
      %v1661 = vpop.f32.mrf.mxu0
      %v1662 = vpop.f32.mrf.mxu0
      %1663 = vdwg.mxu0
      %1664 = vmatprep.subr.bf16.mxu0 %v1268
      %1665 = vmatpush1.bf16.msra.mxu0 %v1267
      %1666 = vmatprep.subr.bf16.mxu0 %v1264
      %1667 = vmatpush1.bf16.msra.mxu0 %v1263
      %1668 = vmatprep.subr.bf16.mxu0 %v1260
      %1669 = vmatpush1.bf16.msra.mxu0 %v1259
      %1670 = vmatprep.subr.bf16.mxu0 %v1256
      %1671 = vmatpush1.bf16.msra.mxu0 %v1255
      %1672 = vmatprep.subr.bf16.mxu0 %v1252
      %1673 = vmatpush1.bf16.msra.mxu0 %v1251
      %1674 = vmatprep.subr.bf16.mxu0 %v1248
      %1675 = vmatpush1.bf16.msra.mxu0 %v1247
      %1676 = vmatprep.subr.bf16.mxu0 %v1244
      %1677 = vmatpush1.bf16.msra.mxu0 %v1243
      %1678 = vmatprep.subr.bf16.mxu0 %v1240
      %1679 = vmatpush1.bf16.msra.mxu0 %v1239
      %1680 = vmatprep.subr.bf16.mxu0 %v1300
      %1681 = vmatpush2.bf16.msra.mxu0 %v1299
      %1682 = vmatprep.subr.bf16.mxu0 %v1296
      %1683 = vmatpush2.bf16.msra.mxu0 %v1295
      %1684 = vmatprep.subr.bf16.mxu0 %v1292
      %1685 = vmatpush2.bf16.msra.mxu0 %v1291
      %1686 = vmatprep.subr.bf16.mxu0 %v1288
      %1687 = vmatpush2.bf16.msra.mxu0 %v1287
      %1688 = vmatprep.subr.bf16.mxu0 %v1284
      %1689 = vmatpush2.bf16.msra.mxu0 %v1283
      %1690 = vmatprep.subr.bf16.mxu0 %v1280
      %1691 = vmatpush2.bf16.msra.mxu0 %v1279
      %1692 = vmatprep.subr.bf16.mxu0 %v1276
      %1693 = vmatpush2.bf16.msra.mxu0 %v1275
      %1694 = vmatprep.subr.bf16.mxu0 %v1272
      %1695 = vmatpush2.bf16.msra.mxu0 %v1271
      %1696 = vmatprep.mubr.bf16.mxu0 %v492
      %1697 = vmatmul.mubr.bf16.gmra.mxu0 %v491
      %v1698 = vpop.f32.mrf.mxu0
      %v1699 = vadd.f32 %v1658, %v1698
      %v1700 = vpop.f32.mrf.mxu0
      %v1701 = vadd.f32 %v1660, %v1700
      %v1702 = vpop.f32.mrf.mxu0
      %v1703 = vpop.f32.mrf.mxu0
      %1704 = vdwg.mxu0
      %1705 = vmatprep.subr.bf16.mxu0 %v1332
      %1706 = vmatpush1.bf16.msra.mxu0 %v1331
      %1707 = vmatprep.subr.bf16.mxu0 %v1328
      %1708 = vmatpush1.bf16.msra.mxu0 %v1327
      %1709 = vmatprep.subr.bf16.mxu0 %v1324
      %1710 = vmatpush1.bf16.msra.mxu0 %v1323
      %1711 = vmatprep.subr.bf16.mxu0 %v1320
      %1712 = vmatpush1.bf16.msra.mxu0 %v1319
      %1713 = vmatprep.subr.bf16.mxu0 %v1316
      %1714 = vmatpush1.bf16.msra.mxu0 %v1315
      %1715 = vmatprep.subr.bf16.mxu0 %v1312
      %1716 = vmatpush1.bf16.msra.mxu0 %v1311
      %1717 = vmatprep.subr.bf16.mxu0 %v1308
      %1718 = vmatpush1.bf16.msra.mxu0 %v1307
      %1719 = vmatprep.subr.bf16.mxu0 %v1304
      %1720 = vmatpush1.bf16.msra.mxu0 %v1303
      %1721 = vmatprep.subr.bf16.mxu0 %v1364
      %1722 = vmatpush2.bf16.msra.mxu0 %v1363
      %1723 = vmatprep.subr.bf16.mxu0 %v1360
      %1724 = vmatpush2.bf16.msra.mxu0 %v1359
      %1725 = vmatprep.subr.bf16.mxu0 %v1356
      %1726 = vmatpush2.bf16.msra.mxu0 %v1355
      %1727 = vmatprep.subr.bf16.mxu0 %v1352
      %1728 = vmatpush2.bf16.msra.mxu0 %v1351
      %1729 = vmatprep.subr.bf16.mxu0 %v1348
      %1730 = vmatpush2.bf16.msra.mxu0 %v1347
      %1731 = vmatprep.subr.bf16.mxu0 %v1344
      %1732 = vmatpush2.bf16.msra.mxu0 %v1343
      %1733 = vmatprep.subr.bf16.mxu0 %v1340
      %1734 = vmatpush2.bf16.msra.mxu0 %v1339
      %1735 = vmatprep.subr.bf16.mxu0 %v1336
      %1736 = vmatpush2.bf16.msra.mxu0 %v1335
      %1737 = vmatprep.mubr.bf16.mxu0 %v494
      %1738 = vmatmul.mubr.bf16.gmra.mxu0 %v493
      %v1739 = vpop.f32.mrf.mxu0
      %v1740 = vadd.f32 %v1699, %v1739
      %v1741 = vpop.f32.mrf.mxu0
      %v1742 = vadd.f32 %v1701, %v1741
      %v1743 = vpop.f32.mrf.mxu0
      %v1744 = vpop.f32.mrf.mxu0
      %1745 = vdwg.mxu0
      %1746 = vmatprep.subr.bf16.mxu0 %v1396
      %1747 = vmatpush1.bf16.msra.mxu0 %v1395
      %1748 = vmatprep.subr.bf16.mxu0 %v1392
      %1749 = vmatpush1.bf16.msra.mxu0 %v1391
      %1750 = vmatprep.subr.bf16.mxu0 %v1388
      %1751 = vmatpush1.bf16.msra.mxu0 %v1387
      %1752 = vmatprep.subr.bf16.mxu0 %v1384
      %1753 = vmatpush1.bf16.msra.mxu0 %v1383
      %1754 = vmatprep.subr.bf16.mxu0 %v1380
      %1755 = vmatpush1.bf16.msra.mxu0 %v1379
      %1756 = vmatprep.subr.bf16.mxu0 %v1376
      %1757 = vmatpush1.bf16.msra.mxu0 %v1375
      %1758 = vmatprep.subr.bf16.mxu0 %v1372
      %1759 = vmatpush1.bf16.msra.mxu0 %v1371
      %1760 = vmatprep.subr.bf16.mxu0 %v1368
      %1761 = vmatpush1.bf16.msra.mxu0 %v1367
      %1762 = vmatprep.subr.bf16.mxu0 0
      %1763 = vmatpush2.bf16.msra.mxu0 0
      %1764 = vmatprep.subr.bf16.mxu0 0
      %1765 = vmatpush2.bf16.msra.mxu0 0
      %1766 = vmatprep.subr.bf16.mxu0 0
      %1767 = vmatpush2.bf16.msra.mxu0 0
      %1768 = vmatprep.subr.bf16.mxu0 0
      %1769 = vmatpush2.bf16.msra.mxu0 0
      %1770 = vmatprep.subr.bf16.mxu0 0
      %1771 = vmatpush2.bf16.msra.mxu0 0
      %1772 = vmatprep.subr.bf16.mxu0 0
      %1773 = vmatpush2.bf16.msra.mxu0 0
      %1774 = vmatprep.subr.bf16.mxu0 0
      %1775 = vmatpush2.bf16.msra.mxu0 0
      %1776 = vmatprep.subr.bf16.mxu0 0
      %1777 = vmatpush2.bf16.msra.mxu0 0
      %1778 = vmatprep.mubr.bf16.mxu0 0
      %1779 = vmatmul.mubr.bf16.gmra.mxu0 %v495
      %v1780 = vpop.f32.mrf.mxu0
      %v1781 = vadd.f32 %v1740, %v1780
      %v1782 = vpop.f32.mrf.mxu0
      %v1783 = vadd.f32 %v1742, %v1782
      %v1784 = vpop.f32.mrf.mxu0
      %v1785 = vpop.f32.mrf.mxu0
      %1786 = vdwg.mxu0
      %1787 = vmatprep.subr.bf16.mxu0 %v1206
      %1788 = vmatpush1.bf16.msra.mxu0 %v1205
      %1789 = vmatprep.subr.bf16.mxu0 %v1202
      %1790 = vmatpush1.bf16.msra.mxu0 %v1201
      %1791 = vmatprep.subr.bf16.mxu0 %v1198
      %1792 = vmatpush1.bf16.msra.mxu0 %v1197
      %1793 = vmatprep.subr.bf16.mxu0 %v1194
      %1794 = vmatpush1.bf16.msra.mxu0 %v1193
      %1795 = vmatprep.subr.bf16.mxu0 %v1190
      %1796 = vmatpush1.bf16.msra.mxu0 %v1189
      %1797 = vmatprep.subr.bf16.mxu0 %v1186
      %1798 = vmatpush1.bf16.msra.mxu0 %v1185
      %1799 = vmatprep.subr.bf16.mxu0 %v1182
      %1800 = vmatpush1.bf16.msra.mxu0 %v1181
      %1801 = vmatprep.subr.bf16.mxu0 %v1178
      %1802 = vmatpush1.bf16.msra.mxu0 %v1177
      %1803 = vmatprep.subr.bf16.mxu0 %v1238
      %1804 = vmatpush2.bf16.msra.mxu0 %v1237
      %1805 = vmatprep.subr.bf16.mxu0 %v1234
      %1806 = vmatpush2.bf16.msra.mxu0 %v1233
      %1807 = vmatprep.subr.bf16.mxu0 %v1230
      %1808 = vmatpush2.bf16.msra.mxu0 %v1229
      %1809 = vmatprep.subr.bf16.mxu0 %v1226
      %1810 = vmatpush2.bf16.msra.mxu0 %v1225
      %1811 = vmatprep.subr.bf16.mxu0 %v1222
      %1812 = vmatpush2.bf16.msra.mxu0 %v1221
      %1813 = vmatprep.subr.bf16.mxu0 %v1218
      %1814 = vmatpush2.bf16.msra.mxu0 %v1217
      %1815 = vmatprep.subr.bf16.mxu0 %v1214
      %1816 = vmatpush2.bf16.msra.mxu0 %v1213
      %1817 = vmatprep.subr.bf16.mxu0 %v1210
      %1818 = vmatpush2.bf16.msra.mxu0 %v1209
      %1819 = vmatprep.mubr.bf16.mxu0 %v490
      %1820 = vmatmul.mubr.bf16.gmra.mxu0 %v489
      %v1821 = vpop.f32.mrf.mxu0
      %v1822 = vadd.f32 0.0, %v1821
      %v1823 = vpop.f32.mrf.mxu0
      %v1824 = vadd.f32 0.0, %v1823
      %v1825 = vpop.f32.mrf.mxu0
      %v1826 = vpop.f32.mrf.mxu0
      %1827 = vdwg.mxu0
      %1828 = vmatprep.subr.bf16.mxu0 %v1270
      %1829 = vmatpush1.bf16.msra.mxu0 %v1269
      %1830 = vmatprep.subr.bf16.mxu0 %v1266
      %1831 = vmatpush1.bf16.msra.mxu0 %v1265
      %1832 = vmatprep.subr.bf16.mxu0 %v1262
      %1833 = vmatpush1.bf16.msra.mxu0 %v1261
      %1834 = vmatprep.subr.bf16.mxu0 %v1258
      %1835 = vmatpush1.bf16.msra.mxu0 %v1257
      %1836 = vmatprep.subr.bf16.mxu0 %v1254
      %1837 = vmatpush1.bf16.msra.mxu0 %v1253
      %1838 = vmatprep.subr.bf16.mxu0 %v1250
      %1839 = vmatpush1.bf16.msra.mxu0 %v1249
      %1840 = vmatprep.subr.bf16.mxu0 %v1246
      %1841 = vmatpush1.bf16.msra.mxu0 %v1245
      %1842 = vmatprep.subr.bf16.mxu0 %v1242
      %1843 = vmatpush1.bf16.msra.mxu0 %v1241
      %1844 = vmatprep.subr.bf16.mxu0 %v1302
      %1845 = vmatpush2.bf16.msra.mxu0 %v1301
      %1846 = vmatprep.subr.bf16.mxu0 %v1298
      %1847 = vmatpush2.bf16.msra.mxu0 %v1297
      %1848 = vmatprep.subr.bf16.mxu0 %v1294
      %1849 = vmatpush2.bf16.msra.mxu0 %v1293
      %1850 = vmatprep.subr.bf16.mxu0 %v1290
      %1851 = vmatpush2.bf16.msra.mxu0 %v1289
      %1852 = vmatprep.subr.bf16.mxu0 %v1286
      %1853 = vmatpush2.bf16.msra.mxu0 %v1285
      %1854 = vmatprep.subr.bf16.mxu0 %v1282
      %1855 = vmatpush2.bf16.msra.mxu0 %v1281
      %1856 = vmatprep.subr.bf16.mxu0 %v1278
      %1857 = vmatpush2.bf16.msra.mxu0 %v1277
      %1858 = vmatprep.subr.bf16.mxu0 %v1274
      %1859 = vmatpush2.bf16.msra.mxu0 %v1273
      %1860 = vmatprep.mubr.bf16.mxu0 %v492
      %1861 = vmatmul.mubr.bf16.gmra.mxu0 %v491
      %v1862 = vpop.f32.mrf.mxu0
      %v1863 = vadd.f32 %v1822, %v1862
      %v1864 = vpop.f32.mrf.mxu0
      %v1865 = vadd.f32 %v1824, %v1864
      %v1866 = vpop.f32.mrf.mxu0
      %v1867 = vpop.f32.mrf.mxu0
      %1868 = vdwg.mxu0
      %1869 = vmatprep.subr.bf16.mxu0 %v1334
      %1870 = vmatpush1.bf16.msra.mxu0 %v1333
      %1871 = vmatprep.subr.bf16.mxu0 %v1330
      %1872 = vmatpush1.bf16.msra.mxu0 %v1329
      %1873 = vmatprep.subr.bf16.mxu0 %v1326
      %1874 = vmatpush1.bf16.msra.mxu0 %v1325
      %1875 = vmatprep.subr.bf16.mxu0 %v1322
      %1876 = vmatpush1.bf16.msra.mxu0 %v1321
      %1877 = vmatprep.subr.bf16.mxu0 %v1318
      %1878 = vmatpush1.bf16.msra.mxu0 %v1317
      %1879 = vmatprep.subr.bf16.mxu0 %v1314
      %1880 = vmatpush1.bf16.msra.mxu0 %v1313
      %1881 = vmatprep.subr.bf16.mxu0 %v1310
      %1882 = vmatpush1.bf16.msra.mxu0 %v1309
      %1883 = vmatprep.subr.bf16.mxu0 %v1306
      %1884 = vmatpush1.bf16.msra.mxu0 %v1305
      %1885 = vmatprep.subr.bf16.mxu0 %v1366
      %1886 = vmatpush2.bf16.msra.mxu0 %v1365
      %1887 = vmatprep.subr.bf16.mxu0 %v1362
      %1888 = vmatpush2.bf16.msra.mxu0 %v1361
      %1889 = vmatprep.subr.bf16.mxu0 %v1358
      %1890 = vmatpush2.bf16.msra.mxu0 %v1357
      %1891 = vmatprep.subr.bf16.mxu0 %v1354
      %1892 = vmatpush2.bf16.msra.mxu0 %v1353
      %1893 = vmatprep.subr.bf16.mxu0 %v1350
      %1894 = vmatpush2.bf16.msra.mxu0 %v1349
      %1895 = vmatprep.subr.bf16.mxu0 %v1346
      %1896 = vmatpush2.bf16.msra.mxu0 %v1345
      %1897 = vmatprep.subr.bf16.mxu0 %v1342
      %1898 = vmatpush2.bf16.msra.mxu0 %v1341
      %1899 = vmatprep.subr.bf16.mxu0 %v1338
      %1900 = vmatpush2.bf16.msra.mxu0 %v1337
      %1901 = vmatprep.mubr.bf16.mxu0 %v494
      %1902 = vmatmul.mubr.bf16.gmra.mxu0 %v493
      %v1903 = vpop.f32.mrf.mxu0
      %v1904 = vadd.f32 %v1863, %v1903
      %v1905 = vpop.f32.mrf.mxu0
      %v1906 = vadd.f32 %v1865, %v1905
      %v1907 = vpop.f32.mrf.mxu0
      %v1908 = vpop.f32.mrf.mxu0
      %1909 = vdwg.mxu0
      %1910 = vmatprep.subr.bf16.mxu0 %v1398
      %1911 = vmatpush1.bf16.msra.mxu0 %v1397
      %1912 = vmatprep.subr.bf16.mxu0 %v1394
      %1913 = vmatpush1.bf16.msra.mxu0 %v1393
      %1914 = vmatprep.subr.bf16.mxu0 %v1390
      %1915 = vmatpush1.bf16.msra.mxu0 %v1389
      %1916 = vmatprep.subr.bf16.mxu0 %v1386
      %1917 = vmatpush1.bf16.msra.mxu0 %v1385
      %1918 = vmatprep.subr.bf16.mxu0 %v1382
      %1919 = vmatpush1.bf16.msra.mxu0 %v1381
      %1920 = vmatprep.subr.bf16.mxu0 %v1378
      %1921 = vmatpush1.bf16.msra.mxu0 %v1377
      %1922 = vmatprep.subr.bf16.mxu0 %v1374
      %1923 = vmatpush1.bf16.msra.mxu0 %v1373
      %1924 = vmatprep.subr.bf16.mxu0 %v1370
      %1925 = vmatpush1.bf16.msra.mxu0 %v1369
      %1926 = vmatprep.subr.bf16.mxu0 0
      %1927 = vmatpush2.bf16.msra.mxu0 0
      %1928 = vmatprep.subr.bf16.mxu0 0
      %1929 = vmatpush2.bf16.msra.mxu0 0
      %1930 = vmatprep.subr.bf16.mxu0 0
      %1931 = vmatpush2.bf16.msra.mxu0 0
      %1932 = vmatprep.subr.bf16.mxu0 0
      %1933 = vmatpush2.bf16.msra.mxu0 0
      %1934 = vmatprep.subr.bf16.mxu0 0
      %1935 = vmatpush2.bf16.msra.mxu0 0
      %1936 = vmatprep.subr.bf16.mxu0 0
      %1937 = vmatpush2.bf16.msra.mxu0 0
      %1938 = vmatprep.subr.bf16.mxu0 0
      %1939 = vmatpush2.bf16.msra.mxu0 0
      %1940 = vmatprep.subr.bf16.mxu0 0
      %1941 = vmatpush2.bf16.msra.mxu0 0
      %1942 = vmatprep.mubr.bf16.mxu0 0
      %1943 = vmatmul.mubr.bf16.gmra.mxu0 %v495
      %v1944 = vpop.f32.mrf.mxu0
      %v1945 = vadd.f32 %v1904, %v1944
      %v1946 = vpop.f32.mrf.mxu0
      %v1947 = vadd.f32 %v1906, %v1946
      %v1948 = vpop.f32.mrf.mxu0
      %v1949 = vpop.f32.mrf.mxu0
      %1950 = vdwg.mxu0
      %v1951 = vadd.f32 %v246, %v1781
      %v1952 = vadd.f32 %v247, %v1783
      %v1953 = vadd.f32 %v248, %v1945
      %v1954 = vadd.f32 %v249, %v1947
      %1955 = vst [vmem:[#allocation2] sm:$0x1f] %v1951
      %1956 = vst [vmem:[#allocation2 + $0x8] sm:$0x1f] %v1952
      %1957 = vst [vmem:[#allocation2 + $0x10] sm:$0x1f] %v1953
      %1958 = vst [vmem:[#allocation2 + $0x18] sm:$0x1f] %v1954
      %p1959 = scmp.eq.s32.totalorder %s16, 1
      // Predicated region
      $region45: #{forward.5} parent=39 // pred_check
        %p1960 = pneg %p1959
      $region46: #{forward.5} parent=39 // pred_check_branch
        %1962 = sbr.rel (%p1960) target = $region48
      $region47: #{forward.5} parent=39 // pred_region
        %v1963 = vld [vmem:[#allocation2] sm:$0x1f]
        %v1964 = vld [vmem:[#allocation2 + $0x8] sm:$0x1f]
        %v1965 = vld [vmem:[#allocation2 + $0x10] sm:$0x1f]
        %v1966 = vld [vmem:[#allocation2 + $0x18] sm:$0x1f]
        %v1967 = vld [vmem:[%s2] sm:$0xf]
        %v1969 = vlaneseq
        %v1970 = vshrl.u32 %v1969, 7
        %v1971 = vsub.s32 0, %v1970
        %v1972 = vrot.slane %v1967, %v1971
        %v1973 = vlaneseq
        %v1974 = vshrl.u32 %v1973, 7
        %v1975 = vsub.s32 1, %v1974
        %v1976 = vrot.slane %v1967, %v1975
        %v1977 = vlaneseq
        %v1978 = vshrl.u32 %v1977, 7
        %v1979 = vsub.s32 2, %v1978
        %v1980 = vrot.slane %v1967, %v1979
        %v1981 = vlaneseq
        %v1982 = vshrl.u32 %v1981, 7
        %v1983 = vsub.s32 3, %v1982
        %v1984 = vrot.slane %v1967, %v1983
        %v1989 = vadd.f32 %v1963, %v1972
        %v1990 = vadd.f32 %v1964, %v1976
        %v1991 = vadd.f32 %v1965, %v1980
        %v1992 = vadd.f32 %v1966, %v1984
        %v1993 = vmax.f32 %v1989, 0.0
        %v1994 = vmax.f32 %v1990, 0.0
        %v1995 = vmax.f32 %v1991, 0.0
        %v1996 = vmax.f32 %v1992, 0.0
        %v1997 = vpack.c.bf16 %v1993, %v1993
        %v1998 = vpack.c.bf16 %v1994, %v1994
        %v1999 = vpack.c.bf16 %v1995, %v1995
        %v2000 = vpack.c.bf16 %v1996, %v1996
        %v2001 = vld [vmem:[%s3] sm:$0xf]
        %v2002 = vld [vmem:[%s3 + $0x4] sm:$0xf]
        %v2003 = vld [vmem:[%s3 + $0x8] sm:$0xf]
        %v2004 = vld [vmem:[%s3 + $0xc] sm:$0xf]
        %v2005 = vld [vmem:[%s3 + $0x10] sm:$0xf]
        %v2006 = vld [vmem:[%s3 + $0x14] sm:$0xf]
        %v2007 = vld [vmem:[%s3 + $0x18] sm:$0xf]
        %v2008 = vld [vmem:[%s3 + $0x1c] sm:$0xf]
        %v2009 = vld [vmem:[%s3 + $0x20] sm:$0xf]
        %v2010 = vld [vmem:[%s3 + $0x24] sm:$0xf]
        %v2011 = vld [vmem:[%s3 + $0x28] sm:$0xf]
        %v2012 = vld [vmem:[%s3 + $0x2c] sm:$0xf]
        %v2013 = vld [vmem:[%s3 + $0x30] sm:$0xf]
        %v2014 = vld [vmem:[%s3 + $0x34] sm:$0xf]
        %v2015 = vld [vmem:[%s3 + $0x38] sm:$0xf]
        %v2016 = vld [vmem:[%s3 + $0x3c] sm:$0xf]
        %v2017 = vld [vmem:[%s3 + $0x40] sm:$0xf]
        %v2018 = vld [vmem:[%s3 + $0x44] sm:$0xf]
        %v2019 = vld [vmem:[%s3 + $0x48] sm:$0xf]
        %v2020 = vld [vmem:[%s3 + $0x4c] sm:$0xf]
        %v2021 = vld [vmem:[%s3 + $0x50] sm:$0xf]
        %v2022 = vld [vmem:[%s3 + $0x54] sm:$0xf]
        %v2023 = vld [vmem:[%s3 + $0x58] sm:$0xf]
        %v2024 = vld [vmem:[%s3 + $0x5c] sm:$0xf]
        %v2025 = vld [vmem:[%s3 + $0x60] sm:$0xf]
        %v2026 = vld [vmem:[%s3 + $0x64] sm:$0xf]
        %v2027 = vld [vmem:[%s3 + $0x68] sm:$0xf]
        %v2028 = vld [vmem:[%s3 + $0x6c] sm:$0xf]
        %v2029 = vld [vmem:[%s3 + $0x70] sm:$0xf]
        %v2030 = vld [vmem:[%s3 + $0x74] sm:$0xf]
        %v2031 = vld [vmem:[%s3 + $0x78] sm:$0xf]
        %v2032 = vld [vmem:[%s3 + $0x7c] sm:$0xf]
        %v2033 = vld [vmem:[%s3 + $0x80] sm:$0xf]
        %v2034 = vld [vmem:[%s3 + $0x84] sm:$0xf]
        %v2035 = vld [vmem:[%s3 + $0x88] sm:$0xf]
        %v2036 = vld [vmem:[%s3 + $0x8c] sm:$0xf]
        %v2037 = vld [vmem:[%s3 + $0x90] sm:$0xf]
        %v2038 = vld [vmem:[%s3 + $0x94] sm:$0xf]
        %v2039 = vld [vmem:[%s3 + $0x98] sm:$0xf]
        %v2040 = vld [vmem:[%s3 + $0x9c] sm:$0xf]
        %v2041 = vld [vmem:[%s3 + $0xa0] sm:$0xf]
        %v2042 = vld [vmem:[%s3 + $0xa4] sm:$0xf]
        %v2043 = vld [vmem:[%s3 + $0xa8] sm:$0xf]
        %v2044 = vld [vmem:[%s3 + $0xac] sm:$0xf]
        %v2045 = vld [vmem:[%s3 + $0xb0] sm:$0xf]
        %v2046 = vld [vmem:[%s3 + $0xb4] sm:$0xf]
        %v2047 = vld [vmem:[%s3 + $0xb8] sm:$0xf]
        %v2048 = vld [vmem:[%s3 + $0xbc] sm:$0xf]
        %v2049 = vld [vmem:[%s3 + $0xc0] sm:$0xf]
        %v2050 = vld [vmem:[%s3 + $0xc4] sm:$0xf]
        %v2051 = vld [vmem:[%s3 + $0xc8] sm:$0xf]
        %v2052 = vld [vmem:[%s3 + $0xcc] sm:$0xf]
        %v2053 = vld [vmem:[%s3 + $0xd0] sm:$0xf]
        %v2054 = vld [vmem:[%s3 + $0xd4] sm:$0xf]
        %v2055 = vld [vmem:[%s3 + $0xd8] sm:$0xf]
        %v2056 = vld [vmem:[%s3 + $0xdc] sm:$0xf]
        %v2057 = vld [vmem:[%s3 + $0xe0] sm:$0xf]
        %v2058 = vld [vmem:[%s3 + $0xe4] sm:$0xf]
        %v2059 = vld [vmem:[%s3 + $0xe8] sm:$0xf]
        %v2060 = vld [vmem:[%s3 + $0xec] sm:$0xf]
        %v2061 = vld [vmem:[%s3 + $0xf0] sm:$0xf]
        %v2062 = vld [vmem:[%s3 + $0xf4] sm:$0xf]
        %v2063 = vld [vmem:[%s3 + $0xf8] sm:$0xf]
        %v2064 = vld [vmem:[%s3 + $0xfc] sm:$0xf]
        %v2065 = vld [vmem:[%s4] sm:$0x1]
        %v2067 = vlaneseq
        %v2068 = vshrl.u32 %v2067, 7
        %v2069 = vsub.s32 0, %v2068
        %v2070 = vrot.slane %v2065, %v2069
        %v2136 = vunpack.c.l.b16 %v2001
        %v2137 = vunpack.c.l.b16 %v2002
        %v2138 = vunpack.c.l.b16 %v2003
        %v2139 = vunpack.c.l.b16 %v2004
        %v2140 = vunpack.c.l.b16 %v2005
        %v2141 = vunpack.c.l.b16 %v2006
        %v2142 = vunpack.c.l.b16 %v2007
        %v2143 = vunpack.c.l.b16 %v2008
        %v2144 = vunpack.c.l.b16 %v2009
        %v2145 = vunpack.c.l.b16 %v2010
        %v2146 = vunpack.c.l.b16 %v2011
        %v2147 = vunpack.c.l.b16 %v2012
        %v2148 = vunpack.c.l.b16 %v2013
        %v2149 = vunpack.c.l.b16 %v2014
        %v2150 = vunpack.c.l.b16 %v2015
        %v2151 = vunpack.c.l.b16 %v2016
        %v2152 = vunpack.c.l.b16 %v2017
        %v2153 = vunpack.c.l.b16 %v2018
        %v2154 = vunpack.c.l.b16 %v2019
        %v2155 = vunpack.c.l.b16 %v2020
        %v2156 = vunpack.c.l.b16 %v2021
        %v2157 = vunpack.c.l.b16 %v2022
        %v2158 = vunpack.c.l.b16 %v2023
        %v2159 = vunpack.c.l.b16 %v2024
        %v2160 = vunpack.c.l.b16 %v2025
        %v2161 = vunpack.c.l.b16 %v2026
        %v2162 = vunpack.c.l.b16 %v2027
        %v2163 = vunpack.c.l.b16 %v2028
        %v2164 = vunpack.c.l.b16 %v2029
        %v2165 = vunpack.c.l.b16 %v2030
        %v2166 = vunpack.c.l.b16 %v2031
        %v2167 = vunpack.c.l.b16 %v2032
        %v2168 = vunpack.c.l.b16 %v2033
        %v2169 = vunpack.c.l.b16 %v2034
        %v2170 = vunpack.c.l.b16 %v2035
        %v2171 = vunpack.c.l.b16 %v2036
        %v2172 = vunpack.c.l.b16 %v2037
        %v2173 = vunpack.c.l.b16 %v2038
        %v2174 = vunpack.c.l.b16 %v2039
        %v2175 = vunpack.c.l.b16 %v2040
        %v2176 = vunpack.c.l.b16 %v2041
        %v2177 = vunpack.c.l.b16 %v2042
        %v2178 = vunpack.c.l.b16 %v2043
        %v2179 = vunpack.c.l.b16 %v2044
        %v2180 = vunpack.c.l.b16 %v2045
        %v2181 = vunpack.c.l.b16 %v2046
        %v2182 = vunpack.c.l.b16 %v2047
        %v2183 = vunpack.c.l.b16 %v2048
        %v2184 = vunpack.c.l.b16 %v2049
        %v2185 = vunpack.c.l.b16 %v2050
        %v2186 = vunpack.c.l.b16 %v2051
        %v2187 = vunpack.c.l.b16 %v2052
        %v2188 = vunpack.c.l.b16 %v2053
        %v2189 = vunpack.c.l.b16 %v2054
        %v2190 = vunpack.c.l.b16 %v2055
        %v2191 = vunpack.c.l.b16 %v2056
        %v2192 = vunpack.c.l.b16 %v2057
        %v2193 = vunpack.c.l.b16 %v2058
        %v2194 = vunpack.c.l.b16 %v2059
        %v2195 = vunpack.c.l.b16 %v2060
        %v2196 = vunpack.c.l.b16 %v2061
        %v2197 = vunpack.c.l.b16 %v2062
        %v2198 = vunpack.c.l.b16 %v2063
        %v2199 = vunpack.c.l.b16 %v2064
        %v2200 = vpack.c.b16 %v2137, %v2136
        %v2201 = vpack.c.b16 %v2139, %v2138
        %v2202 = vpack.c.b16 %v2141, %v2140
        %v2203 = vpack.c.b16 %v2143, %v2142
        %v2204 = vpack.c.b16 %v2145, %v2144
        %v2205 = vpack.c.b16 %v2147, %v2146
        %v2206 = vpack.c.b16 %v2149, %v2148
        %v2207 = vpack.c.b16 %v2151, %v2150
        %v2208 = vpack.c.b16 %v2153, %v2152
        %v2209 = vpack.c.b16 %v2155, %v2154
        %v2210 = vpack.c.b16 %v2157, %v2156
        %v2211 = vpack.c.b16 %v2159, %v2158
        %v2212 = vpack.c.b16 %v2161, %v2160
        %v2213 = vpack.c.b16 %v2163, %v2162
        %v2214 = vpack.c.b16 %v2165, %v2164
        %v2215 = vpack.c.b16 %v2167, %v2166
        %v2216 = vpack.c.b16 %v2169, %v2168
        %v2217 = vpack.c.b16 %v2171, %v2170
        %v2218 = vpack.c.b16 %v2173, %v2172
        %v2219 = vpack.c.b16 %v2175, %v2174
        %v2220 = vpack.c.b16 %v2177, %v2176
        %v2221 = vpack.c.b16 %v2179, %v2178
        %v2222 = vpack.c.b16 %v2181, %v2180
        %v2223 = vpack.c.b16 %v2183, %v2182
        %v2224 = vpack.c.b16 %v2185, %v2184
        %v2225 = vpack.c.b16 %v2187, %v2186
        %v2226 = vpack.c.b16 %v2189, %v2188
        %v2227 = vpack.c.b16 %v2191, %v2190
        %v2228 = vpack.c.b16 %v2193, %v2192
        %v2229 = vpack.c.b16 %v2195, %v2194
        %v2230 = vpack.c.b16 %v2197, %v2196
        %v2231 = vpack.c.b16 %v2199, %v2198
        %2264 = vmatprep.subr.bf16.mxu0 0
        %2265 = vmatpush1.bf16.msra.mxu0 %v2207
        %2266 = vmatprep.subr.bf16.mxu0 0
        %2267 = vmatpush1.bf16.msra.mxu0 %v2206
        %2268 = vmatprep.subr.bf16.mxu0 0
        %2269 = vmatpush1.bf16.msra.mxu0 %v2205
        %2270 = vmatprep.subr.bf16.mxu0 0
        %2271 = vmatpush1.bf16.msra.mxu0 %v2204
        %2272 = vmatprep.subr.bf16.mxu0 0
        %2273 = vmatpush1.bf16.msra.mxu0 %v2203
        %2274 = vmatprep.subr.bf16.mxu0 0
        %2275 = vmatpush1.bf16.msra.mxu0 %v2202
        %2276 = vmatprep.subr.bf16.mxu0 0
        %2277 = vmatpush1.bf16.msra.mxu0 %v2201
        %2278 = vmatprep.subr.bf16.mxu0 0
        %2279 = vmatpush1.bf16.msra.mxu0 %v2200
        %2280 = vmatprep.subr.bf16.mxu0 0
        %2281 = vmatpush2.bf16.msra.mxu0 %v2215
        %2282 = vmatprep.subr.bf16.mxu0 0
        %2283 = vmatpush2.bf16.msra.mxu0 %v2214
        %2284 = vmatprep.subr.bf16.mxu0 0
        %2285 = vmatpush2.bf16.msra.mxu0 %v2213
        %2286 = vmatprep.subr.bf16.mxu0 0
        %2287 = vmatpush2.bf16.msra.mxu0 %v2212
        %2288 = vmatprep.subr.bf16.mxu0 0
        %2289 = vmatpush2.bf16.msra.mxu0 %v2211
        %2290 = vmatprep.subr.bf16.mxu0 0
        %2291 = vmatpush2.bf16.msra.mxu0 %v2210
        %2292 = vmatprep.subr.bf16.mxu0 0
        %2293 = vmatpush2.bf16.msra.mxu0 %v2209
        %2294 = vmatprep.subr.bf16.mxu0 0
        %2295 = vmatpush2.bf16.msra.mxu0 %v2208
        %2296 = vmatprep.mubr.bf16.mxu0 %v1998
        %2297 = vmatmul.mubr.bf16.gmra.mxu0 %v1997
        %v2298 = vpop.f32.mrf.mxu0
        %v2299 = vadd.f32 %v2070, %v2298
        %v2300 = vpop.f32.mrf.mxu0
        %v2301 = vpop.f32.mrf.mxu0
        %v2302 = vpop.f32.mrf.mxu0
        %2303 = vdwg.mxu0
        %2304 = vmatprep.subr.bf16.mxu0 0
        %2305 = vmatpush1.bf16.msra.mxu0 %v2223
        %2306 = vmatprep.subr.bf16.mxu0 0
        %2307 = vmatpush1.bf16.msra.mxu0 %v2222
        %2308 = vmatprep.subr.bf16.mxu0 0
        %2309 = vmatpush1.bf16.msra.mxu0 %v2221
        %2310 = vmatprep.subr.bf16.mxu0 0
        %2311 = vmatpush1.bf16.msra.mxu0 %v2220
        %2312 = vmatprep.subr.bf16.mxu0 0
        %2313 = vmatpush1.bf16.msra.mxu0 %v2219
        %2314 = vmatprep.subr.bf16.mxu0 0
        %2315 = vmatpush1.bf16.msra.mxu0 %v2218
        %2316 = vmatprep.subr.bf16.mxu0 0
        %2317 = vmatpush1.bf16.msra.mxu0 %v2217
        %2318 = vmatprep.subr.bf16.mxu0 0
        %2319 = vmatpush1.bf16.msra.mxu0 %v2216
        %2320 = vmatprep.subr.bf16.mxu0 0
        %2321 = vmatpush2.bf16.msra.mxu0 %v2231
        %2322 = vmatprep.subr.bf16.mxu0 0
        %2323 = vmatpush2.bf16.msra.mxu0 %v2230
        %2324 = vmatprep.subr.bf16.mxu0 0
        %2325 = vmatpush2.bf16.msra.mxu0 %v2229
        %2326 = vmatprep.subr.bf16.mxu0 0
        %2327 = vmatpush2.bf16.msra.mxu0 %v2228
        %2328 = vmatprep.subr.bf16.mxu0 0
        %2329 = vmatpush2.bf16.msra.mxu0 %v2227
        %2330 = vmatprep.subr.bf16.mxu0 0
        %2331 = vmatpush2.bf16.msra.mxu0 %v2226
        %2332 = vmatprep.subr.bf16.mxu0 0
        %2333 = vmatpush2.bf16.msra.mxu0 %v2225
        %2334 = vmatprep.subr.bf16.mxu0 0
        %2335 = vmatpush2.bf16.msra.mxu0 %v2224
        %2336 = vmatprep.mubr.bf16.mxu0 %v2000
        %2337 = vmatmul.mubr.bf16.gmra.mxu0 %v1999
        %v2338 = vpop.f32.mrf.mxu0
        %v2339 = vadd.f32 %v2299, %v2338
        %v2340 = vpop.f32.mrf.mxu0
        %v2341 = vpop.f32.mrf.mxu0
        %v2342 = vpop.f32.mrf.mxu0
        %2343 = vdwg.mxu0
        %v2344 = vlaneseq
        %v2345 = vand.u32 %v2344, 127
        %vm2346 = vcmp.lt.s32.totalorder %v2345, 6
        %v2347 = vsel %vm2346, %v2339, -1e+30
        %vm2348 = vcmask 61440
        %v2349 = vsel %vm2348, %v2347, -inf
        %2350 = vmax.xlane.f32.xlu0 %v2349
        %v2351 = vpop.xlane.xlu0 %2350
        %v2352 = vsub.f32 %v2347, %v2351
        %v2353 = vmul.f32 %v2352, 1.442695
        %v2354 = vpow.pop %v2353
        %v2355 = vsel %vm2346, %v2354, 0.0
        %v2356 = vsel %vm2348, %v2355, 0.0
        %2357 = vadd.xlane.f32.xlu0 %v2356
        %v2358 = vpop.xlane.xlu0 %2357
        %v2359 = vrcp.pop %v2358
        %v2360 = vmul.f32 %v2355, %v2359
        %v2361 = vsel %vm2346, %v2360, %v2339
        %2362 = vst.msk [vmem:[%s5] sm:$0x1f] %vm2348, %v2361
      $region48: #{forward.5} parent=39 // pred_fallthru
        _
      // Predicated region
      $region49: #{forward.5} parent=39 // pred_check
        %p2363 = pneg %p144
      $region50: #{forward.5} parent=39 // pred_check_branch
        %2365 = sbr.rel (%p2363) target = $region52
      $region51: #{forward.5} parent=39 // pred_region
        _
      $region52: #{forward.5} parent=39 // pred_fallthru
        _
      // Predicated region
      $region53: #{forward.5} parent=39 // pred_check
        %p2366 = pneg %p144
      $region54: #{forward.5} parent=39 // pred_check_branch
        %2368 = sbr.rel (%p2366) target = $region56
      $region55: #{forward.5} parent=39 // pred_region
        _
      $region56: #{forward.5} parent=39 // pred_fallthru
        _
    $region40: #{forward.5} parent=5 // pred_fallthru
      _
    %p2369 = scmp.le.s32.totalorder 2, %s11
    // Predicated region
    $region57: #{forward.5} parent=5 // pred_check
      %p2370 = pneg %p2369
    $region58: #{forward.5} parent=5 // pred_check_branch
      %2372 = sbr.rel (%p2370) target = $region60
    $region59: #{forward.5} parent=5 // pred_region
      %s2373 = ssub.s32 %s11, 2
    $region60: #{forward.5} parent=5 // pred_fallthru
      _
  $region6: #{forward.5} parent=0 // loop_footer
    %s15 = sadd.s32 1, %s11
  $region7: #{forward.5} parent=0 // loop_footer_branch
    %10 = sbr.rel target = $region3
  $region8: #{forward.5} parent=0 // loop_exit
    _

</llo_original>
